<compile_context>
chip_gen: v7x
topology: tpu7x:2x2x1
jax: 0.10.0
libtpu: 0.0.40
codegen_flags: <defaults>
</compile_context>

<pallas_src>
import functools
import math

import jax
import jax.numpy as jnp
from jax.experimental import pallas as pl
from jax.experimental.pallas import tpu as pltpu

D_IN = 784        # flattened 28x28 image
H1_E = 256
H2_E = 512
LAT = 2           # true latent dim
LAT_HEAD = 128    # lane width of the fused mean|logvar head (MXU tile)
MV_OUT = 8        # lanes actually written back (0:2 mean, 2:4 logvar)
LAT_SUB = 8       # sublane-padded rows for the (2, 512) decoder-input weight
H1_D = 512
D_OUT = 784
D_OUT_PAD = 896   # 7 * 128, lane-dense reconstruction width


def _round_up(n, m):
    return ((n + m - 1) // m) * m


def _choose_tb(B, max_tb):
    """Pick a batch tile: >=2 grid steps when possible, minimal row padding."""
    num_steps = min(max(2, -(-B // max_tb)), max(1, -(-B // 16)))
    tb = _round_up(-(-B // num_steps), 16)   # 16-row granularity (bf16 sublanes)
    return max(tb, 16)


def _vae_kernel(x_ref, eps_ref,
                w1e_ref, b1e_ref, w2e_ref, b2e_ref,
                wmv_ref, bmv_ref,
                w1d_ref, b1d_ref, w2d_ref, b2d_ref,
                recon_ref, mv_ref):
    f32 = jnp.float32
    bf16 = jnp.bfloat16

    # ---- Encoder ----
    x = x_ref[...]                                               # already bf16
    h1 = jnp.dot(x, w1e_ref[...], preferred_element_type=f32) + b1e_ref[...]
    h1 = jnp.maximum(h1, 0.0)                                    # ReLU
    h2 = jnp.dot(h1.astype(bf16), w2e_ref[...],
                 preferred_element_type=f32) + b2e_ref[...]
    h2 = jnp.tanh(h2)                                            # Tanh (f32)

    # Fused mean/logvar head: lanes 0:2 = mean, lanes 2:4 = logvar, rest 0.
    mv = jnp.dot(h2.astype(bf16), wmv_ref[...],
                 preferred_element_type=f32) + bmv_ref[...]
    mv_ref[...] = mv[:, 0:MV_OUT]                                # 8 f32 lanes out

    # ---- Reparameterize: z = mean + eps * exp(0.5 * logvar) (2 real lanes) ----
    eps = eps_ref[...]
    z0 = mv[:, 0:1] + eps[:, 0:1] * jnp.exp(0.5 * mv[:, 2:3])
    z1 = mv[:, 1:2] + eps[:, 1:2] * jnp.exp(0.5 * mv[:, 3:4])

    # ---- Decoder ----
    # First layer as a rank-2 broadcast-FMA on the VPU (latent dim is only 2).
    h3 = z0 * w1d_ref[0:1, :] + z1 * w1d_ref[1:2, :] + b1d_ref[...]
    h3 = jnp.maximum(h3, 0.0)                                    # ReLU
    logits = jnp.dot(h3.astype(bf16), w2d_ref[...],
                     preferred_element_type=f32) + b2d_ref[...]
    # sigmoid(x) == 0.5 * tanh(0.5 * x) + 0.5 : single EUP transcendental,
    # no exp overflow.  Stored as bf16 (values in [0, 1]).
    recon = 0.5 * jnp.tanh(0.5 * logits) + 0.5
    recon_ref[...] = recon.astype(recon_ref.dtype)


@functools.partial(jax.jit, static_argnames=("max_tb",))
def vae_forward(x, eps, params, max_tb=512):
    """x: (B, 784) f32 or bf16, eps: (B, 2) f32 standard-normal noise."""
    B = x.shape[0]
    TB = _choose_tb(B, max_tb)
    Bp = _round_up(B, TB)

    x = x.astype(jnp.bfloat16)           # bf16 HBM stream into the kernel
    eps = eps.astype(jnp.float32)
    if Bp != B:
        x = jnp.pad(x, ((0, Bp - B), (0, 0)))
        eps = jnp.pad(eps, ((0, Bp - B), (0, 0)))
    grid = (Bp // TB,)

    def tile(cols):                      # batch-tiled activations / outputs
        return pl.BlockSpec((TB, cols), lambda i: (i, 0))

    def resident(shape):                 # weights: same block every grid step
        # (Constant index_map keeps the block VMEM-resident across steps.)
        return pl.BlockSpec(shape, lambda i: (0, 0))

    in_specs = [
        tile(D_IN),                      # x (bf16)
        tile(LAT),                       # eps (f32)
        resident((D_IN, H1_E)),          # w1e (bf16)
        resident((1, H1_E)),             # b1e
        resident((H1_E, H2_E)),          # w2e (bf16)
        resident((1, H2_E)),             # b2e
        resident((H2_E, LAT_HEAD)),      # wmv (bf16, fused mean|logvar)
        resident((1, LAT_HEAD)),         # bmv
        resident((LAT_SUB, H1_D)),       # w1d (f32, rows 0:1 real)
        resident((1, H1_D)),             # b1d
        resident((H1_D, D_OUT_PAD)),     # w2d (bf16, lane-padded 784->896)
        resident((1, D_OUT_PAD)),        # b2d
    ]
    out_specs = (tile(D_OUT_PAD), tile(MV_OUT))

    flops = 2 * Bp * (D_IN * H1_E + H1_E * H2_E + H2_E * LAT_HEAD
                      + LAT * H1_D + H1_D * D_OUT_PAD)
    transcendentals = Bp * (H2_E + LAT + D_OUT_PAD)
    weight_bytes = (2 * (D_IN * H1_E + H1_E * H2_E + H2_E * LAT_HEAD
                         + H1_D * D_OUT_PAD)
                    + 4 * (LAT_SUB * H1_D + H1_E + H2_E + LAT_HEAD
                           + H1_D + D_OUT_PAD))
    bytes_accessed = (2 * Bp * (D_IN + D_OUT_PAD)        # bf16 x / recon streams
                      + 4 * Bp * (LAT + MV_OUT)          # f32 eps / mv streams
                      + weight_bytes)

    recon_p, mv = pl.pallas_call(
        _vae_kernel,
        grid=grid,
        out_shape=(
            jax.ShapeDtypeStruct((Bp, D_OUT_PAD), jnp.bfloat16),
            jax.ShapeDtypeStruct((Bp, MV_OUT), jnp.float32),
        ),
        in_specs=in_specs,
        out_specs=out_specs,
        compiler_params=pltpu.CompilerParams(
            dimension_semantics=("parallel",),
            vmem_limit_bytes=32 * 1024 * 1024,   # v7x-safe (64 MiB physical)
        ),
        cost_estimate=pl.CostEstimate(
            flops=flops,
            transcendentals=transcendentals,
            bytes_accessed=bytes_accessed,
        ),
    )(
        x, eps,
        params["w1e"], params["b1e"],
        params["w2e"], params["b2e"],
        params["wmv"], params["bmv"],
        params["w1d"], params["b1d"],
        params["w2d"], params["b2d"],
    )

    recon = recon_p[:B, :D_OUT]
    mean = mv[:B, 0:LAT]
    logvar = mv[:B, LAT:2 * LAT]
    return recon, mean, logvar


def init_params(key):
    """PyTorch nn.Linear default init: U[-1/sqrt(fan_in), +1/sqrt(fan_in)].

    Returns (kernel_params, ref_params): kernel dict holds packed / padded /
    bf16 weights; ref dict holds plain f32 copies for the pure-JAX reference.
    """
    def linear(k, fan_in, fan_out):
        kw, kb = jax.random.split(k)
        bound = 1.0 / float(fan_in) ** 0.5
        w = jax.random.uniform(kw, (fan_in, fan_out), jnp.float32, -bound, bound)
        b = jax.random.uniform(kb, (1, fan_out), jnp.float32, -bound, bound)
        return w, b

    ks = jax.random.split(key, 6)
    w1e, b1e = linear(ks[0], D_IN, H1_E)
    w2e, b2e = linear(ks[1], H1_E, H2_E)
    wm, bm = linear(ks[2], H2_E, LAT)
    wv, bv = linear(ks[3], H2_E, LAT)
    w1d, b1d = linear(ks[4], LAT, H1_D)
    w2d, b2d = linear(ks[5], H1_D, D_OUT)

    # Fused mean/logvar head: lanes 0:2 = mean, lanes 2:4 = logvar, rest zero.
    wmv = jnp.zeros((H2_E, LAT_HEAD), jnp.float32)
    wmv = wmv.at[:, 0:LAT].set(wm).at[:, LAT:2 * LAT].set(wv)
    bmv = jnp.zeros((1, LAT_HEAD), jnp.float32)
    bmv = bmv.at[:, 0:LAT].set(bm).at[:, LAT:2 * LAT].set(bv)

    # Sublane-pad the tiny (2, 512) decoder-input weight to (8, 512);
    # the kernel only reads rows 0 and 1.
    w1d_p = jnp.zeros((LAT_SUB, H1_D), jnp.float32).at[:LAT, :].set(w1d)

    # Lane-pad the reconstruction head 784 -> 896 (zero cols, sliced off later).
    w2d_p = jnp.zeros((H1_D, D_OUT_PAD), jnp.float32).at[:, :D_OUT].set(w2d)
    b2d_p = jnp.zeros((1, D_OUT_PAD), jnp.float32).at[:, :D_OUT].set(b2d)

    kern = {
        "w1e": w1e.astype(jnp.bfloat16), "b1e": b1e,
        "w2e": w2e.astype(jnp.bfloat16), "b2e": b2e,
        "wmv": wmv.astype(jnp.bfloat16), "bmv": bmv,
        "w1d": w1d_p, "b1d": b1d,
        "w2d": w2d_p.astype(jnp.bfloat16), "b2d": b2d_p,
    }
    ref = {
        "w1e": w1e, "b1e": b1e, "w2e": w2e, "b2e": b2e,
        "wm": wm, "bm": bm, "wv": wv, "bv": bv,
        "w1d": w1d, "b1d": b1d, "w2d": w2d, "b2d": b2d,
    }
    return kern, ref


def vae_forward_ref(x, eps, p):
    """Pure-JAX f32 reference matching the PyTorch forward exactly."""
    h1 = jnp.maximum(x @ p["w1e"] + p["b1e"], 0.0)
    h2 = jnp.tanh(h1 @ p["w2e"] + p["b2e"])
    mean = h2 @ p["wm"] + p["bm"]
    logvar = h2 @ p["wv"] + p["bv"]
    z = mean + eps * jnp.exp(0.5 * logvar)
    h3 = jnp.maximum(z @ p["w1d"] + p["b1d"], 0.0)
    recon = jax.nn.sigmoid(h3 @ p["w2d"] + p["b2d"])
    return recon, mean, logvar


if __name__ == "__main__":
    key = jax.random.PRNGKey(0)
    k_param, k_x, k_eps = jax.random.split(key, 3)

    # B=300 -> TB=160, Bp=320, a 2-step "parallel" grid (both v7x TCs busy)
    # with only ~6% batch padding, and exercises the wrapper padding path.
    B = 300
    kern_params, ref_params = init_params(k_param)
    x = jax.random.uniform(k_x, (B, D_IN), jnp.float32)
    # torch.randn_like-equivalent reparameterization noise; sampled in glue
    # code so kernel and reference see identical eps.
    eps = jax.random.normal(k_eps, (B, LAT), jnp.float32)

    recon, mean, logvar = vae_forward(x, eps, kern_params)
    jax.block_until_ready((recon, mean, logvar))

    recon_r, mean_r, logvar_r = vae_forward_ref(x, eps, ref_params)
    assert recon.shape == (B, D_OUT)
    assert mean.shape == (B, LAT) and logvar.shape == (B, LAT)
    # bf16 inputs / matmul weights / recon stream (f32 accumulation) ->
    # loosened tolerance vs the f32 reference.
    recon_f32 = recon.astype(jnp.float32)
    assert jnp.allclose(recon_f32, recon_r, atol=3e-2, rtol=3e-2)
    assert jnp.allclose(mean, mean_r, atol=3e-2, rtol=3e-2)
    assert jnp.allclose(logvar, logvar_r, atol=3e-2, rtol=3e-2)

    print("KERNEL_OK")
</pallas_src>

<mosaic_0001>
module attributes {stable_mosaic.version = 11 : i64} {
  func.func @_vae_kernel(%arg0: i32, %arg1: memref<160x784xbf16, #tpu.memory_space<vmem>>, %arg2: memref<160x2xf32, #tpu.memory_space<vmem>>, %arg3: memref<784x256xbf16, #tpu.memory_space<vmem>>, %arg4: memref<1x256xf32, #tpu.memory_space<vmem>>, %arg5: memref<256x512xbf16, #tpu.memory_space<vmem>>, %arg6: memref<1x512xf32, #tpu.memory_space<vmem>>, %arg7: memref<512x128xbf16, #tpu.memory_space<vmem>>, %arg8: memref<1x128xf32, #tpu.memory_space<vmem>>, %arg9: memref<8x512xf32, #tpu.memory_space<vmem>>, %arg10: memref<1x512xf32, #tpu.memory_space<vmem>>, %arg11: memref<512x896xbf16, #tpu.memory_space<vmem>>, %arg12: memref<1x896xf32, #tpu.memory_space<vmem>>, %arg13: memref<160x896xbf16, #tpu.memory_space<vmem>>, %arg14: memref<160x8xf32, #tpu.memory_space<vmem>>) attributes {dimension_semantics = [#tpu.dimension_semantics<parallel>], iteration_bounds = array<i64: 2>, scalar_prefetch = 0 : i64, scratch_operands = 0 : i64, tpu.core_type = #tpu.core_type<tc>, window_params = [{transform_indices = @transform_0, window_bounds = array<i64: 160, 784>}, {transform_indices = @transform_1, window_bounds = array<i64: 160, 2>}, {pipeline_mode = #tpu.pipeline_mode<synchronous>, transform_indices = @transform_2, window_bounds = array<i64: 784, 256>}, {pipeline_mode = #tpu.pipeline_mode<synchronous>, transform_indices = @transform_3, window_bounds = array<i64: 1, 256>}, {pipeline_mode = #tpu.pipeline_mode<synchronous>, transform_indices = @transform_4, window_bounds = array<i64: 256, 512>}, {pipeline_mode = #tpu.pipeline_mode<synchronous>, transform_indices = @transform_5, window_bounds = array<i64: 1, 512>}, {pipeline_mode = #tpu.pipeline_mode<synchronous>, transform_indices = @transform_6, window_bounds = array<i64: 512, 128>}, {pipeline_mode = #tpu.pipeline_mode<synchronous>, transform_indices = @transform_7, window_bounds = array<i64: 1, 128>}, {pipeline_mode = #tpu.pipeline_mode<synchronous>, transform_indices = @transform_8, window_bounds = array<i64: 8, 512>}, {pipeline_mode = #tpu.pipeline_mode<synchronous>, transform_indices = @transform_9, window_bounds = array<i64: 1, 512>}, {pipeline_mode = #tpu.pipeline_mode<synchronous>, transform_indices = @transform_10, window_bounds = array<i64: 512, 896>}, {pipeline_mode = #tpu.pipeline_mode<synchronous>, transform_indices = @transform_11, window_bounds = array<i64: 1, 896>}, {transform_indices = @transform_12, window_bounds = array<i64: 160, 896>}, {transform_indices = @transform_13, window_bounds = array<i64: 160, 8>}]} {
    %c0 = arith.constant 0 : index
    %c0_0 = arith.constant 0 : index
    %0 = vector.load %arg1[%c0, %c0_0] : memref<160x784xbf16, #tpu.memory_space<vmem>>, vector<160x784xbf16>
    %c0_1 = arith.constant 0 : index
    %c0_2 = arith.constant 0 : index
    %1 = vector.load %arg3[%c0_1, %c0_2] : memref<784x256xbf16, #tpu.memory_space<vmem>>, vector<784x256xbf16>
    %cst = arith.constant dense<0.000000e+00> : vector<160x256xf32>
    %2 = tpu.matmul %0, %1, %cst {dimension_numbers = #tpu.dot_dimension_numbers<[1], [0], [0], [1], [0, 0, 1, 1], [], []>} : vector<160x784xbf16>, vector<784x256xbf16>, vector<160x256xf32> -> vector<160x256xf32>
    %c0_3 = arith.constant 0 : index
    %c0_4 = arith.constant 0 : index
    %3 = vector.load %arg4[%c0_3, %c0_4] : memref<1x256xf32, #tpu.memory_space<vmem>>, vector<1x256xf32>
    %4 = vector.broadcast %3 : vector<1x256xf32> to vector<160x256xf32>
    %5 = arith.addf %2, %4 : vector<160x256xf32>
    %cst_5 = arith.constant 0.000000e+00 : f32
    %6 = vector.broadcast %cst_5 : f32 to vector<160x256xf32>
    %7 = arith.maximumf %5, %6 : vector<160x256xf32>
    %8 = arith.truncf %7 : vector<160x256xf32> to vector<160x256xbf16>
    %c0_6 = arith.constant 0 : index
    %c0_7 = arith.constant 0 : index
    %9 = vector.load %arg5[%c0_6, %c0_7] : memref<256x512xbf16, #tpu.memory_space<vmem>>, vector<256x512xbf16>
    %cst_8 = arith.constant dense<0.000000e+00> : vector<160x512xf32>
    %10 = tpu.matmul %8, %9, %cst_8 {dimension_numbers = #tpu.dot_dimension_numbers<[1], [0], [0], [1], [0, 0, 1, 1], [], []>} : vector<160x256xbf16>, vector<256x512xbf16>, vector<160x512xf32> -> vector<160x512xf32>
    %c0_9 = arith.constant 0 : index
    %c0_10 = arith.constant 0 : index
    %11 = vector.load %arg6[%c0_9, %c0_10] : memref<1x512xf32, #tpu.memory_space<vmem>>, vector<1x512xf32>
    %12 = vector.broadcast %11 : vector<1x512xf32> to vector<160x512xf32>
    %13 = arith.addf %10, %12 : vector<160x512xf32>
    %14 = math.tanh %13 : vector<160x512xf32>
    %15 = arith.truncf %14 : vector<160x512xf32> to vector<160x512xbf16>
    %c0_11 = arith.constant 0 : index
    %c0_12 = arith.constant 0 : index
    %16 = vector.load %arg7[%c0_11, %c0_12] : memref<512x128xbf16, #tpu.memory_space<vmem>>, vector<512x128xbf16>
    %cst_13 = arith.constant dense<0.000000e+00> : vector<160x128xf32>
    %17 = tpu.matmul %15, %16, %cst_13 {dimension_numbers = #tpu.dot_dimension_numbers<[1], [0], [0], [1], [0, 0, 1, 1], [], []>} : vector<160x512xbf16>, vector<512x128xbf16>, vector<160x128xf32> -> vector<160x128xf32>
    %c0_14 = arith.constant 0 : index
    %c0_15 = arith.constant 0 : index
    %18 = vector.load %arg8[%c0_14, %c0_15] : memref<1x128xf32, #tpu.memory_space<vmem>>, vector<1x128xf32>
    %19 = vector.broadcast %18 : vector<1x128xf32> to vector<160x128xf32>
    %20 = arith.addf %17, %19 : vector<160x128xf32>
    %21 = vector.extract_strided_slice %20 {offsets = [0, 0], sizes = [160, 8], strides = [1, 1]} : vector<160x128xf32> to vector<160x8xf32>
    %c0_16 = arith.constant 0 : index
    %c0_17 = arith.constant 0 : index
    %22 = vector.load %arg14[%c0_16, %c0_17] : memref<160x8xf32, #tpu.memory_space<vmem>>, vector<160x8xf32>
    tpu.vector_store %arg14[%c0_16, %c0_17], %21 {strides = array<i32>} : memref<160x8xf32, #tpu.memory_space<vmem>>, vector<160x8xf32>,
    %c0_18 = arith.constant 0 : index
    %c0_19 = arith.constant 0 : index
    %23 = vector.load %arg2[%c0_18, %c0_19] : memref<160x2xf32, #tpu.memory_space<vmem>>, vector<160x2xf32>
    %24 = vector.extract_strided_slice %20 {offsets = [0, 0], sizes = [160, 1], strides = [1, 1]} : vector<160x128xf32> to vector<160x1xf32>
    %25 = vector.extract_strided_slice %23 {offsets = [0, 0], sizes = [160, 1], strides = [1, 1]} : vector<160x2xf32> to vector<160x1xf32>
    %26 = vector.extract_strided_slice %20 {offsets = [0, 2], sizes = [160, 1], strides = [1, 1]} : vector<160x128xf32> to vector<160x1xf32>
    %cst_20 = arith.constant 5.000000e-01 : f32
    %27 = vector.broadcast %cst_20 : f32 to vector<160x1xf32>
    %28 = arith.mulf %27, %26 : vector<160x1xf32>
    %29 = math.exp %28 : vector<160x1xf32>
    %30 = arith.mulf %25, %29 : vector<160x1xf32>
    %31 = arith.addf %24, %30 : vector<160x1xf32>
    %32 = vector.extract_strided_slice %20 {offsets = [0, 1], sizes = [160, 1], strides = [1, 1]} : vector<160x128xf32> to vector<160x1xf32>
    %33 = vector.extract_strided_slice %23 {offsets = [0, 1], sizes = [160, 1], strides = [1, 1]} : vector<160x2xf32> to vector<160x1xf32>
    %34 = vector.extract_strided_slice %20 {offsets = [0, 3], sizes = [160, 1], strides = [1, 1]} : vector<160x128xf32> to vector<160x1xf32>
    %cst_21 = arith.constant 5.000000e-01 : f32
    %35 = vector.broadcast %cst_21 : f32 to vector<160x1xf32>
    %36 = arith.mulf %35, %34 : vector<160x1xf32>
    %37 = math.exp %36 : vector<160x1xf32>
    %38 = arith.mulf %33, %37 : vector<160x1xf32>
    %39 = arith.addf %32, %38 : vector<160x1xf32>
    %c0_22 = arith.constant 0 : index
    %c0_23 = arith.constant 0 : index
    %40 = vector.load %arg9[%c0_22, %c0_23] : memref<8x512xf32, #tpu.memory_space<vmem>>, vector<1x512xf32>
    %41 = vector.broadcast %31 : vector<160x1xf32> to vector<160x512xf32>
    %42 = vector.broadcast %40 : vector<1x512xf32> to vector<160x512xf32>
    %43 = arith.mulf %41, %42 : vector<160x512xf32>
    %c1 = arith.constant 1 : index
    %c0_24 = arith.constant 0 : index
    %44 = vector.load %arg9[%c1, %c0_24] : memref<8x512xf32, #tpu.memory_space<vmem>>, vector<1x512xf32>
    %45 = vector.broadcast %39 : vector<160x1xf32> to vector<160x512xf32>
    %46 = vector.broadcast %44 : vector<1x512xf32> to vector<160x512xf32>
    %47 = arith.mulf %45, %46 : vector<160x512xf32>
    %48 = arith.addf %43, %47 : vector<160x512xf32>
    %c0_25 = arith.constant 0 : index
    %c0_26 = arith.constant 0 : index
    %49 = vector.load %arg10[%c0_25, %c0_26] : memref<1x512xf32, #tpu.memory_space<vmem>>, vector<1x512xf32>
    %50 = vector.broadcast %49 : vector<1x512xf32> to vector<160x512xf32>
    %51 = arith.addf %48, %50 : vector<160x512xf32>
    %cst_27 = arith.constant 0.000000e+00 : f32
    %52 = vector.broadcast %cst_27 : f32 to vector<160x512xf32>
    %53 = arith.maximumf %51, %52 : vector<160x512xf32>
    %54 = arith.truncf %53 : vector<160x512xf32> to vector<160x512xbf16>
    %c0_28 = arith.constant 0 : index
    %c0_29 = arith.constant 0 : index
    %55 = vector.load %arg11[%c0_28, %c0_29] : memref<512x896xbf16, #tpu.memory_space<vmem>>, vector<512x896xbf16>
    %cst_30 = arith.constant dense<0.000000e+00> : vector<160x896xf32>
    %56 = tpu.matmul %54, %55, %cst_30 {dimension_numbers = #tpu.dot_dimension_numbers<[1], [0], [0], [1], [0, 0, 1, 1], [], []>} : vector<160x512xbf16>, vector<512x896xbf16>, vector<160x896xf32> -> vector<160x896xf32>
    %c0_31 = arith.constant 0 : index
    %c0_32 = arith.constant 0 : index
    %57 = vector.load %arg12[%c0_31, %c0_32] : memref<1x896xf32, #tpu.memory_space<vmem>>, vector<1x896xf32>
    %58 = vector.broadcast %57 : vector<1x896xf32> to vector<160x896xf32>
    %59 = arith.addf %56, %58 : vector<160x896xf32>
    %cst_33 = arith.constant 5.000000e-01 : f32
    %60 = vector.broadcast %cst_33 : f32 to vector<160x896xf32>
    %61 = arith.mulf %60, %59 : vector<160x896xf32>
    %62 = math.tanh %61 : vector<160x896xf32>
    %cst_34 = arith.constant 5.000000e-01 : f32
    %63 = vector.broadcast %cst_34 : f32 to vector<160x896xf32>
    %64 = arith.mulf %63, %62 : vector<160x896xf32>
    %cst_35 = arith.constant 5.000000e-01 : f32
    %65 = vector.broadcast %cst_35 : f32 to vector<160x896xf32>
    %66 = arith.addf %64, %65 : vector<160x896xf32>
    %67 = arith.truncf %66 : vector<160x896xf32> to vector<160x896xbf16>
    %c0_36 = arith.constant 0 : index
    %c0_37 = arith.constant 0 : index
    %68 = vector.load %arg13[%c0_36, %c0_37] : memref<160x896xbf16, #tpu.memory_space<vmem>>, vector<160x896xbf16>
    tpu.vector_store %arg13[%c0_36, %c0_37], %67 {strides = array<i32>} : memref<160x896xbf16, #tpu.memory_space<vmem>>, vector<160x896xbf16>,
    return
  }
  func.func @transform_0(%arg0: i32) -> (i32, i32) {
    %c0_i32 = arith.constant 0 : i32
    %c0_i32_0 = arith.constant 0 : i32
    return %arg0, %c0_i32 : i32, i32
  }
  func.func @transform_1(%arg0: i32) -> (i32, i32) {
    %c0_i32 = arith.constant 0 : i32
    %c0_i32_0 = arith.constant 0 : i32
    return %arg0, %c0_i32 : i32, i32
  }
  func.func @transform_2(%arg0: i32) -> (i32, i32) {
    %c0_i32 = arith.constant 0 : i32
    %c0_i32_0 = arith.constant 0 : i32
    %c0_i32_1 = arith.constant 0 : i32
    return %c0_i32, %c0_i32_0 : i32, i32
  }
  func.func @transform_3(%arg0: i32) -> (i32, i32) {
    %c0_i32 = arith.constant 0 : i32
    %c0_i32_0 = arith.constant 0 : i32
    %c0_i32_1 = arith.constant 0 : i32
    return %c0_i32, %c0_i32_0 : i32, i32
  }
  func.func @transform_4(%arg0: i32) -> (i32, i32) {
    %c0_i32 = arith.constant 0 : i32
    %c0_i32_0 = arith.constant 0 : i32
    %c0_i32_1 = arith.constant 0 : i32
    return %c0_i32, %c0_i32_0 : i32, i32
  }
  func.func @transform_5(%arg0: i32) -> (i32, i32) {
    %c0_i32 = arith.constant 0 : i32
    %c0_i32_0 = arith.constant 0 : i32
    %c0_i32_1 = arith.constant 0 : i32
    return %c0_i32, %c0_i32_0 : i32, i32
  }
  func.func @transform_6(%arg0: i32) -> (i32, i32) {
    %c0_i32 = arith.constant 0 : i32
    %c0_i32_0 = arith.constant 0 : i32
    %c0_i32_1 = arith.constant 0 : i32
    return %c0_i32, %c0_i32_0 : i32, i32
  }
  func.func @transform_7(%arg0: i32) -> (i32, i32) {
    %c0_i32 = arith.constant 0 : i32
    %c0_i32_0 = arith.constant 0 : i32
    %c0_i32_1 = arith.constant 0 : i32
    return %c0_i32, %c0_i32_0 : i32, i32
  }
  func.func @transform_8(%arg0: i32) -> (i32, i32) {
    %c0_i32 = arith.constant 0 : i32
    %c0_i32_0 = arith.constant 0 : i32
    %c0_i32_1 = arith.constant 0 : i32
    return %c0_i32, %c0_i32_0 : i32, i32
  }
  func.func @transform_9(%arg0: i32) -> (i32, i32) {
    %c0_i32 = arith.constant 0 : i32
    %c0_i32_0 = arith.constant 0 : i32
    %c0_i32_1 = arith.constant 0 : i32
    return %c0_i32, %c0_i32_0 : i32, i32
  }
  func.func @transform_10(%arg0: i32) -> (i32, i32) {
    %c0_i32 = arith.constant 0 : i32
    %c0_i32_0 = arith.constant 0 : i32
    %c0_i32_1 = arith.constant 0 : i32
    return %c0_i32, %c0_i32_0 : i32, i32
  }
  func.func @transform_11(%arg0: i32) -> (i32, i32) {
    %c0_i32 = arith.constant 0 : i32
    %c0_i32_0 = arith.constant 0 : i32
    %c0_i32_1 = arith.constant 0 : i32
    return %c0_i32, %c0_i32_0 : i32, i32
  }
  func.func @transform_12(%arg0: i32) -> (i32, i32) {
    %c0_i32 = arith.constant 0 : i32
    %c0_i32_0 = arith.constant 0 : i32
    return %arg0, %c0_i32 : i32, i32
  }
  func.func @transform_13(%arg0: i32) -> (i32, i32) {
    %c0_i32 = arith.constant 0 : i32
    %c0_i32_0 = arith.constant 0 : i32
    return %arg0, %c0_i32 : i32, i32
  }
}

</mosaic_0001>

<llo_original>
// kernel: vae_forward.1
$region0: #{vae_forward.1}
  #allocation0 [shape = 'u32[]', space=smem, size = 0x4, offset = 0x4, fixed_abs, tag = 'smem constant byte address 0x4 - core index']
  #allocation1 [shape = 'u32[144,128]{1,0:T(1,128)}', space=vmem, size = 0x12000, scoped, tag = 'internal scratch']
  %s0 = inlined_call_operand.vmem [shape: bf16[320,784], index: 0, kind: input, shape index: {}]
  %s1 = inlined_call_operand.vmem [shape: f32[320,2], index: 1, kind: input, shape index: {}]
  %s2 = inlined_call_operand.vmem [shape: bf16[784,256], index: 2, kind: input, shape index: {}]
  %s3 = inlined_call_operand.vmem [shape: f32[1,256], index: 3, kind: input, shape index: {}]
  %s4 = inlined_call_operand.vmem [shape: bf16[256,512], index: 4, kind: input, shape index: {}]
  %s5 = inlined_call_operand.vmem [shape: f32[1,512], index: 5, kind: input, shape index: {}]
  %s6 = inlined_call_operand.vmem [shape: bf16[512,128], index: 6, kind: input, shape index: {}]
  %s7 = inlined_call_operand.vmem [shape: f32[1,128], index: 7, kind: input, shape index: {}]
  %s8 = inlined_call_operand.vmem [shape: f32[8,512], index: 8, kind: input, shape index: {}]
  %s9 = inlined_call_operand.vmem [shape: f32[1,512], index: 9, kind: input, shape index: {}]
  %s10 = inlined_call_operand.vmem [shape: bf16[512,896], index: 10, kind: input, shape index: {}]
  %s11 = inlined_call_operand.vmem [shape: f32[1,896], index: 11, kind: input, shape index: {}]
  %s12 = inlined_call_operand.vmem [shape: bf16[320,896], index: 12, kind: output, shape index: {0}]
  %s13 = inlined_call_operand.vmem [shape: f32[320,8], index: 13, kind: output, shape index: {1}]
  %14 = xla_tuple %s12, %s13
  %s15 = sld [smem:[#allocation0]]
  $region89: #{vae_forward.1} parent=0
    _
  %s17 = ssub.s32 1, %s15
  %s18 = scalar_select 0, %s17, %s15
  loop: start=0, step=1, limit=4
  $region2: #{vae_forward.1} parent=0 // loop_pre_header
    _
  $region3: #{vae_forward.1} parent=0 // loop_header
    %s20 = sphi 0, %s24
    %p21 = scmp.ge.s32.totalorder %s20, 4
    %s30 = sphi 0, %s32
    %s33 = sphi 0, %s30
    %s34 = sphi 0, %s33
    %s50 = sphi 0, %s34
    %s56 = sphi 0, %s58
    %s59 = sphi 0, %s56
    %s60 = sphi 0, %s59
    %s76 = sphi 0, %s60
    %s80 = sphi 0, %s80
    %s82 = sphi 0, %s80
    %s83 = sphi 0, %s82
    %s97 = sphi 0, %s83
    %s101 = sphi 0, %s101
    %s103 = sphi 0, %s101
    %s104 = sphi 0, %s103
    %s118 = sphi 0, %s104
    %s122 = sphi 0, %s122
    %s124 = sphi 0, %s122
    %s125 = sphi 0, %s124
    %s139 = sphi 0, %s125
    %s143 = sphi 0, %s143
    %s145 = sphi 0, %s143
    %s146 = sphi 0, %s145
    %s160 = sphi 0, %s146
    %s164 = sphi 0, %s164
    %s166 = sphi 0, %s164
    %s167 = sphi 0, %s166
    %s181 = sphi 0, %s167
    %s185 = sphi 0, %s185
    %s187 = sphi 0, %s185
    %s188 = sphi 0, %s187
    %s202 = sphi 0, %s188
    %s206 = sphi 0, %s206
    %s208 = sphi 0, %s206
    %s209 = sphi 0, %s208
    %s223 = sphi 0, %s209
    %s227 = sphi 0, %s227
    %s229 = sphi 0, %s227
    %s230 = sphi 0, %s229
    %s244 = sphi 0, %s230
    %s248 = sphi 0, %s248
    %s250 = sphi 0, %s248
    %s251 = sphi 0, %s250
    %s265 = sphi 0, %s251
    %s269 = sphi 0, %s269
    %s271 = sphi 0, %s269
    %s272 = sphi 0, %s271
    %s286 = sphi 0, %s272
    %s292 = sphi 0, %s294
    %s295 = sphi 0, %s292
    %s296 = sphi 0, %s295
    %s312 = sphi 0, %s296
    %s318 = sphi 0, %s320
    %s321 = sphi 0, %s318
    %s322 = sphi 0, %s321
    %s338 = sphi 0, %s322
  $region4: #{vae_forward.1} parent=0 // loop_header_branch
    %23 = sbr.rel (%p21) target = $region8
  $region5: #{vae_forward.1} parent=0 // loop_body
    %s25 = ssub.s32 %s20, 1
    %s26 = ssub.s32 %s20, 2
    %s27 = sadd.s32 %s20, 1
    %s28 = ssub.s32 %s20, %s27
    %p29 = scmp.eq.s32.totalorder %s28, 0
    %s31 = sadd.s32 %s30, 1
    %s32 = scalar_select %p29, %s30, %s31
    %p35 = pneg %p29
    %p36 = scmp.eq.s32.totalorder %s20, 1
    %p37 = por %p35, %p36
    %p38 = scmp.ne.s32.totalorder %s30, %s33
    %p39 = scmp.eq.s32.totalorder %s20, 0
    %p40 = por %p38, %p39
    %p41 = scmp.ne.s32.totalorder %s30, %s33
    %p42 = scmp.eq.s32.totalorder %s25, 1
    %p43 = por %p41, %p42
    %p44 = scmp.ne.s32.totalorder %s33, %s34
    %p45 = scmp.eq.s32.totalorder %s25, 0
    %p46 = por %p44, %p45
    %p47 = scmp.ne.s32.totalorder %s33, %s34
    %p48 = scmp.eq.s32.totalorder %s26, 1
    %p49 = por %p47, %p48
    %p51 = scmp.ne.s32.totalorder %s34, %s50
    %p52 = scmp.eq.s32.totalorder %s26, 0
    %p53 = por %p51, %p52
    %s54 = ssub.s32 %s20, %s27
    %p55 = scmp.eq.s32.totalorder %s54, 0
    %s57 = sadd.s32 %s56, 1
    %s58 = scalar_select %p55, %s56, %s57
    %p61 = pneg %p55
    %p62 = scmp.eq.s32.totalorder %s20, 1
    %p63 = por %p61, %p62
    %p64 = scmp.ne.s32.totalorder %s56, %s59
    %p65 = scmp.eq.s32.totalorder %s20, 0
    %p66 = por %p64, %p65
    %p67 = scmp.ne.s32.totalorder %s56, %s59
    %p68 = scmp.eq.s32.totalorder %s25, 1
    %p69 = por %p67, %p68
    %p70 = scmp.ne.s32.totalorder %s59, %s60
    %p71 = scmp.eq.s32.totalorder %s25, 0
    %p72 = por %p70, %p71
    %p73 = scmp.ne.s32.totalorder %s59, %s60
    %p74 = scmp.eq.s32.totalorder %s26, 1
    %p75 = por %p73, %p74
    %p77 = scmp.ne.s32.totalorder %s60, %s76
    %p78 = scmp.eq.s32.totalorder %s26, 0
    %p79 = por %p77, %p78
    %s81 = sadd.s32 %s80, 1
    %p84 = scmp.eq.s32.totalorder %s20, 1
    %p85 = scmp.ne.s32.totalorder %s80, %s82
    %p86 = scmp.eq.s32.totalorder %s20, 0
    %p87 = por %p85, %p86
    %p88 = scmp.ne.s32.totalorder %s80, %s82
    %p89 = scmp.eq.s32.totalorder %s25, 1
    %p90 = por %p88, %p89
    %p91 = scmp.ne.s32.totalorder %s82, %s83
    %p92 = scmp.eq.s32.totalorder %s25, 0
    %p93 = por %p91, %p92
    %p94 = scmp.ne.s32.totalorder %s82, %s83
    %p95 = scmp.eq.s32.totalorder %s26, 1
    %p96 = por %p94, %p95
    %p98 = scmp.ne.s32.totalorder %s83, %s97
    %p99 = scmp.eq.s32.totalorder %s26, 0
    %p100 = por %p98, %p99
    %s102 = sadd.s32 %s101, 1
    %p105 = scmp.eq.s32.totalorder %s20, 1
    %p106 = scmp.ne.s32.totalorder %s101, %s103
    %p107 = scmp.eq.s32.totalorder %s20, 0
    %p108 = por %p106, %p107
    %p109 = scmp.ne.s32.totalorder %s101, %s103
    %p110 = scmp.eq.s32.totalorder %s25, 1
    %p111 = por %p109, %p110
    %p112 = scmp.ne.s32.totalorder %s103, %s104
    %p113 = scmp.eq.s32.totalorder %s25, 0
    %p114 = por %p112, %p113
    %p115 = scmp.ne.s32.totalorder %s103, %s104
    %p116 = scmp.eq.s32.totalorder %s26, 1
    %p117 = por %p115, %p116
    %p119 = scmp.ne.s32.totalorder %s104, %s118
    %p120 = scmp.eq.s32.totalorder %s26, 0
    %p121 = por %p119, %p120
    %s123 = sadd.s32 %s122, 1
    %p126 = scmp.eq.s32.totalorder %s20, 1
    %p127 = scmp.ne.s32.totalorder %s122, %s124
    %p128 = scmp.eq.s32.totalorder %s20, 0
    %p129 = por %p127, %p128
    %p130 = scmp.ne.s32.totalorder %s122, %s124
    %p131 = scmp.eq.s32.totalorder %s25, 1
    %p132 = por %p130, %p131
    %p133 = scmp.ne.s32.totalorder %s124, %s125
    %p134 = scmp.eq.s32.totalorder %s25, 0
    %p135 = por %p133, %p134
    %p136 = scmp.ne.s32.totalorder %s124, %s125
    %p137 = scmp.eq.s32.totalorder %s26, 1
    %p138 = por %p136, %p137
    %p140 = scmp.ne.s32.totalorder %s125, %s139
    %p141 = scmp.eq.s32.totalorder %s26, 0
    %p142 = por %p140, %p141
    %s144 = sadd.s32 %s143, 1
    %p147 = scmp.eq.s32.totalorder %s20, 1
    %p148 = scmp.ne.s32.totalorder %s143, %s145
    %p149 = scmp.eq.s32.totalorder %s20, 0
    %p150 = por %p148, %p149
    %p151 = scmp.ne.s32.totalorder %s143, %s145
    %p152 = scmp.eq.s32.totalorder %s25, 1
    %p153 = por %p151, %p152
    %p154 = scmp.ne.s32.totalorder %s145, %s146
    %p155 = scmp.eq.s32.totalorder %s25, 0
    %p156 = por %p154, %p155
    %p157 = scmp.ne.s32.totalorder %s145, %s146
    %p158 = scmp.eq.s32.totalorder %s26, 1
    %p159 = por %p157, %p158
    %p161 = scmp.ne.s32.totalorder %s146, %s160
    %p162 = scmp.eq.s32.totalorder %s26, 0
    %p163 = por %p161, %p162
    %s165 = sadd.s32 %s164, 1
    %p168 = scmp.eq.s32.totalorder %s20, 1
    %p169 = scmp.ne.s32.totalorder %s164, %s166
    %p170 = scmp.eq.s32.totalorder %s20, 0
    %p171 = por %p169, %p170
    %p172 = scmp.ne.s32.totalorder %s164, %s166
    %p173 = scmp.eq.s32.totalorder %s25, 1
    %p174 = por %p172, %p173
    %p175 = scmp.ne.s32.totalorder %s166, %s167
    %p176 = scmp.eq.s32.totalorder %s25, 0
    %p177 = por %p175, %p176
    %p178 = scmp.ne.s32.totalorder %s166, %s167
    %p179 = scmp.eq.s32.totalorder %s26, 1
    %p180 = por %p178, %p179
    %p182 = scmp.ne.s32.totalorder %s167, %s181
    %p183 = scmp.eq.s32.totalorder %s26, 0
    %p184 = por %p182, %p183
    %s186 = sadd.s32 %s185, 1
    %p189 = scmp.eq.s32.totalorder %s20, 1
    %p190 = scmp.ne.s32.totalorder %s185, %s187
    %p191 = scmp.eq.s32.totalorder %s20, 0
    %p192 = por %p190, %p191
    %p193 = scmp.ne.s32.totalorder %s185, %s187
    %p194 = scmp.eq.s32.totalorder %s25, 1
    %p195 = por %p193, %p194
    %p196 = scmp.ne.s32.totalorder %s187, %s188
    %p197 = scmp.eq.s32.totalorder %s25, 0
    %p198 = por %p196, %p197
    %p199 = scmp.ne.s32.totalorder %s187, %s188
    %p200 = scmp.eq.s32.totalorder %s26, 1
    %p201 = por %p199, %p200
    %p203 = scmp.ne.s32.totalorder %s188, %s202
    %p204 = scmp.eq.s32.totalorder %s26, 0
    %p205 = por %p203, %p204
    %s207 = sadd.s32 %s206, 1
    %p210 = scmp.eq.s32.totalorder %s20, 1
    %p211 = scmp.ne.s32.totalorder %s206, %s208
    %p212 = scmp.eq.s32.totalorder %s20, 0
    %p213 = por %p211, %p212
    %p214 = scmp.ne.s32.totalorder %s206, %s208
    %p215 = scmp.eq.s32.totalorder %s25, 1
    %p216 = por %p214, %p215
    %p217 = scmp.ne.s32.totalorder %s208, %s209
    %p218 = scmp.eq.s32.totalorder %s25, 0
    %p219 = por %p217, %p218
    %p220 = scmp.ne.s32.totalorder %s208, %s209
    %p221 = scmp.eq.s32.totalorder %s26, 1
    %p222 = por %p220, %p221
    %p224 = scmp.ne.s32.totalorder %s209, %s223
    %p225 = scmp.eq.s32.totalorder %s26, 0
    %p226 = por %p224, %p225
    %s228 = sadd.s32 %s227, 1
    %p231 = scmp.eq.s32.totalorder %s20, 1
    %p232 = scmp.ne.s32.totalorder %s227, %s229
    %p233 = scmp.eq.s32.totalorder %s20, 0
    %p234 = por %p232, %p233
    %p235 = scmp.ne.s32.totalorder %s227, %s229
    %p236 = scmp.eq.s32.totalorder %s25, 1
    %p237 = por %p235, %p236
    %p238 = scmp.ne.s32.totalorder %s229, %s230
    %p239 = scmp.eq.s32.totalorder %s25, 0
    %p240 = por %p238, %p239
    %p241 = scmp.ne.s32.totalorder %s229, %s230
    %p242 = scmp.eq.s32.totalorder %s26, 1
    %p243 = por %p241, %p242
    %p245 = scmp.ne.s32.totalorder %s230, %s244
    %p246 = scmp.eq.s32.totalorder %s26, 0
    %p247 = por %p245, %p246
    %s249 = sadd.s32 %s248, 1
    %p252 = scmp.eq.s32.totalorder %s20, 1
    %p253 = scmp.ne.s32.totalorder %s248, %s250
    %p254 = scmp.eq.s32.totalorder %s20, 0
    %p255 = por %p253, %p254
    %p256 = scmp.ne.s32.totalorder %s248, %s250
    %p257 = scmp.eq.s32.totalorder %s25, 1
    %p258 = por %p256, %p257
    %p259 = scmp.ne.s32.totalorder %s250, %s251
    %p260 = scmp.eq.s32.totalorder %s25, 0
    %p261 = por %p259, %p260
    %p262 = scmp.ne.s32.totalorder %s250, %s251
    %p263 = scmp.eq.s32.totalorder %s26, 1
    %p264 = por %p262, %p263
    %p266 = scmp.ne.s32.totalorder %s251, %s265
    %p267 = scmp.eq.s32.totalorder %s26, 0
    %p268 = por %p266, %p267
    %s270 = sadd.s32 %s269, 1
    %p273 = scmp.eq.s32.totalorder %s20, 1
    %p274 = scmp.ne.s32.totalorder %s269, %s271
    %p275 = scmp.eq.s32.totalorder %s20, 0
    %p276 = por %p274, %p275
    %p277 = scmp.ne.s32.totalorder %s269, %s271
    %p278 = scmp.eq.s32.totalorder %s25, 1
    %p279 = por %p277, %p278
    %p280 = scmp.ne.s32.totalorder %s271, %s272
    %p281 = scmp.eq.s32.totalorder %s25, 0
    %p282 = por %p280, %p281
    %p283 = scmp.ne.s32.totalorder %s271, %s272
    %p284 = scmp.eq.s32.totalorder %s26, 1
    %p285 = por %p283, %p284
    %p287 = scmp.ne.s32.totalorder %s272, %s286
    %p288 = scmp.eq.s32.totalorder %s26, 0
    %p289 = por %p287, %p288
    %s290 = ssub.s32 %s20, %s27
    %p291 = scmp.eq.s32.totalorder %s290, 0
    %s293 = sadd.s32 %s292, 1
    %s294 = scalar_select %p291, %s292, %s293
    %p297 = pneg %p291
    %p298 = scmp.eq.s32.totalorder %s20, 1
    %p299 = por %p297, %p298
    %p300 = scmp.ne.s32.totalorder %s292, %s295
    %p301 = scmp.eq.s32.totalorder %s20, 0
    %p302 = por %p300, %p301
    %p303 = scmp.ne.s32.totalorder %s292, %s295
    %p304 = scmp.eq.s32.totalorder %s25, 1
    %p305 = por %p303, %p304
    %p306 = scmp.ne.s32.totalorder %s295, %s296
    %p307 = scmp.eq.s32.totalorder %s25, 0
    %p308 = por %p306, %p307
    %p309 = scmp.ne.s32.totalorder %s295, %s296
    %p310 = scmp.eq.s32.totalorder %s26, 1
    %p311 = por %p309, %p310
    %p313 = scmp.ne.s32.totalorder %s296, %s312
    %p314 = scmp.eq.s32.totalorder %s26, 0
    %p315 = por %p313, %p314
    %s316 = ssub.s32 %s20, %s27
    %p317 = scmp.eq.s32.totalorder %s316, 0
    %s319 = sadd.s32 %s318, 1
    %s320 = scalar_select %p317, %s318, %s319
    %p323 = pneg %p317
    %p324 = scmp.eq.s32.totalorder %s20, 1
    %p325 = por %p323, %p324
    %p326 = scmp.ne.s32.totalorder %s318, %s321
    %p327 = scmp.eq.s32.totalorder %s20, 0
    %p328 = por %p326, %p327
    %p329 = scmp.ne.s32.totalorder %s318, %s321
    %p330 = scmp.eq.s32.totalorder %s25, 1
    %p331 = por %p329, %p330
    %p332 = scmp.ne.s32.totalorder %s321, %s322
    %p333 = scmp.eq.s32.totalorder %s25, 0
    %p334 = por %p332, %p333
    %p335 = scmp.ne.s32.totalorder %s321, %s322
    %p336 = scmp.eq.s32.totalorder %s26, 1
    %p337 = por %p335, %p336
    %p339 = scmp.ne.s32.totalorder %s322, %s338
    %p340 = scmp.eq.s32.totalorder %s26, 0
    %p341 = por %p339, %p340
    %p342 = scmp.le.s32.totalorder 1, %s20
    %p343 = scmp.lt.s32.totalorder %s20, 3
    %p344 = pnand %p342, %p343
    %p345 = pneg %p344
    // Predicated region
    $region9: #{vae_forward.1} parent=5 // pred_check
      _
    $region10: #{vae_forward.1} parent=5 // pred_check_branch
      %347 = sbr.rel (%p344) target = $region12
    $region11: #{vae_forward.1} parent=5 // pred_region
      %s348 = ssub.s32 %s20, 1
      // Predicated region
      $region13: #{vae_forward.1} parent=11 // pred_check
        %p349 = pneg %p93
      $region14: #{vae_forward.1} parent=11 // pred_check_branch
        %351 = sbr.rel (%p349) target = $region16
      $region15: #{vae_forward.1} parent=11 // pred_region
        _
      $region16: #{vae_forward.1} parent=11 // pred_fallthru
        _
      // Predicated region
      $region17: #{vae_forward.1} parent=11 // pred_check
        %p352 = pneg %p114
      $region18: #{vae_forward.1} parent=11 // pred_check_branch
        %354 = sbr.rel (%p352) target = $region20
      $region19: #{vae_forward.1} parent=11 // pred_region
        _
      $region20: #{vae_forward.1} parent=11 // pred_fallthru
        _
      // Predicated region
      $region21: #{vae_forward.1} parent=11 // pred_check
        %p355 = pneg %p135
      $region22: #{vae_forward.1} parent=11 // pred_check_branch
        %357 = sbr.rel (%p355) target = $region24
      $region23: #{vae_forward.1} parent=11 // pred_region
        _
      $region24: #{vae_forward.1} parent=11 // pred_fallthru
        _
      // Predicated region
      $region25: #{vae_forward.1} parent=11 // pred_check
        %p358 = pneg %p156
      $region26: #{vae_forward.1} parent=11 // pred_check_branch
        %360 = sbr.rel (%p358) target = $region28
      $region27: #{vae_forward.1} parent=11 // pred_region
        _
      $region28: #{vae_forward.1} parent=11 // pred_fallthru
        _
      // Predicated region
      $region29: #{vae_forward.1} parent=11 // pred_check
        %p361 = pneg %p177
      $region30: #{vae_forward.1} parent=11 // pred_check_branch
        %363 = sbr.rel (%p361) target = $region32
      $region31: #{vae_forward.1} parent=11 // pred_region
        _
      $region32: #{vae_forward.1} parent=11 // pred_fallthru
        _
      // Predicated region
      $region33: #{vae_forward.1} parent=11 // pred_check
        %p364 = pneg %p198
      $region34: #{vae_forward.1} parent=11 // pred_check_branch
        %366 = sbr.rel (%p364) target = $region36
      $region35: #{vae_forward.1} parent=11 // pred_region
        _
      $region36: #{vae_forward.1} parent=11 // pred_fallthru
        _
      // Predicated region
      $region37: #{vae_forward.1} parent=11 // pred_check
        %p367 = pneg %p219
      $region38: #{vae_forward.1} parent=11 // pred_check_branch
        %369 = sbr.rel (%p367) target = $region40
      $region39: #{vae_forward.1} parent=11 // pred_region
        _
      $region40: #{vae_forward.1} parent=11 // pred_fallthru
        _
      // Predicated region
      $region41: #{vae_forward.1} parent=11 // pred_check
        %p370 = pneg %p240
      $region42: #{vae_forward.1} parent=11 // pred_check_branch
        %372 = sbr.rel (%p370) target = $region44
      $region43: #{vae_forward.1} parent=11 // pred_region
        _
      $region44: #{vae_forward.1} parent=11 // pred_fallthru
        _
      // Predicated region
      $region45: #{vae_forward.1} parent=11 // pred_check
        %p373 = pneg %p261
      $region46: #{vae_forward.1} parent=11 // pred_check_branch
        %375 = sbr.rel (%p373) target = $region48
      $region47: #{vae_forward.1} parent=11 // pred_region
        _
      $region48: #{vae_forward.1} parent=11 // pred_fallthru
        _
      // Predicated region
      $region49: #{vae_forward.1} parent=11 // pred_check
        %p376 = pneg %p282
      $region50: #{vae_forward.1} parent=11 // pred_check_branch
        %378 = sbr.rel (%p376) target = $region52
      $region51: #{vae_forward.1} parent=11 // pred_region
        _
      $region52: #{vae_forward.1} parent=11 // pred_fallthru
        _
    $region12: #{vae_forward.1} parent=5 // pred_fallthru
      _
    %p379 = scmp.lt.s32.totalorder %s20, 2
    // Predicated region
    $region53: #{vae_forward.1} parent=5 // pred_check
      %p380 = pneg %p379
    $region54: #{vae_forward.1} parent=5 // pred_check_branch
      %382 = sbr.rel (%p380) target = $region56
    $region55: #{vae_forward.1} parent=5 // pred_region
      // Predicated region
      $region57: #{vae_forward.1} parent=55 // pred_check
        %p383 = pneg %p40
      $region58: #{vae_forward.1} parent=55 // pred_check_branch
        %385 = sbr.rel (%p383) target = $region60
      $region59: #{vae_forward.1} parent=55 // pred_region
        %s386 = smul.u32 20, %s20
        %p387 = scmp.lt.s32.totalorder %s386, 39
        %s388 = scalar_select %p387, %s386, 39
        %s389 = smul.addr %s388, 7
        %s390 = smul.addr %s389, 4
        %s391 = scalar_lea.vmem %s0, %s390
        %s392 = smul.u32 20, %s20
      $region60: #{vae_forward.1} parent=55 // pred_fallthru
        _
      // Predicated region
      $region61: #{vae_forward.1} parent=55 // pred_check
        %p393 = pneg %p66
      $region62: #{vae_forward.1} parent=55 // pred_check_branch
        %395 = sbr.rel (%p393) target = $region64
      $region63: #{vae_forward.1} parent=55 // pred_region
        %s396 = smul.u32 20, %s20
        %p397 = scmp.lt.s32.totalorder %s396, 39
        %s398 = scalar_select %p397, %s396, 39
        %s399 = smul.addr %s398, 8
        %s400 = scalar_lea.vmem %s1, %s399
        %s401 = smul.u32 20, %s20
      $region64: #{vae_forward.1} parent=55 // pred_fallthru
        _
    $region56: #{vae_forward.1} parent=5 // pred_fallthru
      _
    %p402 = scmp.le.s32.totalorder 1, %s20
    %p403 = scmp.lt.s32.totalorder %s20, 3
    %p404 = pnand %p402, %p403
    %p405 = pneg %p404
    // Predicated region
    $region65: #{vae_forward.1} parent=5 // pred_check
      _
    $region66: #{vae_forward.1} parent=5 // pred_check_branch
      %407 = sbr.rel (%p404) target = $region68
    $region67: #{vae_forward.1} parent=5 // pred_region
      %s408 = ssub.s32 %s20, 1
      %s409 = smul.u32 20, %s25
      %p410 = scmp.lt.s32.totalorder %s409, 39
      %s411 = scalar_select %p410, %s409, 39
      %s412 = smul.addr %s411, 7
      %s413 = smul.addr %s412, 4
      %s414 = scalar_lea.vmem %s0, %s413
      %p415 = pneg %p46
      %p416 = pneg %p43
      %s417 = smul.u32 20, %s25
      %p418 = scmp.lt.s32.totalorder %s417, 39
      %s419 = scalar_select %p418, %s417, 39
      %s420 = smul.addr %s419, 8
      %s421 = scalar_lea.vmem %s1, %s420
      %p422 = pneg %p72
      %p423 = pneg %p69
      %p424 = pneg %p93
      %p425 = pneg %p90
      %p426 = pneg %p114
      %p427 = pneg %p111
      %p428 = pneg %p135
      %p429 = pneg %p132
      %p430 = pneg %p156
      %p431 = pneg %p153
      %p432 = pneg %p177
      %p433 = pneg %p174
      %p434 = pneg %p198
      %p435 = pneg %p195
      %p436 = pneg %p219
      %p437 = pneg %p216
      %p438 = pneg %p240
      %p439 = pneg %p237
      %p440 = pneg %p261
      %p441 = pneg %p258
      %p442 = pneg %p282
      %p443 = pneg %p279
      %p444 = pneg %p308
      %p445 = pneg %p305
      %s446 = smul.u32 20, %s25
      %p447 = scmp.lt.s32.totalorder %s446, 39
      %s448 = scalar_select %p447, %s446, 39
      %s449 = smul.addr %s448, 7
      %s450 = smul.addr %s449, 4
      %s451 = scalar_lea.vmem %s12, %s450
      %p452 = pneg %p334
      %p453 = pneg %p331
      %s454 = smul.u32 20, %s25
      %p455 = scmp.lt.s32.totalorder %s454, 39
      %s456 = scalar_select %p455, %s454, 39
      %s457 = smul.addr %s456, 8
      %s458 = scalar_lea.vmem %s13, %s457
      %s459 = smul.u32 20, %s25
      %p460 = scmp.lt.s32.totalorder %s459, 39
      %s461 = scalar_select %p460, %s459, 39
      %s462 = smul.addr %s461, 7
      %s463 = smul.addr %s462, 4
      %s464 = scalar_lea.vmem %s0, %s463
      %s465 = smul.u32 20, %s25
      %s466 = smul.u32 20, %s25
      %p467 = scmp.lt.s32.totalorder %s466, 39
      %s468 = scalar_select %p467, %s466, 39
      %s469 = smul.addr %s468, 8
      %s470 = scalar_lea.vmem %s1, %s469
      %s471 = smul.u32 20, %s25
      %s472 = smul.u32 20, %s25
      %p473 = scmp.lt.s32.totalorder %s472, 39
      %s474 = scalar_select %p473, %s472, 39
      %s475 = smul.addr %s474, 7
      %s476 = smul.addr %s475, 4
      %s477 = scalar_lea.vmem %s12, %s476
      %s478 = smul.u32 20, %s25
      %s479 = smul.u32 20, %s25
      %p480 = scmp.lt.s32.totalorder %s479, 39
      %s481 = scalar_select %p480, %s479, 39
      %s482 = smul.addr %s481, 8
      %s483 = scalar_lea.vmem %s13, %s482
      %s484 = smul.u32 20, %s25
      %v486 = vld [vmem:[%s464] sm:$0xff]
      %v487 = vld [vmem:[%s464 + $0x8] sm:$0xff]
      %v488 = vld [vmem:[%s464 + $0x10] sm:$0xff]
      %v489 = vld [vmem:[%s464 + $0x18] sm:$0xf]
      %v490 = vld [vmem:[%s464 + $0x1c] sm:$0xff]
      %v491 = vld [vmem:[%s464 + $0x24] sm:$0xff]
      %v492 = vld [vmem:[%s464 + $0x2c] sm:$0xff]
      %v493 = vld [vmem:[%s464 + $0x34] sm:$0xf]
      %v494 = vld [vmem:[%s464 + $0x38] sm:$0xff]
      %v495 = vld [vmem:[%s464 + $0x40] sm:$0xff]
      %v496 = vld [vmem:[%s464 + $0x48] sm:$0xff]
      %v497 = vld [vmem:[%s464 + $0x50] sm:$0xf]
      %v498 = vld [vmem:[%s464 + $0x54] sm:$0xff]
      %v499 = vld [vmem:[%s464 + $0x5c] sm:$0xff]
      %v500 = vld [vmem:[%s464 + $0x64] sm:$0xff]
      %v501 = vld [vmem:[%s464 + $0x6c] sm:$0xf]
      %v502 = vld [vmem:[%s464 + $0x70] sm:$0xff]
      %v503 = vld [vmem:[%s464 + $0x78] sm:$0xff]
      %v504 = vld [vmem:[%s464 + $0x80] sm:$0xff]
      %v505 = vld [vmem:[%s464 + $0x88] sm:$0xf]
      %v506 = vld [vmem:[%s464 + $0x8c] sm:$0xff]
      %v507 = vld [vmem:[%s464 + $0x94] sm:$0xff]
      %v508 = vld [vmem:[%s464 + $0x9c] sm:$0xff]
      %v509 = vld [vmem:[%s464 + $0xa4] sm:$0xf]
      %v510 = vld [vmem:[%s464 + $0xa8] sm:$0xff]
      %v511 = vld [vmem:[%s464 + $0xb0] sm:$0xff]
      %v512 = vld [vmem:[%s464 + $0xb8] sm:$0xff]
      %v513 = vld [vmem:[%s464 + $0xc0] sm:$0xf]
      %v514 = vld [vmem:[%s464 + $0xc4] sm:$0xff]
      %v515 = vld [vmem:[%s464 + $0xcc] sm:$0xff]
      %v516 = vld [vmem:[%s464 + $0xd4] sm:$0xff]
      %v517 = vld [vmem:[%s464 + $0xdc] sm:$0xf]
      %v518 = vld [vmem:[%s464 + $0xe0] sm:$0xff]
      %v519 = vld [vmem:[%s464 + $0xe8] sm:$0xff]
      %v520 = vld [vmem:[%s464 + $0xf0] sm:$0xff]
      %v521 = vld [vmem:[%s464 + $0xf8] sm:$0xf]
      %v522 = vld [vmem:[%s464 + $0xfc] sm:$0xff]
      %v523 = vld [vmem:[%s464 + $0x104] sm:$0xff]
      %v524 = vld [vmem:[%s464 + $0x10c] sm:$0xff]
      %v525 = vld [vmem:[%s464 + $0x114] sm:$0xf]
      %v526 = vld [vmem:[%s464 + $0x118] sm:$0xff]
      %v527 = vld [vmem:[%s464 + $0x120] sm:$0xff]
      %v528 = vld [vmem:[%s464 + $0x128] sm:$0xff]
      %v529 = vld [vmem:[%s464 + $0x130] sm:$0xf]
      %v530 = vld [vmem:[%s464 + $0x134] sm:$0xff]
      %v531 = vld [vmem:[%s464 + $0x13c] sm:$0xff]
      %v532 = vld [vmem:[%s464 + $0x144] sm:$0xff]
      %v533 = vld [vmem:[%s464 + $0x14c] sm:$0xf]
      %v534 = vld [vmem:[%s464 + $0x150] sm:$0xff]
      %v535 = vld [vmem:[%s464 + $0x158] sm:$0xff]
      %v536 = vld [vmem:[%s464 + $0x160] sm:$0xff]
      %v537 = vld [vmem:[%s464 + $0x168] sm:$0xf]
      %v538 = vld [vmem:[%s464 + $0x16c] sm:$0xff]
      %v539 = vld [vmem:[%s464 + $0x174] sm:$0xff]
      %v540 = vld [vmem:[%s464 + $0x17c] sm:$0xff]
      %v541 = vld [vmem:[%s464 + $0x184] sm:$0xf]
      %v542 = vld [vmem:[%s464 + $0x188] sm:$0xff]
      %v543 = vld [vmem:[%s464 + $0x190] sm:$0xff]
      %v544 = vld [vmem:[%s464 + $0x198] sm:$0xff]
      %v545 = vld [vmem:[%s464 + $0x1a0] sm:$0xf]
      %v546 = vld [vmem:[%s464 + $0x1a4] sm:$0xff]
      %v547 = vld [vmem:[%s464 + $0x1ac] sm:$0xff]
      %v548 = vld [vmem:[%s464 + $0x1b4] sm:$0xff]
      %v549 = vld [vmem:[%s464 + $0x1bc] sm:$0xf]
      %v550 = vld [vmem:[%s464 + $0x1c0] sm:$0xff]
      %v551 = vld [vmem:[%s464 + $0x1c8] sm:$0xff]
      %v552 = vld [vmem:[%s464 + $0x1d0] sm:$0xff]
      %v553 = vld [vmem:[%s464 + $0x1d8] sm:$0xf]
      %v554 = vld [vmem:[%s464 + $0x1dc] sm:$0xff]
      %v555 = vld [vmem:[%s464 + $0x1e4] sm:$0xff]
      %v556 = vld [vmem:[%s464 + $0x1ec] sm:$0xff]
      %v557 = vld [vmem:[%s464 + $0x1f4] sm:$0xf]
      %v558 = vld [vmem:[%s464 + $0x1f8] sm:$0xff]
      %v559 = vld [vmem:[%s464 + $0x200] sm:$0xff]
      %v560 = vld [vmem:[%s464 + $0x208] sm:$0xff]
      %v561 = vld [vmem:[%s464 + $0x210] sm:$0xf]
      %v562 = vld [vmem:[%s464 + $0x214] sm:$0xff]
      %v563 = vld [vmem:[%s464 + $0x21c] sm:$0xff]
      %v564 = vld [vmem:[%s464 + $0x224] sm:$0xff]
      %v565 = vld [vmem:[%s464 + $0x22c] sm:$0xf]
      %v566 = vld [vmem:[%s2] sm:$0xff]
      %v567 = vld [vmem:[%s2 + $0x8] sm:$0xff]
      %v568 = vld [vmem:[%s2 + $0x10] sm:$0xff]
      %v569 = vld [vmem:[%s2 + $0x18] sm:$0xff]
      %v570 = vld [vmem:[%s2 + $0x20] sm:$0xff]
      %v571 = vld [vmem:[%s2 + $0x28] sm:$0xff]
      %v572 = vld [vmem:[%s2 + $0x30] sm:$0xff]
      %v573 = vld [vmem:[%s2 + $0x38] sm:$0xff]
      %v574 = vld [vmem:[%s2 + $0x40] sm:$0xff]
      %v575 = vld [vmem:[%s2 + $0x48] sm:$0xff]
      %v576 = vld [vmem:[%s2 + $0x50] sm:$0xff]
      %v577 = vld [vmem:[%s2 + $0x58] sm:$0xff]
      %v578 = vld [vmem:[%s2 + $0x60] sm:$0xff]
      %v579 = vld [vmem:[%s2 + $0x68] sm:$0xff]
      %v580 = vld [vmem:[%s2 + $0x70] sm:$0xff]
      %v581 = vld [vmem:[%s2 + $0x78] sm:$0xff]
      %v582 = vld [vmem:[%s2 + $0x80] sm:$0xff]
      %v583 = vld [vmem:[%s2 + $0x88] sm:$0xff]
      %v584 = vld [vmem:[%s2 + $0x90] sm:$0xff]
      %v585 = vld [vmem:[%s2 + $0x98] sm:$0xff]
      %v586 = vld [vmem:[%s2 + $0xa0] sm:$0xff]
      %v587 = vld [vmem:[%s2 + $0xa8] sm:$0xff]
      %v588 = vld [vmem:[%s2 + $0xb0] sm:$0xff]
      %v589 = vld [vmem:[%s2 + $0xb8] sm:$0xff]
      %v590 = vld [vmem:[%s2 + $0xc0] sm:$0xff]
      %v591 = vld [vmem:[%s2 + $0xc8] sm:$0xff]
      %v592 = vld [vmem:[%s2 + $0xd0] sm:$0xff]
      %v593 = vld [vmem:[%s2 + $0xd8] sm:$0xff]
      %v594 = vld [vmem:[%s2 + $0xe0] sm:$0xff]
      %v595 = vld [vmem:[%s2 + $0xe8] sm:$0xff]
      %v596 = vld [vmem:[%s2 + $0xf0] sm:$0xff]
      %v597 = vld [vmem:[%s2 + $0xf8] sm:$0xff]
      %v598 = vld [vmem:[%s2 + $0x100] sm:$0xff]
      %v599 = vld [vmem:[%s2 + $0x108] sm:$0xff]
      %v600 = vld [vmem:[%s2 + $0x110] sm:$0xff]
      %v601 = vld [vmem:[%s2 + $0x118] sm:$0xff]
      %v602 = vld [vmem:[%s2 + $0x120] sm:$0xff]
      %v603 = vld [vmem:[%s2 + $0x128] sm:$0xff]
      %v604 = vld [vmem:[%s2 + $0x130] sm:$0xff]
      %v605 = vld [vmem:[%s2 + $0x138] sm:$0xff]
      %v606 = vld [vmem:[%s2 + $0x140] sm:$0xff]
      %v607 = vld [vmem:[%s2 + $0x148] sm:$0xff]
      %v608 = vld [vmem:[%s2 + $0x150] sm:$0xff]
      %v609 = vld [vmem:[%s2 + $0x158] sm:$0xff]
      %v610 = vld [vmem:[%s2 + $0x160] sm:$0xff]
      %v611 = vld [vmem:[%s2 + $0x168] sm:$0xff]
      %v612 = vld [vmem:[%s2 + $0x170] sm:$0xff]
      %v613 = vld [vmem:[%s2 + $0x178] sm:$0xff]
      %v614 = vld [vmem:[%s2 + $0x180] sm:$0xff]
      %v615 = vld [vmem:[%s2 + $0x188] sm:$0xff]
      %v616 = vld [vmem:[%s2 + $0x190] sm:$0xff]
      %v617 = vld [vmem:[%s2 + $0x198] sm:$0xff]
      %v618 = vld [vmem:[%s2 + $0x1a0] sm:$0xff]
      %v619 = vld [vmem:[%s2 + $0x1a8] sm:$0xff]
      %v620 = vld [vmem:[%s2 + $0x1b0] sm:$0xff]
      %v621 = vld [vmem:[%s2 + $0x1b8] sm:$0xff]
      %v622 = vld [vmem:[%s2 + $0x1c0] sm:$0xff]
      %v623 = vld [vmem:[%s2 + $0x1c8] sm:$0xff]
      %v624 = vld [vmem:[%s2 + $0x1d0] sm:$0xff]
      %v625 = vld [vmem:[%s2 + $0x1d8] sm:$0xff]
      %v626 = vld [vmem:[%s2 + $0x1e0] sm:$0xff]
      %v627 = vld [vmem:[%s2 + $0x1e8] sm:$0xff]
      %v628 = vld [vmem:[%s2 + $0x1f0] sm:$0xff]
      %v629 = vld [vmem:[%s2 + $0x1f8] sm:$0xff]
      %v630 = vld [vmem:[%s2 + $0x200] sm:$0xff]
      %v631 = vld [vmem:[%s2 + $0x208] sm:$0xff]
      %v632 = vld [vmem:[%s2 + $0x210] sm:$0xff]
      %v633 = vld [vmem:[%s2 + $0x218] sm:$0xff]
      %v634 = vld [vmem:[%s2 + $0x220] sm:$0xff]
      %v635 = vld [vmem:[%s2 + $0x228] sm:$0xff]
      %v636 = vld [vmem:[%s2 + $0x230] sm:$0xff]
      %v637 = vld [vmem:[%s2 + $0x238] sm:$0xff]
      %v638 = vld [vmem:[%s2 + $0x240] sm:$0xff]
      %v639 = vld [vmem:[%s2 + $0x248] sm:$0xff]
      %v640 = vld [vmem:[%s2 + $0x250] sm:$0xff]
      %v641 = vld [vmem:[%s2 + $0x258] sm:$0xff]
      %v642 = vld [vmem:[%s2 + $0x260] sm:$0xff]
      %v643 = vld [vmem:[%s2 + $0x268] sm:$0xff]
      %v644 = vld [vmem:[%s2 + $0x270] sm:$0xff]
      %v645 = vld [vmem:[%s2 + $0x278] sm:$0xff]
      %v646 = vld [vmem:[%s2 + $0x280] sm:$0xff]
      %v647 = vld [vmem:[%s2 + $0x288] sm:$0xff]
      %v648 = vld [vmem:[%s2 + $0x290] sm:$0xff]
      %v649 = vld [vmem:[%s2 + $0x298] sm:$0xff]
      %v650 = vld [vmem:[%s2 + $0x2a0] sm:$0xff]
      %v651 = vld [vmem:[%s2 + $0x2a8] sm:$0xff]
      %v652 = vld [vmem:[%s2 + $0x2b0] sm:$0xff]
      %v653 = vld [vmem:[%s2 + $0x2b8] sm:$0xff]
      %v654 = vld [vmem:[%s2 + $0x2c0] sm:$0xff]
      %v655 = vld [vmem:[%s2 + $0x2c8] sm:$0xff]
      %v656 = vld [vmem:[%s2 + $0x2d0] sm:$0xff]
      %v657 = vld [vmem:[%s2 + $0x2d8] sm:$0xff]
      %v658 = vld [vmem:[%s2 + $0x2e0] sm:$0xff]
      %v659 = vld [vmem:[%s2 + $0x2e8] sm:$0xff]
      %v660 = vld [vmem:[%s2 + $0x2f0] sm:$0xff]
      %v661 = vld [vmem:[%s2 + $0x2f8] sm:$0xff]
      %v662 = vld [vmem:[%s2 + $0x300] sm:$0xff]
      %v663 = vld [vmem:[%s2 + $0x308] sm:$0xff]
      %v664 = vld [vmem:[%s3] sm:$0x3]
      %v666 = vlaneseq
      %v667 = vshrl.u32 %v666, 7
      %v668 = vsub.s32 0, %v667
      %v669 = vrot.slane %v664, %v668
      %v670 = vlaneseq
      %v671 = vshrl.u32 %v670, 7
      %v672 = vsub.s32 1, %v671
      %v673 = vrot.slane %v664, %v672
      %v756 = vunpack.c.l.b16 %v486
      %v757 = vunpack.c.h.b16 %v486
      %v758 = vunpack.c.l.b16 %v487
      %v759 = vunpack.c.h.b16 %v487
      %v760 = vunpack.c.l.b16 %v488
      %v761 = vunpack.c.h.b16 %v488
      %v762 = vunpack.c.l.b16 %v489
      %v763 = vunpack.c.l.b16 %v490
      %v764 = vunpack.c.h.b16 %v490
      %v765 = vunpack.c.l.b16 %v491
      %v766 = vunpack.c.h.b16 %v491
      %v767 = vunpack.c.l.b16 %v492
      %v768 = vunpack.c.h.b16 %v492
      %v769 = vunpack.c.l.b16 %v493
      %v770 = vunpack.c.l.b16 %v494
      %v771 = vunpack.c.h.b16 %v494
      %v772 = vunpack.c.l.b16 %v495
      %v773 = vunpack.c.h.b16 %v495
      %v774 = vunpack.c.l.b16 %v496
      %v775 = vunpack.c.h.b16 %v496
      %v776 = vunpack.c.l.b16 %v497
      %v777 = vunpack.c.l.b16 %v498
      %v778 = vunpack.c.h.b16 %v498
      %v779 = vunpack.c.l.b16 %v499
      %v780 = vunpack.c.h.b16 %v499
      %v781 = vunpack.c.l.b16 %v500
      %v782 = vunpack.c.h.b16 %v500
      %v783 = vunpack.c.l.b16 %v501
      %v784 = vunpack.c.l.b16 %v502
      %v785 = vunpack.c.h.b16 %v502
      %v786 = vunpack.c.l.b16 %v503
      %v787 = vunpack.c.h.b16 %v503
      %v788 = vunpack.c.l.b16 %v504
      %v789 = vunpack.c.h.b16 %v504
      %v790 = vunpack.c.l.b16 %v505
      %v791 = vunpack.c.l.b16 %v506
      %v792 = vunpack.c.h.b16 %v506
      %v793 = vunpack.c.l.b16 %v507
      %v794 = vunpack.c.h.b16 %v507
      %v795 = vunpack.c.l.b16 %v508
      %v796 = vunpack.c.h.b16 %v508
      %v797 = vunpack.c.l.b16 %v509
      %v798 = vunpack.c.l.b16 %v510
      %v799 = vunpack.c.h.b16 %v510
      %v800 = vunpack.c.l.b16 %v511
      %v801 = vunpack.c.h.b16 %v511
      %v802 = vunpack.c.l.b16 %v512
      %v803 = vunpack.c.h.b16 %v512
      %v804 = vunpack.c.l.b16 %v513
      %v805 = vunpack.c.l.b16 %v514
      %v806 = vunpack.c.h.b16 %v514
      %v807 = vunpack.c.l.b16 %v515
      %v808 = vunpack.c.h.b16 %v515
      %v809 = vunpack.c.l.b16 %v516
      %v810 = vunpack.c.h.b16 %v516
      %v811 = vunpack.c.l.b16 %v517
      %v812 = vunpack.c.l.b16 %v518
      %v813 = vunpack.c.h.b16 %v518
      %v814 = vunpack.c.l.b16 %v519
      %v815 = vunpack.c.h.b16 %v519
      %v816 = vunpack.c.l.b16 %v520
      %v817 = vunpack.c.h.b16 %v520
      %v818 = vunpack.c.l.b16 %v521
      %v819 = vunpack.c.l.b16 %v522
      %v820 = vunpack.c.h.b16 %v522
      %v821 = vunpack.c.l.b16 %v523
      %v822 = vunpack.c.h.b16 %v523
      %v823 = vunpack.c.l.b16 %v524
      %v824 = vunpack.c.h.b16 %v524
      %v825 = vunpack.c.l.b16 %v525
      %v826 = vunpack.c.l.b16 %v526
      %v827 = vunpack.c.h.b16 %v526
      %v828 = vunpack.c.l.b16 %v527
      %v829 = vunpack.c.h.b16 %v527
      %v830 = vunpack.c.l.b16 %v528
      %v831 = vunpack.c.h.b16 %v528
      %v832 = vunpack.c.l.b16 %v529
      %v833 = vunpack.c.l.b16 %v530
      %v834 = vunpack.c.h.b16 %v530
      %v835 = vunpack.c.l.b16 %v531
      %v836 = vunpack.c.h.b16 %v531
      %v837 = vunpack.c.l.b16 %v532
      %v838 = vunpack.c.h.b16 %v532
      %v839 = vunpack.c.l.b16 %v533
      %v840 = vunpack.c.l.b16 %v534
      %v841 = vunpack.c.h.b16 %v534
      %v842 = vunpack.c.l.b16 %v535
      %v843 = vunpack.c.h.b16 %v535
      %v844 = vunpack.c.l.b16 %v536
      %v845 = vunpack.c.h.b16 %v536
      %v846 = vunpack.c.l.b16 %v537
      %v847 = vunpack.c.l.b16 %v538
      %v848 = vunpack.c.h.b16 %v538
      %v849 = vunpack.c.l.b16 %v539
      %v850 = vunpack.c.h.b16 %v539
      %v851 = vunpack.c.l.b16 %v540
      %v852 = vunpack.c.h.b16 %v540
      %v853 = vunpack.c.l.b16 %v541
      %v854 = vunpack.c.l.b16 %v542
      %v855 = vunpack.c.h.b16 %v542
      %v856 = vunpack.c.l.b16 %v543
      %v857 = vunpack.c.h.b16 %v543
      %v858 = vunpack.c.l.b16 %v544
      %v859 = vunpack.c.h.b16 %v544
      %v860 = vunpack.c.l.b16 %v545
      %v861 = vunpack.c.l.b16 %v546
      %v862 = vunpack.c.h.b16 %v546
      %v863 = vunpack.c.l.b16 %v547
      %v864 = vunpack.c.h.b16 %v547
      %v865 = vunpack.c.l.b16 %v548
      %v866 = vunpack.c.h.b16 %v548
      %v867 = vunpack.c.l.b16 %v549
      %v868 = vunpack.c.l.b16 %v550
      %v869 = vunpack.c.h.b16 %v550
      %v870 = vunpack.c.l.b16 %v551
      %v871 = vunpack.c.h.b16 %v551
      %v872 = vunpack.c.l.b16 %v552
      %v873 = vunpack.c.h.b16 %v552
      %v874 = vunpack.c.l.b16 %v553
      %v875 = vunpack.c.l.b16 %v554
      %v876 = vunpack.c.h.b16 %v554
      %v877 = vunpack.c.l.b16 %v555
      %v878 = vunpack.c.h.b16 %v555
      %v879 = vunpack.c.l.b16 %v556
      %v880 = vunpack.c.h.b16 %v556
      %v881 = vunpack.c.l.b16 %v557
      %v882 = vunpack.c.l.b16 %v558
      %v883 = vunpack.c.h.b16 %v558
      %v884 = vunpack.c.l.b16 %v559
      %v885 = vunpack.c.h.b16 %v559
      %v886 = vunpack.c.l.b16 %v560
      %v887 = vunpack.c.h.b16 %v560
      %v888 = vunpack.c.l.b16 %v561
      %v889 = vunpack.c.l.b16 %v562
      %v890 = vunpack.c.h.b16 %v562
      %v891 = vunpack.c.l.b16 %v563
      %v892 = vunpack.c.h.b16 %v563
      %v893 = vunpack.c.l.b16 %v564
      %v894 = vunpack.c.h.b16 %v564
      %v895 = vunpack.c.l.b16 %v565
      %v896 = vpack.c.b16 %v763, %v756
      %v897 = vpack.c.b16 %v764, %v757
      %v898 = vpack.c.b16 %v765, %v758
      %v899 = vpack.c.b16 %v766, %v759
      %v900 = vpack.c.b16 %v767, %v760
      %v901 = vpack.c.b16 %v768, %v761
      %v902 = vpack.c.b16 %v769, %v762
      %v903 = vpack.c.b16 %v777, %v770
      %v904 = vpack.c.b16 %v778, %v771
      %v905 = vpack.c.b16 %v779, %v772
      %v906 = vpack.c.b16 %v780, %v773
      %v907 = vpack.c.b16 %v781, %v774
      %v908 = vpack.c.b16 %v782, %v775
      %v909 = vpack.c.b16 %v783, %v776
      %v910 = vpack.c.b16 %v791, %v784
      %v911 = vpack.c.b16 %v792, %v785
      %v912 = vpack.c.b16 %v793, %v786
      %v913 = vpack.c.b16 %v794, %v787
      %v914 = vpack.c.b16 %v795, %v788
      %v915 = vpack.c.b16 %v796, %v789
      %v916 = vpack.c.b16 %v797, %v790
      %v917 = vpack.c.b16 %v805, %v798
      %v918 = vpack.c.b16 %v806, %v799
      %v919 = vpack.c.b16 %v807, %v800
      %v920 = vpack.c.b16 %v808, %v801
      %v921 = vpack.c.b16 %v809, %v802
      %v922 = vpack.c.b16 %v810, %v803
      %v923 = vpack.c.b16 %v811, %v804
      %v924 = vpack.c.b16 %v819, %v812
      %v925 = vpack.c.b16 %v820, %v813
      %v926 = vpack.c.b16 %v821, %v814
      %v927 = vpack.c.b16 %v822, %v815
      %v928 = vpack.c.b16 %v823, %v816
      %v929 = vpack.c.b16 %v824, %v817
      %v930 = vpack.c.b16 %v825, %v818
      %v931 = vpack.c.b16 %v833, %v826
      %v932 = vpack.c.b16 %v834, %v827
      %v933 = vpack.c.b16 %v835, %v828
      %v934 = vpack.c.b16 %v836, %v829
      %v935 = vpack.c.b16 %v837, %v830
      %v936 = vpack.c.b16 %v838, %v831
      %v937 = vpack.c.b16 %v839, %v832
      %v938 = vpack.c.b16 %v847, %v840
      %v939 = vpack.c.b16 %v848, %v841
      %v940 = vpack.c.b16 %v849, %v842
      %v941 = vpack.c.b16 %v850, %v843
      %v942 = vpack.c.b16 %v851, %v844
      %v943 = vpack.c.b16 %v852, %v845
      %v944 = vpack.c.b16 %v853, %v846
      %v945 = vpack.c.b16 %v861, %v854
      %v946 = vpack.c.b16 %v862, %v855
      %v947 = vpack.c.b16 %v863, %v856
      %v948 = vpack.c.b16 %v864, %v857
      %v949 = vpack.c.b16 %v865, %v858
      %v950 = vpack.c.b16 %v866, %v859
      %v951 = vpack.c.b16 %v867, %v860
      %v952 = vpack.c.b16 %v875, %v868
      %v953 = vpack.c.b16 %v876, %v869
      %v954 = vpack.c.b16 %v877, %v870
      %v955 = vpack.c.b16 %v878, %v871
      %v956 = vpack.c.b16 %v879, %v872
      %v957 = vpack.c.b16 %v880, %v873
      %v958 = vpack.c.b16 %v881, %v874
      %v959 = vpack.c.b16 %v889, %v882
      %v960 = vpack.c.b16 %v890, %v883
      %v961 = vpack.c.b16 %v891, %v884
      %v962 = vpack.c.b16 %v892, %v885
      %v963 = vpack.c.b16 %v893, %v886
      %v964 = vpack.c.b16 %v894, %v887
      %v965 = vpack.c.b16 %v895, %v888
      %v1124 = vunpack.c.l.b16 %v566
      %v1125 = vunpack.c.h.b16 %v566
      %v1126 = vunpack.c.l.b16 %v567
      %v1127 = vunpack.c.h.b16 %v567
      %v1128 = vunpack.c.l.b16 %v568
      %v1129 = vunpack.c.h.b16 %v568
      %v1130 = vunpack.c.l.b16 %v569
      %v1131 = vunpack.c.h.b16 %v569
      %v1132 = vunpack.c.l.b16 %v570
      %v1133 = vunpack.c.h.b16 %v570
      %v1134 = vunpack.c.l.b16 %v571
      %v1135 = vunpack.c.h.b16 %v571
      %v1136 = vunpack.c.l.b16 %v572
      %v1137 = vunpack.c.h.b16 %v572
      %v1138 = vunpack.c.l.b16 %v573
      %v1139 = vunpack.c.h.b16 %v573
      %v1140 = vunpack.c.l.b16 %v574
      %v1141 = vunpack.c.h.b16 %v574
      %v1142 = vunpack.c.l.b16 %v575
      %v1143 = vunpack.c.h.b16 %v575
      %v1144 = vunpack.c.l.b16 %v576
      %v1145 = vunpack.c.h.b16 %v576
      %v1146 = vunpack.c.l.b16 %v577
      %v1147 = vunpack.c.h.b16 %v577
      %v1148 = vunpack.c.l.b16 %v578
      %v1149 = vunpack.c.h.b16 %v578
      %v1150 = vunpack.c.l.b16 %v579
      %v1151 = vunpack.c.h.b16 %v579
      %v1152 = vunpack.c.l.b16 %v580
      %v1153 = vunpack.c.h.b16 %v580
      %v1154 = vunpack.c.l.b16 %v581
      %v1155 = vunpack.c.h.b16 %v581
      %v1156 = vunpack.c.l.b16 %v582
      %v1157 = vunpack.c.h.b16 %v582
      %v1158 = vunpack.c.l.b16 %v583
      %v1159 = vunpack.c.h.b16 %v583
      %v1160 = vunpack.c.l.b16 %v584
      %v1161 = vunpack.c.h.b16 %v584
      %v1162 = vunpack.c.l.b16 %v585
      %v1163 = vunpack.c.h.b16 %v585
      %v1164 = vunpack.c.l.b16 %v586
      %v1165 = vunpack.c.h.b16 %v586
      %v1166 = vunpack.c.l.b16 %v587
      %v1167 = vunpack.c.h.b16 %v587
      %v1168 = vunpack.c.l.b16 %v588
      %v1169 = vunpack.c.h.b16 %v588
      %v1170 = vunpack.c.l.b16 %v589
      %v1171 = vunpack.c.h.b16 %v589
      %v1172 = vunpack.c.l.b16 %v590
      %v1173 = vunpack.c.h.b16 %v590
      %v1174 = vunpack.c.l.b16 %v591
      %v1175 = vunpack.c.h.b16 %v591
      %v1176 = vunpack.c.l.b16 %v592
      %v1177 = vunpack.c.h.b16 %v592
      %v1178 = vunpack.c.l.b16 %v593
      %v1179 = vunpack.c.h.b16 %v593
      %v1180 = vunpack.c.l.b16 %v594
      %v1181 = vunpack.c.h.b16 %v594
      %v1182 = vunpack.c.l.b16 %v595
      %v1183 = vunpack.c.h.b16 %v595
      %v1184 = vunpack.c.l.b16 %v596
      %v1185 = vunpack.c.h.b16 %v596
      %v1186 = vunpack.c.l.b16 %v597
      %v1187 = vunpack.c.h.b16 %v597
      %v1188 = vunpack.c.l.b16 %v598
      %v1189 = vunpack.c.h.b16 %v598
      %v1190 = vunpack.c.l.b16 %v599
      %v1191 = vunpack.c.h.b16 %v599
      %v1192 = vunpack.c.l.b16 %v600
      %v1193 = vunpack.c.h.b16 %v600
      %v1194 = vunpack.c.l.b16 %v601
      %v1195 = vunpack.c.h.b16 %v601
      %v1196 = vunpack.c.l.b16 %v602
      %v1197 = vunpack.c.h.b16 %v602
      %v1198 = vunpack.c.l.b16 %v603
      %v1199 = vunpack.c.h.b16 %v603
      %v1200 = vunpack.c.l.b16 %v604
      %v1201 = vunpack.c.h.b16 %v604
      %v1202 = vunpack.c.l.b16 %v605
      %v1203 = vunpack.c.h.b16 %v605
      %v1204 = vunpack.c.l.b16 %v606
      %v1205 = vunpack.c.h.b16 %v606
      %v1206 = vunpack.c.l.b16 %v607
      %v1207 = vunpack.c.h.b16 %v607
      %v1208 = vunpack.c.l.b16 %v608
      %v1209 = vunpack.c.h.b16 %v608
      %v1210 = vunpack.c.l.b16 %v609
      %v1211 = vunpack.c.h.b16 %v609
      %v1212 = vunpack.c.l.b16 %v610
      %v1213 = vunpack.c.h.b16 %v610
      %v1214 = vunpack.c.l.b16 %v611
      %v1215 = vunpack.c.h.b16 %v611
      %v1216 = vunpack.c.l.b16 %v612
      %v1217 = vunpack.c.h.b16 %v612
      %v1218 = vunpack.c.l.b16 %v613
      %v1219 = vunpack.c.h.b16 %v613
      %v1220 = vunpack.c.l.b16 %v614
      %v1221 = vunpack.c.h.b16 %v614
      %v1222 = vunpack.c.l.b16 %v615
      %v1223 = vunpack.c.h.b16 %v615
      %v1224 = vunpack.c.l.b16 %v616
      %v1225 = vunpack.c.h.b16 %v616
      %v1226 = vunpack.c.l.b16 %v617
      %v1227 = vunpack.c.h.b16 %v617
      %v1228 = vunpack.c.l.b16 %v618
      %v1229 = vunpack.c.h.b16 %v618
      %v1230 = vunpack.c.l.b16 %v619
      %v1231 = vunpack.c.h.b16 %v619
      %v1232 = vunpack.c.l.b16 %v620
      %v1233 = vunpack.c.h.b16 %v620
      %v1234 = vunpack.c.l.b16 %v621
      %v1235 = vunpack.c.h.b16 %v621
      %v1236 = vunpack.c.l.b16 %v622
      %v1237 = vunpack.c.h.b16 %v622
      %v1238 = vunpack.c.l.b16 %v623
      %v1239 = vunpack.c.h.b16 %v623
      %v1240 = vunpack.c.l.b16 %v624
      %v1241 = vunpack.c.h.b16 %v624
      %v1242 = vunpack.c.l.b16 %v625
      %v1243 = vunpack.c.h.b16 %v625
      %v1244 = vunpack.c.l.b16 %v626
      %v1245 = vunpack.c.h.b16 %v626
      %v1246 = vunpack.c.l.b16 %v627
      %v1247 = vunpack.c.h.b16 %v627
      %v1248 = vunpack.c.l.b16 %v628
      %v1249 = vunpack.c.h.b16 %v628
      %v1250 = vunpack.c.l.b16 %v629
      %v1251 = vunpack.c.h.b16 %v629
      %v1252 = vunpack.c.l.b16 %v630
      %v1253 = vunpack.c.h.b16 %v630
      %v1254 = vunpack.c.l.b16 %v631
      %v1255 = vunpack.c.h.b16 %v631
      %v1256 = vunpack.c.l.b16 %v632
      %v1257 = vunpack.c.h.b16 %v632
      %v1258 = vunpack.c.l.b16 %v633
      %v1259 = vunpack.c.h.b16 %v633
      %v1260 = vunpack.c.l.b16 %v634
      %v1261 = vunpack.c.h.b16 %v634
      %v1262 = vunpack.c.l.b16 %v635
      %v1263 = vunpack.c.h.b16 %v635
      %v1264 = vunpack.c.l.b16 %v636
      %v1265 = vunpack.c.h.b16 %v636
      %v1266 = vunpack.c.l.b16 %v637
      %v1267 = vunpack.c.h.b16 %v637
      %v1268 = vunpack.c.l.b16 %v638
      %v1269 = vunpack.c.h.b16 %v638
      %v1270 = vunpack.c.l.b16 %v639
      %v1271 = vunpack.c.h.b16 %v639
      %v1272 = vunpack.c.l.b16 %v640
      %v1273 = vunpack.c.h.b16 %v640
      %v1274 = vunpack.c.l.b16 %v641
      %v1275 = vunpack.c.h.b16 %v641
      %v1276 = vunpack.c.l.b16 %v642
      %v1277 = vunpack.c.h.b16 %v642
      %v1278 = vunpack.c.l.b16 %v643
      %v1279 = vunpack.c.h.b16 %v643
      %v1280 = vunpack.c.l.b16 %v644
      %v1281 = vunpack.c.h.b16 %v644
      %v1282 = vunpack.c.l.b16 %v645
      %v1283 = vunpack.c.h.b16 %v645
      %v1284 = vunpack.c.l.b16 %v646
      %v1285 = vunpack.c.h.b16 %v646
      %v1286 = vunpack.c.l.b16 %v647
      %v1287 = vunpack.c.h.b16 %v647
      %v1288 = vunpack.c.l.b16 %v648
      %v1289 = vunpack.c.h.b16 %v648
      %v1290 = vunpack.c.l.b16 %v649
      %v1291 = vunpack.c.h.b16 %v649
      %v1292 = vunpack.c.l.b16 %v650
      %v1293 = vunpack.c.h.b16 %v650
      %v1294 = vunpack.c.l.b16 %v651
      %v1295 = vunpack.c.h.b16 %v651
      %v1296 = vunpack.c.l.b16 %v652
      %v1297 = vunpack.c.h.b16 %v652
      %v1298 = vunpack.c.l.b16 %v653
      %v1299 = vunpack.c.h.b16 %v653
      %v1300 = vunpack.c.l.b16 %v654
      %v1301 = vunpack.c.h.b16 %v654
      %v1302 = vunpack.c.l.b16 %v655
      %v1303 = vunpack.c.h.b16 %v655
      %v1304 = vunpack.c.l.b16 %v656
      %v1305 = vunpack.c.h.b16 %v656
      %v1306 = vunpack.c.l.b16 %v657
      %v1307 = vunpack.c.h.b16 %v657
      %v1308 = vunpack.c.l.b16 %v658
      %v1309 = vunpack.c.h.b16 %v658
      %v1310 = vunpack.c.l.b16 %v659
      %v1311 = vunpack.c.h.b16 %v659
      %v1312 = vunpack.c.l.b16 %v660
      %v1313 = vunpack.c.h.b16 %v660
      %v1314 = vunpack.c.l.b16 %v661
      %v1315 = vunpack.c.h.b16 %v661
      %v1316 = vunpack.c.l.b16 %v662
      %v1317 = vunpack.c.h.b16 %v662
      %v1318 = vunpack.c.l.b16 %v663
      %v1319 = vunpack.c.h.b16 %v663
      %v1320 = vpack.c.b16 %v1126, %v1124
      %v1321 = vpack.c.b16 %v1127, %v1125
      %v1322 = vpack.c.b16 %v1130, %v1128
      %v1323 = vpack.c.b16 %v1131, %v1129
      %v1324 = vpack.c.b16 %v1134, %v1132
      %v1325 = vpack.c.b16 %v1135, %v1133
      %v1326 = vpack.c.b16 %v1138, %v1136
      %v1327 = vpack.c.b16 %v1139, %v1137
      %v1328 = vpack.c.b16 %v1142, %v1140
      %v1329 = vpack.c.b16 %v1143, %v1141
      %v1330 = vpack.c.b16 %v1146, %v1144
      %v1331 = vpack.c.b16 %v1147, %v1145
      %v1332 = vpack.c.b16 %v1150, %v1148
      %v1333 = vpack.c.b16 %v1151, %v1149
      %v1334 = vpack.c.b16 %v1154, %v1152
      %v1335 = vpack.c.b16 %v1155, %v1153
      %v1336 = vpack.c.b16 %v1158, %v1156
      %v1337 = vpack.c.b16 %v1159, %v1157
      %v1338 = vpack.c.b16 %v1162, %v1160
      %v1339 = vpack.c.b16 %v1163, %v1161
      %v1340 = vpack.c.b16 %v1166, %v1164
      %v1341 = vpack.c.b16 %v1167, %v1165
      %v1342 = vpack.c.b16 %v1170, %v1168
      %v1343 = vpack.c.b16 %v1171, %v1169
      %v1344 = vpack.c.b16 %v1174, %v1172
      %v1345 = vpack.c.b16 %v1175, %v1173
      %v1346 = vpack.c.b16 %v1178, %v1176
      %v1347 = vpack.c.b16 %v1179, %v1177
      %v1348 = vpack.c.b16 %v1182, %v1180
      %v1349 = vpack.c.b16 %v1183, %v1181
      %v1350 = vpack.c.b16 %v1186, %v1184
      %v1351 = vpack.c.b16 %v1187, %v1185
      %v1352 = vpack.c.b16 %v1190, %v1188
      %v1353 = vpack.c.b16 %v1191, %v1189
      %v1354 = vpack.c.b16 %v1194, %v1192
      %v1355 = vpack.c.b16 %v1195, %v1193
      %v1356 = vpack.c.b16 %v1198, %v1196
      %v1357 = vpack.c.b16 %v1199, %v1197
      %v1358 = vpack.c.b16 %v1202, %v1200
      %v1359 = vpack.c.b16 %v1203, %v1201
      %v1360 = vpack.c.b16 %v1206, %v1204
      %v1361 = vpack.c.b16 %v1207, %v1205
      %v1362 = vpack.c.b16 %v1210, %v1208
      %v1363 = vpack.c.b16 %v1211, %v1209
      %v1364 = vpack.c.b16 %v1214, %v1212
      %v1365 = vpack.c.b16 %v1215, %v1213
      %v1366 = vpack.c.b16 %v1218, %v1216
      %v1367 = vpack.c.b16 %v1219, %v1217
      %v1368 = vpack.c.b16 %v1222, %v1220
      %v1369 = vpack.c.b16 %v1223, %v1221
      %v1370 = vpack.c.b16 %v1226, %v1224
      %v1371 = vpack.c.b16 %v1227, %v1225
      %v1372 = vpack.c.b16 %v1230, %v1228
      %v1373 = vpack.c.b16 %v1231, %v1229
      %v1374 = vpack.c.b16 %v1234, %v1232
      %v1375 = vpack.c.b16 %v1235, %v1233
      %v1376 = vpack.c.b16 %v1238, %v1236
      %v1377 = vpack.c.b16 %v1239, %v1237
      %v1378 = vpack.c.b16 %v1242, %v1240
      %v1379 = vpack.c.b16 %v1243, %v1241
      %v1380 = vpack.c.b16 %v1246, %v1244
      %v1381 = vpack.c.b16 %v1247, %v1245
      %v1382 = vpack.c.b16 %v1250, %v1248
      %v1383 = vpack.c.b16 %v1251, %v1249
      %v1384 = vpack.c.b16 %v1254, %v1252
      %v1385 = vpack.c.b16 %v1255, %v1253
      %v1386 = vpack.c.b16 %v1258, %v1256
      %v1387 = vpack.c.b16 %v1259, %v1257
      %v1388 = vpack.c.b16 %v1262, %v1260
      %v1389 = vpack.c.b16 %v1263, %v1261
      %v1390 = vpack.c.b16 %v1266, %v1264
      %v1391 = vpack.c.b16 %v1267, %v1265
      %v1392 = vpack.c.b16 %v1270, %v1268
      %v1393 = vpack.c.b16 %v1271, %v1269
      %v1394 = vpack.c.b16 %v1274, %v1272
      %v1395 = vpack.c.b16 %v1275, %v1273
      %v1396 = vpack.c.b16 %v1278, %v1276
      %v1397 = vpack.c.b16 %v1279, %v1277
      %v1398 = vpack.c.b16 %v1282, %v1280
      %v1399 = vpack.c.b16 %v1283, %v1281
      %v1400 = vpack.c.b16 %v1286, %v1284
      %v1401 = vpack.c.b16 %v1287, %v1285
      %v1402 = vpack.c.b16 %v1290, %v1288
      %v1403 = vpack.c.b16 %v1291, %v1289
      %v1404 = vpack.c.b16 %v1294, %v1292
      %v1405 = vpack.c.b16 %v1295, %v1293
      %v1406 = vpack.c.b16 %v1298, %v1296
      %v1407 = vpack.c.b16 %v1299, %v1297
      %v1408 = vpack.c.b16 %v1302, %v1300
      %v1409 = vpack.c.b16 %v1303, %v1301
      %v1410 = vpack.c.b16 %v1306, %v1304
      %v1411 = vpack.c.b16 %v1307, %v1305
      %v1412 = vpack.c.b16 %v1310, %v1308
      %v1413 = vpack.c.b16 %v1311, %v1309
      %v1414 = vpack.c.b16 %v1314, %v1312
      %v1415 = vpack.c.b16 %v1315, %v1313
      %v1416 = vpack.c.b16 %v1318, %v1316
      %v1417 = vpack.c.b16 %v1319, %v1317
      %vm1516 = vcmask 130048
      %v1518 = vsel %vm1516, %v902, 0
      %v1521 = vsel %vm1516, %v909, 0
      %v1524 = vsel %vm1516, %v916, 0
      %v1527 = vsel %vm1516, %v923, 0
      %v1530 = vsel %vm1516, %v930, 0
      %v1533 = vsel %vm1516, %v937, 0
      %v1536 = vsel %vm1516, %v944, 0
      %v1539 = vsel %vm1516, %v951, 0
      %v1542 = vsel %vm1516, %v958, 0
      %v1545 = vsel %vm1516, %v965, 0
      %1547 = vmatprep.subr.bf16.mxu0 %v1321
      %1548 = vmatpush1.bf16.msra.mxu0 %v1320
      %1549 = vmatprep.subr.bf16.mxu0 %v1323
      %1550 = vmatpush1.bf16.msra.mxu0 %v1322
      %1551 = vmatprep.subr.bf16.mxu0 %v1325
      %1552 = vmatpush1.bf16.msra.mxu0 %v1324
      %1553 = vmatprep.subr.bf16.mxu0 %v1327
      %1554 = vmatpush1.bf16.msra.mxu0 %v1326
      %1555 = vmatprep.subr.bf16.mxu0 %v1329
      %1556 = vmatpush1.bf16.msra.mxu0 %v1328
      %1557 = vmatprep.subr.bf16.mxu0 %v1331
      %1558 = vmatpush1.bf16.msra.mxu0 %v1330
      %1559 = vmatprep.subr.bf16.mxu0 %v1333
      %1560 = vmatpush1.bf16.msra.mxu0 %v1332
      %1561 = vmatprep.subr.bf16.mxu0 %v1335
      %1562 = vmatpush1.bf16.msra.mxu0 %v1334
      %1563 = vmatprep.subr.bf16.mxu0 %v1337
      %1564 = vmatpush1.bf16.msra.mxu0 %v1336
      %1565 = vmatprep.subr.bf16.mxu0 %v1339
      %1566 = vmatpush1.bf16.msra.mxu0 %v1338
      %1567 = vmatprep.subr.bf16.mxu0 %v1341
      %1568 = vmatpush1.bf16.msra.mxu0 %v1340
      %1569 = vmatprep.subr.bf16.mxu0 %v1343
      %1570 = vmatpush1.bf16.msra.mxu0 %v1342
      %1571 = vmatprep.subr.bf16.mxu0 %v1345
      %1572 = vmatpush1.bf16.msra.mxu0 %v1344
      %1573 = vmatprep.subr.bf16.mxu0 %v1347
      %1574 = vmatpush1.bf16.msra.mxu0 %v1346
      %1575 = vmatprep.subr.bf16.mxu0 %v1349
      %1576 = vmatpush1.bf16.msra.mxu0 %v1348
      %1577 = vmatprep.subr.bf16.mxu0 %v1351
      %1578 = vmatpush1.bf16.msra.mxu0 %v1350
      %1579 = vmatprep.mubr.bf16.mxu0 %v897
      %1580 = vmatmul.mubr.bf16.gmra.mrb[0].mxu0 %v896
      %v1581 = vpop.f32.mrb[0].mxu0
      %v1582 = vadd.f32 %v669, %v1581
      %v1583 = vpop.f32.mrb[0].mxu0
      %v1584 = vadd.f32 %v673, %v1583
      %v1585 = vpop.f32.mrb[0].mxu0
      %v1586 = vadd.f32 %v669, %v1585
      %v1587 = vpop.f32.mrb[0].mxu0
      %v1588 = vadd.f32 %v673, %v1587
      %1589 = vmatprep.mubr.bf16.mxu0 %v904
      %1590 = vmatmul.mubr.bf16.gmra.mrb[0].mxu0 %v903
      %v1591 = vpop.f32.mrb[0].mxu0
      %v1592 = vadd.f32 %v669, %v1591
      %v1593 = vpop.f32.mrb[0].mxu0
      %v1594 = vadd.f32 %v673, %v1593
      %v1595 = vpop.f32.mrb[0].mxu0
      %v1596 = vadd.f32 %v669, %v1595
      %v1597 = vpop.f32.mrb[0].mxu0
      %v1598 = vadd.f32 %v673, %v1597
      %1599 = vmatprep.mubr.bf16.mxu0 %v911
      %1600 = vmatmul.mubr.bf16.gmra.mrb[0].mxu0 %v910
      %v1601 = vpop.f32.mrb[0].mxu0
      %v1602 = vadd.f32 %v669, %v1601
      %v1603 = vpop.f32.mrb[0].mxu0
      %v1604 = vadd.f32 %v673, %v1603
      %v1605 = vpop.f32.mrb[0].mxu0
      %v1606 = vadd.f32 %v669, %v1605
      %v1607 = vpop.f32.mrb[0].mxu0
      %v1608 = vadd.f32 %v673, %v1607
      %1609 = vmatprep.mubr.bf16.mxu0 %v918
      %1610 = vmatmul.mubr.bf16.gmra.mrb[0].mxu0 %v917
      %v1611 = vpop.f32.mrb[0].mxu0
      %v1612 = vadd.f32 %v669, %v1611
      %v1613 = vpop.f32.mrb[0].mxu0
      %v1614 = vadd.f32 %v673, %v1613
      %v1615 = vpop.f32.mrb[0].mxu0
      %v1616 = vadd.f32 %v669, %v1615
      %v1617 = vpop.f32.mrb[0].mxu0
      %v1618 = vadd.f32 %v673, %v1617
      %1619 = vmatprep.mubr.bf16.mxu0 %v925
      %1620 = vmatmul.mubr.bf16.gmra.mrb[0].mxu0 %v924
      %v1621 = vpop.f32.mrb[0].mxu0
      %v1622 = vadd.f32 %v669, %v1621
      %v1623 = vpop.f32.mrb[0].mxu0
      %v1624 = vadd.f32 %v673, %v1623
      %v1625 = vpop.f32.mrb[0].mxu0
      %v1626 = vadd.f32 %v669, %v1625
      %v1627 = vpop.f32.mrb[0].mxu0
      %v1628 = vadd.f32 %v673, %v1627
      %1629 = vmatprep.mubr.bf16.mxu0 %v932
      %1630 = vmatmul.mubr.bf16.gmra.mrb[0].mxu0 %v931
      %v1631 = vpop.f32.mrb[0].mxu0
      %v1632 = vadd.f32 %v669, %v1631
      %v1633 = vpop.f32.mrb[0].mxu0
      %v1634 = vadd.f32 %v673, %v1633
      %v1635 = vpop.f32.mrb[0].mxu0
      %v1636 = vadd.f32 %v669, %v1635
      %v1637 = vpop.f32.mrb[0].mxu0
      %v1638 = vadd.f32 %v673, %v1637
      %1639 = vmatprep.mubr.bf16.mxu0 %v939
      %1640 = vmatmul.mubr.bf16.gmra.mrb[0].mxu0 %v938
      %v1641 = vpop.f32.mrb[0].mxu0
      %v1642 = vadd.f32 %v669, %v1641
      %v1643 = vpop.f32.mrb[0].mxu0
      %v1644 = vadd.f32 %v673, %v1643
      %v1645 = vpop.f32.mrb[0].mxu0
      %v1646 = vadd.f32 %v669, %v1645
      %v1647 = vpop.f32.mrb[0].mxu0
      %v1648 = vadd.f32 %v673, %v1647
      %1649 = vmatprep.mubr.bf16.mxu0 %v946
      %1650 = vmatmul.mubr.bf16.gmra.mrb[0].mxu0 %v945
      %v1651 = vpop.f32.mrb[0].mxu0
      %v1652 = vadd.f32 %v669, %v1651
      %v1653 = vpop.f32.mrb[0].mxu0
      %v1654 = vadd.f32 %v673, %v1653
      %v1655 = vpop.f32.mrb[0].mxu0
      %v1656 = vadd.f32 %v669, %v1655
      %v1657 = vpop.f32.mrb[0].mxu0
      %v1658 = vadd.f32 %v673, %v1657
      %1659 = vmatprep.mubr.bf16.mxu0 %v953
      %1660 = vmatmul.mubr.bf16.gmra.mrb[0].mxu0 %v952
      %v1661 = vpop.f32.mrb[0].mxu0
      %v1662 = vadd.f32 %v669, %v1661
      %v1663 = vpop.f32.mrb[0].mxu0
      %v1664 = vadd.f32 %v673, %v1663
      %v1665 = vpop.f32.mrb[0].mxu0
      %v1666 = vadd.f32 %v669, %v1665
      %v1667 = vpop.f32.mrb[0].mxu0
      %v1668 = vadd.f32 %v673, %v1667
      %1669 = vmatprep.mubr.bf16.mxu0 %v960
      %1670 = vmatmul.mubr.bf16.gmra.mrb[0].mxu0 %v959
      %v1671 = vpop.f32.mrb[0].mxu0
      %v1672 = vadd.f32 %v669, %v1671
      %v1673 = vpop.f32.mrb[0].mxu0
      %v1674 = vadd.f32 %v673, %v1673
      %v1675 = vpop.f32.mrb[0].mxu0
      %v1676 = vadd.f32 %v669, %v1675
      %v1677 = vpop.f32.mrb[0].mxu0
      %v1678 = vadd.f32 %v673, %v1677
      %1679 = vdwg.mxu0
      %1680 = vmatprep.subr.bf16.mxu0 %v1353
      %1681 = vmatpush1.bf16.msra.mxu0 %v1352
      %1682 = vmatprep.subr.bf16.mxu0 %v1355
      %1683 = vmatpush1.bf16.msra.mxu0 %v1354
      %1684 = vmatprep.subr.bf16.mxu0 %v1357
      %1685 = vmatpush1.bf16.msra.mxu0 %v1356
      %1686 = vmatprep.subr.bf16.mxu0 %v1359
      %1687 = vmatpush1.bf16.msra.mxu0 %v1358
      %1688 = vmatprep.subr.bf16.mxu0 %v1361
      %1689 = vmatpush1.bf16.msra.mxu0 %v1360
      %1690 = vmatprep.subr.bf16.mxu0 %v1363
      %1691 = vmatpush1.bf16.msra.mxu0 %v1362
      %1692 = vmatprep.subr.bf16.mxu0 %v1365
      %1693 = vmatpush1.bf16.msra.mxu0 %v1364
      %1694 = vmatprep.subr.bf16.mxu0 %v1367
      %1695 = vmatpush1.bf16.msra.mxu0 %v1366
      %1696 = vmatprep.subr.bf16.mxu0 %v1369
      %1697 = vmatpush1.bf16.msra.mxu0 %v1368
      %1698 = vmatprep.subr.bf16.mxu0 %v1371
      %1699 = vmatpush1.bf16.msra.mxu0 %v1370
      %1700 = vmatprep.subr.bf16.mxu0 %v1373
      %1701 = vmatpush1.bf16.msra.mxu0 %v1372
      %1702 = vmatprep.subr.bf16.mxu0 %v1375
      %1703 = vmatpush1.bf16.msra.mxu0 %v1374
      %1704 = vmatprep.subr.bf16.mxu0 %v1377
      %1705 = vmatpush1.bf16.msra.mxu0 %v1376
      %1706 = vmatprep.subr.bf16.mxu0 %v1379
      %1707 = vmatpush1.bf16.msra.mxu0 %v1378
      %1708 = vmatprep.subr.bf16.mxu0 %v1381
      %1709 = vmatpush1.bf16.msra.mxu0 %v1380
      %1710 = vmatprep.subr.bf16.mxu0 %v1383
      %1711 = vmatpush1.bf16.msra.mxu0 %v1382
      %1712 = vmatprep.mubr.bf16.mxu0 %v899
      %1713 = vmatmul.mubr.bf16.gmra.mrb[0].mxu0 %v898
      %v1714 = vpop.f32.mrb[0].mxu0
      %v1715 = vadd.f32 %v1582, %v1714
      %v1716 = vpop.f32.mrb[0].mxu0
      %v1717 = vadd.f32 %v1584, %v1716
      %v1718 = vpop.f32.mrb[0].mxu0
      %v1719 = vadd.f32 %v1586, %v1718
      %v1720 = vpop.f32.mrb[0].mxu0
      %v1721 = vadd.f32 %v1588, %v1720
      %1722 = vmatprep.mubr.bf16.mxu0 %v906
      %1723 = vmatmul.mubr.bf16.gmra.mrb[0].mxu0 %v905
      %v1724 = vpop.f32.mrb[0].mxu0
      %v1725 = vadd.f32 %v1592, %v1724
      %v1726 = vpop.f32.mrb[0].mxu0
      %v1727 = vadd.f32 %v1594, %v1726
      %v1728 = vpop.f32.mrb[0].mxu0
      %v1729 = vadd.f32 %v1596, %v1728
      %v1730 = vpop.f32.mrb[0].mxu0
      %v1731 = vadd.f32 %v1598, %v1730
      %1732 = vmatprep.mubr.bf16.mxu0 %v913
      %1733 = vmatmul.mubr.bf16.gmra.mrb[0].mxu0 %v912
      %v1734 = vpop.f32.mrb[0].mxu0
      %v1735 = vadd.f32 %v1602, %v1734
      %v1736 = vpop.f32.mrb[0].mxu0
      %v1737 = vadd.f32 %v1604, %v1736
      %v1738 = vpop.f32.mrb[0].mxu0
      %v1739 = vadd.f32 %v1606, %v1738
      %v1740 = vpop.f32.mrb[0].mxu0
      %v1741 = vadd.f32 %v1608, %v1740
      %1742 = vmatprep.mubr.bf16.mxu0 %v920
      %1743 = vmatmul.mubr.bf16.gmra.mrb[0].mxu0 %v919
      %v1744 = vpop.f32.mrb[0].mxu0
      %v1745 = vadd.f32 %v1612, %v1744
      %v1746 = vpop.f32.mrb[0].mxu0
      %v1747 = vadd.f32 %v1614, %v1746
      %v1748 = vpop.f32.mrb[0].mxu0
      %v1749 = vadd.f32 %v1616, %v1748
      %v1750 = vpop.f32.mrb[0].mxu0
      %v1751 = vadd.f32 %v1618, %v1750
      %1752 = vmatprep.mubr.bf16.mxu0 %v927
      %1753 = vmatmul.mubr.bf16.gmra.mrb[0].mxu0 %v926
      %v1754 = vpop.f32.mrb[0].mxu0
      %v1755 = vadd.f32 %v1622, %v1754
      %v1756 = vpop.f32.mrb[0].mxu0
      %v1757 = vadd.f32 %v1624, %v1756
      %v1758 = vpop.f32.mrb[0].mxu0
      %v1759 = vadd.f32 %v1626, %v1758
      %v1760 = vpop.f32.mrb[0].mxu0
      %v1761 = vadd.f32 %v1628, %v1760
      %1762 = vmatprep.mubr.bf16.mxu0 %v934
      %1763 = vmatmul.mubr.bf16.gmra.mrb[0].mxu0 %v933
      %v1764 = vpop.f32.mrb[0].mxu0
      %v1765 = vadd.f32 %v1632, %v1764
      %v1766 = vpop.f32.mrb[0].mxu0
      %v1767 = vadd.f32 %v1634, %v1766
      %v1768 = vpop.f32.mrb[0].mxu0
      %v1769 = vadd.f32 %v1636, %v1768
      %v1770 = vpop.f32.mrb[0].mxu0
      %v1771 = vadd.f32 %v1638, %v1770
      %1772 = vmatprep.mubr.bf16.mxu0 %v941
      %1773 = vmatmul.mubr.bf16.gmra.mrb[0].mxu0 %v940
      %v1774 = vpop.f32.mrb[0].mxu0
      %v1775 = vadd.f32 %v1642, %v1774
      %v1776 = vpop.f32.mrb[0].mxu0
      %v1777 = vadd.f32 %v1644, %v1776
      %v1778 = vpop.f32.mrb[0].mxu0
      %v1779 = vadd.f32 %v1646, %v1778
      %v1780 = vpop.f32.mrb[0].mxu0
      %v1781 = vadd.f32 %v1648, %v1780
      %1782 = vmatprep.mubr.bf16.mxu0 %v948
      %1783 = vmatmul.mubr.bf16.gmra.mrb[0].mxu0 %v947
      %v1784 = vpop.f32.mrb[0].mxu0
      %v1785 = vadd.f32 %v1652, %v1784
      %v1786 = vpop.f32.mrb[0].mxu0
      %v1787 = vadd.f32 %v1654, %v1786
      %v1788 = vpop.f32.mrb[0].mxu0
      %v1789 = vadd.f32 %v1656, %v1788
      %v1790 = vpop.f32.mrb[0].mxu0
      %v1791 = vadd.f32 %v1658, %v1790
      %1792 = vmatprep.mubr.bf16.mxu0 %v955
      %1793 = vmatmul.mubr.bf16.gmra.mrb[0].mxu0 %v954
      %v1794 = vpop.f32.mrb[0].mxu0
      %v1795 = vadd.f32 %v1662, %v1794
      %v1796 = vpop.f32.mrb[0].mxu0
      %v1797 = vadd.f32 %v1664, %v1796
      %v1798 = vpop.f32.mrb[0].mxu0
      %v1799 = vadd.f32 %v1666, %v1798
      %v1800 = vpop.f32.mrb[0].mxu0
      %v1801 = vadd.f32 %v1668, %v1800
      %1802 = vmatprep.mubr.bf16.mxu0 %v962
      %1803 = vmatmul.mubr.bf16.gmra.mrb[0].mxu0 %v961
      %v1804 = vpop.f32.mrb[0].mxu0
      %v1805 = vadd.f32 %v1672, %v1804
      %v1806 = vpop.f32.mrb[0].mxu0
      %v1807 = vadd.f32 %v1674, %v1806
      %v1808 = vpop.f32.mrb[0].mxu0
      %v1809 = vadd.f32 %v1676, %v1808
      %v1810 = vpop.f32.mrb[0].mxu0
      %v1811 = vadd.f32 %v1678, %v1810
      %1812 = vdwg.mxu0
      %1813 = vmatprep.subr.bf16.mxu0 %v1385
      %1814 = vmatpush1.bf16.msra.mxu0 %v1384
      %1815 = vmatprep.subr.bf16.mxu0 %v1387
      %1816 = vmatpush1.bf16.msra.mxu0 %v1386
      %1817 = vmatprep.subr.bf16.mxu0 %v1389
      %1818 = vmatpush1.bf16.msra.mxu0 %v1388
      %1819 = vmatprep.subr.bf16.mxu0 %v1391
      %1820 = vmatpush1.bf16.msra.mxu0 %v1390
      %1821 = vmatprep.subr.bf16.mxu0 %v1393
      %1822 = vmatpush1.bf16.msra.mxu0 %v1392
      %1823 = vmatprep.subr.bf16.mxu0 %v1395
      %1824 = vmatpush1.bf16.msra.mxu0 %v1394
      %1825 = vmatprep.subr.bf16.mxu0 %v1397
      %1826 = vmatpush1.bf16.msra.mxu0 %v1396
      %1827 = vmatprep.subr.bf16.mxu0 %v1399
      %1828 = vmatpush1.bf16.msra.mxu0 %v1398
      %1829 = vmatprep.subr.bf16.mxu0 %v1401
      %1830 = vmatpush1.bf16.msra.mxu0 %v1400
      %1831 = vmatprep.subr.bf16.mxu0 %v1403
      %1832 = vmatpush1.bf16.msra.mxu0 %v1402
      %1833 = vmatprep.subr.bf16.mxu0 %v1405
      %1834 = vmatpush1.bf16.msra.mxu0 %v1404
      %1835 = vmatprep.subr.bf16.mxu0 %v1407
      %1836 = vmatpush1.bf16.msra.mxu0 %v1406
      %1837 = vmatprep.subr.bf16.mxu0 %v1409
      %1838 = vmatpush1.bf16.msra.mxu0 %v1408
      %1839 = vmatprep.subr.bf16.mxu0 %v1411
      %1840 = vmatpush1.bf16.msra.mxu0 %v1410
      %1841 = vmatprep.subr.bf16.mxu0 %v1413
      %1842 = vmatpush1.bf16.msra.mxu0 %v1412
      %1843 = vmatprep.subr.bf16.mxu0 %v1415
      %1844 = vmatpush1.bf16.msra.mxu0 %v1414
      %1845 = vmatprep.mubr.bf16.mxu0 %v901
      %1846 = vmatmul.mubr.bf16.gmra.mrb[0].mxu0 %v900
      %v1847 = vpop.f32.mrb[0].mxu0
      %v1848 = vadd.f32 %v1715, %v1847
      %v1849 = vpop.f32.mrb[0].mxu0
      %v1850 = vadd.f32 %v1717, %v1849
      %v1851 = vpop.f32.mrb[0].mxu0
      %v1852 = vadd.f32 %v1719, %v1851
      %v1853 = vpop.f32.mrb[0].mxu0
      %v1854 = vadd.f32 %v1721, %v1853
      %1855 = vmatprep.mubr.bf16.mxu0 %v908
      %1856 = vmatmul.mubr.bf16.gmra.mrb[0].mxu0 %v907
      %v1857 = vpop.f32.mrb[0].mxu0
      %v1858 = vadd.f32 %v1725, %v1857
      %v1859 = vpop.f32.mrb[0].mxu0
      %v1860 = vadd.f32 %v1727, %v1859
      %v1861 = vpop.f32.mrb[0].mxu0
      %v1862 = vadd.f32 %v1729, %v1861
      %v1863 = vpop.f32.mrb[0].mxu0
      %v1864 = vadd.f32 %v1731, %v1863
      %1865 = vmatprep.mubr.bf16.mxu0 %v915
      %1866 = vmatmul.mubr.bf16.gmra.mrb[0].mxu0 %v914
      %v1867 = vpop.f32.mrb[0].mxu0
      %v1868 = vadd.f32 %v1735, %v1867
      %v1869 = vpop.f32.mrb[0].mxu0
      %v1870 = vadd.f32 %v1737, %v1869
      %v1871 = vpop.f32.mrb[0].mxu0
      %v1872 = vadd.f32 %v1739, %v1871
      %v1873 = vpop.f32.mrb[0].mxu0
      %v1874 = vadd.f32 %v1741, %v1873
      %1875 = vmatprep.mubr.bf16.mxu0 %v922
      %1876 = vmatmul.mubr.bf16.gmra.mrb[0].mxu0 %v921
      %v1877 = vpop.f32.mrb[0].mxu0
      %v1878 = vadd.f32 %v1745, %v1877
      %v1879 = vpop.f32.mrb[0].mxu0
      %v1880 = vadd.f32 %v1747, %v1879
      %v1881 = vpop.f32.mrb[0].mxu0
      %v1882 = vadd.f32 %v1749, %v1881
      %v1883 = vpop.f32.mrb[0].mxu0
      %v1884 = vadd.f32 %v1751, %v1883
      %1885 = vmatprep.mubr.bf16.mxu0 %v929
      %1886 = vmatmul.mubr.bf16.gmra.mrb[0].mxu0 %v928
      %v1887 = vpop.f32.mrb[0].mxu0
      %v1888 = vadd.f32 %v1755, %v1887
      %v1889 = vpop.f32.mrb[0].mxu0
      %v1890 = vadd.f32 %v1757, %v1889
      %v1891 = vpop.f32.mrb[0].mxu0
      %v1892 = vadd.f32 %v1759, %v1891
      %v1893 = vpop.f32.mrb[0].mxu0
      %v1894 = vadd.f32 %v1761, %v1893
      %1895 = vmatprep.mubr.bf16.mxu0 %v936
      %1896 = vmatmul.mubr.bf16.gmra.mrb[0].mxu0 %v935
      %v1897 = vpop.f32.mrb[0].mxu0
      %v1898 = vadd.f32 %v1765, %v1897
      %v1899 = vpop.f32.mrb[0].mxu0
      %v1900 = vadd.f32 %v1767, %v1899
      %v1901 = vpop.f32.mrb[0].mxu0
      %v1902 = vadd.f32 %v1769, %v1901
      %v1903 = vpop.f32.mrb[0].mxu0
      %v1904 = vadd.f32 %v1771, %v1903
      %1905 = vmatprep.mubr.bf16.mxu0 %v943
      %1906 = vmatmul.mubr.bf16.gmra.mrb[0].mxu0 %v942
      %v1907 = vpop.f32.mrb[0].mxu0
      %v1908 = vadd.f32 %v1775, %v1907
      %v1909 = vpop.f32.mrb[0].mxu0
      %v1910 = vadd.f32 %v1777, %v1909
      %v1911 = vpop.f32.mrb[0].mxu0
      %v1912 = vadd.f32 %v1779, %v1911
      %v1913 = vpop.f32.mrb[0].mxu0
      %v1914 = vadd.f32 %v1781, %v1913
      %1915 = vmatprep.mubr.bf16.mxu0 %v950
      %1916 = vmatmul.mubr.bf16.gmra.mrb[0].mxu0 %v949
      %v1917 = vpop.f32.mrb[0].mxu0
      %v1918 = vadd.f32 %v1785, %v1917
      %v1919 = vpop.f32.mrb[0].mxu0
      %v1920 = vadd.f32 %v1787, %v1919
      %v1921 = vpop.f32.mrb[0].mxu0
      %v1922 = vadd.f32 %v1789, %v1921
      %v1923 = vpop.f32.mrb[0].mxu0
      %v1924 = vadd.f32 %v1791, %v1923
      %1925 = vmatprep.mubr.bf16.mxu0 %v957
      %1926 = vmatmul.mubr.bf16.gmra.mrb[0].mxu0 %v956
      %v1927 = vpop.f32.mrb[0].mxu0
      %v1928 = vadd.f32 %v1795, %v1927
      %v1929 = vpop.f32.mrb[0].mxu0
      %v1930 = vadd.f32 %v1797, %v1929
      %v1931 = vpop.f32.mrb[0].mxu0
      %v1932 = vadd.f32 %v1799, %v1931
      %v1933 = vpop.f32.mrb[0].mxu0
      %v1934 = vadd.f32 %v1801, %v1933
      %1935 = vmatprep.mubr.bf16.mxu0 %v964
      %1936 = vmatmul.mubr.bf16.gmra.mrb[0].mxu0 %v963
      %v1937 = vpop.f32.mrb[0].mxu0
      %v1938 = vadd.f32 %v1805, %v1937
      %v1939 = vpop.f32.mrb[0].mxu0
      %v1940 = vadd.f32 %v1807, %v1939
      %v1941 = vpop.f32.mrb[0].mxu0
      %v1942 = vadd.f32 %v1809, %v1941
      %v1943 = vpop.f32.mrb[0].mxu0
      %v1944 = vadd.f32 %v1811, %v1943
      %1945 = vdwg.mxu0
      %1946 = vmatprep.subr.bf16.mxu0 %v1417
      %1947 = vmatpush1.bf16.msra.mxu0 %v1416
      %1948 = vmatprep.subr.bf16.mxu0 0
      %1949 = vmatpush1.bf16.msra.mxu0 0
      %1950 = vmatprep.subr.bf16.mxu0 0
      %1951 = vmatpush1.bf16.msra.mxu0 0
      %1952 = vmatprep.subr.bf16.mxu0 0
      %1953 = vmatpush1.bf16.msra.mxu0 0
      %1954 = vmatprep.subr.bf16.mxu0 0
      %1955 = vmatpush1.bf16.msra.mxu0 0
      %1956 = vmatprep.subr.bf16.mxu0 0
      %1957 = vmatpush1.bf16.msra.mxu0 0
      %1958 = vmatprep.subr.bf16.mxu0 0
      %1959 = vmatpush1.bf16.msra.mxu0 0
      %1960 = vmatprep.subr.bf16.mxu0 0
      %1961 = vmatpush1.bf16.msra.mxu0 0
      %1962 = vmatprep.subr.bf16.mxu0 0
      %1963 = vmatpush1.bf16.msra.mxu0 0
      %1964 = vmatprep.subr.bf16.mxu0 0
      %1965 = vmatpush1.bf16.msra.mxu0 0
      %1966 = vmatprep.subr.bf16.mxu0 0
      %1967 = vmatpush1.bf16.msra.mxu0 0
      %1968 = vmatprep.subr.bf16.mxu0 0
      %1969 = vmatpush1.bf16.msra.mxu0 0
      %1970 = vmatprep.subr.bf16.mxu0 0
      %1971 = vmatpush1.bf16.msra.mxu0 0
      %1972 = vmatprep.subr.bf16.mxu0 0
      %1973 = vmatpush1.bf16.msra.mxu0 0
      %1974 = vmatprep.subr.bf16.mxu0 0
      %1975 = vmatpush1.bf16.msra.mxu0 0
      %1976 = vmatprep.subr.bf16.mxu0 0
      %1977 = vmatpush1.bf16.msra.mxu0 0
      %1978 = vmatprep.mubr.bf16.mxu0 0
      %1979 = vmatmul.mubr.bf16.gmra.mrb[0].mxu0 %v1518
      %v1980 = vpop.f32.mrb[0].mxu0
      %v1981 = vadd.f32 %v1848, %v1980
      %v1982 = vpop.f32.mrb[0].mxu0
      %v1983 = vadd.f32 %v1850, %v1982
      %v1984 = vpop.f32.mrb[0].mxu0
      %v1985 = vadd.f32 %v1852, %v1984
      %v1986 = vpop.f32.mrb[0].mxu0
      %v1987 = vadd.f32 %v1854, %v1986
      %1988 = vmatprep.mubr.bf16.mxu0 0
      %1989 = vmatmul.mubr.bf16.gmra.mrb[0].mxu0 %v1521
      %v1990 = vpop.f32.mrb[0].mxu0
      %v1991 = vadd.f32 %v1858, %v1990
      %v1992 = vpop.f32.mrb[0].mxu0
      %v1993 = vadd.f32 %v1860, %v1992
      %v1994 = vpop.f32.mrb[0].mxu0
      %v1995 = vadd.f32 %v1862, %v1994
      %v1996 = vpop.f32.mrb[0].mxu0
      %v1997 = vadd.f32 %v1864, %v1996
      %1998 = vmatprep.mubr.bf16.mxu0 0
      %1999 = vmatmul.mubr.bf16.gmra.mrb[0].mxu0 %v1524
      %v2000 = vpop.f32.mrb[0].mxu0
      %v2001 = vadd.f32 %v1868, %v2000
      %v2002 = vpop.f32.mrb[0].mxu0
      %v2003 = vadd.f32 %v1870, %v2002
      %v2004 = vpop.f32.mrb[0].mxu0
      %v2005 = vadd.f32 %v1872, %v2004
      %v2006 = vpop.f32.mrb[0].mxu0
      %v2007 = vadd.f32 %v1874, %v2006
      %2008 = vmatprep.mubr.bf16.mxu0 0
      %2009 = vmatmul.mubr.bf16.gmra.mrb[0].mxu0 %v1527
      %v2010 = vpop.f32.mrb[0].mxu0
      %v2011 = vadd.f32 %v1878, %v2010
      %v2012 = vpop.f32.mrb[0].mxu0
      %v2013 = vadd.f32 %v1880, %v2012
      %v2014 = vpop.f32.mrb[0].mxu0
      %v2015 = vadd.f32 %v1882, %v2014
      %v2016 = vpop.f32.mrb[0].mxu0
      %v2017 = vadd.f32 %v1884, %v2016
      %2018 = vmatprep.mubr.bf16.mxu0 0
      %2019 = vmatmul.mubr.bf16.gmra.mrb[0].mxu0 %v1530
      %v2020 = vpop.f32.mrb[0].mxu0
      %v2021 = vadd.f32 %v1888, %v2020
      %v2022 = vpop.f32.mrb[0].mxu0
      %v2023 = vadd.f32 %v1890, %v2022
      %v2024 = vpop.f32.mrb[0].mxu0
      %v2025 = vadd.f32 %v1892, %v2024
      %v2026 = vpop.f32.mrb[0].mxu0
      %v2027 = vadd.f32 %v1894, %v2026
      %2028 = vmatprep.mubr.bf16.mxu0 0
      %2029 = vmatmul.mubr.bf16.gmra.mrb[0].mxu0 %v1533
      %v2030 = vpop.f32.mrb[0].mxu0
      %v2031 = vadd.f32 %v1898, %v2030
      %v2032 = vpop.f32.mrb[0].mxu0
      %v2033 = vadd.f32 %v1900, %v2032
      %v2034 = vpop.f32.mrb[0].mxu0
      %v2035 = vadd.f32 %v1902, %v2034
      %v2036 = vpop.f32.mrb[0].mxu0
      %v2037 = vadd.f32 %v1904, %v2036
      %2038 = vmatprep.mubr.bf16.mxu0 0
      %2039 = vmatmul.mubr.bf16.gmra.mrb[0].mxu0 %v1536
      %v2040 = vpop.f32.mrb[0].mxu0
      %v2041 = vadd.f32 %v1908, %v2040
      %v2042 = vpop.f32.mrb[0].mxu0
      %v2043 = vadd.f32 %v1910, %v2042
      %v2044 = vpop.f32.mrb[0].mxu0
      %v2045 = vadd.f32 %v1912, %v2044
      %v2046 = vpop.f32.mrb[0].mxu0
      %v2047 = vadd.f32 %v1914, %v2046
      %2048 = vmatprep.mubr.bf16.mxu0 0
      %2049 = vmatmul.mubr.bf16.gmra.mrb[0].mxu0 %v1539
      %v2050 = vpop.f32.mrb[0].mxu0
      %v2051 = vadd.f32 %v1918, %v2050
      %v2052 = vpop.f32.mrb[0].mxu0
      %v2053 = vadd.f32 %v1920, %v2052
      %v2054 = vpop.f32.mrb[0].mxu0
      %v2055 = vadd.f32 %v1922, %v2054
      %v2056 = vpop.f32.mrb[0].mxu0
      %v2057 = vadd.f32 %v1924, %v2056
      %2058 = vmatprep.mubr.bf16.mxu0 0
      %2059 = vmatmul.mubr.bf16.gmra.mrb[0].mxu0 %v1542
      %v2060 = vpop.f32.mrb[0].mxu0
      %v2061 = vadd.f32 %v1928, %v2060
      %v2062 = vpop.f32.mrb[0].mxu0
      %v2063 = vadd.f32 %v1930, %v2062
      %v2064 = vpop.f32.mrb[0].mxu0
      %v2065 = vadd.f32 %v1932, %v2064
      %v2066 = vpop.f32.mrb[0].mxu0
      %v2067 = vadd.f32 %v1934, %v2066
      %2068 = vmatprep.mubr.bf16.mxu0 0
      %2069 = vmatmul.mubr.bf16.gmra.mrb[0].mxu0 %v1545
      %v2070 = vpop.f32.mrb[0].mxu0
      %v2071 = vadd.f32 %v1938, %v2070
      %v2072 = vpop.f32.mrb[0].mxu0
      %v2073 = vadd.f32 %v1940, %v2072
      %v2074 = vpop.f32.mrb[0].mxu0
      %v2075 = vadd.f32 %v1942, %v2074
      %v2076 = vpop.f32.mrb[0].mxu0
      %v2077 = vadd.f32 %v1944, %v2076
      %2078 = vdwg.mxu0
      %v2079 = vmax.f32 %v1981, 0.0
      %v2080 = vmax.f32 %v1983, 0.0
      %v2081 = vmax.f32 %v1985, 0.0
      %v2082 = vmax.f32 %v1987, 0.0
      %v2083 = vmax.f32 %v1991, 0.0
      %v2084 = vmax.f32 %v1993, 0.0
      %v2085 = vmax.f32 %v1995, 0.0
      %v2086 = vmax.f32 %v1997, 0.0
      %v2087 = vmax.f32 %v2001, 0.0
      %v2088 = vmax.f32 %v2003, 0.0
      %v2089 = vmax.f32 %v2005, 0.0
      %v2090 = vmax.f32 %v2007, 0.0
      %v2091 = vmax.f32 %v2011, 0.0
      %v2092 = vmax.f32 %v2013, 0.0
      %v2093 = vmax.f32 %v2015, 0.0
      %v2094 = vmax.f32 %v2017, 0.0
      %v2095 = vmax.f32 %v2021, 0.0
      %v2096 = vmax.f32 %v2023, 0.0
      %v2097 = vmax.f32 %v2025, 0.0
      %v2098 = vmax.f32 %v2027, 0.0
      %v2099 = vmax.f32 %v2031, 0.0
      %v2100 = vmax.f32 %v2033, 0.0
      %v2101 = vmax.f32 %v2035, 0.0
      %v2102 = vmax.f32 %v2037, 0.0
      %v2103 = vmax.f32 %v2041, 0.0
      %v2104 = vmax.f32 %v2043, 0.0
      %v2105 = vmax.f32 %v2045, 0.0
      %v2106 = vmax.f32 %v2047, 0.0
      %v2107 = vmax.f32 %v2051, 0.0
      %v2108 = vmax.f32 %v2053, 0.0
      %v2109 = vmax.f32 %v2055, 0.0
      %v2110 = vmax.f32 %v2057, 0.0
      %v2111 = vmax.f32 %v2061, 0.0
      %v2112 = vmax.f32 %v2063, 0.0
      %v2113 = vmax.f32 %v2065, 0.0
      %v2114 = vmax.f32 %v2067, 0.0
      %v2115 = vmax.f32 %v2071, 0.0
      %v2116 = vmax.f32 %v2073, 0.0
      %v2117 = vmax.f32 %v2075, 0.0
      %v2118 = vmax.f32 %v2077, 0.0
      %v2119 = vpack.c.bf16 %v2081, %v2079
      %v2120 = vpack.c.bf16 %v2082, %v2080
      %v2121 = vpack.c.bf16 %v2085, %v2083
      %v2122 = vpack.c.bf16 %v2086, %v2084
      %v2123 = vpack.c.bf16 %v2089, %v2087
      %v2124 = vpack.c.bf16 %v2090, %v2088
      %v2125 = vpack.c.bf16 %v2093, %v2091
      %v2126 = vpack.c.bf16 %v2094, %v2092
      %v2127 = vpack.c.bf16 %v2097, %v2095
      %v2128 = vpack.c.bf16 %v2098, %v2096
      %v2129 = vpack.c.bf16 %v2101, %v2099
      %v2130 = vpack.c.bf16 %v2102, %v2100
      %v2131 = vpack.c.bf16 %v2105, %v2103
      %v2132 = vpack.c.bf16 %v2106, %v2104
      %v2133 = vpack.c.bf16 %v2109, %v2107
      %v2134 = vpack.c.bf16 %v2110, %v2108
      %v2135 = vpack.c.bf16 %v2113, %v2111
      %v2136 = vpack.c.bf16 %v2114, %v2112
      %v2137 = vpack.c.bf16 %v2117, %v2115
      %v2138 = vpack.c.bf16 %v2118, %v2116
      %v2139 = vld [vmem:[%s4] sm:$0xff]
      %v2140 = vld [vmem:[%s4 + $0x8] sm:$0xff]
      %v2141 = vld [vmem:[%s4 + $0x10] sm:$0xff]
      %v2142 = vld [vmem:[%s4 + $0x18] sm:$0xff]
      %v2143 = vld [vmem:[%s4 + $0x20] sm:$0xff]
      %v2144 = vld [vmem:[%s4 + $0x28] sm:$0xff]
      %v2145 = vld [vmem:[%s4 + $0x30] sm:$0xff]
      %v2146 = vld [vmem:[%s4 + $0x38] sm:$0xff]
      %v2147 = vld [vmem:[%s4 + $0x40] sm:$0xff]
      %v2148 = vld [vmem:[%s4 + $0x48] sm:$0xff]
      %v2149 = vld [vmem:[%s4 + $0x50] sm:$0xff]
      %v2150 = vld [vmem:[%s4 + $0x58] sm:$0xff]
      %v2151 = vld [vmem:[%s4 + $0x60] sm:$0xff]
      %v2152 = vld [vmem:[%s4 + $0x68] sm:$0xff]
      %v2153 = vld [vmem:[%s4 + $0x70] sm:$0xff]
      %v2154 = vld [vmem:[%s4 + $0x78] sm:$0xff]
      %v2155 = vld [vmem:[%s4 + $0x80] sm:$0xff]
      %v2156 = vld [vmem:[%s4 + $0x88] sm:$0xff]
      %v2157 = vld [vmem:[%s4 + $0x90] sm:$0xff]
      %v2158 = vld [vmem:[%s4 + $0x98] sm:$0xff]
      %v2159 = vld [vmem:[%s4 + $0xa0] sm:$0xff]
      %v2160 = vld [vmem:[%s4 + $0xa8] sm:$0xff]
      %v2161 = vld [vmem:[%s4 + $0xb0] sm:$0xff]
      %v2162 = vld [vmem:[%s4 + $0xb8] sm:$0xff]
      %v2163 = vld [vmem:[%s4 + $0xc0] sm:$0xff]
      %v2164 = vld [vmem:[%s4 + $0xc8] sm:$0xff]
      %v2165 = vld [vmem:[%s4 + $0xd0] sm:$0xff]
      %v2166 = vld [vmem:[%s4 + $0xd8] sm:$0xff]
      %v2167 = vld [vmem:[%s4 + $0xe0] sm:$0xff]
      %v2168 = vld [vmem:[%s4 + $0xe8] sm:$0xff]
      %v2169 = vld [vmem:[%s4 + $0xf0] sm:$0xff]
      %v2170 = vld [vmem:[%s4 + $0xf8] sm:$0xff]
      %v2171 = vld [vmem:[%s4 + $0x100] sm:$0xff]
      %v2172 = vld [vmem:[%s4 + $0x108] sm:$0xff]
      %v2173 = vld [vmem:[%s4 + $0x110] sm:$0xff]
      %v2174 = vld [vmem:[%s4 + $0x118] sm:$0xff]
      %v2175 = vld [vmem:[%s4 + $0x120] sm:$0xff]
      %v2176 = vld [vmem:[%s4 + $0x128] sm:$0xff]
      %v2177 = vld [vmem:[%s4 + $0x130] sm:$0xff]
      %v2178 = vld [vmem:[%s4 + $0x138] sm:$0xff]
      %v2179 = vld [vmem:[%s4 + $0x140] sm:$0xff]
      %v2180 = vld [vmem:[%s4 + $0x148] sm:$0xff]
      %v2181 = vld [vmem:[%s4 + $0x150] sm:$0xff]
      %v2182 = vld [vmem:[%s4 + $0x158] sm:$0xff]
      %v2183 = vld [vmem:[%s4 + $0x160] sm:$0xff]
      %v2184 = vld [vmem:[%s4 + $0x168] sm:$0xff]
      %v2185 = vld [vmem:[%s4 + $0x170] sm:$0xff]
      %v2186 = vld [vmem:[%s4 + $0x178] sm:$0xff]
      %v2187 = vld [vmem:[%s4 + $0x180] sm:$0xff]
      %v2188 = vld [vmem:[%s4 + $0x188] sm:$0xff]
      %v2189 = vld [vmem:[%s4 + $0x190] sm:$0xff]
      %v2190 = vld [vmem:[%s4 + $0x198] sm:$0xff]
      %v2191 = vld [vmem:[%s4 + $0x1a0] sm:$0xff]
      %v2192 = vld [vmem:[%s4 + $0x1a8] sm:$0xff]
      %v2193 = vld [vmem:[%s4 + $0x1b0] sm:$0xff]
      %v2194 = vld [vmem:[%s4 + $0x1b8] sm:$0xff]
      %v2195 = vld [vmem:[%s4 + $0x1c0] sm:$0xff]
      %v2196 = vld [vmem:[%s4 + $0x1c8] sm:$0xff]
      %v2197 = vld [vmem:[%s4 + $0x1d0] sm:$0xff]
      %v2198 = vld [vmem:[%s4 + $0x1d8] sm:$0xff]
      %v2199 = vld [vmem:[%s4 + $0x1e0] sm:$0xff]
      %v2200 = vld [vmem:[%s4 + $0x1e8] sm:$0xff]
      %v2201 = vld [vmem:[%s4 + $0x1f0] sm:$0xff]
      %v2202 = vld [vmem:[%s4 + $0x1f8] sm:$0xff]
      %v2203 = vld [vmem:[%s5] sm:$0xf]
      %v2205 = vlaneseq
      %v2206 = vshrl.u32 %v2205, 7
      %v2207 = vsub.s32 0, %v2206
      %v2208 = vrot.slane %v2203, %v2207
      %v2209 = vlaneseq
      %v2210 = vshrl.u32 %v2209, 7
      %v2211 = vsub.s32 1, %v2210
      %v2212 = vrot.slane %v2203, %v2211
      %v2213 = vlaneseq
      %v2214 = vshrl.u32 %v2213, 7
      %v2215 = vsub.s32 2, %v2214
      %v2216 = vrot.slane %v2203, %v2215
      %v2217 = vlaneseq
      %v2218 = vshrl.u32 %v2217, 7
      %v2219 = vsub.s32 3, %v2218
      %v2220 = vrot.slane %v2203, %v2219
      %v2289 = vunpack.c.l.b16 %v2139
      %v2290 = vunpack.c.h.b16 %v2139
      %v2291 = vunpack.c.l.b16 %v2140
      %v2292 = vunpack.c.h.b16 %v2140
      %v2293 = vunpack.c.l.b16 %v2141
      %v2294 = vunpack.c.h.b16 %v2141
      %v2295 = vunpack.c.l.b16 %v2142
      %v2296 = vunpack.c.h.b16 %v2142
      %v2297 = vunpack.c.l.b16 %v2143
      %v2298 = vunpack.c.h.b16 %v2143
      %v2299 = vunpack.c.l.b16 %v2144
      %v2300 = vunpack.c.h.b16 %v2144
      %v2301 = vunpack.c.l.b16 %v2145
      %v2302 = vunpack.c.h.b16 %v2145
      %v2303 = vunpack.c.l.b16 %v2146
      %v2304 = vunpack.c.h.b16 %v2146
      %v2305 = vunpack.c.l.b16 %v2147
      %v2306 = vunpack.c.h.b16 %v2147
      %v2307 = vunpack.c.l.b16 %v2148
      %v2308 = vunpack.c.h.b16 %v2148
      %v2309 = vunpack.c.l.b16 %v2149
      %v2310 = vunpack.c.h.b16 %v2149
      %v2311 = vunpack.c.l.b16 %v2150
      %v2312 = vunpack.c.h.b16 %v2150
      %v2313 = vunpack.c.l.b16 %v2151
      %v2314 = vunpack.c.h.b16 %v2151
      %v2315 = vunpack.c.l.b16 %v2152
      %v2316 = vunpack.c.h.b16 %v2152
      %v2317 = vunpack.c.l.b16 %v2153
      %v2318 = vunpack.c.h.b16 %v2153
      %v2319 = vunpack.c.l.b16 %v2154
      %v2320 = vunpack.c.h.b16 %v2154
      %v2321 = vunpack.c.l.b16 %v2155
      %v2322 = vunpack.c.h.b16 %v2155
      %v2323 = vunpack.c.l.b16 %v2156
      %v2324 = vunpack.c.h.b16 %v2156
      %v2325 = vunpack.c.l.b16 %v2157
      %v2326 = vunpack.c.h.b16 %v2157
      %v2327 = vunpack.c.l.b16 %v2158
      %v2328 = vunpack.c.h.b16 %v2158
      %v2329 = vunpack.c.l.b16 %v2159
      %v2330 = vunpack.c.h.b16 %v2159
      %v2331 = vunpack.c.l.b16 %v2160
      %v2332 = vunpack.c.h.b16 %v2160
      %v2333 = vunpack.c.l.b16 %v2161
      %v2334 = vunpack.c.h.b16 %v2161
      %v2335 = vunpack.c.l.b16 %v2162
      %v2336 = vunpack.c.h.b16 %v2162
      %v2337 = vunpack.c.l.b16 %v2163
      %v2338 = vunpack.c.h.b16 %v2163
      %v2339 = vunpack.c.l.b16 %v2164
      %v2340 = vunpack.c.h.b16 %v2164
      %v2341 = vunpack.c.l.b16 %v2165
      %v2342 = vunpack.c.h.b16 %v2165
      %v2343 = vunpack.c.l.b16 %v2166
      %v2344 = vunpack.c.h.b16 %v2166
      %v2345 = vunpack.c.l.b16 %v2167
      %v2346 = vunpack.c.h.b16 %v2167
      %v2347 = vunpack.c.l.b16 %v2168
      %v2348 = vunpack.c.h.b16 %v2168
      %v2349 = vunpack.c.l.b16 %v2169
      %v2350 = vunpack.c.h.b16 %v2169
      %v2351 = vunpack.c.l.b16 %v2170
      %v2352 = vunpack.c.h.b16 %v2170
      %v2353 = vunpack.c.l.b16 %v2171
      %v2354 = vunpack.c.h.b16 %v2171
      %v2355 = vunpack.c.l.b16 %v2172
      %v2356 = vunpack.c.h.b16 %v2172
      %v2357 = vunpack.c.l.b16 %v2173
      %v2358 = vunpack.c.h.b16 %v2173
      %v2359 = vunpack.c.l.b16 %v2174
      %v2360 = vunpack.c.h.b16 %v2174
      %v2361 = vunpack.c.l.b16 %v2175
      %v2362 = vunpack.c.h.b16 %v2175
      %v2363 = vunpack.c.l.b16 %v2176
      %v2364 = vunpack.c.h.b16 %v2176
      %v2365 = vunpack.c.l.b16 %v2177
      %v2366 = vunpack.c.h.b16 %v2177
      %v2367 = vunpack.c.l.b16 %v2178
      %v2368 = vunpack.c.h.b16 %v2178
      %v2369 = vunpack.c.l.b16 %v2179
      %v2370 = vunpack.c.h.b16 %v2179
      %v2371 = vunpack.c.l.b16 %v2180
      %v2372 = vunpack.c.h.b16 %v2180
      %v2373 = vunpack.c.l.b16 %v2181
      %v2374 = vunpack.c.h.b16 %v2181
      %v2375 = vunpack.c.l.b16 %v2182
      %v2376 = vunpack.c.h.b16 %v2182
      %v2377 = vunpack.c.l.b16 %v2183
      %v2378 = vunpack.c.h.b16 %v2183
      %v2379 = vunpack.c.l.b16 %v2184
      %v2380 = vunpack.c.h.b16 %v2184
      %v2381 = vunpack.c.l.b16 %v2185
      %v2382 = vunpack.c.h.b16 %v2185
      %v2383 = vunpack.c.l.b16 %v2186
      %v2384 = vunpack.c.h.b16 %v2186
      %v2385 = vunpack.c.l.b16 %v2187
      %v2386 = vunpack.c.h.b16 %v2187
      %v2387 = vunpack.c.l.b16 %v2188
      %v2388 = vunpack.c.h.b16 %v2188
      %v2389 = vunpack.c.l.b16 %v2189
      %v2390 = vunpack.c.h.b16 %v2189
      %v2391 = vunpack.c.l.b16 %v2190
      %v2392 = vunpack.c.h.b16 %v2190
      %v2393 = vunpack.c.l.b16 %v2191
      %v2394 = vunpack.c.h.b16 %v2191
      %v2395 = vunpack.c.l.b16 %v2192
      %v2396 = vunpack.c.h.b16 %v2192
      %v2397 = vunpack.c.l.b16 %v2193
      %v2398 = vunpack.c.h.b16 %v2193
      %v2399 = vunpack.c.l.b16 %v2194
      %v2400 = vunpack.c.h.b16 %v2194
      %v2401 = vunpack.c.l.b16 %v2195
      %v2402 = vunpack.c.h.b16 %v2195
      %v2403 = vunpack.c.l.b16 %v2196
      %v2404 = vunpack.c.h.b16 %v2196
      %v2405 = vunpack.c.l.b16 %v2197
      %v2406 = vunpack.c.h.b16 %v2197
      %v2407 = vunpack.c.l.b16 %v2198
      %v2408 = vunpack.c.h.b16 %v2198
      %v2409 = vunpack.c.l.b16 %v2199
      %v2410 = vunpack.c.h.b16 %v2199
      %v2411 = vunpack.c.l.b16 %v2200
      %v2412 = vunpack.c.h.b16 %v2200
      %v2413 = vunpack.c.l.b16 %v2201
      %v2414 = vunpack.c.h.b16 %v2201
      %v2415 = vunpack.c.l.b16 %v2202
      %v2416 = vunpack.c.h.b16 %v2202
      %v2417 = vpack.c.b16 %v2293, %v2289
      %v2418 = vpack.c.b16 %v2294, %v2290
      %v2419 = vpack.c.b16 %v2295, %v2291
      %v2420 = vpack.c.b16 %v2296, %v2292
      %v2421 = vpack.c.b16 %v2301, %v2297
      %v2422 = vpack.c.b16 %v2302, %v2298
      %v2423 = vpack.c.b16 %v2303, %v2299
      %v2424 = vpack.c.b16 %v2304, %v2300
      %v2425 = vpack.c.b16 %v2309, %v2305
      %v2426 = vpack.c.b16 %v2310, %v2306
      %v2427 = vpack.c.b16 %v2311, %v2307
      %v2428 = vpack.c.b16 %v2312, %v2308
      %v2429 = vpack.c.b16 %v2317, %v2313
      %v2430 = vpack.c.b16 %v2318, %v2314
      %v2431 = vpack.c.b16 %v2319, %v2315
      %v2432 = vpack.c.b16 %v2320, %v2316
      %v2433 = vpack.c.b16 %v2325, %v2321
      %v2434 = vpack.c.b16 %v2326, %v2322
      %v2435 = vpack.c.b16 %v2327, %v2323
      %v2436 = vpack.c.b16 %v2328, %v2324
      %v2437 = vpack.c.b16 %v2333, %v2329
      %v2438 = vpack.c.b16 %v2334, %v2330
      %v2439 = vpack.c.b16 %v2335, %v2331
      %v2440 = vpack.c.b16 %v2336, %v2332
      %v2441 = vpack.c.b16 %v2341, %v2337
      %v2442 = vpack.c.b16 %v2342, %v2338
      %v2443 = vpack.c.b16 %v2343, %v2339
      %v2444 = vpack.c.b16 %v2344, %v2340
      %v2445 = vpack.c.b16 %v2349, %v2345
      %v2446 = vpack.c.b16 %v2350, %v2346
      %v2447 = vpack.c.b16 %v2351, %v2347
      %v2448 = vpack.c.b16 %v2352, %v2348
      %v2449 = vpack.c.b16 %v2357, %v2353
      %v2450 = vpack.c.b16 %v2358, %v2354
      %v2451 = vpack.c.b16 %v2359, %v2355
      %v2452 = vpack.c.b16 %v2360, %v2356
      %v2453 = vpack.c.b16 %v2365, %v2361
      %v2454 = vpack.c.b16 %v2366, %v2362
      %v2455 = vpack.c.b16 %v2367, %v2363
      %v2456 = vpack.c.b16 %v2368, %v2364
      %v2457 = vpack.c.b16 %v2373, %v2369
      %v2458 = vpack.c.b16 %v2374, %v2370
      %v2459 = vpack.c.b16 %v2375, %v2371
      %v2460 = vpack.c.b16 %v2376, %v2372
      %v2461 = vpack.c.b16 %v2381, %v2377
      %v2462 = vpack.c.b16 %v2382, %v2378
      %v2463 = vpack.c.b16 %v2383, %v2379
      %v2464 = vpack.c.b16 %v2384, %v2380
      %v2465 = vpack.c.b16 %v2389, %v2385
      %v2466 = vpack.c.b16 %v2390, %v2386
      %v2467 = vpack.c.b16 %v2391, %v2387
      %v2468 = vpack.c.b16 %v2392, %v2388
      %v2469 = vpack.c.b16 %v2397, %v2393
      %v2470 = vpack.c.b16 %v2398, %v2394
      %v2471 = vpack.c.b16 %v2399, %v2395
      %v2472 = vpack.c.b16 %v2400, %v2396
      %v2473 = vpack.c.b16 %v2405, %v2401
      %v2474 = vpack.c.b16 %v2406, %v2402
      %v2475 = vpack.c.b16 %v2407, %v2403
      %v2476 = vpack.c.b16 %v2408, %v2404
      %v2477 = vpack.c.b16 %v2413, %v2409
      %v2478 = vpack.c.b16 %v2414, %v2410
      %v2479 = vpack.c.b16 %v2415, %v2411
      %v2480 = vpack.c.b16 %v2416, %v2412
      %2545 = vmatprep.subr.bf16.mxu0 %v2418
      %2546 = vmatpush1.bf16.msra.mxu0 %v2417
      %2547 = vmatprep.subr.bf16.mxu0 %v2422
      %2548 = vmatpush1.bf16.msra.mxu0 %v2421
      %2549 = vmatprep.subr.bf16.mxu0 %v2426
      %2550 = vmatpush1.bf16.msra.mxu0 %v2425
      %2551 = vmatprep.subr.bf16.mxu0 %v2430
      %2552 = vmatpush1.bf16.msra.mxu0 %v2429
      %2553 = vmatprep.subr.bf16.mxu0 %v2434
      %2554 = vmatpush1.bf16.msra.mxu0 %v2433
      %2555 = vmatprep.subr.bf16.mxu0 %v2438
      %2556 = vmatpush1.bf16.msra.mxu0 %v2437
      %2557 = vmatprep.subr.bf16.mxu0 %v2442
      %2558 = vmatpush1.bf16.msra.mxu0 %v2441
      %2559 = vmatprep.subr.bf16.mxu0 %v2446
      %2560 = vmatpush1.bf16.msra.mxu0 %v2445
      %2561 = vmatprep.subr.bf16.mxu0 %v2450
      %2562 = vmatpush1.bf16.msra.mxu0 %v2449
      %2563 = vmatprep.subr.bf16.mxu0 %v2454
      %2564 = vmatpush1.bf16.msra.mxu0 %v2453
      %2565 = vmatprep.subr.bf16.mxu0 %v2458
      %2566 = vmatpush1.bf16.msra.mxu0 %v2457
      %2567 = vmatprep.subr.bf16.mxu0 %v2462
      %2568 = vmatpush1.bf16.msra.mxu0 %v2461
      %2569 = vmatprep.subr.bf16.mxu0 %v2466
      %2570 = vmatpush1.bf16.msra.mxu0 %v2465
      %2571 = vmatprep.subr.bf16.mxu0 %v2470
      %2572 = vmatpush1.bf16.msra.mxu0 %v2469
      %2573 = vmatprep.subr.bf16.mxu0 %v2474
      %2574 = vmatpush1.bf16.msra.mxu0 %v2473
      %2575 = vmatprep.subr.bf16.mxu0 %v2478
      %2576 = vmatpush1.bf16.msra.mxu0 %v2477
      %2577 = vmatprep.mubr.bf16.mxu0 %v2120
      %2578 = vmatmul.mubr.bf16.gmra.mrb[0].mxu0 %v2119
      %v2579 = vpop.f32.mrb[0].mxu0
      %v2580 = vadd.f32 %v2208, %v2579
      %v2581 = vpop.f32.mrb[0].mxu0
      %v2582 = vadd.f32 %v2212, %v2581
      %v2583 = vpop.f32.mrb[0].mxu0
      %v2584 = vadd.f32 %v2208, %v2583
      %v2585 = vpop.f32.mrb[0].mxu0
      %v2586 = vadd.f32 %v2212, %v2585
      %2587 = vmatprep.mubr.bf16.mxu0 %v2122
      %2588 = vmatmul.mubr.bf16.gmra.mrb[0].mxu0 %v2121
      %v2589 = vpop.f32.mrb[0].mxu0
      %v2590 = vadd.f32 %v2208, %v2589
      %v2591 = vpop.f32.mrb[0].mxu0
      %v2592 = vadd.f32 %v2212, %v2591
      %v2593 = vpop.f32.mrb[0].mxu0
      %v2594 = vadd.f32 %v2208, %v2593
      %v2595 = vpop.f32.mrb[0].mxu0
      %v2596 = vadd.f32 %v2212, %v2595
      %2597 = vmatprep.mubr.bf16.mxu0 %v2124
      %2598 = vmatmul.mubr.bf16.gmra.mrb[0].mxu0 %v2123
      %v2599 = vpop.f32.mrb[0].mxu0
      %v2600 = vadd.f32 %v2208, %v2599
      %v2601 = vpop.f32.mrb[0].mxu0
      %v2602 = vadd.f32 %v2212, %v2601
      %v2603 = vpop.f32.mrb[0].mxu0
      %v2604 = vadd.f32 %v2208, %v2603
      %v2605 = vpop.f32.mrb[0].mxu0
      %v2606 = vadd.f32 %v2212, %v2605
      %2607 = vmatprep.mubr.bf16.mxu0 %v2126
      %2608 = vmatmul.mubr.bf16.gmra.mrb[0].mxu0 %v2125
      %v2609 = vpop.f32.mrb[0].mxu0
      %v2610 = vadd.f32 %v2208, %v2609
      %v2611 = vpop.f32.mrb[0].mxu0
      %v2612 = vadd.f32 %v2212, %v2611
      %v2613 = vpop.f32.mrb[0].mxu0
      %v2614 = vadd.f32 %v2208, %v2613
      %v2615 = vpop.f32.mrb[0].mxu0
      %v2616 = vadd.f32 %v2212, %v2615
      %2617 = vmatprep.mubr.bf16.mxu0 %v2128
      %2618 = vmatmul.mubr.bf16.gmra.mrb[0].mxu0 %v2127
      %v2619 = vpop.f32.mrb[0].mxu0
      %v2620 = vadd.f32 %v2208, %v2619
      %v2621 = vpop.f32.mrb[0].mxu0
      %v2622 = vadd.f32 %v2212, %v2621
      %v2623 = vpop.f32.mrb[0].mxu0
      %v2624 = vadd.f32 %v2208, %v2623
      %v2625 = vpop.f32.mrb[0].mxu0
      %v2626 = vadd.f32 %v2212, %v2625
      %2627 = vmatprep.mubr.bf16.mxu0 %v2130
      %2628 = vmatmul.mubr.bf16.gmra.mrb[0].mxu0 %v2129
      %v2629 = vpop.f32.mrb[0].mxu0
      %v2630 = vadd.f32 %v2208, %v2629
      %v2631 = vpop.f32.mrb[0].mxu0
      %v2632 = vadd.f32 %v2212, %v2631
      %v2633 = vpop.f32.mrb[0].mxu0
      %v2634 = vadd.f32 %v2208, %v2633
      %v2635 = vpop.f32.mrb[0].mxu0
      %v2636 = vadd.f32 %v2212, %v2635
      %2637 = vmatprep.mubr.bf16.mxu0 %v2132
      %2638 = vmatmul.mubr.bf16.gmra.mrb[0].mxu0 %v2131
      %v2639 = vpop.f32.mrb[0].mxu0
      %v2640 = vadd.f32 %v2208, %v2639
      %v2641 = vpop.f32.mrb[0].mxu0
      %v2642 = vadd.f32 %v2212, %v2641
      %v2643 = vpop.f32.mrb[0].mxu0
      %v2644 = vadd.f32 %v2208, %v2643
      %v2645 = vpop.f32.mrb[0].mxu0
      %v2646 = vadd.f32 %v2212, %v2645
      %2647 = vmatprep.mubr.bf16.mxu0 %v2134
      %2648 = vmatmul.mubr.bf16.gmra.mrb[0].mxu0 %v2133
      %v2649 = vpop.f32.mrb[0].mxu0
      %v2650 = vadd.f32 %v2208, %v2649
      %v2651 = vpop.f32.mrb[0].mxu0
      %v2652 = vadd.f32 %v2212, %v2651
      %v2653 = vpop.f32.mrb[0].mxu0
      %v2654 = vadd.f32 %v2208, %v2653
      %v2655 = vpop.f32.mrb[0].mxu0
      %v2656 = vadd.f32 %v2212, %v2655
      %2657 = vmatprep.mubr.bf16.mxu0 %v2136
      %2658 = vmatmul.mubr.bf16.gmra.mrb[0].mxu0 %v2135
      %v2659 = vpop.f32.mrb[0].mxu0
      %v2660 = vadd.f32 %v2208, %v2659
      %v2661 = vpop.f32.mrb[0].mxu0
      %v2662 = vadd.f32 %v2212, %v2661
      %v2663 = vpop.f32.mrb[0].mxu0
      %v2664 = vadd.f32 %v2208, %v2663
      %v2665 = vpop.f32.mrb[0].mxu0
      %v2666 = vadd.f32 %v2212, %v2665
      %2667 = vmatprep.mubr.bf16.mxu0 %v2138
      %2668 = vmatmul.mubr.bf16.gmra.mrb[0].mxu0 %v2137
      %v2669 = vpop.f32.mrb[0].mxu0
      %v2670 = vadd.f32 %v2208, %v2669
      %v2671 = vpop.f32.mrb[0].mxu0
      %v2672 = vadd.f32 %v2212, %v2671
      %v2673 = vpop.f32.mrb[0].mxu0
      %v2674 = vadd.f32 %v2208, %v2673
      %v2675 = vpop.f32.mrb[0].mxu0
      %v2676 = vadd.f32 %v2212, %v2675
      %2677 = vdwg.mxu0
      %2678 = vmatprep.subr.bf16.mxu0 %v2420
      %2679 = vmatpush1.bf16.msra.mxu0 %v2419
      %2680 = vmatprep.subr.bf16.mxu0 %v2424
      %2681 = vmatpush1.bf16.msra.mxu0 %v2423
      %2682 = vmatprep.subr.bf16.mxu0 %v2428
      %2683 = vmatpush1.bf16.msra.mxu0 %v2427
      %2684 = vmatprep.subr.bf16.mxu0 %v2432
      %2685 = vmatpush1.bf16.msra.mxu0 %v2431
      %2686 = vmatprep.subr.bf16.mxu0 %v2436
      %2687 = vmatpush1.bf16.msra.mxu0 %v2435
      %2688 = vmatprep.subr.bf16.mxu0 %v2440
      %2689 = vmatpush1.bf16.msra.mxu0 %v2439
      %2690 = vmatprep.subr.bf16.mxu0 %v2444
      %2691 = vmatpush1.bf16.msra.mxu0 %v2443
      %2692 = vmatprep.subr.bf16.mxu0 %v2448
      %2693 = vmatpush1.bf16.msra.mxu0 %v2447
      %2694 = vmatprep.subr.bf16.mxu0 %v2452
      %2695 = vmatpush1.bf16.msra.mxu0 %v2451
      %2696 = vmatprep.subr.bf16.mxu0 %v2456
      %2697 = vmatpush1.bf16.msra.mxu0 %v2455
      %2698 = vmatprep.subr.bf16.mxu0 %v2460
      %2699 = vmatpush1.bf16.msra.mxu0 %v2459
      %2700 = vmatprep.subr.bf16.mxu0 %v2464
      %2701 = vmatpush1.bf16.msra.mxu0 %v2463
      %2702 = vmatprep.subr.bf16.mxu0 %v2468
      %2703 = vmatpush1.bf16.msra.mxu0 %v2467
      %2704 = vmatprep.subr.bf16.mxu0 %v2472
      %2705 = vmatpush1.bf16.msra.mxu0 %v2471
      %2706 = vmatprep.subr.bf16.mxu0 %v2476
      %2707 = vmatpush1.bf16.msra.mxu0 %v2475
      %2708 = vmatprep.subr.bf16.mxu0 %v2480
      %2709 = vmatpush1.bf16.msra.mxu0 %v2479
      %2710 = vmatprep.mubr.bf16.mxu0 %v2120
      %2711 = vmatmul.mubr.bf16.gmra.mrb[0].mxu0 %v2119
      %v2712 = vpop.f32.mrb[0].mxu0
      %v2713 = vadd.f32 %v2216, %v2712
      %v2714 = vpop.f32.mrb[0].mxu0
      %v2715 = vadd.f32 %v2220, %v2714
      %v2716 = vpop.f32.mrb[0].mxu0
      %v2717 = vadd.f32 %v2216, %v2716
      %v2718 = vpop.f32.mrb[0].mxu0
      %v2719 = vadd.f32 %v2220, %v2718
      %2720 = vmatprep.mubr.bf16.mxu0 %v2122
      %2721 = vmatmul.mubr.bf16.gmra.mrb[0].mxu0 %v2121
      %v2722 = vpop.f32.mrb[0].mxu0
      %v2723 = vadd.f32 %v2216, %v2722
      %v2724 = vpop.f32.mrb[0].mxu0
      %v2725 = vadd.f32 %v2220, %v2724
      %v2726 = vpop.f32.mrb[0].mxu0
      %v2727 = vadd.f32 %v2216, %v2726
      %v2728 = vpop.f32.mrb[0].mxu0
      %v2729 = vadd.f32 %v2220, %v2728
      %2730 = vmatprep.mubr.bf16.mxu0 %v2124
      %2731 = vmatmul.mubr.bf16.gmra.mrb[0].mxu0 %v2123
      %v2732 = vpop.f32.mrb[0].mxu0
      %v2733 = vadd.f32 %v2216, %v2732
      %v2734 = vpop.f32.mrb[0].mxu0
      %v2735 = vadd.f32 %v2220, %v2734
      %v2736 = vpop.f32.mrb[0].mxu0
      %v2737 = vadd.f32 %v2216, %v2736
      %v2738 = vpop.f32.mrb[0].mxu0
      %v2739 = vadd.f32 %v2220, %v2738
      %2740 = vmatprep.mubr.bf16.mxu0 %v2126
      %2741 = vmatmul.mubr.bf16.gmra.mrb[0].mxu0 %v2125
      %v2742 = vpop.f32.mrb[0].mxu0
      %v2743 = vadd.f32 %v2216, %v2742
      %v2744 = vpop.f32.mrb[0].mxu0
      %v2745 = vadd.f32 %v2220, %v2744
      %v2746 = vpop.f32.mrb[0].mxu0
      %v2747 = vadd.f32 %v2216, %v2746
      %v2748 = vpop.f32.mrb[0].mxu0
      %v2749 = vadd.f32 %v2220, %v2748
      %2750 = vmatprep.mubr.bf16.mxu0 %v2128
      %2751 = vmatmul.mubr.bf16.gmra.mrb[0].mxu0 %v2127
      %v2752 = vpop.f32.mrb[0].mxu0
      %v2753 = vadd.f32 %v2216, %v2752
      %v2754 = vpop.f32.mrb[0].mxu0
      %v2755 = vadd.f32 %v2220, %v2754
      %v2756 = vpop.f32.mrb[0].mxu0
      %v2757 = vadd.f32 %v2216, %v2756
      %v2758 = vpop.f32.mrb[0].mxu0
      %v2759 = vadd.f32 %v2220, %v2758
      %2760 = vmatprep.mubr.bf16.mxu0 %v2130
      %2761 = vmatmul.mubr.bf16.gmra.mrb[0].mxu0 %v2129
      %v2762 = vpop.f32.mrb[0].mxu0
      %v2763 = vadd.f32 %v2216, %v2762
      %v2764 = vpop.f32.mrb[0].mxu0
      %v2765 = vadd.f32 %v2220, %v2764
      %v2766 = vpop.f32.mrb[0].mxu0
      %v2767 = vadd.f32 %v2216, %v2766
      %v2768 = vpop.f32.mrb[0].mxu0
      %v2769 = vadd.f32 %v2220, %v2768
      %2770 = vmatprep.mubr.bf16.mxu0 %v2132
      %2771 = vmatmul.mubr.bf16.gmra.mrb[0].mxu0 %v2131
      %v2772 = vpop.f32.mrb[0].mxu0
      %v2773 = vadd.f32 %v2216, %v2772
      %v2774 = vpop.f32.mrb[0].mxu0
      %v2775 = vadd.f32 %v2220, %v2774
      %v2776 = vpop.f32.mrb[0].mxu0
      %v2777 = vadd.f32 %v2216, %v2776
      %v2778 = vpop.f32.mrb[0].mxu0
      %v2779 = vadd.f32 %v2220, %v2778
      %2780 = vmatprep.mubr.bf16.mxu0 %v2134
      %2781 = vmatmul.mubr.bf16.gmra.mrb[0].mxu0 %v2133
      %v2782 = vpop.f32.mrb[0].mxu0
      %v2783 = vadd.f32 %v2216, %v2782
      %v2784 = vpop.f32.mrb[0].mxu0
      %v2785 = vadd.f32 %v2220, %v2784
      %v2786 = vpop.f32.mrb[0].mxu0
      %v2787 = vadd.f32 %v2216, %v2786
      %v2788 = vpop.f32.mrb[0].mxu0
      %v2789 = vadd.f32 %v2220, %v2788
      %2790 = vmatprep.mubr.bf16.mxu0 %v2136
      %2791 = vmatmul.mubr.bf16.gmra.mrb[0].mxu0 %v2135
      %v2792 = vpop.f32.mrb[0].mxu0
      %v2793 = vadd.f32 %v2216, %v2792
      %v2794 = vpop.f32.mrb[0].mxu0
      %v2795 = vadd.f32 %v2220, %v2794
      %v2796 = vpop.f32.mrb[0].mxu0
      %v2797 = vadd.f32 %v2216, %v2796
      %v2798 = vpop.f32.mrb[0].mxu0
      %v2799 = vadd.f32 %v2220, %v2798
      %2800 = vmatprep.mubr.bf16.mxu0 %v2138
      %2801 = vmatmul.mubr.bf16.gmra.mrb[0].mxu0 %v2137
      %v2802 = vpop.f32.mrb[0].mxu0
      %v2803 = vadd.f32 %v2216, %v2802
      %v2804 = vpop.f32.mrb[0].mxu0
      %v2805 = vadd.f32 %v2220, %v2804
      %v2806 = vpop.f32.mrb[0].mxu0
      %v2807 = vadd.f32 %v2216, %v2806
      %v2808 = vpop.f32.mrb[0].mxu0
      %v2809 = vadd.f32 %v2220, %v2808
      %2810 = vdwg.mxu0
      %v2811 = vtanh.pop %v2580
      %v2812 = vtanh.pop %v2582
      %v2813 = vtanh.pop %v2713
      %v2814 = vtanh.pop %v2715
      %v2815 = vtanh.pop %v2584
      %v2816 = vtanh.pop %v2586
      %v2817 = vtanh.pop %v2717
      %v2818 = vtanh.pop %v2719
      %v2819 = vtanh.pop %v2590
      %v2820 = vtanh.pop %v2592
      %v2821 = vtanh.pop %v2723
      %v2822 = vtanh.pop %v2725
      %v2823 = vtanh.pop %v2594
      %v2824 = vtanh.pop %v2596
      %v2825 = vtanh.pop %v2727
      %v2826 = vtanh.pop %v2729
      %v2827 = vtanh.pop %v2600
      %v2828 = vtanh.pop %v2602
      %v2829 = vtanh.pop %v2733
      %v2830 = vtanh.pop %v2735
      %v2831 = vtanh.pop %v2604
      %v2832 = vtanh.pop %v2606
      %v2833 = vtanh.pop %v2737
      %v2834 = vtanh.pop %v2739
      %v2835 = vtanh.pop %v2610
      %v2836 = vtanh.pop %v2612
      %v2837 = vtanh.pop %v2743
      %v2838 = vtanh.pop %v2745
      %v2839 = vtanh.pop %v2614
      %v2840 = vtanh.pop %v2616
      %v2841 = vtanh.pop %v2747
      %v2842 = vtanh.pop %v2749
      %v2843 = vtanh.pop %v2620
      %v2844 = vtanh.pop %v2622
      %v2845 = vtanh.pop %v2753
      %v2846 = vtanh.pop %v2755
      %v2847 = vtanh.pop %v2624
      %v2848 = vtanh.pop %v2626
      %v2849 = vtanh.pop %v2757
      %v2850 = vtanh.pop %v2759
      %v2851 = vtanh.pop %v2630
      %v2852 = vtanh.pop %v2632
      %v2853 = vtanh.pop %v2763
      %v2854 = vtanh.pop %v2765
      %v2855 = vtanh.pop %v2634
      %v2856 = vtanh.pop %v2636
      %v2857 = vtanh.pop %v2767
      %v2858 = vtanh.pop %v2769
      %v2859 = vtanh.pop %v2640
      %v2860 = vtanh.pop %v2642
      %v2861 = vtanh.pop %v2773
      %v2862 = vtanh.pop %v2775
      %v2863 = vtanh.pop %v2644
      %v2864 = vtanh.pop %v2646
      %v2865 = vtanh.pop %v2777
      %v2866 = vtanh.pop %v2779
      %v2867 = vtanh.pop %v2650
      %v2868 = vtanh.pop %v2652
      %v2869 = vtanh.pop %v2783
      %v2870 = vtanh.pop %v2785
      %v2871 = vtanh.pop %v2654
      %v2872 = vtanh.pop %v2656
      %v2873 = vtanh.pop %v2787
      %v2874 = vtanh.pop %v2789
      %v2875 = vtanh.pop %v2660
      %v2876 = vtanh.pop %v2662
      %v2877 = vtanh.pop %v2793
      %v2878 = vtanh.pop %v2795
      %v2879 = vtanh.pop %v2664
      %v2880 = vtanh.pop %v2666
      %v2881 = vtanh.pop %v2797
      %v2882 = vtanh.pop %v2799
      %v2883 = vtanh.pop %v2670
      %v2884 = vtanh.pop %v2672
      %v2885 = vtanh.pop %v2803
      %v2886 = vtanh.pop %v2805
      %v2887 = vtanh.pop %v2674
      %v2888 = vtanh.pop %v2676
      %v2889 = vtanh.pop %v2807
      %v2890 = vtanh.pop %v2809
      %v2891 = vpack.c.bf16 %v2815, %v2811
      %v2892 = vpack.c.bf16 %v2816, %v2812
      %v2893 = vpack.c.bf16 %v2817, %v2813
      %v2894 = vpack.c.bf16 %v2818, %v2814
      %v2895 = vpack.c.bf16 %v2823, %v2819
      %v2896 = vpack.c.bf16 %v2824, %v2820
      %v2897 = vpack.c.bf16 %v2825, %v2821
      %v2898 = vpack.c.bf16 %v2826, %v2822
      %v2899 = vpack.c.bf16 %v2831, %v2827
      %v2900 = vpack.c.bf16 %v2832, %v2828
      %v2901 = vpack.c.bf16 %v2833, %v2829
      %v2902 = vpack.c.bf16 %v2834, %v2830
      %v2903 = vpack.c.bf16 %v2839, %v2835
      %v2904 = vpack.c.bf16 %v2840, %v2836
      %v2905 = vpack.c.bf16 %v2841, %v2837
      %v2906 = vpack.c.bf16 %v2842, %v2838
      %v2907 = vpack.c.bf16 %v2847, %v2843
      %v2908 = vpack.c.bf16 %v2848, %v2844
      %v2909 = vpack.c.bf16 %v2849, %v2845
      %v2910 = vpack.c.bf16 %v2850, %v2846
      %v2911 = vpack.c.bf16 %v2855, %v2851
      %v2912 = vpack.c.bf16 %v2856, %v2852
      %v2913 = vpack.c.bf16 %v2857, %v2853
      %v2914 = vpack.c.bf16 %v2858, %v2854
      %v2915 = vpack.c.bf16 %v2863, %v2859
      %v2916 = vpack.c.bf16 %v2864, %v2860
      %v2917 = vpack.c.bf16 %v2865, %v2861
      %v2918 = vpack.c.bf16 %v2866, %v2862
      %v2919 = vpack.c.bf16 %v2871, %v2867
      %v2920 = vpack.c.bf16 %v2872, %v2868
      %v2921 = vpack.c.bf16 %v2873, %v2869
      %v2922 = vpack.c.bf16 %v2874, %v2870
      %v2923 = vpack.c.bf16 %v2879, %v2875
      %v2924 = vpack.c.bf16 %v2880, %v2876
      %v2925 = vpack.c.bf16 %v2881, %v2877
      %v2926 = vpack.c.bf16 %v2882, %v2878
      %v2927 = vpack.c.bf16 %v2887, %v2883
      %v2928 = vpack.c.bf16 %v2888, %v2884
      %v2929 = vpack.c.bf16 %v2889, %v2885
      %v2930 = vpack.c.bf16 %v2890, %v2886
      %v2931 = vld [vmem:[%s6] sm:$0xf]
      %v2932 = vld [vmem:[%s6 + $0x4] sm:$0xf]
      %v2933 = vld [vmem:[%s6 + $0x8] sm:$0xf]
      %v2934 = vld [vmem:[%s6 + $0xc] sm:$0xf]
      %v2935 = vld [vmem:[%s6 + $0x10] sm:$0xf]
      %v2936 = vld [vmem:[%s6 + $0x14] sm:$0xf]
      %v2937 = vld [vmem:[%s6 + $0x18] sm:$0xf]
      %v2938 = vld [vmem:[%s6 + $0x1c] sm:$0xf]
      %v2939 = vld [vmem:[%s6 + $0x20] sm:$0xf]
      %v2940 = vld [vmem:[%s6 + $0x24] sm:$0xf]
      %v2941 = vld [vmem:[%s6 + $0x28] sm:$0xf]
      %v2942 = vld [vmem:[%s6 + $0x2c] sm:$0xf]
      %v2943 = vld [vmem:[%s6 + $0x30] sm:$0xf]
      %v2944 = vld [vmem:[%s6 + $0x34] sm:$0xf]
      %v2945 = vld [vmem:[%s6 + $0x38] sm:$0xf]
      %v2946 = vld [vmem:[%s6 + $0x3c] sm:$0xf]
      %v2947 = vld [vmem:[%s6 + $0x40] sm:$0xf]
      %v2948 = vld [vmem:[%s6 + $0x44] sm:$0xf]
      %v2949 = vld [vmem:[%s6 + $0x48] sm:$0xf]
      %v2950 = vld [vmem:[%s6 + $0x4c] sm:$0xf]
      %v2951 = vld [vmem:[%s6 + $0x50] sm:$0xf]
      %v2952 = vld [vmem:[%s6 + $0x54] sm:$0xf]
      %v2953 = vld [vmem:[%s6 + $0x58] sm:$0xf]
      %v2954 = vld [vmem:[%s6 + $0x5c] sm:$0xf]
      %v2955 = vld [vmem:[%s6 + $0x60] sm:$0xf]
      %v2956 = vld [vmem:[%s6 + $0x64] sm:$0xf]
      %v2957 = vld [vmem:[%s6 + $0x68] sm:$0xf]
      %v2958 = vld [vmem:[%s6 + $0x6c] sm:$0xf]
      %v2959 = vld [vmem:[%s6 + $0x70] sm:$0xf]
      %v2960 = vld [vmem:[%s6 + $0x74] sm:$0xf]
      %v2961 = vld [vmem:[%s6 + $0x78] sm:$0xf]
      %v2962 = vld [vmem:[%s6 + $0x7c] sm:$0xf]
      %v2963 = vld [vmem:[%s6 + $0x80] sm:$0xf]
      %v2964 = vld [vmem:[%s6 + $0x84] sm:$0xf]
      %v2965 = vld [vmem:[%s6 + $0x88] sm:$0xf]
      %v2966 = vld [vmem:[%s6 + $0x8c] sm:$0xf]
      %v2967 = vld [vmem:[%s6 + $0x90] sm:$0xf]
      %v2968 = vld [vmem:[%s6 + $0x94] sm:$0xf]
      %v2969 = vld [vmem:[%s6 + $0x98] sm:$0xf]
      %v2970 = vld [vmem:[%s6 + $0x9c] sm:$0xf]
      %v2971 = vld [vmem:[%s6 + $0xa0] sm:$0xf]
      %v2972 = vld [vmem:[%s6 + $0xa4] sm:$0xf]
      %v2973 = vld [vmem:[%s6 + $0xa8] sm:$0xf]
      %v2974 = vld [vmem:[%s6 + $0xac] sm:$0xf]
      %v2975 = vld [vmem:[%s6 + $0xb0] sm:$0xf]
      %v2976 = vld [vmem:[%s6 + $0xb4] sm:$0xf]
      %v2977 = vld [vmem:[%s6 + $0xb8] sm:$0xf]
      %v2978 = vld [vmem:[%s6 + $0xbc] sm:$0xf]
      %v2979 = vld [vmem:[%s6 + $0xc0] sm:$0xf]
      %v2980 = vld [vmem:[%s6 + $0xc4] sm:$0xf]
      %v2981 = vld [vmem:[%s6 + $0xc8] sm:$0xf]
      %v2982 = vld [vmem:[%s6 + $0xcc] sm:$0xf]
      %v2983 = vld [vmem:[%s6 + $0xd0] sm:$0xf]
      %v2984 = vld [vmem:[%s6 + $0xd4] sm:$0xf]
      %v2985 = vld [vmem:[%s6 + $0xd8] sm:$0xf]
      %v2986 = vld [vmem:[%s6 + $0xdc] sm:$0xf]
      %v2987 = vld [vmem:[%s6 + $0xe0] sm:$0xf]
      %v2988 = vld [vmem:[%s6 + $0xe4] sm:$0xf]
      %v2989 = vld [vmem:[%s6 + $0xe8] sm:$0xf]
      %v2990 = vld [vmem:[%s6 + $0xec] sm:$0xf]
      %v2991 = vld [vmem:[%s6 + $0xf0] sm:$0xf]
      %v2992 = vld [vmem:[%s6 + $0xf4] sm:$0xf]
      %v2993 = vld [vmem:[%s6 + $0xf8] sm:$0xf]
      %v2994 = vld [vmem:[%s6 + $0xfc] sm:$0xf]
      %v2995 = vld [vmem:[%s7] sm:$0x1]
      %v2997 = vlaneseq
      %v2998 = vshrl.u32 %v2997, 7
      %v2999 = vsub.s32 0, %v2998
      %v3000 = vrot.slane %v2995, %v2999
      %v3066 = vunpack.c.l.b16 %v2931
      %v3067 = vunpack.c.l.b16 %v2932
      %v3068 = vunpack.c.l.b16 %v2933
      %v3069 = vunpack.c.l.b16 %v2934
      %v3070 = vunpack.c.l.b16 %v2935
      %v3071 = vunpack.c.l.b16 %v2936
      %v3072 = vunpack.c.l.b16 %v2937
      %v3073 = vunpack.c.l.b16 %v2938
      %v3074 = vunpack.c.l.b16 %v2939
      %v3075 = vunpack.c.l.b16 %v2940
      %v3076 = vunpack.c.l.b16 %v2941
      %v3077 = vunpack.c.l.b16 %v2942
      %v3078 = vunpack.c.l.b16 %v2943
      %v3079 = vunpack.c.l.b16 %v2944
      %v3080 = vunpack.c.l.b16 %v2945
      %v3081 = vunpack.c.l.b16 %v2946
      %v3082 = vunpack.c.l.b16 %v2947
      %v3083 = vunpack.c.l.b16 %v2948
      %v3084 = vunpack.c.l.b16 %v2949
      %v3085 = vunpack.c.l.b16 %v2950
      %v3086 = vunpack.c.l.b16 %v2951
      %v3087 = vunpack.c.l.b16 %v2952
      %v3088 = vunpack.c.l.b16 %v2953
      %v3089 = vunpack.c.l.b16 %v2954
      %v3090 = vunpack.c.l.b16 %v2955
      %v3091 = vunpack.c.l.b16 %v2956
      %v3092 = vunpack.c.l.b16 %v2957
      %v3093 = vunpack.c.l.b16 %v2958
      %v3094 = vunpack.c.l.b16 %v2959
      %v3095 = vunpack.c.l.b16 %v2960
      %v3096 = vunpack.c.l.b16 %v2961
      %v3097 = vunpack.c.l.b16 %v2962
      %v3098 = vunpack.c.l.b16 %v2963
      %v3099 = vunpack.c.l.b16 %v2964
      %v3100 = vunpack.c.l.b16 %v2965
      %v3101 = vunpack.c.l.b16 %v2966
      %v3102 = vunpack.c.l.b16 %v2967
      %v3103 = vunpack.c.l.b16 %v2968
      %v3104 = vunpack.c.l.b16 %v2969
      %v3105 = vunpack.c.l.b16 %v2970
      %v3106 = vunpack.c.l.b16 %v2971
      %v3107 = vunpack.c.l.b16 %v2972
      %v3108 = vunpack.c.l.b16 %v2973
      %v3109 = vunpack.c.l.b16 %v2974
      %v3110 = vunpack.c.l.b16 %v2975
      %v3111 = vunpack.c.l.b16 %v2976
      %v3112 = vunpack.c.l.b16 %v2977
      %v3113 = vunpack.c.l.b16 %v2978
      %v3114 = vunpack.c.l.b16 %v2979
      %v3115 = vunpack.c.l.b16 %v2980
      %v3116 = vunpack.c.l.b16 %v2981
      %v3117 = vunpack.c.l.b16 %v2982
      %v3118 = vunpack.c.l.b16 %v2983
      %v3119 = vunpack.c.l.b16 %v2984
      %v3120 = vunpack.c.l.b16 %v2985
      %v3121 = vunpack.c.l.b16 %v2986
      %v3122 = vunpack.c.l.b16 %v2987
      %v3123 = vunpack.c.l.b16 %v2988
      %v3124 = vunpack.c.l.b16 %v2989
      %v3125 = vunpack.c.l.b16 %v2990
      %v3126 = vunpack.c.l.b16 %v2991
      %v3127 = vunpack.c.l.b16 %v2992
      %v3128 = vunpack.c.l.b16 %v2993
      %v3129 = vunpack.c.l.b16 %v2994
      %v3130 = vpack.c.b16 %v3067, %v3066
      %v3131 = vpack.c.b16 %v3069, %v3068
      %v3132 = vpack.c.b16 %v3071, %v3070
      %v3133 = vpack.c.b16 %v3073, %v3072
      %v3134 = vpack.c.b16 %v3075, %v3074
      %v3135 = vpack.c.b16 %v3077, %v3076
      %v3136 = vpack.c.b16 %v3079, %v3078
      %v3137 = vpack.c.b16 %v3081, %v3080
      %v3138 = vpack.c.b16 %v3083, %v3082
      %v3139 = vpack.c.b16 %v3085, %v3084
      %v3140 = vpack.c.b16 %v3087, %v3086
      %v3141 = vpack.c.b16 %v3089, %v3088
      %v3142 = vpack.c.b16 %v3091, %v3090
      %v3143 = vpack.c.b16 %v3093, %v3092
      %v3144 = vpack.c.b16 %v3095, %v3094
      %v3145 = vpack.c.b16 %v3097, %v3096
      %v3146 = vpack.c.b16 %v3099, %v3098
      %v3147 = vpack.c.b16 %v3101, %v3100
      %v3148 = vpack.c.b16 %v3103, %v3102
      %v3149 = vpack.c.b16 %v3105, %v3104
      %v3150 = vpack.c.b16 %v3107, %v3106
      %v3151 = vpack.c.b16 %v3109, %v3108
      %v3152 = vpack.c.b16 %v3111, %v3110
      %v3153 = vpack.c.b16 %v3113, %v3112
      %v3154 = vpack.c.b16 %v3115, %v3114
      %v3155 = vpack.c.b16 %v3117, %v3116
      %v3156 = vpack.c.b16 %v3119, %v3118
      %v3157 = vpack.c.b16 %v3121, %v3120
      %v3158 = vpack.c.b16 %v3123, %v3122
      %v3159 = vpack.c.b16 %v3125, %v3124
      %v3160 = vpack.c.b16 %v3127, %v3126
      %v3161 = vpack.c.b16 %v3129, %v3128
      %3194 = vmatprep.subr.bf16.mxu0 0
      %3195 = vmatpush1.bf16.msra.mxu0 %v3130
      %3196 = vmatprep.subr.bf16.mxu0 0
      %3197 = vmatpush1.bf16.msra.mxu0 %v3131
      %3198 = vmatprep.subr.bf16.mxu0 0
      %3199 = vmatpush1.bf16.msra.mxu0 %v3132
      %3200 = vmatprep.subr.bf16.mxu0 0
      %3201 = vmatpush1.bf16.msra.mxu0 %v3133
      %3202 = vmatprep.subr.bf16.mxu0 0
      %3203 = vmatpush1.bf16.msra.mxu0 %v3134
      %3204 = vmatprep.subr.bf16.mxu0 0
      %3205 = vmatpush1.bf16.msra.mxu0 %v3135
      %3206 = vmatprep.subr.bf16.mxu0 0
      %3207 = vmatpush1.bf16.msra.mxu0 %v3136
      %3208 = vmatprep.subr.bf16.mxu0 0
      %3209 = vmatpush1.bf16.msra.mxu0 %v3137
      %3210 = vmatprep.subr.bf16.mxu0 0
      %3211 = vmatpush1.bf16.msra.mxu0 %v3138
      %3212 = vmatprep.subr.bf16.mxu0 0
      %3213 = vmatpush1.bf16.msra.mxu0 %v3139
      %3214 = vmatprep.subr.bf16.mxu0 0
      %3215 = vmatpush1.bf16.msra.mxu0 %v3140
      %3216 = vmatprep.subr.bf16.mxu0 0
      %3217 = vmatpush1.bf16.msra.mxu0 %v3141
      %3218 = vmatprep.subr.bf16.mxu0 0
      %3219 = vmatpush1.bf16.msra.mxu0 %v3142
      %3220 = vmatprep.subr.bf16.mxu0 0
      %3221 = vmatpush1.bf16.msra.mxu0 %v3143
      %3222 = vmatprep.subr.bf16.mxu0 0
      %3223 = vmatpush1.bf16.msra.mxu0 %v3144
      %3224 = vmatprep.subr.bf16.mxu0 0
      %3225 = vmatpush1.bf16.msra.mxu0 %v3145
      %3226 = vmatprep.mubr.bf16.mxu0 %v2892
      %3227 = vmatmul.mubr.bf16.gmra.mrb[0].mxu0 %v2891
      %v3228 = vpop.f32.mrb[0].mxu0
      %v3229 = vadd.f32 %v3000, %v3228
      %v3230 = vpop.f32.mrb[0].mxu0
      %v3231 = vpop.f32.mrb[0].mxu0
      %v3232 = vadd.f32 %v3000, %v3231
      %v3233 = vpop.f32.mrb[0].mxu0
      %3234 = vmatprep.mubr.bf16.mxu0 %v2896
      %3235 = vmatmul.mubr.bf16.gmra.mrb[0].mxu0 %v2895
      %v3236 = vpop.f32.mrb[0].mxu0
      %v3237 = vadd.f32 %v3000, %v3236
      %v3238 = vpop.f32.mrb[0].mxu0
      %v3239 = vpop.f32.mrb[0].mxu0
      %v3240 = vadd.f32 %v3000, %v3239
      %v3241 = vpop.f32.mrb[0].mxu0
      %3242 = vmatprep.mubr.bf16.mxu0 %v2900
      %3243 = vmatmul.mubr.bf16.gmra.mrb[0].mxu0 %v2899
      %v3244 = vpop.f32.mrb[0].mxu0
      %v3245 = vadd.f32 %v3000, %v3244
      %v3246 = vpop.f32.mrb[0].mxu0
      %v3247 = vpop.f32.mrb[0].mxu0
      %v3248 = vadd.f32 %v3000, %v3247
      %v3249 = vpop.f32.mrb[0].mxu0
      %3250 = vmatprep.mubr.bf16.mxu0 %v2904
      %3251 = vmatmul.mubr.bf16.gmra.mrb[0].mxu0 %v2903
      %v3252 = vpop.f32.mrb[0].mxu0
      %v3253 = vadd.f32 %v3000, %v3252
      %v3254 = vpop.f32.mrb[0].mxu0
      %v3255 = vpop.f32.mrb[0].mxu0
      %v3256 = vadd.f32 %v3000, %v3255
      %v3257 = vpop.f32.mrb[0].mxu0
      %3258 = vmatprep.mubr.bf16.mxu0 %v2908
      %3259 = vmatmul.mubr.bf16.gmra.mrb[0].mxu0 %v2907
      %v3260 = vpop.f32.mrb[0].mxu0
      %v3261 = vadd.f32 %v3000, %v3260
      %v3262 = vpop.f32.mrb[0].mxu0
      %v3263 = vpop.f32.mrb[0].mxu0
      %v3264 = vadd.f32 %v3000, %v3263
      %v3265 = vpop.f32.mrb[0].mxu0
      %3266 = vmatprep.mubr.bf16.mxu0 %v2912
      %3267 = vmatmul.mubr.bf16.gmra.mrb[0].mxu0 %v2911
      %v3268 = vpop.f32.mrb[0].mxu0
      %v3269 = vadd.f32 %v3000, %v3268
      %v3270 = vpop.f32.mrb[0].mxu0
      %v3271 = vpop.f32.mrb[0].mxu0
      %v3272 = vadd.f32 %v3000, %v3271
      %v3273 = vpop.f32.mrb[0].mxu0
      %3274 = vmatprep.mubr.bf16.mxu0 %v2916
      %3275 = vmatmul.mubr.bf16.gmra.mrb[0].mxu0 %v2915
      %v3276 = vpop.f32.mrb[0].mxu0
      %v3277 = vadd.f32 %v3000, %v3276
      %v3278 = vpop.f32.mrb[0].mxu0
      %v3279 = vpop.f32.mrb[0].mxu0
      %v3280 = vadd.f32 %v3000, %v3279
      %v3281 = vpop.f32.mrb[0].mxu0
      %3282 = vmatprep.mubr.bf16.mxu0 %v2920
      %3283 = vmatmul.mubr.bf16.gmra.mrb[0].mxu0 %v2919
      %v3284 = vpop.f32.mrb[0].mxu0
      %v3285 = vadd.f32 %v3000, %v3284
      %v3286 = vpop.f32.mrb[0].mxu0
      %v3287 = vpop.f32.mrb[0].mxu0
      %v3288 = vadd.f32 %v3000, %v3287
      %v3289 = vpop.f32.mrb[0].mxu0
      %3290 = vmatprep.mubr.bf16.mxu0 %v2924
      %3291 = vmatmul.mubr.bf16.gmra.mrb[0].mxu0 %v2923
      %v3292 = vpop.f32.mrb[0].mxu0
      %v3293 = vadd.f32 %v3000, %v3292
      %v3294 = vpop.f32.mrb[0].mxu0
      %v3295 = vpop.f32.mrb[0].mxu0
      %v3296 = vadd.f32 %v3000, %v3295
      %v3297 = vpop.f32.mrb[0].mxu0
      %3298 = vmatprep.mubr.bf16.mxu0 %v2928
      %3299 = vmatmul.mubr.bf16.gmra.mrb[0].mxu0 %v2927
      %v3300 = vpop.f32.mrb[0].mxu0
      %v3301 = vadd.f32 %v3000, %v3300
      %v3302 = vpop.f32.mrb[0].mxu0
      %v3303 = vpop.f32.mrb[0].mxu0
      %v3304 = vadd.f32 %v3000, %v3303
      %v3305 = vpop.f32.mrb[0].mxu0
      %3306 = vdwg.mxu0
      %3307 = vmatprep.subr.bf16.mxu0 0
      %3308 = vmatpush1.bf16.msra.mxu0 %v3146
      %3309 = vmatprep.subr.bf16.mxu0 0
      %3310 = vmatpush1.bf16.msra.mxu0 %v3147
      %3311 = vmatprep.subr.bf16.mxu0 0
      %3312 = vmatpush1.bf16.msra.mxu0 %v3148
      %3313 = vmatprep.subr.bf16.mxu0 0
      %3314 = vmatpush1.bf16.msra.mxu0 %v3149
      %3315 = vmatprep.subr.bf16.mxu0 0
      %3316 = vmatpush1.bf16.msra.mxu0 %v3150
      %3317 = vmatprep.subr.bf16.mxu0 0
      %3318 = vmatpush1.bf16.msra.mxu0 %v3151
      %3319 = vmatprep.subr.bf16.mxu0 0
      %3320 = vmatpush1.bf16.msra.mxu0 %v3152
      %3321 = vmatprep.subr.bf16.mxu0 0
      %3322 = vmatpush1.bf16.msra.mxu0 %v3153
      %3323 = vmatprep.subr.bf16.mxu0 0
      %3324 = vmatpush1.bf16.msra.mxu0 %v3154
      %3325 = vmatprep.subr.bf16.mxu0 0
      %3326 = vmatpush1.bf16.msra.mxu0 %v3155
      %3327 = vmatprep.subr.bf16.mxu0 0
      %3328 = vmatpush1.bf16.msra.mxu0 %v3156
      %3329 = vmatprep.subr.bf16.mxu0 0
      %3330 = vmatpush1.bf16.msra.mxu0 %v3157
      %3331 = vmatprep.subr.bf16.mxu0 0
      %3332 = vmatpush1.bf16.msra.mxu0 %v3158
      %3333 = vmatprep.subr.bf16.mxu0 0
      %3334 = vmatpush1.bf16.msra.mxu0 %v3159
      %3335 = vmatprep.subr.bf16.mxu0 0
      %3336 = vmatpush1.bf16.msra.mxu0 %v3160
      %3337 = vmatprep.subr.bf16.mxu0 0
      %3338 = vmatpush1.bf16.msra.mxu0 %v3161
      %3339 = vmatprep.mubr.bf16.mxu0 %v2894
      %3340 = vmatmul.mubr.bf16.gmra.mrb[0].mxu0 %v2893
      %v3341 = vpop.f32.mrb[0].mxu0
      %v3342 = vadd.f32 %v3229, %v3341
      %v3343 = vpop.f32.mrb[0].mxu0
      %v3344 = vpop.f32.mrb[0].mxu0
      %v3345 = vadd.f32 %v3232, %v3344
      %v3346 = vpop.f32.mrb[0].mxu0
      %3347 = vmatprep.mubr.bf16.mxu0 %v2898
      %3348 = vmatmul.mubr.bf16.gmra.mrb[0].mxu0 %v2897
      %v3349 = vpop.f32.mrb[0].mxu0
      %v3350 = vadd.f32 %v3237, %v3349
      %v3351 = vpop.f32.mrb[0].mxu0
      %v3352 = vpop.f32.mrb[0].mxu0
      %v3353 = vadd.f32 %v3240, %v3352
      %v3354 = vpop.f32.mrb[0].mxu0
      %3355 = vmatprep.mubr.bf16.mxu0 %v2902
      %3356 = vmatmul.mubr.bf16.gmra.mrb[0].mxu0 %v2901
      %v3357 = vpop.f32.mrb[0].mxu0
      %v3358 = vadd.f32 %v3245, %v3357
      %v3359 = vpop.f32.mrb[0].mxu0
      %v3360 = vpop.f32.mrb[0].mxu0
      %v3361 = vadd.f32 %v3248, %v3360
      %v3362 = vpop.f32.mrb[0].mxu0
      %3363 = vmatprep.mubr.bf16.mxu0 %v2906
      %3364 = vmatmul.mubr.bf16.gmra.mrb[0].mxu0 %v2905
      %v3365 = vpop.f32.mrb[0].mxu0
      %v3366 = vadd.f32 %v3253, %v3365
      %v3367 = vpop.f32.mrb[0].mxu0
      %v3368 = vpop.f32.mrb[0].mxu0
      %v3369 = vadd.f32 %v3256, %v3368
      %v3370 = vpop.f32.mrb[0].mxu0
      %3371 = vmatprep.mubr.bf16.mxu0 %v2910
      %3372 = vmatmul.mubr.bf16.gmra.mrb[0].mxu0 %v2909
      %v3373 = vpop.f32.mrb[0].mxu0
      %v3374 = vadd.f32 %v3261, %v3373
      %v3375 = vpop.f32.mrb[0].mxu0
      %v3376 = vpop.f32.mrb[0].mxu0
      %v3377 = vadd.f32 %v3264, %v3376
      %v3378 = vpop.f32.mrb[0].mxu0
      %3379 = vmatprep.mubr.bf16.mxu0 %v2914
      %3380 = vmatmul.mubr.bf16.gmra.mrb[0].mxu0 %v2913
      %v3381 = vpop.f32.mrb[0].mxu0
      %v3382 = vadd.f32 %v3269, %v3381
      %v3383 = vpop.f32.mrb[0].mxu0
      %v3384 = vpop.f32.mrb[0].mxu0
      %v3385 = vadd.f32 %v3272, %v3384
      %v3386 = vpop.f32.mrb[0].mxu0
      %3387 = vmatprep.mubr.bf16.mxu0 %v2918
      %3388 = vmatmul.mubr.bf16.gmra.mrb[0].mxu0 %v2917
      %v3389 = vpop.f32.mrb[0].mxu0
      %v3390 = vadd.f32 %v3277, %v3389
      %v3391 = vpop.f32.mrb[0].mxu0
      %v3392 = vpop.f32.mrb[0].mxu0
      %v3393 = vadd.f32 %v3280, %v3392
      %v3394 = vpop.f32.mrb[0].mxu0
      %3395 = vmatprep.mubr.bf16.mxu0 %v2922
      %3396 = vmatmul.mubr.bf16.gmra.mrb[0].mxu0 %v2921
      %v3397 = vpop.f32.mrb[0].mxu0
      %v3398 = vadd.f32 %v3285, %v3397
      %v3399 = vpop.f32.mrb[0].mxu0
      %v3400 = vpop.f32.mrb[0].mxu0
      %v3401 = vadd.f32 %v3288, %v3400
      %v3402 = vpop.f32.mrb[0].mxu0
      %3403 = vmatprep.mubr.bf16.mxu0 %v2926
      %3404 = vmatmul.mubr.bf16.gmra.mrb[0].mxu0 %v2925
      %v3405 = vpop.f32.mrb[0].mxu0
      %v3406 = vadd.f32 %v3293, %v3405
      %v3407 = vpop.f32.mrb[0].mxu0
      %v3408 = vpop.f32.mrb[0].mxu0
      %v3409 = vadd.f32 %v3296, %v3408
      %v3410 = vpop.f32.mrb[0].mxu0
      %3411 = vmatprep.mubr.bf16.mxu0 %v2930
      %3412 = vmatmul.mubr.bf16.gmra.mrb[0].mxu0 %v2929
      %v3413 = vpop.f32.mrb[0].mxu0
      %v3414 = vadd.f32 %v3301, %v3413
      %v3415 = vpop.f32.mrb[0].mxu0
      %v3416 = vpop.f32.mrb[0].mxu0
      %v3417 = vadd.f32 %v3304, %v3416
      %v3418 = vpop.f32.mrb[0].mxu0
      %3419 = vdwg.mxu0
      %vm3420 = vcmask 64512
      %3421 = vst.msk [vmem:[%s483] sm:$0xff] %vm3420, %v3342
      %3422 = vst.msk [vmem:[%s483 + $0x8] sm:$0xff] %vm3420, %v3345
      %3423 = vst.msk [vmem:[%s483 + $0x10] sm:$0xff] %vm3420, %v3350
      %3424 = vst.msk [vmem:[%s483 + $0x18] sm:$0xff] %vm3420, %v3353
      %3425 = vst.msk [vmem:[%s483 + $0x20] sm:$0xff] %vm3420, %v3358
      %3426 = vst.msk [vmem:[%s483 + $0x28] sm:$0xff] %vm3420, %v3361
      %3427 = vst.msk [vmem:[%s483 + $0x30] sm:$0xff] %vm3420, %v3366
      %3428 = vst.msk [vmem:[%s483 + $0x38] sm:$0xff] %vm3420, %v3369
      %3429 = vst.msk [vmem:[%s483 + $0x40] sm:$0xff] %vm3420, %v3374
      %3430 = vst.msk [vmem:[%s483 + $0x48] sm:$0xff] %vm3420, %v3377
      %3431 = vst.msk [vmem:[%s483 + $0x50] sm:$0xff] %vm3420, %v3382
      %3432 = vst.msk [vmem:[%s483 + $0x58] sm:$0xff] %vm3420, %v3385
      %3433 = vst.msk [vmem:[%s483 + $0x60] sm:$0xff] %vm3420, %v3390
      %3434 = vst.msk [vmem:[%s483 + $0x68] sm:$0xff] %vm3420, %v3393
      %3435 = vst.msk [vmem:[%s483 + $0x70] sm:$0xff] %vm3420, %v3398
      %3436 = vst.msk [vmem:[%s483 + $0x78] sm:$0xff] %vm3420, %v3401
      %3437 = vst.msk [vmem:[%s483 + $0x80] sm:$0xff] %vm3420, %v3406
      %3438 = vst.msk [vmem:[%s483 + $0x88] sm:$0xff] %vm3420, %v3409
      %3439 = vst.msk [vmem:[%s483 + $0x90] sm:$0xff] %vm3420, %v3414
      %3440 = vst.msk [vmem:[%s483 + $0x98] sm:$0xff] %vm3420, %v3417
      %v3441 = vld [vmem:[%s470] sm:$0xff]
      %v3442 = vld [vmem:[%s470 + $0x8] sm:$0xff]
      %v3443 = vld [vmem:[%s470 + $0x10] sm:$0xff]
      %v3444 = vld [vmem:[%s470 + $0x18] sm:$0xff]
      %v3445 = vld [vmem:[%s470 + $0x20] sm:$0xff]
      %v3446 = vld [vmem:[%s470 + $0x28] sm:$0xff]
      %v3447 = vld [vmem:[%s470 + $0x30] sm:$0xff]
      %v3448 = vld [vmem:[%s470 + $0x38] sm:$0xff]
      %v3449 = vld [vmem:[%s470 + $0x40] sm:$0xff]
      %v3450 = vld [vmem:[%s470 + $0x48] sm:$0xff]
      %v3451 = vld [vmem:[%s470 + $0x50] sm:$0xff]
      %v3452 = vld [vmem:[%s470 + $0x58] sm:$0xff]
      %v3453 = vld [vmem:[%s470 + $0x60] sm:$0xff]
      %v3454 = vld [vmem:[%s470 + $0x68] sm:$0xff]
      %v3455 = vld [vmem:[%s470 + $0x70] sm:$0xff]
      %v3456 = vld [vmem:[%s470 + $0x78] sm:$0xff]
      %v3457 = vld [vmem:[%s470 + $0x80] sm:$0xff]
      %v3458 = vld [vmem:[%s470 + $0x88] sm:$0xff]
      %v3459 = vld [vmem:[%s470 + $0x90] sm:$0xff]
      %v3460 = vld [vmem:[%s470 + $0x98] sm:$0xff]
      %v3461 = vmul.f32 %v3342, 0.5
      %v3462 = vmul.f32 %v3345, 0.5
      %v3463 = vmul.f32 %v3350, 0.5
      %v3464 = vmul.f32 %v3353, 0.5
      %v3465 = vmul.f32 %v3358, 0.5
      %v3466 = vmul.f32 %v3361, 0.5
      %v3467 = vmul.f32 %v3366, 0.5
      %v3468 = vmul.f32 %v3369, 0.5
      %v3469 = vmul.f32 %v3374, 0.5
      %v3470 = vmul.f32 %v3377, 0.5
      %v3471 = vmul.f32 %v3382, 0.5
      %v3472 = vmul.f32 %v3385, 0.5
      %v3473 = vmul.f32 %v3390, 0.5
      %v3474 = vmul.f32 %v3393, 0.5
      %v3475 = vmul.f32 %v3398, 0.5
      %v3476 = vmul.f32 %v3401, 0.5
      %v3477 = vmul.f32 %v3406, 0.5
      %v3478 = vmul.f32 %v3409, 0.5
      %v3479 = vmul.f32 %v3414, 0.5
      %v3480 = vmul.f32 %v3417, 0.5
      %v3481 = vmul.f32 %v3461, 1.442695
      %v3482 = vpow.pop %v3481
      %v3483 = vmul.f32 %v3462, 1.442695
      %v3484 = vpow.pop %v3483
      %v3485 = vmul.f32 %v3463, 1.442695
      %v3486 = vpow.pop %v3485
      %v3487 = vmul.f32 %v3464, 1.442695
      %v3488 = vpow.pop %v3487
      %v3489 = vmul.f32 %v3465, 1.442695
      %v3490 = vpow.pop %v3489
      %v3491 = vmul.f32 %v3466, 1.442695
      %v3492 = vpow.pop %v3491
      %v3493 = vmul.f32 %v3467, 1.442695
      %v3494 = vpow.pop %v3493
      %v3495 = vmul.f32 %v3468, 1.442695
      %v3496 = vpow.pop %v3495
      %v3497 = vmul.f32 %v3469, 1.442695
      %v3498 = vpow.pop %v3497
      %v3499 = vmul.f32 %v3470, 1.442695
      %v3500 = vpow.pop %v3499
      %v3501 = vmul.f32 %v3471, 1.442695
      %v3502 = vpow.pop %v3501
      %v3503 = vmul.f32 %v3472, 1.442695
      %v3504 = vpow.pop %v3503
      %v3505 = vmul.f32 %v3473, 1.442695
      %v3506 = vpow.pop %v3505
      %v3507 = vmul.f32 %v3474, 1.442695
      %v3508 = vpow.pop %v3507
      %v3509 = vmul.f32 %v3475, 1.442695
      %v3510 = vpow.pop %v3509
      %v3511 = vmul.f32 %v3476, 1.442695
      %v3512 = vpow.pop %v3511
      %v3513 = vmul.f32 %v3477, 1.442695
      %v3514 = vpow.pop %v3513
      %v3515 = vmul.f32 %v3478, 1.442695
      %v3516 = vpow.pop %v3515
      %v3517 = vmul.f32 %v3479, 1.442695
      %v3518 = vpow.pop %v3517
      %v3519 = vmul.f32 %v3480, 1.442695
      %v3520 = vpow.pop %v3519
      %3541 = vrot.lane.b32.xlu0 %v3482, 126
      %v3542 = vpop.permute.xlu0 %3541
      %3543 = vrot.lane.b32.xlu0 %v3484, 126
      %v3544 = vpop.permute.xlu0 %3543
      %3545 = vrot.lane.b32.xlu0 %v3486, 126
      %v3546 = vpop.permute.xlu0 %3545
      %3547 = vrot.lane.b32.xlu0 %v3488, 126
      %v3548 = vpop.permute.xlu0 %3547
      %3549 = vrot.lane.b32.xlu0 %v3490, 126
      %v3550 = vpop.permute.xlu0 %3549
      %3551 = vrot.lane.b32.xlu0 %v3492, 126
      %v3552 = vpop.permute.xlu0 %3551
      %3553 = vrot.lane.b32.xlu0 %v3494, 126
      %v3554 = vpop.permute.xlu0 %3553
      %3555 = vrot.lane.b32.xlu0 %v3496, 126
      %v3556 = vpop.permute.xlu0 %3555
      %3557 = vrot.lane.b32.xlu0 %v3498, 126
      %v3558 = vpop.permute.xlu0 %3557
      %3559 = vrot.lane.b32.xlu0 %v3500, 126
      %v3560 = vpop.permute.xlu0 %3559
      %3561 = vrot.lane.b32.xlu0 %v3502, 126
      %v3562 = vpop.permute.xlu0 %3561
      %3563 = vrot.lane.b32.xlu0 %v3504, 126
      %v3564 = vpop.permute.xlu0 %3563
      %3565 = vrot.lane.b32.xlu0 %v3506, 126
      %v3566 = vpop.permute.xlu0 %3565
      %3567 = vrot.lane.b32.xlu0 %v3508, 126
      %v3568 = vpop.permute.xlu0 %3567
      %3569 = vrot.lane.b32.xlu0 %v3510, 126
      %v3570 = vpop.permute.xlu0 %3569
      %3571 = vrot.lane.b32.xlu0 %v3512, 126
      %v3572 = vpop.permute.xlu0 %3571
      %3573 = vrot.lane.b32.xlu0 %v3514, 126
      %v3574 = vpop.permute.xlu0 %3573
      %3575 = vrot.lane.b32.xlu0 %v3516, 126
      %v3576 = vpop.permute.xlu0 %3575
      %3577 = vrot.lane.b32.xlu0 %v3518, 126
      %v3578 = vpop.permute.xlu0 %3577
      %3579 = vrot.lane.b32.xlu0 %v3520, 126
      %v3580 = vpop.permute.xlu0 %3579
      %v3601 = vmul.f32 %v3441, %v3542
      %v3602 = vmul.f32 %v3442, %v3544
      %v3603 = vmul.f32 %v3443, %v3546
      %v3604 = vmul.f32 %v3444, %v3548
      %v3605 = vmul.f32 %v3445, %v3550
      %v3606 = vmul.f32 %v3446, %v3552
      %v3607 = vmul.f32 %v3447, %v3554
      %v3608 = vmul.f32 %v3448, %v3556
      %v3609 = vmul.f32 %v3449, %v3558
      %v3610 = vmul.f32 %v3450, %v3560
      %v3611 = vmul.f32 %v3451, %v3562
      %v3612 = vmul.f32 %v3452, %v3564
      %v3613 = vmul.f32 %v3453, %v3566
      %v3614 = vmul.f32 %v3454, %v3568
      %v3615 = vmul.f32 %v3455, %v3570
      %v3616 = vmul.f32 %v3456, %v3572
      %v3617 = vmul.f32 %v3457, %v3574
      %v3618 = vmul.f32 %v3458, %v3576
      %v3619 = vmul.f32 %v3459, %v3578
      %v3620 = vmul.f32 %v3460, %v3580
      %v3621 = vadd.f32 %v3342, %v3601
      %v3622 = vadd.f32 %v3345, %v3602
      %v3623 = vadd.f32 %v3350, %v3603
      %v3624 = vadd.f32 %v3353, %v3604
      %v3625 = vadd.f32 %v3358, %v3605
      %v3626 = vadd.f32 %v3361, %v3606
      %v3627 = vadd.f32 %v3366, %v3607
      %v3628 = vadd.f32 %v3369, %v3608
      %v3629 = vadd.f32 %v3374, %v3609
      %v3630 = vadd.f32 %v3377, %v3610
      %v3631 = vadd.f32 %v3382, %v3611
      %v3632 = vadd.f32 %v3385, %v3612
      %v3633 = vadd.f32 %v3390, %v3613
      %v3634 = vadd.f32 %v3393, %v3614
      %v3635 = vadd.f32 %v3398, %v3615
      %v3636 = vadd.f32 %v3401, %v3616
      %v3637 = vadd.f32 %v3406, %v3617
      %v3638 = vadd.f32 %v3409, %v3618
      %v3639 = vadd.f32 %v3414, %v3619
      %v3640 = vadd.f32 %v3417, %v3620
      %v3641 = vld [vmem:[%s8] ss:$8 sm:$0xf]
      %3643 = vset.pattern.permute.xlu0 0
      %3644 = vperm.xlu0 %3643, %v3621
      %v3645 = vpop.permute.xlu0 %3644
      %3648 = vset.pattern.permute.xlu0 0
      %3649 = vperm.xlu0 %3648, %v3622
      %v3650 = vpop.permute.xlu0 %3649
      %3653 = vset.pattern.permute.xlu0 0
      %3654 = vperm.xlu0 %3653, %v3623
      %v3655 = vpop.permute.xlu0 %3654
      %3658 = vset.pattern.permute.xlu0 0
      %3659 = vperm.xlu0 %3658, %v3624
      %v3660 = vpop.permute.xlu0 %3659
      %3663 = vset.pattern.permute.xlu0 0
      %3664 = vperm.xlu0 %3663, %v3625
      %v3665 = vpop.permute.xlu0 %3664
      %3668 = vset.pattern.permute.xlu0 0
      %3669 = vperm.xlu0 %3668, %v3626
      %v3670 = vpop.permute.xlu0 %3669
      %3673 = vset.pattern.permute.xlu0 0
      %3674 = vperm.xlu0 %3673, %v3627
      %v3675 = vpop.permute.xlu0 %3674
      %3678 = vset.pattern.permute.xlu0 0
      %3679 = vperm.xlu0 %3678, %v3628
      %v3680 = vpop.permute.xlu0 %3679
      %3683 = vset.pattern.permute.xlu0 0
      %3684 = vperm.xlu0 %3683, %v3629
      %v3685 = vpop.permute.xlu0 %3684
      %3688 = vset.pattern.permute.xlu0 0
      %3689 = vperm.xlu0 %3688, %v3630
      %v3690 = vpop.permute.xlu0 %3689
      %3693 = vset.pattern.permute.xlu0 0
      %3694 = vperm.xlu0 %3693, %v3631
      %v3695 = vpop.permute.xlu0 %3694
      %3698 = vset.pattern.permute.xlu0 0
      %3699 = vperm.xlu0 %3698, %v3632
      %v3700 = vpop.permute.xlu0 %3699
      %3703 = vset.pattern.permute.xlu0 0
      %3704 = vperm.xlu0 %3703, %v3633
      %v3705 = vpop.permute.xlu0 %3704
      %3708 = vset.pattern.permute.xlu0 0
      %3709 = vperm.xlu0 %3708, %v3634
      %v3710 = vpop.permute.xlu0 %3709
      %3713 = vset.pattern.permute.xlu0 0
      %3714 = vperm.xlu0 %3713, %v3635
      %v3715 = vpop.permute.xlu0 %3714
      %3718 = vset.pattern.permute.xlu0 0
      %3719 = vperm.xlu0 %3718, %v3636
      %v3720 = vpop.permute.xlu0 %3719
      %3723 = vset.pattern.permute.xlu0 0
      %3724 = vperm.xlu0 %3723, %v3637
      %v3725 = vpop.permute.xlu0 %3724
      %3728 = vset.pattern.permute.xlu0 0
      %3729 = vperm.xlu0 %3728, %v3638
      %v3730 = vpop.permute.xlu0 %3729
      %3733 = vset.pattern.permute.xlu0 0
      %3734 = vperm.xlu0 %3733, %v3639
      %v3735 = vpop.permute.xlu0 %3734
      %3738 = vset.pattern.permute.xlu0 0
      %3739 = vperm.xlu0 %3738, %v3640
      %v3740 = vpop.permute.xlu0 %3739
      %v3743 = vlaneseq
      %v3744 = vshrl.u32 %v3743, 7
      %v3745 = vsub.s32 0, %v3744
      %v3746 = vrot.slane %v3641, %v3745
      %v3747 = vlaneseq
      %v3748 = vshrl.u32 %v3747, 7
      %v3749 = vsub.s32 1, %v3748
      %v3750 = vrot.slane %v3641, %v3749
      %v3751 = vlaneseq
      %v3752 = vshrl.u32 %v3751, 7
      %v3753 = vsub.s32 2, %v3752
      %v3754 = vrot.slane %v3641, %v3753
      %v3755 = vlaneseq
      %v3756 = vshrl.u32 %v3755, 7
      %v3757 = vsub.s32 3, %v3756
      %v3758 = vrot.slane %v3641, %v3757
      %v3763 = vmul.f32 %v3645, %v3746
      %v3764 = vmul.f32 %v3645, %v3750
      %v3765 = vmul.f32 %v3645, %v3754
      %v3766 = vmul.f32 %v3645, %v3758
      %v3767 = vmul.f32 %v3650, %v3746
      %v3768 = vmul.f32 %v3650, %v3750
      %v3769 = vmul.f32 %v3650, %v3754
      %v3770 = vmul.f32 %v3650, %v3758
      %v3771 = vmul.f32 %v3655, %v3746
      %v3772 = vmul.f32 %v3655, %v3750
      %v3773 = vmul.f32 %v3655, %v3754
      %v3774 = vmul.f32 %v3655, %v3758
      %v3775 = vmul.f32 %v3660, %v3746
      %v3776 = vmul.f32 %v3660, %v3750
      %v3777 = vmul.f32 %v3660, %v3754
      %v3778 = vmul.f32 %v3660, %v3758
      %v3779 = vmul.f32 %v3665, %v3746
      %v3780 = vmul.f32 %v3665, %v3750
      %v3781 = vmul.f32 %v3665, %v3754
      %v3782 = vmul.f32 %v3665, %v3758
      %v3783 = vmul.f32 %v3670, %v3746
      %v3784 = vmul.f32 %v3670, %v3750
      %v3785 = vmul.f32 %v3670, %v3754
      %v3786 = vmul.f32 %v3670, %v3758
      %v3787 = vmul.f32 %v3675, %v3746
      %v3788 = vmul.f32 %v3675, %v3750
      %v3789 = vmul.f32 %v3675, %v3754
      %v3790 = vmul.f32 %v3675, %v3758
      %v3791 = vmul.f32 %v3680, %v3746
      %v3792 = vmul.f32 %v3680, %v3750
      %v3793 = vmul.f32 %v3680, %v3754
      %v3794 = vmul.f32 %v3680, %v3758
      %v3795 = vmul.f32 %v3685, %v3746
      %v3796 = vmul.f32 %v3685, %v3750
      %v3797 = vmul.f32 %v3685, %v3754
      %v3798 = vmul.f32 %v3685, %v3758
      %v3799 = vmul.f32 %v3690, %v3746
      %v3800 = vmul.f32 %v3690, %v3750
      %v3801 = vmul.f32 %v3690, %v3754
      %v3802 = vmul.f32 %v3690, %v3758
      %v3803 = vmul.f32 %v3695, %v3746
      %v3804 = vmul.f32 %v3695, %v3750
      %v3805 = vmul.f32 %v3695, %v3754
      %v3806 = vmul.f32 %v3695, %v3758
      %v3807 = vmul.f32 %v3700, %v3746
      %v3808 = vmul.f32 %v3700, %v3750
      %v3809 = vmul.f32 %v3700, %v3754
      %v3810 = vmul.f32 %v3700, %v3758
      %v3811 = vmul.f32 %v3705, %v3746
      %v3812 = vmul.f32 %v3705, %v3750
      %v3813 = vmul.f32 %v3705, %v3754
      %v3814 = vmul.f32 %v3705, %v3758
      %v3815 = vmul.f32 %v3710, %v3746
      %v3816 = vmul.f32 %v3710, %v3750
      %v3817 = vmul.f32 %v3710, %v3754
      %v3818 = vmul.f32 %v3710, %v3758
      %v3819 = vmul.f32 %v3715, %v3746
      %v3820 = vmul.f32 %v3715, %v3750
      %v3821 = vmul.f32 %v3715, %v3754
      %v3822 = vmul.f32 %v3715, %v3758
      %v3823 = vmul.f32 %v3720, %v3746
      %v3824 = vmul.f32 %v3720, %v3750
      %v3825 = vmul.f32 %v3720, %v3754
      %v3826 = vmul.f32 %v3720, %v3758
      %v3827 = vmul.f32 %v3725, %v3746
      %v3828 = vmul.f32 %v3725, %v3750
      %v3829 = vmul.f32 %v3725, %v3754
      %v3830 = vmul.f32 %v3725, %v3758
      %v3831 = vmul.f32 %v3730, %v3746
      %v3832 = vmul.f32 %v3730, %v3750
      %v3833 = vmul.f32 %v3730, %v3754
      %v3834 = vmul.f32 %v3730, %v3758
      %v3835 = vmul.f32 %v3735, %v3746
      %v3836 = vmul.f32 %v3735, %v3750
      %v3837 = vmul.f32 %v3735, %v3754
      %v3838 = vmul.f32 %v3735, %v3758
      %v3839 = vmul.f32 %v3740, %v3746
      %v3840 = vmul.f32 %v3740, %v3750
      %v3841 = vmul.f32 %v3740, %v3754
      %v3842 = vmul.f32 %v3740, %v3758
      %s3843 = scalar_lea.vmem %s8, 1
      %v3844 = vld [vmem:[%s3843] ss:$8 sm:$0xf]
      %3845 = vset.pattern.permute.xlu0 1
      %3846 = vperm.xlu0 %3845, %v3621
      %v3847 = vpop.permute.xlu0 %3846
      %3849 = vset.pattern.permute.xlu0 1
      %3850 = vperm.xlu0 %3849, %v3622
      %v3851 = vpop.permute.xlu0 %3850
      %3853 = vset.pattern.permute.xlu0 1
      %3854 = vperm.xlu0 %3853, %v3623
      %v3855 = vpop.permute.xlu0 %3854
      %3857 = vset.pattern.permute.xlu0 1
      %3858 = vperm.xlu0 %3857, %v3624
      %v3859 = vpop.permute.xlu0 %3858
      %3861 = vset.pattern.permute.xlu0 1
      %3862 = vperm.xlu0 %3861, %v3625
      %v3863 = vpop.permute.xlu0 %3862
      %3865 = vset.pattern.permute.xlu0 1
      %3866 = vperm.xlu0 %3865, %v3626
      %v3867 = vpop.permute.xlu0 %3866
      %3869 = vset.pattern.permute.xlu0 1
      %3870 = vperm.xlu0 %3869, %v3627
      %v3871 = vpop.permute.xlu0 %3870
      %3873 = vset.pattern.permute.xlu0 1
      %3874 = vperm.xlu0 %3873, %v3628
      %v3875 = vpop.permute.xlu0 %3874
      %3877 = vset.pattern.permute.xlu0 1
      %3878 = vperm.xlu0 %3877, %v3629
      %v3879 = vpop.permute.xlu0 %3878
      %3881 = vset.pattern.permute.xlu0 1
      %3882 = vperm.xlu0 %3881, %v3630
      %v3883 = vpop.permute.xlu0 %3882
      %3885 = vset.pattern.permute.xlu0 1
      %3886 = vperm.xlu0 %3885, %v3631
      %v3887 = vpop.permute.xlu0 %3886
      %3889 = vset.pattern.permute.xlu0 1
      %3890 = vperm.xlu0 %3889, %v3632
      %v3891 = vpop.permute.xlu0 %3890
      %3893 = vset.pattern.permute.xlu0 1
      %3894 = vperm.xlu0 %3893, %v3633
      %v3895 = vpop.permute.xlu0 %3894
      %3897 = vset.pattern.permute.xlu0 1
      %3898 = vperm.xlu0 %3897, %v3634
      %v3899 = vpop.permute.xlu0 %3898
      %3901 = vset.pattern.permute.xlu0 1
      %3902 = vperm.xlu0 %3901, %v3635
      %v3903 = vpop.permute.xlu0 %3902
      %3905 = vset.pattern.permute.xlu0 1
      %3906 = vperm.xlu0 %3905, %v3636
      %v3907 = vpop.permute.xlu0 %3906
      %3909 = vset.pattern.permute.xlu0 1
      %3910 = vperm.xlu0 %3909, %v3637
      %v3911 = vpop.permute.xlu0 %3910
      %3913 = vset.pattern.permute.xlu0 1
      %3914 = vperm.xlu0 %3913, %v3638
      %v3915 = vpop.permute.xlu0 %3914
      %3917 = vset.pattern.permute.xlu0 1
      %3918 = vperm.xlu0 %3917, %v3639
      %v3919 = vpop.permute.xlu0 %3918
      %3921 = vset.pattern.permute.xlu0 1
      %3922 = vperm.xlu0 %3921, %v3640
      %v3923 = vpop.permute.xlu0 %3922
      %v3926 = vlaneseq
      %v3927 = vshrl.u32 %v3926, 7
      %v3928 = vsub.s32 0, %v3927
      %v3929 = vrot.slane %v3844, %v3928
      %v3930 = vlaneseq
      %v3931 = vshrl.u32 %v3930, 7
      %v3932 = vsub.s32 1, %v3931
      %v3933 = vrot.slane %v3844, %v3932
      %v3934 = vlaneseq
      %v3935 = vshrl.u32 %v3934, 7
      %v3936 = vsub.s32 2, %v3935
      %v3937 = vrot.slane %v3844, %v3936
      %v3938 = vlaneseq
      %v3939 = vshrl.u32 %v3938, 7
      %v3940 = vsub.s32 3, %v3939
      %v3941 = vrot.slane %v3844, %v3940
      %v3946 = vmul.f32 %v3847, %v3929
      %v3947 = vmul.f32 %v3847, %v3933
      %v3948 = vmul.f32 %v3847, %v3937
      %v3949 = vmul.f32 %v3847, %v3941
      %v3950 = vmul.f32 %v3851, %v3929
      %v3951 = vmul.f32 %v3851, %v3933
      %v3952 = vmul.f32 %v3851, %v3937
      %v3953 = vmul.f32 %v3851, %v3941
      %v3954 = vmul.f32 %v3855, %v3929
      %v3955 = vmul.f32 %v3855, %v3933
      %v3956 = vmul.f32 %v3855, %v3937
      %v3957 = vmul.f32 %v3855, %v3941
      %v3958 = vmul.f32 %v3859, %v3929
      %v3959 = vmul.f32 %v3859, %v3933
      %v3960 = vmul.f32 %v3859, %v3937
      %v3961 = vmul.f32 %v3859, %v3941
      %v3962 = vmul.f32 %v3863, %v3929
      %v3963 = vmul.f32 %v3863, %v3933
      %v3964 = vmul.f32 %v3863, %v3937
      %v3965 = vmul.f32 %v3863, %v3941
      %v3966 = vmul.f32 %v3867, %v3929
      %v3967 = vmul.f32 %v3867, %v3933
      %v3968 = vmul.f32 %v3867, %v3937
      %v3969 = vmul.f32 %v3867, %v3941
      %v3970 = vmul.f32 %v3871, %v3929
      %v3971 = vmul.f32 %v3871, %v3933
      %v3972 = vmul.f32 %v3871, %v3937
      %v3973 = vmul.f32 %v3871, %v3941
      %v3974 = vmul.f32 %v3875, %v3929
      %v3975 = vmul.f32 %v3875, %v3933
      %v3976 = vmul.f32 %v3875, %v3937
      %v3977 = vmul.f32 %v3875, %v3941
      %v3978 = vmul.f32 %v3879, %v3929
      %v3979 = vmul.f32 %v3879, %v3933
      %v3980 = vmul.f32 %v3879, %v3937
      %v3981 = vmul.f32 %v3879, %v3941
      %v3982 = vmul.f32 %v3883, %v3929
      %v3983 = vmul.f32 %v3883, %v3933
      %v3984 = vmul.f32 %v3883, %v3937
      %v3985 = vmul.f32 %v3883, %v3941
      %v3986 = vmul.f32 %v3887, %v3929
      %v3987 = vmul.f32 %v3887, %v3933
      %v3988 = vmul.f32 %v3887, %v3937
      %v3989 = vmul.f32 %v3887, %v3941
      %v3990 = vmul.f32 %v3891, %v3929
      %v3991 = vmul.f32 %v3891, %v3933
      %v3992 = vmul.f32 %v3891, %v3937
      %v3993 = vmul.f32 %v3891, %v3941
      %v3994 = vmul.f32 %v3895, %v3929
      %v3995 = vmul.f32 %v3895, %v3933
      %v3996 = vmul.f32 %v3895, %v3937
      %v3997 = vmul.f32 %v3895, %v3941
      %v3998 = vmul.f32 %v3899, %v3929
      %v3999 = vmul.f32 %v3899, %v3933
      %v4000 = vmul.f32 %v3899, %v3937
      %v4001 = vmul.f32 %v3899, %v3941
      %v4002 = vmul.f32 %v3903, %v3929
      %v4003 = vmul.f32 %v3903, %v3933
      %v4004 = vmul.f32 %v3903, %v3937
      %v4005 = vmul.f32 %v3903, %v3941
      %v4006 = vmul.f32 %v3907, %v3929
      %v4007 = vmul.f32 %v3907, %v3933
      %v4008 = vmul.f32 %v3907, %v3937
      %v4009 = vmul.f32 %v3907, %v3941
      %v4010 = vmul.f32 %v3911, %v3929
      %v4011 = vmul.f32 %v3911, %v3933
      %v4012 = vmul.f32 %v3911, %v3937
      %v4013 = vmul.f32 %v3911, %v3941
      %v4014 = vmul.f32 %v3915, %v3929
      %v4015 = vmul.f32 %v3915, %v3933
      %v4016 = vmul.f32 %v3915, %v3937
      %v4017 = vmul.f32 %v3915, %v3941
      %v4018 = vmul.f32 %v3919, %v3929
      %v4019 = vmul.f32 %v3919, %v3933
      %v4020 = vmul.f32 %v3919, %v3937
      %v4021 = vmul.f32 %v3919, %v3941
      %v4022 = vmul.f32 %v3923, %v3929
      %v4023 = vmul.f32 %v3923, %v3933
      %v4024 = vmul.f32 %v3923, %v3937
      %v4025 = vmul.f32 %v3923, %v3941
      %v4026 = vadd.f32 %v3763, %v3946
      %v4027 = vadd.f32 %v3764, %v3947
      %v4028 = vadd.f32 %v3765, %v3948
      %v4029 = vadd.f32 %v3766, %v3949
      %v4030 = vadd.f32 %v3767, %v3950
      %v4031 = vadd.f32 %v3768, %v3951
      %v4032 = vadd.f32 %v3769, %v3952
      %v4033 = vadd.f32 %v3770, %v3953
      %v4034 = vadd.f32 %v3771, %v3954
      %v4035 = vadd.f32 %v3772, %v3955
      %v4036 = vadd.f32 %v3773, %v3956
      %v4037 = vadd.f32 %v3774, %v3957
      %v4038 = vadd.f32 %v3775, %v3958
      %v4039 = vadd.f32 %v3776, %v3959
      %v4040 = vadd.f32 %v3777, %v3960
      %v4041 = vadd.f32 %v3778, %v3961
      %v4042 = vadd.f32 %v3779, %v3962
      %v4043 = vadd.f32 %v3780, %v3963
      %v4044 = vadd.f32 %v3781, %v3964
      %v4045 = vadd.f32 %v3782, %v3965
      %v4046 = vadd.f32 %v3783, %v3966
      %v4047 = vadd.f32 %v3784, %v3967
      %v4048 = vadd.f32 %v3785, %v3968
      %v4049 = vadd.f32 %v3786, %v3969
      %v4050 = vadd.f32 %v3787, %v3970
      %v4051 = vadd.f32 %v3788, %v3971
      %v4052 = vadd.f32 %v3789, %v3972
      %v4053 = vadd.f32 %v3790, %v3973
      %v4054 = vadd.f32 %v3791, %v3974
      %v4055 = vadd.f32 %v3792, %v3975
      %v4056 = vadd.f32 %v3793, %v3976
      %v4057 = vadd.f32 %v3794, %v3977
      %v4058 = vadd.f32 %v3795, %v3978
      %v4059 = vadd.f32 %v3796, %v3979
      %v4060 = vadd.f32 %v3797, %v3980
      %v4061 = vadd.f32 %v3798, %v3981
      %v4062 = vadd.f32 %v3799, %v3982
      %v4063 = vadd.f32 %v3800, %v3983
      %v4064 = vadd.f32 %v3801, %v3984
      %v4065 = vadd.f32 %v3802, %v3985
      %v4066 = vadd.f32 %v3803, %v3986
      %v4067 = vadd.f32 %v3804, %v3987
      %v4068 = vadd.f32 %v3805, %v3988
      %v4069 = vadd.f32 %v3806, %v3989
      %v4070 = vadd.f32 %v3807, %v3990
      %v4071 = vadd.f32 %v3808, %v3991
      %v4072 = vadd.f32 %v3809, %v3992
      %v4073 = vadd.f32 %v3810, %v3993
      %v4074 = vadd.f32 %v3811, %v3994
      %v4075 = vadd.f32 %v3812, %v3995
      %v4076 = vadd.f32 %v3813, %v3996
      %v4077 = vadd.f32 %v3814, %v3997
      %v4078 = vadd.f32 %v3815, %v3998
      %v4079 = vadd.f32 %v3816, %v3999
      %v4080 = vadd.f32 %v3817, %v4000
      %v4081 = vadd.f32 %v3818, %v4001
      %v4082 = vadd.f32 %v3819, %v4002
      %v4083 = vadd.f32 %v3820, %v4003
      %v4084 = vadd.f32 %v3821, %v4004
      %v4085 = vadd.f32 %v3822, %v4005
      %v4086 = vadd.f32 %v3823, %v4006
      %v4087 = vadd.f32 %v3824, %v4007
      %v4088 = vadd.f32 %v3825, %v4008
      %v4089 = vadd.f32 %v3826, %v4009
      %v4090 = vadd.f32 %v3827, %v4010
      %v4091 = vadd.f32 %v3828, %v4011
      %v4092 = vadd.f32 %v3829, %v4012
      %v4093 = vadd.f32 %v3830, %v4013
      %v4094 = vadd.f32 %v3831, %v4014
      %v4095 = vadd.f32 %v3832, %v4015
      %v4096 = vadd.f32 %v3833, %v4016
      %v4097 = vadd.f32 %v3834, %v4017
      %v4098 = vadd.f32 %v3835, %v4018
      %v4099 = vadd.f32 %v3836, %v4019
      %v4100 = vadd.f32 %v3837, %v4020
      %v4101 = vadd.f32 %v3838, %v4021
      %v4102 = vadd.f32 %v3839, %v4022
      %v4103 = vadd.f32 %v3840, %v4023
      %v4104 = vadd.f32 %v3841, %v4024
      %v4105 = vadd.f32 %v3842, %v4025
      %v4106 = vld [vmem:[%s9] sm:$0xf]
      %v4108 = vlaneseq
      %v4109 = vshrl.u32 %v4108, 7
      %v4110 = vsub.s32 0, %v4109
      %v4111 = vrot.slane %v4106, %v4110
      %v4112 = vlaneseq
      %v4113 = vshrl.u32 %v4112, 7
      %v4114 = vsub.s32 1, %v4113
      %v4115 = vrot.slane %v4106, %v4114
      %v4116 = vlaneseq
      %v4117 = vshrl.u32 %v4116, 7
      %v4118 = vsub.s32 2, %v4117
      %v4119 = vrot.slane %v4106, %v4118
      %v4120 = vlaneseq
      %v4121 = vshrl.u32 %v4120, 7
      %v4122 = vsub.s32 3, %v4121
      %v4123 = vrot.slane %v4106, %v4122
      %v4128 = vadd.f32 %v4026, %v4111
      %v4129 = vadd.f32 %v4027, %v4115
      %v4130 = vadd.f32 %v4028, %v4119
      %v4131 = vadd.f32 %v4029, %v4123
      %v4132 = vadd.f32 %v4030, %v4111
      %v4133 = vadd.f32 %v4031, %v4115
      %v4134 = vadd.f32 %v4032, %v4119
      %v4135 = vadd.f32 %v4033, %v4123
      %v4136 = vadd.f32 %v4034, %v4111
      %v4137 = vadd.f32 %v4035, %v4115
      %v4138 = vadd.f32 %v4036, %v4119
      %v4139 = vadd.f32 %v4037, %v4123
      %v4140 = vadd.f32 %v4038, %v4111
      %v4141 = vadd.f32 %v4039, %v4115
      %v4142 = vadd.f32 %v4040, %v4119
      %v4143 = vadd.f32 %v4041, %v4123
      %v4144 = vadd.f32 %v4042, %v4111
      %v4145 = vadd.f32 %v4043, %v4115
      %v4146 = vadd.f32 %v4044, %v4119
      %v4147 = vadd.f32 %v4045, %v4123
      %v4148 = vadd.f32 %v4046, %v4111
      %v4149 = vadd.f32 %v4047, %v4115
      %v4150 = vadd.f32 %v4048, %v4119
      %v4151 = vadd.f32 %v4049, %v4123
      %v4152 = vadd.f32 %v4050, %v4111
      %v4153 = vadd.f32 %v4051, %v4115
      %v4154 = vadd.f32 %v4052, %v4119
      %v4155 = vadd.f32 %v4053, %v4123
      %v4156 = vadd.f32 %v4054, %v4111
      %v4157 = vadd.f32 %v4055, %v4115
      %v4158 = vadd.f32 %v4056, %v4119
      %v4159 = vadd.f32 %v4057, %v4123
      %v4160 = vadd.f32 %v4058, %v4111
      %v4161 = vadd.f32 %v4059, %v4115
      %v4162 = vadd.f32 %v4060, %v4119
      %v4163 = vadd.f32 %v4061, %v4123
      %v4164 = vadd.f32 %v4062, %v4111
      %v4165 = vadd.f32 %v4063, %v4115
      %v4166 = vadd.f32 %v4064, %v4119
      %v4167 = vadd.f32 %v4065, %v4123
      %v4168 = vadd.f32 %v4066, %v4111
      %v4169 = vadd.f32 %v4067, %v4115
      %v4170 = vadd.f32 %v4068, %v4119
      %v4171 = vadd.f32 %v4069, %v4123
      %v4172 = vadd.f32 %v4070, %v4111
      %v4173 = vadd.f32 %v4071, %v4115
      %v4174 = vadd.f32 %v4072, %v4119
      %v4175 = vadd.f32 %v4073, %v4123
      %v4176 = vadd.f32 %v4074, %v4111
      %v4177 = vadd.f32 %v4075, %v4115
      %v4178 = vadd.f32 %v4076, %v4119
      %v4179 = vadd.f32 %v4077, %v4123
      %v4180 = vadd.f32 %v4078, %v4111
      %v4181 = vadd.f32 %v4079, %v4115
      %v4182 = vadd.f32 %v4080, %v4119
      %v4183 = vadd.f32 %v4081, %v4123
      %v4184 = vadd.f32 %v4082, %v4111
      %v4185 = vadd.f32 %v4083, %v4115
      %v4186 = vadd.f32 %v4084, %v4119
      %v4187 = vadd.f32 %v4085, %v4123
      %v4188 = vadd.f32 %v4086, %v4111
      %v4189 = vadd.f32 %v4087, %v4115
      %v4190 = vadd.f32 %v4088, %v4119
      %v4191 = vadd.f32 %v4089, %v4123
      %v4192 = vadd.f32 %v4090, %v4111
      %v4193 = vadd.f32 %v4091, %v4115
      %v4194 = vadd.f32 %v4092, %v4119
      %v4195 = vadd.f32 %v4093, %v4123
      %v4196 = vadd.f32 %v4094, %v4111
      %v4197 = vadd.f32 %v4095, %v4115
      %v4198 = vadd.f32 %v4096, %v4119
      %v4199 = vadd.f32 %v4097, %v4123
      %v4200 = vadd.f32 %v4098, %v4111
      %v4201 = vadd.f32 %v4099, %v4115
      %v4202 = vadd.f32 %v4100, %v4119
      %v4203 = vadd.f32 %v4101, %v4123
      %v4204 = vadd.f32 %v4102, %v4111
      %v4205 = vadd.f32 %v4103, %v4115
      %v4206 = vadd.f32 %v4104, %v4119
      %v4207 = vadd.f32 %v4105, %v4123
      %v4208 = vmax.f32 %v4128, 0.0
      %v4209 = vmax.f32 %v4129, 0.0
      %v4210 = vmax.f32 %v4130, 0.0
      %v4211 = vmax.f32 %v4131, 0.0
      %v4212 = vmax.f32 %v4132, 0.0
      %v4213 = vmax.f32 %v4133, 0.0
      %v4214 = vmax.f32 %v4134, 0.0
      %v4215 = vmax.f32 %v4135, 0.0
      %v4216 = vmax.f32 %v4136, 0.0
      %v4217 = vmax.f32 %v4137, 0.0
      %v4218 = vmax.f32 %v4138, 0.0
      %v4219 = vmax.f32 %v4139, 0.0
      %v4220 = vmax.f32 %v4140, 0.0
      %v4221 = vmax.f32 %v4141, 0.0
      %v4222 = vmax.f32 %v4142, 0.0
      %v4223 = vmax.f32 %v4143, 0.0
      %v4224 = vmax.f32 %v4144, 0.0
      %v4225 = vmax.f32 %v4145, 0.0
      %v4226 = vmax.f32 %v4146, 0.0
      %v4227 = vmax.f32 %v4147, 0.0
      %v4228 = vmax.f32 %v4148, 0.0
      %v4229 = vmax.f32 %v4149, 0.0
      %v4230 = vmax.f32 %v4150, 0.0
      %v4231 = vmax.f32 %v4151, 0.0
      %v4232 = vmax.f32 %v4152, 0.0
      %v4233 = vmax.f32 %v4153, 0.0
      %v4234 = vmax.f32 %v4154, 0.0
      %v4235 = vmax.f32 %v4155, 0.0
      %v4236 = vmax.f32 %v4156, 0.0
      %v4237 = vmax.f32 %v4157, 0.0
      %v4238 = vmax.f32 %v4158, 0.0
      %v4239 = vmax.f32 %v4159, 0.0
      %v4240 = vmax.f32 %v4160, 0.0
      %v4241 = vmax.f32 %v4161, 0.0
      %v4242 = vmax.f32 %v4162, 0.0
      %v4243 = vmax.f32 %v4163, 0.0
      %v4244 = vmax.f32 %v4164, 0.0
      %v4245 = vmax.f32 %v4165, 0.0
      %v4246 = vmax.f32 %v4166, 0.0
      %v4247 = vmax.f32 %v4167, 0.0
      %v4248 = vmax.f32 %v4168, 0.0
      %v4249 = vmax.f32 %v4169, 0.0
      %v4250 = vmax.f32 %v4170, 0.0
      %v4251 = vmax.f32 %v4171, 0.0
      %v4252 = vmax.f32 %v4172, 0.0
      %v4253 = vmax.f32 %v4173, 0.0
      %v4254 = vmax.f32 %v4174, 0.0
      %v4255 = vmax.f32 %v4175, 0.0
      %v4256 = vmax.f32 %v4176, 0.0
      %v4257 = vmax.f32 %v4177, 0.0
      %v4258 = vmax.f32 %v4178, 0.0
      %v4259 = vmax.f32 %v4179, 0.0
      %v4260 = vmax.f32 %v4180, 0.0
      %v4261 = vmax.f32 %v4181, 0.0
      %v4262 = vmax.f32 %v4182, 0.0
      %v4263 = vmax.f32 %v4183, 0.0
      %v4264 = vmax.f32 %v4184, 0.0
      %v4265 = vmax.f32 %v4185, 0.0
      %v4266 = vmax.f32 %v4186, 0.0
      %v4267 = vmax.f32 %v4187, 0.0
      %v4268 = vmax.f32 %v4188, 0.0
      %v4269 = vmax.f32 %v4189, 0.0
      %v4270 = vmax.f32 %v4190, 0.0
      %v4271 = vmax.f32 %v4191, 0.0
      %v4272 = vmax.f32 %v4192, 0.0
      %v4273 = vmax.f32 %v4193, 0.0
      %v4274 = vmax.f32 %v4194, 0.0
      %v4275 = vmax.f32 %v4195, 0.0
      %v4276 = vmax.f32 %v4196, 0.0
      %v4277 = vmax.f32 %v4197, 0.0
      %v4278 = vmax.f32 %v4198, 0.0
      %v4279 = vmax.f32 %v4199, 0.0
      %v4280 = vmax.f32 %v4200, 0.0
      %v4281 = vmax.f32 %v4201, 0.0
      %v4282 = vmax.f32 %v4202, 0.0
      %v4283 = vmax.f32 %v4203, 0.0
      %v4284 = vmax.f32 %v4204, 0.0
      %v4285 = vmax.f32 %v4205, 0.0
      %v4286 = vmax.f32 %v4206, 0.0
      %v4287 = vmax.f32 %v4207, 0.0
      %v4288 = vpack.c.bf16 %v4212, %v4208
      %v4289 = vpack.c.bf16 %v4213, %v4209
      %v4290 = vpack.c.bf16 %v4214, %v4210
      %v4291 = vpack.c.bf16 %v4215, %v4211
      %v4292 = vpack.c.bf16 %v4220, %v4216
      %v4293 = vpack.c.bf16 %v4221, %v4217
      %v4294 = vpack.c.bf16 %v4222, %v4218
      %v4295 = vpack.c.bf16 %v4223, %v4219
      %v4296 = vpack.c.bf16 %v4228, %v4224
      %v4297 = vpack.c.bf16 %v4229, %v4225
      %v4298 = vpack.c.bf16 %v4230, %v4226
      %v4299 = vpack.c.bf16 %v4231, %v4227
      %v4300 = vpack.c.bf16 %v4236, %v4232
      %v4301 = vpack.c.bf16 %v4237, %v4233
      %v4302 = vpack.c.bf16 %v4238, %v4234
      %v4303 = vpack.c.bf16 %v4239, %v4235
      %v4304 = vpack.c.bf16 %v4244, %v4240
      %v4305 = vpack.c.bf16 %v4245, %v4241
      %v4306 = vpack.c.bf16 %v4246, %v4242
      %v4307 = vpack.c.bf16 %v4247, %v4243
      %v4308 = vpack.c.bf16 %v4252, %v4248
      %v4309 = vpack.c.bf16 %v4253, %v4249
      %v4310 = vpack.c.bf16 %v4254, %v4250
      %v4311 = vpack.c.bf16 %v4255, %v4251
      %v4312 = vpack.c.bf16 %v4260, %v4256
      %v4313 = vpack.c.bf16 %v4261, %v4257
      %v4314 = vpack.c.bf16 %v4262, %v4258
      %v4315 = vpack.c.bf16 %v4263, %v4259
      %v4316 = vpack.c.bf16 %v4268, %v4264
      %v4317 = vpack.c.bf16 %v4269, %v4265
      %v4318 = vpack.c.bf16 %v4270, %v4266
      %v4319 = vpack.c.bf16 %v4271, %v4267
      %v4320 = vpack.c.bf16 %v4276, %v4272
      %v4321 = vpack.c.bf16 %v4277, %v4273
      %v4322 = vpack.c.bf16 %v4278, %v4274
      %v4323 = vpack.c.bf16 %v4279, %v4275
      %v4324 = vpack.c.bf16 %v4284, %v4280
      %v4325 = vpack.c.bf16 %v4285, %v4281
      %v4326 = vpack.c.bf16 %v4286, %v4282
      %v4327 = vpack.c.bf16 %v4287, %v4283
      %v4328 = vld [vmem:[%s10] sm:$0xff]
      %v4329 = vld [vmem:[%s10 + $0x8] sm:$0xff]
      %v4330 = vld [vmem:[%s10 + $0x10] sm:$0xff]
      %v4331 = vld [vmem:[%s10 + $0x18] sm:$0xf]
      %v4332 = vld [vmem:[%s10 + $0x1c] sm:$0xff]
      %v4333 = vld [vmem:[%s10 + $0x24] sm:$0xff]
      %v4334 = vld [vmem:[%s10 + $0x2c] sm:$0xff]
      %v4335 = vld [vmem:[%s10 + $0x34] sm:$0xf]
      %v4336 = vld [vmem:[%s10 + $0x38] sm:$0xff]
      %v4337 = vld [vmem:[%s10 + $0x40] sm:$0xff]
      %v4338 = vld [vmem:[%s10 + $0x48] sm:$0xff]
      %v4339 = vld [vmem:[%s10 + $0x50] sm:$0xf]
      %v4340 = vld [vmem:[%s10 + $0x54] sm:$0xff]
      %v4341 = vld [vmem:[%s10 + $0x5c] sm:$0xff]
      %v4342 = vld [vmem:[%s10 + $0x64] sm:$0xff]
      %v4343 = vld [vmem:[%s10 + $0x6c] sm:$0xf]
      %v4344 = vld [vmem:[%s10 + $0x70] sm:$0xff]
      %v4345 = vld [vmem:[%s10 + $0x78] sm:$0xff]
      %v4346 = vld [vmem:[%s10 + $0x80] sm:$0xff]
      %v4347 = vld [vmem:[%s10 + $0x88] sm:$0xf]
      %v4348 = vld [vmem:[%s10 + $0x8c] sm:$0xff]
      %v4349 = vld [vmem:[%s10 + $0x94] sm:$0xff]
      %v4350 = vld [vmem:[%s10 + $0x9c] sm:$0xff]
      %v4351 = vld [vmem:[%s10 + $0xa4] sm:$0xf]
      %v4352 = vld [vmem:[%s10 + $0xa8] sm:$0xff]
      %v4353 = vld [vmem:[%s10 + $0xb0] sm:$0xff]
      %v4354 = vld [vmem:[%s10 + $0xb8] sm:$0xff]
      %v4355 = vld [vmem:[%s10 + $0xc0] sm:$0xf]
      %v4356 = vld [vmem:[%s10 + $0xc4] sm:$0xff]
      %v4357 = vld [vmem:[%s10 + $0xcc] sm:$0xff]
      %v4358 = vld [vmem:[%s10 + $0xd4] sm:$0xff]
      %v4359 = vld [vmem:[%s10 + $0xdc] sm:$0xf]
      %v4360 = vld [vmem:[%s10 + $0xe0] sm:$0xff]
      %v4361 = vld [vmem:[%s10 + $0xe8] sm:$0xff]
      %v4362 = vld [vmem:[%s10 + $0xf0] sm:$0xff]
      %v4363 = vld [vmem:[%s10 + $0xf8] sm:$0xf]
      %v4364 = vld [vmem:[%s10 + $0xfc] sm:$0xff]
      %v4365 = vld [vmem:[%s10 + $0x104] sm:$0xff]
      %v4366 = vld [vmem:[%s10 + $0x10c] sm:$0xff]
      %v4367 = vld [vmem:[%s10 + $0x114] sm:$0xf]
      %v4368 = vld [vmem:[%s10 + $0x118] sm:$0xff]
      %v4369 = vld [vmem:[%s10 + $0x120] sm:$0xff]
      %v4370 = vld [vmem:[%s10 + $0x128] sm:$0xff]
      %v4371 = vld [vmem:[%s10 + $0x130] sm:$0xf]
      %v4372 = vld [vmem:[%s10 + $0x134] sm:$0xff]
      %v4373 = vld [vmem:[%s10 + $0x13c] sm:$0xff]
      %v4374 = vld [vmem:[%s10 + $0x144] sm:$0xff]
      %v4375 = vld [vmem:[%s10 + $0x14c] sm:$0xf]
      %v4376 = vld [vmem:[%s10 + $0x150] sm:$0xff]
      %v4377 = vld [vmem:[%s10 + $0x158] sm:$0xff]
      %v4378 = vld [vmem:[%s10 + $0x160] sm:$0xff]
      %v4379 = vld [vmem:[%s10 + $0x168] sm:$0xf]
      %v4380 = vld [vmem:[%s10 + $0x16c] sm:$0xff]
      %v4381 = vld [vmem:[%s10 + $0x174] sm:$0xff]
      %v4382 = vld [vmem:[%s10 + $0x17c] sm:$0xff]
      %v4383 = vld [vmem:[%s10 + $0x184] sm:$0xf]
      %v4384 = vld [vmem:[%s10 + $0x188] sm:$0xff]
      %v4385 = vld [vmem:[%s10 + $0x190] sm:$0xff]
      %v4386 = vld [vmem:[%s10 + $0x198] sm:$0xff]
      %v4387 = vld [vmem:[%s10 + $0x1a0] sm:$0xf]
      %v4388 = vld [vmem:[%s10 + $0x1a4] sm:$0xff]
      %v4389 = vld [vmem:[%s10 + $0x1ac] sm:$0xff]
      %v4390 = vld [vmem:[%s10 + $0x1b4] sm:$0xff]
      %v4391 = vld [vmem:[%s10 + $0x1bc] sm:$0xf]
      %v4392 = vld [vmem:[%s10 + $0x1c0] sm:$0xff]
      %v4393 = vld [vmem:[%s10 + $0x1c8] sm:$0xff]
      %v4394 = vld [vmem:[%s10 + $0x1d0] sm:$0xff]
      %v4395 = vld [vmem:[%s10 + $0x1d8] sm:$0xf]
      %v4396 = vld [vmem:[%s10 + $0x1dc] sm:$0xff]
      %v4397 = vld [vmem:[%s10 + $0x1e4] sm:$0xff]
      %v4398 = vld [vmem:[%s10 + $0x1ec] sm:$0xff]
      %v4399 = vld [vmem:[%s10 + $0x1f4] sm:$0xf]
      %v4400 = vld [vmem:[%s10 + $0x1f8] sm:$0xff]
      %v4401 = vld [vmem:[%s10 + $0x200] sm:$0xff]
      %v4402 = vld [vmem:[%s10 + $0x208] sm:$0xff]
      %v4403 = vld [vmem:[%s10 + $0x210] sm:$0xf]
      %v4404 = vld [vmem:[%s10 + $0x214] sm:$0xff]
      %v4405 = vld [vmem:[%s10 + $0x21c] sm:$0xff]
      %v4406 = vld [vmem:[%s10 + $0x224] sm:$0xff]
      %v4407 = vld [vmem:[%s10 + $0x22c] sm:$0xf]
      %v4408 = vld [vmem:[%s10 + $0x230] sm:$0xff]
      %v4409 = vld [vmem:[%s10 + $0x238] sm:$0xff]
      %v4410 = vld [vmem:[%s10 + $0x240] sm:$0xff]
      %v4411 = vld [vmem:[%s10 + $0x248] sm:$0xf]
      %v4412 = vld [vmem:[%s10 + $0x24c] sm:$0xff]
      %v4413 = vld [vmem:[%s10 + $0x254] sm:$0xff]
      %v4414 = vld [vmem:[%s10 + $0x25c] sm:$0xff]
      %v4415 = vld [vmem:[%s10 + $0x264] sm:$0xf]
      %v4416 = vld [vmem:[%s10 + $0x268] sm:$0xff]
      %v4417 = vld [vmem:[%s10 + $0x270] sm:$0xff]
      %v4418 = vld [vmem:[%s10 + $0x278] sm:$0xff]
      %v4419 = vld [vmem:[%s10 + $0x280] sm:$0xf]
      %v4420 = vld [vmem:[%s10 + $0x284] sm:$0xff]
      %v4421 = vld [vmem:[%s10 + $0x28c] sm:$0xff]
      %v4422 = vld [vmem:[%s10 + $0x294] sm:$0xff]
      %v4423 = vld [vmem:[%s10 + $0x29c] sm:$0xf]
      %v4424 = vld [vmem:[%s10 + $0x2a0] sm:$0xff]
      %v4425 = vld [vmem:[%s10 + $0x2a8] sm:$0xff]
      %v4426 = vld [vmem:[%s10 + $0x2b0] sm:$0xff]
      %v4427 = vld [vmem:[%s10 + $0x2b8] sm:$0xf]
      %v4428 = vld [vmem:[%s10 + $0x2bc] sm:$0xff]
      %v4429 = vld [vmem:[%s10 + $0x2c4] sm:$0xff]
      %v4430 = vld [vmem:[%s10 + $0x2cc] sm:$0xff]
      %v4431 = vld [vmem:[%s10 + $0x2d4] sm:$0xf]
      %v4432 = vld [vmem:[%s10 + $0x2d8] sm:$0xff]
      %v4433 = vld [vmem:[%s10 + $0x2e0] sm:$0xff]
      %v4434 = vld [vmem:[%s10 + $0x2e8] sm:$0xff]
      %v4435 = vld [vmem:[%s10 + $0x2f0] sm:$0xf]
      %v4436 = vld [vmem:[%s10 + $0x2f4] sm:$0xff]
      %v4437 = vld [vmem:[%s10 + $0x2fc] sm:$0xff]
      %v4438 = vld [vmem:[%s10 + $0x304] sm:$0xff]
      %v4439 = vld [vmem:[%s10 + $0x30c] sm:$0xf]
      %v4440 = vld [vmem:[%s10 + $0x310] sm:$0xff]
      %v4441 = vld [vmem:[%s10 + $0x318] sm:$0xff]
      %v4442 = vld [vmem:[%s10 + $0x320] sm:$0xff]
      %v4443 = vld [vmem:[%s10 + $0x328] sm:$0xf]
      %v4444 = vld [vmem:[%s10 + $0x32c] sm:$0xff]
      %v4445 = vld [vmem:[%s10 + $0x334] sm:$0xff]
      %v4446 = vld [vmem:[%s10 + $0x33c] sm:$0xff]
      %v4447 = vld [vmem:[%s10 + $0x344] sm:$0xf]
      %v4448 = vld [vmem:[%s10 + $0x348] sm:$0xff]
      %v4449 = vld [vmem:[%s10 + $0x350] sm:$0xff]
      %v4450 = vld [vmem:[%s10 + $0x358] sm:$0xff]
      %v4451 = vld [vmem:[%s10 + $0x360] sm:$0xf]
      %v4452 = vld [vmem:[%s10 + $0x364] sm:$0xff]
      %v4453 = vld [vmem:[%s10 + $0x36c] sm:$0xff]
      %v4454 = vld [vmem:[%s10 + $0x374] sm:$0xff]
      %v4455 = vld [vmem:[%s10 + $0x37c] sm:$0xf]
      %v4456 = vld [vmem:[%s10 + $0x380] sm:$0xff]
      %v4457 = vld [vmem:[%s10 + $0x388] sm:$0xff]
      %v4458 = vld [vmem:[%s10 + $0x390] sm:$0xff]
      %v4459 = vld [vmem:[%s10 + $0x398] sm:$0xf]
      %v4460 = vld [vmem:[%s10 + $0x39c] sm:$0xff]
      %v4461 = vld [vmem:[%s10 + $0x3a4] sm:$0xff]
      %v4462 = vld [vmem:[%s10 + $0x3ac] sm:$0xff]
      %v4463 = vld [vmem:[%s10 + $0x3b4] sm:$0xf]
      %v4464 = vld [vmem:[%s10 + $0x3b8] sm:$0xff]
      %v4465 = vld [vmem:[%s10 + $0x3c0] sm:$0xff]
      %v4466 = vld [vmem:[%s10 + $0x3c8] sm:$0xff]
      %v4467 = vld [vmem:[%s10 + $0x3d0] sm:$0xf]
      %v4468 = vld [vmem:[%s10 + $0x3d4] sm:$0xff]
      %v4469 = vld [vmem:[%s10 + $0x3dc] sm:$0xff]
      %v4470 = vld [vmem:[%s10 + $0x3e4] sm:$0xff]
      %v4471 = vld [vmem:[%s10 + $0x3ec] sm:$0xf]
      %v4472 = vld [vmem:[%s10 + $0x3f0] sm:$0xff]
      %v4473 = vld [vmem:[%s10 + $0x3f8] sm:$0xff]
      %v4474 = vld [vmem:[%s10 + $0x400] sm:$0xff]
      %v4475 = vld [vmem:[%s10 + $0x408] sm:$0xf]
      %v4476 = vld [vmem:[%s10 + $0x40c] sm:$0xff]
      %v4477 = vld [vmem:[%s10 + $0x414] sm:$0xff]
      %v4478 = vld [vmem:[%s10 + $0x41c] sm:$0xff]
      %v4479 = vld [vmem:[%s10 + $0x424] sm:$0xf]
      %v4480 = vld [vmem:[%s10 + $0x428] sm:$0xff]
      %v4481 = vld [vmem:[%s10 + $0x430] sm:$0xff]
      %v4482 = vld [vmem:[%s10 + $0x438] sm:$0xff]
      %v4483 = vld [vmem:[%s10 + $0x440] sm:$0xf]
      %v4484 = vld [vmem:[%s10 + $0x444] sm:$0xff]
      %v4485 = vld [vmem:[%s10 + $0x44c] sm:$0xff]
      %v4486 = vld [vmem:[%s10 + $0x454] sm:$0xff]
      %v4487 = vld [vmem:[%s10 + $0x45c] sm:$0xf]
      %v4488 = vld [vmem:[%s10 + $0x460] sm:$0xff]
      %v4489 = vld [vmem:[%s10 + $0x468] sm:$0xff]
      %v4490 = vld [vmem:[%s10 + $0x470] sm:$0xff]
      %v4491 = vld [vmem:[%s10 + $0x478] sm:$0xf]
      %v4492 = vld [vmem:[%s10 + $0x47c] sm:$0xff]
      %v4493 = vld [vmem:[%s10 + $0x484] sm:$0xff]
      %v4494 = vld [vmem:[%s10 + $0x48c] sm:$0xff]
      %v4495 = vld [vmem:[%s10 + $0x494] sm:$0xf]
      %v4496 = vld [vmem:[%s10 + $0x498] sm:$0xff]
      %v4497 = vld [vmem:[%s10 + $0x4a0] sm:$0xff]
      %v4498 = vld [vmem:[%s10 + $0x4a8] sm:$0xff]
      %v4499 = vld [vmem:[%s10 + $0x4b0] sm:$0xf]
      %v4500 = vld [vmem:[%s10 + $0x4b4] sm:$0xff]
      %v4501 = vld [vmem:[%s10 + $0x4bc] sm:$0xff]
      %v4502 = vld [vmem:[%s10 + $0x4c4] sm:$0xff]
      %v4503 = vld [vmem:[%s10 + $0x4cc] sm:$0xf]
      %v4504 = vld [vmem:[%s10 + $0x4d0] sm:$0xff]
      %v4505 = vld [vmem:[%s10 + $0x4d8] sm:$0xff]
      %v4506 = vld [vmem:[%s10 + $0x4e0] sm:$0xff]
      %v4507 = vld [vmem:[%s10 + $0x4e8] sm:$0xf]
      %v4508 = vld [vmem:[%s10 + $0x4ec] sm:$0xff]
      %v4509 = vld [vmem:[%s10 + $0x4f4] sm:$0xff]
      %v4510 = vld [vmem:[%s10 + $0x4fc] sm:$0xff]
      %v4511 = vld [vmem:[%s10 + $0x504] sm:$0xf]
      %v4512 = vld [vmem:[%s10 + $0x508] sm:$0xff]
      %v4513 = vld [vmem:[%s10 + $0x510] sm:$0xff]
      %v4514 = vld [vmem:[%s10 + $0x518] sm:$0xff]
      %v4515 = vld [vmem:[%s10 + $0x520] sm:$0xf]
      %v4516 = vld [vmem:[%s10 + $0x524] sm:$0xff]
      %v4517 = vld [vmem:[%s10 + $0x52c] sm:$0xff]
      %v4518 = vld [vmem:[%s10 + $0x534] sm:$0xff]
      %v4519 = vld [vmem:[%s10 + $0x53c] sm:$0xf]
      %v4520 = vld [vmem:[%s10 + $0x540] sm:$0xff]
      %v4521 = vld [vmem:[%s10 + $0x548] sm:$0xff]
      %v4522 = vld [vmem:[%s10 + $0x550] sm:$0xff]
      %v4523 = vld [vmem:[%s10 + $0x558] sm:$0xf]
      %v4524 = vld [vmem:[%s10 + $0x55c] sm:$0xff]
      %v4525 = vld [vmem:[%s10 + $0x564] sm:$0xff]
      %v4526 = vld [vmem:[%s10 + $0x56c] sm:$0xff]
      %v4527 = vld [vmem:[%s10 + $0x574] sm:$0xf]
      %v4528 = vld [vmem:[%s10 + $0x578] sm:$0xff]
      %v4529 = vld [vmem:[%s10 + $0x580] sm:$0xff]
      %v4530 = vld [vmem:[%s10 + $0x588] sm:$0xff]
      %v4531 = vld [vmem:[%s10 + $0x590] sm:$0xf]
      %v4532 = vld [vmem:[%s10 + $0x594] sm:$0xff]
      %v4533 = vld [vmem:[%s10 + $0x59c] sm:$0xff]
      %v4534 = vld [vmem:[%s10 + $0x5a4] sm:$0xff]
      %v4535 = vld [vmem:[%s10 + $0x5ac] sm:$0xf]
      %v4536 = vld [vmem:[%s10 + $0x5b0] sm:$0xff]
      %v4537 = vld [vmem:[%s10 + $0x5b8] sm:$0xff]
      %v4538 = vld [vmem:[%s10 + $0x5c0] sm:$0xff]
      %v4539 = vld [vmem:[%s10 + $0x5c8] sm:$0xf]
      %v4540 = vld [vmem:[%s10 + $0x5cc] sm:$0xff]
      %v4541 = vld [vmem:[%s10 + $0x5d4] sm:$0xff]
      %v4542 = vld [vmem:[%s10 + $0x5dc] sm:$0xff]
      %v4543 = vld [vmem:[%s10 + $0x5e4] sm:$0xf]
      %v4544 = vld [vmem:[%s10 + $0x5e8] sm:$0xff]
      %v4545 = vld [vmem:[%s10 + $0x5f0] sm:$0xff]
      %v4546 = vld [vmem:[%s10 + $0x5f8] sm:$0xff]
      %v4547 = vld [vmem:[%s10 + $0x600] sm:$0xf]
      %v4548 = vld [vmem:[%s10 + $0x604] sm:$0xff]
      %v4549 = vld [vmem:[%s10 + $0x60c] sm:$0xff]
      %v4550 = vld [vmem:[%s10 + $0x614] sm:$0xff]
      %v4551 = vld [vmem:[%s10 + $0x61c] sm:$0xf]
      %v4552 = vld [vmem:[%s10 + $0x620] sm:$0xff]
      %v4553 = vld [vmem:[%s10 + $0x628] sm:$0xff]
      %v4554 = vld [vmem:[%s10 + $0x630] sm:$0xff]
      %v4555 = vld [vmem:[%s10 + $0x638] sm:$0xf]
      %v4556 = vld [vmem:[%s10 + $0x63c] sm:$0xff]
      %v4557 = vld [vmem:[%s10 + $0x644] sm:$0xff]
      %v4558 = vld [vmem:[%s10 + $0x64c] sm:$0xff]
      %v4559 = vld [vmem:[%s10 + $0x654] sm:$0xf]
      %v4560 = vld [vmem:[%s10 + $0x658] sm:$0xff]
      %v4561 = vld [vmem:[%s10 + $0x660] sm:$0xff]
      %v4562 = vld [vmem:[%s10 + $0x668] sm:$0xff]
      %v4563 = vld [vmem:[%s10 + $0x670] sm:$0xf]
      %v4564 = vld [vmem:[%s10 + $0x674] sm:$0xff]
      %v4565 = vld [vmem:[%s10 + $0x67c] sm:$0xff]
      %v4566 = vld [vmem:[%s10 + $0x684] sm:$0xff]
      %v4567 = vld [vmem:[%s10 + $0x68c] sm:$0xf]
      %v4568 = vld [vmem:[%s10 + $0x690] sm:$0xff]
      %v4569 = vld [vmem:[%s10 + $0x698] sm:$0xff]
      %v4570 = vld [vmem:[%s10 + $0x6a0] sm:$0xff]
      %v4571 = vld [vmem:[%s10 + $0x6a8] sm:$0xf]
      %v4572 = vld [vmem:[%s10 + $0x6ac] sm:$0xff]
      %v4573 = vld [vmem:[%s10 + $0x6b4] sm:$0xff]
      %v4574 = vld [vmem:[%s10 + $0x6bc] sm:$0xff]
      %v4575 = vld [vmem:[%s10 + $0x6c4] sm:$0xf]
      %v4576 = vld [vmem:[%s10 + $0x6c8] sm:$0xff]
      %v4577 = vld [vmem:[%s10 + $0x6d0] sm:$0xff]
      %v4578 = vld [vmem:[%s10 + $0x6d8] sm:$0xff]
      %v4579 = vld [vmem:[%s10 + $0x6e0] sm:$0xf]
      %v4580 = vld [vmem:[%s10 + $0x6e4] sm:$0xff]
      %v4581 = vld [vmem:[%s10 + $0x6ec] sm:$0xff]
      %v4582 = vld [vmem:[%s10 + $0x6f4] sm:$0xff]
      %v4583 = vld [vmem:[%s10 + $0x6fc] sm:$0xf]
      %v4584 = vld [vmem:[%s11] sm:$0xff]
      %v4586 = vlaneseq
      %v4587 = vshrl.u32 %v4586, 7
      %v4588 = vsub.s32 0, %v4587
      %v4589 = vrot.slane %v4584, %v4588
      %v4590 = vlaneseq
      %v4591 = vshrl.u32 %v4590, 7
      %v4592 = vsub.s32 1, %v4591
      %v4593 = vrot.slane %v4584, %v4592
      %v4594 = vlaneseq
      %v4595 = vshrl.u32 %v4594, 7
      %v4596 = vsub.s32 2, %v4595
      %v4597 = vrot.slane %v4584, %v4596
      %v4598 = vlaneseq
      %v4599 = vshrl.u32 %v4598, 7
      %v4600 = vsub.s32 3, %v4599
      %v4601 = vrot.slane %v4584, %v4600
      %v4602 = vlaneseq
      %v4603 = vshrl.u32 %v4602, 7
      %v4604 = vsub.s32 4, %v4603
      %v4605 = vrot.slane %v4584, %v4604
      %v4606 = vlaneseq
      %v4607 = vshrl.u32 %v4606, 7
      %v4608 = vsub.s32 5, %v4607
      %v4609 = vrot.slane %v4584, %v4608
      %v4610 = vlaneseq
      %v4611 = vshrl.u32 %v4610, 7
      %v4612 = vsub.s32 6, %v4611
      %v4613 = vrot.slane %v4584, %v4612
      %v4877 = vunpack.c.l.b16 %v4328
      %v4878 = vunpack.c.h.b16 %v4328
      %v4879 = vunpack.c.l.b16 %v4329
      %v4880 = vunpack.c.h.b16 %v4329
      %v4881 = vunpack.c.l.b16 %v4330
      %v4882 = vunpack.c.h.b16 %v4330
      %v4883 = vunpack.c.l.b16 %v4331
      %v4884 = vunpack.c.l.b16 %v4332
      %v4885 = vunpack.c.h.b16 %v4332
      %v4886 = vunpack.c.l.b16 %v4333
      %v4887 = vunpack.c.h.b16 %v4333
      %v4888 = vunpack.c.l.b16 %v4334
      %v4889 = vunpack.c.h.b16 %v4334
      %v4890 = vunpack.c.l.b16 %v4335
      %v4891 = vunpack.c.l.b16 %v4336
      %v4892 = vunpack.c.h.b16 %v4336
      %v4893 = vunpack.c.l.b16 %v4337
      %v4894 = vunpack.c.h.b16 %v4337
      %v4895 = vunpack.c.l.b16 %v4338
      %v4896 = vunpack.c.h.b16 %v4338
      %v4897 = vunpack.c.l.b16 %v4339
      %v4898 = vunpack.c.l.b16 %v4340
      %v4899 = vunpack.c.h.b16 %v4340
      %v4900 = vunpack.c.l.b16 %v4341
      %v4901 = vunpack.c.h.b16 %v4341
      %v4902 = vunpack.c.l.b16 %v4342
      %v4903 = vunpack.c.h.b16 %v4342
      %v4904 = vunpack.c.l.b16 %v4343
      %v4905 = vunpack.c.l.b16 %v4344
      %v4906 = vunpack.c.h.b16 %v4344
      %v4907 = vunpack.c.l.b16 %v4345
      %v4908 = vunpack.c.h.b16 %v4345
      %v4909 = vunpack.c.l.b16 %v4346
      %v4910 = vunpack.c.h.b16 %v4346
      %v4911 = vunpack.c.l.b16 %v4347
      %v4912 = vunpack.c.l.b16 %v4348
      %v4913 = vunpack.c.h.b16 %v4348
      %v4914 = vunpack.c.l.b16 %v4349
      %v4915 = vunpack.c.h.b16 %v4349
      %v4916 = vunpack.c.l.b16 %v4350
      %v4917 = vunpack.c.h.b16 %v4350
      %v4918 = vunpack.c.l.b16 %v4351
      %v4919 = vunpack.c.l.b16 %v4352
      %v4920 = vunpack.c.h.b16 %v4352
      %v4921 = vunpack.c.l.b16 %v4353
      %v4922 = vunpack.c.h.b16 %v4353
      %v4923 = vunpack.c.l.b16 %v4354
      %v4924 = vunpack.c.h.b16 %v4354
      %v4925 = vunpack.c.l.b16 %v4355
      %v4926 = vunpack.c.l.b16 %v4356
      %v4927 = vunpack.c.h.b16 %v4356
      %v4928 = vunpack.c.l.b16 %v4357
      %v4929 = vunpack.c.h.b16 %v4357
      %v4930 = vunpack.c.l.b16 %v4358
      %v4931 = vunpack.c.h.b16 %v4358
      %v4932 = vunpack.c.l.b16 %v4359
      %v4933 = vunpack.c.l.b16 %v4360
      %v4934 = vunpack.c.h.b16 %v4360
      %v4935 = vunpack.c.l.b16 %v4361
      %v4936 = vunpack.c.h.b16 %v4361
      %v4937 = vunpack.c.l.b16 %v4362
      %v4938 = vunpack.c.h.b16 %v4362
      %v4939 = vunpack.c.l.b16 %v4363
      %v4940 = vunpack.c.l.b16 %v4364
      %v4941 = vunpack.c.h.b16 %v4364
      %v4942 = vunpack.c.l.b16 %v4365
      %v4943 = vunpack.c.h.b16 %v4365
      %v4944 = vunpack.c.l.b16 %v4366
      %v4945 = vunpack.c.h.b16 %v4366
      %v4946 = vunpack.c.l.b16 %v4367
      %v4947 = vunpack.c.l.b16 %v4368
      %v4948 = vunpack.c.h.b16 %v4368
      %v4949 = vunpack.c.l.b16 %v4369
      %v4950 = vunpack.c.h.b16 %v4369
      %v4951 = vunpack.c.l.b16 %v4370
      %v4952 = vunpack.c.h.b16 %v4370
      %v4953 = vunpack.c.l.b16 %v4371
      %v4954 = vunpack.c.l.b16 %v4372
      %v4955 = vunpack.c.h.b16 %v4372
      %v4956 = vunpack.c.l.b16 %v4373
      %v4957 = vunpack.c.h.b16 %v4373
      %v4958 = vunpack.c.l.b16 %v4374
      %v4959 = vunpack.c.h.b16 %v4374
      %v4960 = vunpack.c.l.b16 %v4375
      %v4961 = vunpack.c.l.b16 %v4376
      %v4962 = vunpack.c.h.b16 %v4376
      %v4963 = vunpack.c.l.b16 %v4377
      %v4964 = vunpack.c.h.b16 %v4377
      %v4965 = vunpack.c.l.b16 %v4378
      %v4966 = vunpack.c.h.b16 %v4378
      %v4967 = vunpack.c.l.b16 %v4379
      %v4968 = vunpack.c.l.b16 %v4380
      %v4969 = vunpack.c.h.b16 %v4380
      %v4970 = vunpack.c.l.b16 %v4381
      %v4971 = vunpack.c.h.b16 %v4381
      %v4972 = vunpack.c.l.b16 %v4382
      %v4973 = vunpack.c.h.b16 %v4382
      %v4974 = vunpack.c.l.b16 %v4383
      %v4975 = vunpack.c.l.b16 %v4384
      %v4976 = vunpack.c.h.b16 %v4384
      %v4977 = vunpack.c.l.b16 %v4385
      %v4978 = vunpack.c.h.b16 %v4385
      %v4979 = vunpack.c.l.b16 %v4386
      %v4980 = vunpack.c.h.b16 %v4386
      %v4981 = vunpack.c.l.b16 %v4387
      %v4982 = vunpack.c.l.b16 %v4388
      %v4983 = vunpack.c.h.b16 %v4388
      %v4984 = vunpack.c.l.b16 %v4389
      %v4985 = vunpack.c.h.b16 %v4389
      %v4986 = vunpack.c.l.b16 %v4390
      %v4987 = vunpack.c.h.b16 %v4390
      %v4988 = vunpack.c.l.b16 %v4391
      %v4989 = vunpack.c.l.b16 %v4392
      %v4990 = vunpack.c.h.b16 %v4392
      %v4991 = vunpack.c.l.b16 %v4393
      %v4992 = vunpack.c.h.b16 %v4393
      %v4993 = vunpack.c.l.b16 %v4394
      %v4994 = vunpack.c.h.b16 %v4394
      %v4995 = vunpack.c.l.b16 %v4395
      %v4996 = vunpack.c.l.b16 %v4396
      %v4997 = vunpack.c.h.b16 %v4396
      %v4998 = vunpack.c.l.b16 %v4397
      %v4999 = vunpack.c.h.b16 %v4397
      %v5000 = vunpack.c.l.b16 %v4398
      %v5001 = vunpack.c.h.b16 %v4398
      %v5002 = vunpack.c.l.b16 %v4399
      %v5003 = vunpack.c.l.b16 %v4400
      %v5004 = vunpack.c.h.b16 %v4400
      %v5005 = vunpack.c.l.b16 %v4401
      %v5006 = vunpack.c.h.b16 %v4401
      %v5007 = vunpack.c.l.b16 %v4402
      %v5008 = vunpack.c.h.b16 %v4402
      %v5009 = vunpack.c.l.b16 %v4403
      %v5010 = vunpack.c.l.b16 %v4404
      %v5011 = vunpack.c.h.b16 %v4404
      %v5012 = vunpack.c.l.b16 %v4405
      %v5013 = vunpack.c.h.b16 %v4405
      %v5014 = vunpack.c.l.b16 %v4406
      %v5015 = vunpack.c.h.b16 %v4406
      %v5016 = vunpack.c.l.b16 %v4407
      %v5017 = vunpack.c.l.b16 %v4408
      %v5018 = vunpack.c.h.b16 %v4408
      %v5019 = vunpack.c.l.b16 %v4409
      %v5020 = vunpack.c.h.b16 %v4409
      %v5021 = vunpack.c.l.b16 %v4410
      %v5022 = vunpack.c.h.b16 %v4410
      %v5023 = vunpack.c.l.b16 %v4411
      %v5024 = vunpack.c.l.b16 %v4412
      %v5025 = vunpack.c.h.b16 %v4412
      %v5026 = vunpack.c.l.b16 %v4413
      %v5027 = vunpack.c.h.b16 %v4413
      %v5028 = vunpack.c.l.b16 %v4414
      %v5029 = vunpack.c.h.b16 %v4414
      %v5030 = vunpack.c.l.b16 %v4415
      %v5031 = vunpack.c.l.b16 %v4416
      %v5032 = vunpack.c.h.b16 %v4416
      %v5033 = vunpack.c.l.b16 %v4417
      %v5034 = vunpack.c.h.b16 %v4417
      %v5035 = vunpack.c.l.b16 %v4418
      %v5036 = vunpack.c.h.b16 %v4418
      %v5037 = vunpack.c.l.b16 %v4419
      %v5038 = vunpack.c.l.b16 %v4420
      %v5039 = vunpack.c.h.b16 %v4420
      %v5040 = vunpack.c.l.b16 %v4421
      %v5041 = vunpack.c.h.b16 %v4421
      %v5042 = vunpack.c.l.b16 %v4422
      %v5043 = vunpack.c.h.b16 %v4422
      %v5044 = vunpack.c.l.b16 %v4423
      %v5045 = vunpack.c.l.b16 %v4424
      %v5046 = vunpack.c.h.b16 %v4424
      %v5047 = vunpack.c.l.b16 %v4425
      %v5048 = vunpack.c.h.b16 %v4425
      %v5049 = vunpack.c.l.b16 %v4426
      %v5050 = vunpack.c.h.b16 %v4426
      %v5051 = vunpack.c.l.b16 %v4427
      %v5052 = vunpack.c.l.b16 %v4428
      %v5053 = vunpack.c.h.b16 %v4428
      %v5054 = vunpack.c.l.b16 %v4429
      %v5055 = vunpack.c.h.b16 %v4429
      %v5056 = vunpack.c.l.b16 %v4430
      %v5057 = vunpack.c.h.b16 %v4430
      %v5058 = vunpack.c.l.b16 %v4431
      %v5059 = vunpack.c.l.b16 %v4432
      %v5060 = vunpack.c.h.b16 %v4432
      %v5061 = vunpack.c.l.b16 %v4433
      %v5062 = vunpack.c.h.b16 %v4433
      %v5063 = vunpack.c.l.b16 %v4434
      %v5064 = vunpack.c.h.b16 %v4434
      %v5065 = vunpack.c.l.b16 %v4435
      %v5066 = vunpack.c.l.b16 %v4436
      %v5067 = vunpack.c.h.b16 %v4436
      %v5068 = vunpack.c.l.b16 %v4437
      %v5069 = vunpack.c.h.b16 %v4437
      %v5070 = vunpack.c.l.b16 %v4438
      %v5071 = vunpack.c.h.b16 %v4438
      %v5072 = vunpack.c.l.b16 %v4439
      %v5073 = vunpack.c.l.b16 %v4440
      %v5074 = vunpack.c.h.b16 %v4440
      %v5075 = vunpack.c.l.b16 %v4441
      %v5076 = vunpack.c.h.b16 %v4441
      %v5077 = vunpack.c.l.b16 %v4442
      %v5078 = vunpack.c.h.b16 %v4442
      %v5079 = vunpack.c.l.b16 %v4443
      %v5080 = vunpack.c.l.b16 %v4444
      %v5081 = vunpack.c.h.b16 %v4444
      %v5082 = vunpack.c.l.b16 %v4445
      %v5083 = vunpack.c.h.b16 %v4445
      %v5084 = vunpack.c.l.b16 %v4446
      %v5085 = vunpack.c.h.b16 %v4446
      %v5086 = vunpack.c.l.b16 %v4447
      %v5087 = vunpack.c.l.b16 %v4448
      %v5088 = vunpack.c.h.b16 %v4448
      %v5089 = vunpack.c.l.b16 %v4449
      %v5090 = vunpack.c.h.b16 %v4449
      %v5091 = vunpack.c.l.b16 %v4450
      %v5092 = vunpack.c.h.b16 %v4450
      %v5093 = vunpack.c.l.b16 %v4451
      %v5094 = vunpack.c.l.b16 %v4452
      %v5095 = vunpack.c.h.b16 %v4452
      %v5096 = vunpack.c.l.b16 %v4453
      %v5097 = vunpack.c.h.b16 %v4453
      %v5098 = vunpack.c.l.b16 %v4454
      %v5099 = vunpack.c.h.b16 %v4454
      %v5100 = vunpack.c.l.b16 %v4455
      %v5101 = vunpack.c.l.b16 %v4456
      %v5102 = vunpack.c.h.b16 %v4456
      %v5103 = vunpack.c.l.b16 %v4457
      %v5104 = vunpack.c.h.b16 %v4457
      %v5105 = vunpack.c.l.b16 %v4458
      %v5106 = vunpack.c.h.b16 %v4458
      %v5107 = vunpack.c.l.b16 %v4459
      %v5108 = vunpack.c.l.b16 %v4460
      %v5109 = vunpack.c.h.b16 %v4460
      %v5110 = vunpack.c.l.b16 %v4461
      %v5111 = vunpack.c.h.b16 %v4461
      %v5112 = vunpack.c.l.b16 %v4462
      %v5113 = vunpack.c.h.b16 %v4462
      %v5114 = vunpack.c.l.b16 %v4463
      %v5115 = vunpack.c.l.b16 %v4464
      %v5116 = vunpack.c.h.b16 %v4464
      %v5117 = vunpack.c.l.b16 %v4465
      %v5118 = vunpack.c.h.b16 %v4465
      %v5119 = vunpack.c.l.b16 %v4466
      %v5120 = vunpack.c.h.b16 %v4466
      %v5121 = vunpack.c.l.b16 %v4467
      %v5122 = vunpack.c.l.b16 %v4468
      %v5123 = vunpack.c.h.b16 %v4468
      %v5124 = vunpack.c.l.b16 %v4469
      %v5125 = vunpack.c.h.b16 %v4469
      %v5126 = vunpack.c.l.b16 %v4470
      %v5127 = vunpack.c.h.b16 %v4470
      %v5128 = vunpack.c.l.b16 %v4471
      %v5129 = vunpack.c.l.b16 %v4472
      %v5130 = vunpack.c.h.b16 %v4472
      %v5131 = vunpack.c.l.b16 %v4473
      %v5132 = vunpack.c.h.b16 %v4473
      %v5133 = vunpack.c.l.b16 %v4474
      %v5134 = vunpack.c.h.b16 %v4474
      %v5135 = vunpack.c.l.b16 %v4475
      %v5136 = vunpack.c.l.b16 %v4476
      %v5137 = vunpack.c.h.b16 %v4476
      %v5138 = vunpack.c.l.b16 %v4477
      %v5139 = vunpack.c.h.b16 %v4477
      %v5140 = vunpack.c.l.b16 %v4478
      %v5141 = vunpack.c.h.b16 %v4478
      %v5142 = vunpack.c.l.b16 %v4479
      %v5143 = vunpack.c.l.b16 %v4480
      %v5144 = vunpack.c.h.b16 %v4480
      %v5145 = vunpack.c.l.b16 %v4481
      %v5146 = vunpack.c.h.b16 %v4481
      %v5147 = vunpack.c.l.b16 %v4482
      %v5148 = vunpack.c.h.b16 %v4482
      %v5149 = vunpack.c.l.b16 %v4483
      %v5150 = vunpack.c.l.b16 %v4484
      %v5151 = vunpack.c.h.b16 %v4484
      %v5152 = vunpack.c.l.b16 %v4485
      %v5153 = vunpack.c.h.b16 %v4485
      %v5154 = vunpack.c.l.b16 %v4486
      %v5155 = vunpack.c.h.b16 %v4486
      %v5156 = vunpack.c.l.b16 %v4487
      %v5157 = vunpack.c.l.b16 %v4488
      %v5158 = vunpack.c.h.b16 %v4488
      %v5159 = vunpack.c.l.b16 %v4489
      %v5160 = vunpack.c.h.b16 %v4489
      %v5161 = vunpack.c.l.b16 %v4490
      %v5162 = vunpack.c.h.b16 %v4490
      %v5163 = vunpack.c.l.b16 %v4491
      %v5164 = vunpack.c.l.b16 %v4492
      %v5165 = vunpack.c.h.b16 %v4492
      %v5166 = vunpack.c.l.b16 %v4493
      %v5167 = vunpack.c.h.b16 %v4493
      %v5168 = vunpack.c.l.b16 %v4494
      %v5169 = vunpack.c.h.b16 %v4494
      %v5170 = vunpack.c.l.b16 %v4495
      %v5171 = vunpack.c.l.b16 %v4496
      %v5172 = vunpack.c.h.b16 %v4496
      %v5173 = vunpack.c.l.b16 %v4497
      %v5174 = vunpack.c.h.b16 %v4497
      %v5175 = vunpack.c.l.b16 %v4498
      %v5176 = vunpack.c.h.b16 %v4498
      %v5177 = vunpack.c.l.b16 %v4499
      %v5178 = vunpack.c.l.b16 %v4500
      %v5179 = vunpack.c.h.b16 %v4500
      %v5180 = vunpack.c.l.b16 %v4501
      %v5181 = vunpack.c.h.b16 %v4501
      %v5182 = vunpack.c.l.b16 %v4502
      %v5183 = vunpack.c.h.b16 %v4502
      %v5184 = vunpack.c.l.b16 %v4503
      %v5185 = vunpack.c.l.b16 %v4504
      %v5186 = vunpack.c.h.b16 %v4504
      %v5187 = vunpack.c.l.b16 %v4505
      %v5188 = vunpack.c.h.b16 %v4505
      %v5189 = vunpack.c.l.b16 %v4506
      %v5190 = vunpack.c.h.b16 %v4506
      %v5191 = vunpack.c.l.b16 %v4507
      %v5192 = vunpack.c.l.b16 %v4508
      %v5193 = vunpack.c.h.b16 %v4508
      %v5194 = vunpack.c.l.b16 %v4509
      %v5195 = vunpack.c.h.b16 %v4509
      %v5196 = vunpack.c.l.b16 %v4510
      %v5197 = vunpack.c.h.b16 %v4510
      %v5198 = vunpack.c.l.b16 %v4511
      %v5199 = vunpack.c.l.b16 %v4512
      %v5200 = vunpack.c.h.b16 %v4512
      %v5201 = vunpack.c.l.b16 %v4513
      %v5202 = vunpack.c.h.b16 %v4513
      %v5203 = vunpack.c.l.b16 %v4514
      %v5204 = vunpack.c.h.b16 %v4514
      %v5205 = vunpack.c.l.b16 %v4515
      %v5206 = vunpack.c.l.b16 %v4516
      %v5207 = vunpack.c.h.b16 %v4516
      %v5208 = vunpack.c.l.b16 %v4517
      %v5209 = vunpack.c.h.b16 %v4517
      %v5210 = vunpack.c.l.b16 %v4518
      %v5211 = vunpack.c.h.b16 %v4518
      %v5212 = vunpack.c.l.b16 %v4519
      %v5213 = vunpack.c.l.b16 %v4520
      %v5214 = vunpack.c.h.b16 %v4520
      %v5215 = vunpack.c.l.b16 %v4521
      %v5216 = vunpack.c.h.b16 %v4521
      %v5217 = vunpack.c.l.b16 %v4522
      %v5218 = vunpack.c.h.b16 %v4522
      %v5219 = vunpack.c.l.b16 %v4523
      %v5220 = vunpack.c.l.b16 %v4524
      %v5221 = vunpack.c.h.b16 %v4524
      %v5222 = vunpack.c.l.b16 %v4525
      %v5223 = vunpack.c.h.b16 %v4525
      %v5224 = vunpack.c.l.b16 %v4526
      %v5225 = vunpack.c.h.b16 %v4526
      %v5226 = vunpack.c.l.b16 %v4527
      %v5227 = vunpack.c.l.b16 %v4528
      %v5228 = vunpack.c.h.b16 %v4528
      %v5229 = vunpack.c.l.b16 %v4529
      %v5230 = vunpack.c.h.b16 %v4529
      %v5231 = vunpack.c.l.b16 %v4530
      %v5232 = vunpack.c.h.b16 %v4530
      %v5233 = vunpack.c.l.b16 %v4531
      %v5234 = vunpack.c.l.b16 %v4532
      %v5235 = vunpack.c.h.b16 %v4532
      %v5236 = vunpack.c.l.b16 %v4533
      %v5237 = vunpack.c.h.b16 %v4533
      %v5238 = vunpack.c.l.b16 %v4534
      %v5239 = vunpack.c.h.b16 %v4534
      %v5240 = vunpack.c.l.b16 %v4535
      %v5241 = vunpack.c.l.b16 %v4536
      %v5242 = vunpack.c.h.b16 %v4536
      %v5243 = vunpack.c.l.b16 %v4537
      %v5244 = vunpack.c.h.b16 %v4537
      %v5245 = vunpack.c.l.b16 %v4538
      %v5246 = vunpack.c.h.b16 %v4538
      %v5247 = vunpack.c.l.b16 %v4539
      %v5248 = vunpack.c.l.b16 %v4540
      %v5249 = vunpack.c.h.b16 %v4540
      %v5250 = vunpack.c.l.b16 %v4541
      %v5251 = vunpack.c.h.b16 %v4541
      %v5252 = vunpack.c.l.b16 %v4542
      %v5253 = vunpack.c.h.b16 %v4542
      %v5254 = vunpack.c.l.b16 %v4543
      %v5255 = vunpack.c.l.b16 %v4544
      %v5256 = vunpack.c.h.b16 %v4544
      %v5257 = vunpack.c.l.b16 %v4545
      %v5258 = vunpack.c.h.b16 %v4545
      %v5259 = vunpack.c.l.b16 %v4546
      %v5260 = vunpack.c.h.b16 %v4546
      %v5261 = vunpack.c.l.b16 %v4547
      %v5262 = vunpack.c.l.b16 %v4548
      %v5263 = vunpack.c.h.b16 %v4548
      %v5264 = vunpack.c.l.b16 %v4549
      %v5265 = vunpack.c.h.b16 %v4549
      %v5266 = vunpack.c.l.b16 %v4550
      %v5267 = vunpack.c.h.b16 %v4550
      %v5268 = vunpack.c.l.b16 %v4551
      %v5269 = vunpack.c.l.b16 %v4552
      %v5270 = vunpack.c.h.b16 %v4552
      %v5271 = vunpack.c.l.b16 %v4553
      %v5272 = vunpack.c.h.b16 %v4553
      %v5273 = vunpack.c.l.b16 %v4554
      %v5274 = vunpack.c.h.b16 %v4554
      %v5275 = vunpack.c.l.b16 %v4555
      %v5276 = vunpack.c.l.b16 %v4556
      %v5277 = vunpack.c.h.b16 %v4556
      %v5278 = vunpack.c.l.b16 %v4557
      %v5279 = vunpack.c.h.b16 %v4557
      %v5280 = vunpack.c.l.b16 %v4558
      %v5281 = vunpack.c.h.b16 %v4558
      %v5282 = vunpack.c.l.b16 %v4559
      %v5283 = vunpack.c.l.b16 %v4560
      %v5284 = vunpack.c.h.b16 %v4560
      %v5285 = vunpack.c.l.b16 %v4561
      %v5286 = vunpack.c.h.b16 %v4561
      %v5287 = vunpack.c.l.b16 %v4562
      %v5288 = vunpack.c.h.b16 %v4562
      %v5289 = vunpack.c.l.b16 %v4563
      %v5290 = vunpack.c.l.b16 %v4564
      %v5291 = vunpack.c.h.b16 %v4564
      %v5292 = vunpack.c.l.b16 %v4565
      %v5293 = vunpack.c.h.b16 %v4565
      %v5294 = vunpack.c.l.b16 %v4566
      %v5295 = vunpack.c.h.b16 %v4566
      %v5296 = vunpack.c.l.b16 %v4567
      %v5297 = vunpack.c.l.b16 %v4568
      %v5298 = vunpack.c.h.b16 %v4568
      %v5299 = vunpack.c.l.b16 %v4569
      %v5300 = vunpack.c.h.b16 %v4569
      %v5301 = vunpack.c.l.b16 %v4570
      %v5302 = vunpack.c.h.b16 %v4570
      %v5303 = vunpack.c.l.b16 %v4571
      %v5304 = vunpack.c.l.b16 %v4572
      %v5305 = vunpack.c.h.b16 %v4572
      %v5306 = vunpack.c.l.b16 %v4573
      %v5307 = vunpack.c.h.b16 %v4573
      %v5308 = vunpack.c.l.b16 %v4574
      %v5309 = vunpack.c.h.b16 %v4574
      %v5310 = vunpack.c.l.b16 %v4575
      %v5311 = vunpack.c.l.b16 %v4576
      %v5312 = vunpack.c.h.b16 %v4576
      %v5313 = vunpack.c.l.b16 %v4577
      %v5314 = vunpack.c.h.b16 %v4577
      %v5315 = vunpack.c.l.b16 %v4578
      %v5316 = vunpack.c.h.b16 %v4578
      %v5317 = vunpack.c.l.b16 %v4579
      %v5318 = vunpack.c.l.b16 %v4580
      %v5319 = vunpack.c.h.b16 %v4580
      %v5320 = vunpack.c.l.b16 %v4581
      %v5321 = vunpack.c.h.b16 %v4581
      %v5322 = vunpack.c.l.b16 %v4582
      %v5323 = vunpack.c.h.b16 %v4582
      %v5324 = vunpack.c.l.b16 %v4583
      %v5325 = vpack.c.b16 %v4884, %v4877
      %v5326 = vpack.c.b16 %v4885, %v4878
      %v5327 = vpack.c.b16 %v4886, %v4879
      %v5328 = vpack.c.b16 %v4887, %v4880
      %v5329 = vpack.c.b16 %v4888, %v4881
      %v5330 = vpack.c.b16 %v4889, %v4882
      %v5331 = vpack.c.b16 %v4890, %v4883
      %v5332 = vpack.c.b16 %v4898, %v4891
      %v5333 = vpack.c.b16 %v4899, %v4892
      %v5334 = vpack.c.b16 %v4900, %v4893
      %v5335 = vpack.c.b16 %v4901, %v4894
      %v5336 = vpack.c.b16 %v4902, %v4895
      %v5337 = vpack.c.b16 %v4903, %v4896
      %v5338 = vpack.c.b16 %v4904, %v4897
      %v5339 = vpack.c.b16 %v4912, %v4905
      %v5340 = vpack.c.b16 %v4913, %v4906
      %v5341 = vpack.c.b16 %v4914, %v4907
      %v5342 = vpack.c.b16 %v4915, %v4908
      %v5343 = vpack.c.b16 %v4916, %v4909
      %v5344 = vpack.c.b16 %v4917, %v4910
      %v5345 = vpack.c.b16 %v4918, %v4911
      %v5346 = vpack.c.b16 %v4926, %v4919
      %v5347 = vpack.c.b16 %v4927, %v4920
      %v5348 = vpack.c.b16 %v4928, %v4921
      %v5349 = vpack.c.b16 %v4929, %v4922
      %v5350 = vpack.c.b16 %v4930, %v4923
      %v5351 = vpack.c.b16 %v4931, %v4924
      %v5352 = vpack.c.b16 %v4932, %v4925
      %v5353 = vpack.c.b16 %v4940, %v4933
      %v5354 = vpack.c.b16 %v4941, %v4934
      %v5355 = vpack.c.b16 %v4942, %v4935
      %v5356 = vpack.c.b16 %v4943, %v4936
      %v5357 = vpack.c.b16 %v4944, %v4937
      %v5358 = vpack.c.b16 %v4945, %v4938
      %v5359 = vpack.c.b16 %v4946, %v4939
      %v5360 = vpack.c.b16 %v4954, %v4947
      %v5361 = vpack.c.b16 %v4955, %v4948
      %v5362 = vpack.c.b16 %v4956, %v4949
      %v5363 = vpack.c.b16 %v4957, %v4950
      %v5364 = vpack.c.b16 %v4958, %v4951
      %v5365 = vpack.c.b16 %v4959, %v4952
      %v5366 = vpack.c.b16 %v4960, %v4953
      %v5367 = vpack.c.b16 %v4968, %v4961
      %v5368 = vpack.c.b16 %v4969, %v4962
      %v5369 = vpack.c.b16 %v4970, %v4963
      %v5370 = vpack.c.b16 %v4971, %v4964
      %v5371 = vpack.c.b16 %v4972, %v4965
      %v5372 = vpack.c.b16 %v4973, %v4966
      %v5373 = vpack.c.b16 %v4974, %v4967
      %v5374 = vpack.c.b16 %v4982, %v4975
      %v5375 = vpack.c.b16 %v4983, %v4976
      %v5376 = vpack.c.b16 %v4984, %v4977
      %v5377 = vpack.c.b16 %v4985, %v4978
      %v5378 = vpack.c.b16 %v4986, %v4979
      %v5379 = vpack.c.b16 %v4987, %v4980
      %v5380 = vpack.c.b16 %v4988, %v4981
      %v5381 = vpack.c.b16 %v4996, %v4989
      %v5382 = vpack.c.b16 %v4997, %v4990
      %v5383 = vpack.c.b16 %v4998, %v4991
      %v5384 = vpack.c.b16 %v4999, %v4992
      %v5385 = vpack.c.b16 %v5000, %v4993
      %v5386 = vpack.c.b16 %v5001, %v4994
      %v5387 = vpack.c.b16 %v5002, %v4995
      %v5388 = vpack.c.b16 %v5010, %v5003
      %v5389 = vpack.c.b16 %v5011, %v5004
      %v5390 = vpack.c.b16 %v5012, %v5005
      %v5391 = vpack.c.b16 %v5013, %v5006
      %v5392 = vpack.c.b16 %v5014, %v5007
      %v5393 = vpack.c.b16 %v5015, %v5008
      %v5394 = vpack.c.b16 %v5016, %v5009
      %v5395 = vpack.c.b16 %v5024, %v5017
      %v5396 = vpack.c.b16 %v5025, %v5018
      %v5397 = vpack.c.b16 %v5026, %v5019
      %v5398 = vpack.c.b16 %v5027, %v5020
      %v5399 = vpack.c.b16 %v5028, %v5021
      %v5400 = vpack.c.b16 %v5029, %v5022
      %v5401 = vpack.c.b16 %v5030, %v5023
      %v5402 = vpack.c.b16 %v5038, %v5031
      %v5403 = vpack.c.b16 %v5039, %v5032
      %v5404 = vpack.c.b16 %v5040, %v5033
      %v5405 = vpack.c.b16 %v5041, %v5034
      %v5406 = vpack.c.b16 %v5042, %v5035
      %v5407 = vpack.c.b16 %v5043, %v5036
      %v5408 = vpack.c.b16 %v5044, %v5037
      %v5409 = vpack.c.b16 %v5052, %v5045
      %v5410 = vpack.c.b16 %v5053, %v5046
      %v5411 = vpack.c.b16 %v5054, %v5047
      %v5412 = vpack.c.b16 %v5055, %v5048
      %v5413 = vpack.c.b16 %v5056, %v5049
      %v5414 = vpack.c.b16 %v5057, %v5050
      %v5415 = vpack.c.b16 %v5058, %v5051
      %v5416 = vpack.c.b16 %v5066, %v5059
      %v5417 = vpack.c.b16 %v5067, %v5060
      %v5418 = vpack.c.b16 %v5068, %v5061
      %v5419 = vpack.c.b16 %v5069, %v5062
      %v5420 = vpack.c.b16 %v5070, %v5063
      %v5421 = vpack.c.b16 %v5071, %v5064
      %v5422 = vpack.c.b16 %v5072, %v5065
      %v5423 = vpack.c.b16 %v5080, %v5073
      %v5424 = vpack.c.b16 %v5081, %v5074
      %v5425 = vpack.c.b16 %v5082, %v5075
      %v5426 = vpack.c.b16 %v5083, %v5076
      %v5427 = vpack.c.b16 %v5084, %v5077
      %v5428 = vpack.c.b16 %v5085, %v5078
      %v5429 = vpack.c.b16 %v5086, %v5079
      %v5430 = vpack.c.b16 %v5094, %v5087
      %v5431 = vpack.c.b16 %v5095, %v5088
      %v5432 = vpack.c.b16 %v5096, %v5089
      %v5433 = vpack.c.b16 %v5097, %v5090
      %v5434 = vpack.c.b16 %v5098, %v5091
      %v5435 = vpack.c.b16 %v5099, %v5092
      %v5436 = vpack.c.b16 %v5100, %v5093
      %v5437 = vpack.c.b16 %v5108, %v5101
      %v5438 = vpack.c.b16 %v5109, %v5102
      %v5439 = vpack.c.b16 %v5110, %v5103
      %v5440 = vpack.c.b16 %v5111, %v5104
      %v5441 = vpack.c.b16 %v5112, %v5105
      %v5442 = vpack.c.b16 %v5113, %v5106
      %v5443 = vpack.c.b16 %v5114, %v5107
      %v5444 = vpack.c.b16 %v5122, %v5115
      %v5445 = vpack.c.b16 %v5123, %v5116
      %v5446 = vpack.c.b16 %v5124, %v5117
      %v5447 = vpack.c.b16 %v5125, %v5118
      %v5448 = vpack.c.b16 %v5126, %v5119
      %v5449 = vpack.c.b16 %v5127, %v5120
      %v5450 = vpack.c.b16 %v5128, %v5121
      %v5451 = vpack.c.b16 %v5136, %v5129
      %v5452 = vpack.c.b16 %v5137, %v5130
      %v5453 = vpack.c.b16 %v5138, %v5131
      %v5454 = vpack.c.b16 %v5139, %v5132
      %v5455 = vpack.c.b16 %v5140, %v5133
      %v5456 = vpack.c.b16 %v5141, %v5134
      %v5457 = vpack.c.b16 %v5142, %v5135
      %v5458 = vpack.c.b16 %v5150, %v5143
      %v5459 = vpack.c.b16 %v5151, %v5144
      %v5460 = vpack.c.b16 %v5152, %v5145
      %v5461 = vpack.c.b16 %v5153, %v5146
      %v5462 = vpack.c.b16 %v5154, %v5147
      %v5463 = vpack.c.b16 %v5155, %v5148
      %v5464 = vpack.c.b16 %v5156, %v5149
      %v5465 = vpack.c.b16 %v5164, %v5157
      %v5466 = vpack.c.b16 %v5165, %v5158
      %v5467 = vpack.c.b16 %v5166, %v5159
      %v5468 = vpack.c.b16 %v5167, %v5160
      %v5469 = vpack.c.b16 %v5168, %v5161
      %v5470 = vpack.c.b16 %v5169, %v5162
      %v5471 = vpack.c.b16 %v5170, %v5163
      %v5472 = vpack.c.b16 %v5178, %v5171
      %v5473 = vpack.c.b16 %v5179, %v5172
      %v5474 = vpack.c.b16 %v5180, %v5173
      %v5475 = vpack.c.b16 %v5181, %v5174
      %v5476 = vpack.c.b16 %v5182, %v5175
      %v5477 = vpack.c.b16 %v5183, %v5176
      %v5478 = vpack.c.b16 %v5184, %v5177
      %v5479 = vpack.c.b16 %v5192, %v5185
      %v5480 = vpack.c.b16 %v5193, %v5186
      %v5481 = vpack.c.b16 %v5194, %v5187
      %v5482 = vpack.c.b16 %v5195, %v5188
      %v5483 = vpack.c.b16 %v5196, %v5189
      %v5484 = vpack.c.b16 %v5197, %v5190
      %v5485 = vpack.c.b16 %v5198, %v5191
      %v5486 = vpack.c.b16 %v5206, %v5199
      %v5487 = vpack.c.b16 %v5207, %v5200
      %v5488 = vpack.c.b16 %v5208, %v5201
      %v5489 = vpack.c.b16 %v5209, %v5202
      %v5490 = vpack.c.b16 %v5210, %v5203
      %v5491 = vpack.c.b16 %v5211, %v5204
      %v5492 = vpack.c.b16 %v5212, %v5205
      %v5493 = vpack.c.b16 %v5220, %v5213
      %v5494 = vpack.c.b16 %v5221, %v5214
      %v5495 = vpack.c.b16 %v5222, %v5215
      %v5496 = vpack.c.b16 %v5223, %v5216
      %v5497 = vpack.c.b16 %v5224, %v5217
      %v5498 = vpack.c.b16 %v5225, %v5218
      %v5499 = vpack.c.b16 %v5226, %v5219
      %v5500 = vpack.c.b16 %v5234, %v5227
      %v5501 = vpack.c.b16 %v5235, %v5228
      %v5502 = vpack.c.b16 %v5236, %v5229
      %v5503 = vpack.c.b16 %v5237, %v5230
      %v5504 = vpack.c.b16 %v5238, %v5231
      %v5505 = vpack.c.b16 %v5239, %v5232
      %v5506 = vpack.c.b16 %v5240, %v5233
      %v5507 = vpack.c.b16 %v5248, %v5241
      %v5508 = vpack.c.b16 %v5249, %v5242
      %v5509 = vpack.c.b16 %v5250, %v5243
      %v5510 = vpack.c.b16 %v5251, %v5244
      %v5511 = vpack.c.b16 %v5252, %v5245
      %v5512 = vpack.c.b16 %v5253, %v5246
      %v5513 = vpack.c.b16 %v5254, %v5247
      %v5514 = vpack.c.b16 %v5262, %v5255
      %v5515 = vpack.c.b16 %v5263, %v5256
      %v5516 = vpack.c.b16 %v5264, %v5257
      %v5517 = vpack.c.b16 %v5265, %v5258
      %v5518 = vpack.c.b16 %v5266, %v5259
      %v5519 = vpack.c.b16 %v5267, %v5260
      %v5520 = vpack.c.b16 %v5268, %v5261
      %v5521 = vpack.c.b16 %v5276, %v5269
      %v5522 = vpack.c.b16 %v5277, %v5270
      %v5523 = vpack.c.b16 %v5278, %v5271
      %v5524 = vpack.c.b16 %v5279, %v5272
      %v5525 = vpack.c.b16 %v5280, %v5273
      %v5526 = vpack.c.b16 %v5281, %v5274
      %v5527 = vpack.c.b16 %v5282, %v5275
      %v5528 = vpack.c.b16 %v5290, %v5283
      %v5529 = vpack.c.b16 %v5291, %v5284
      %v5530 = vpack.c.b16 %v5292, %v5285
      %v5531 = vpack.c.b16 %v5293, %v5286
      %v5532 = vpack.c.b16 %v5294, %v5287
      %v5533 = vpack.c.b16 %v5295, %v5288
      %v5534 = vpack.c.b16 %v5296, %v5289
      %v5535 = vpack.c.b16 %v5304, %v5297
      %v5536 = vpack.c.b16 %v5305, %v5298
      %v5537 = vpack.c.b16 %v5306, %v5299
      %v5538 = vpack.c.b16 %v5307, %v5300
      %v5539 = vpack.c.b16 %v5308, %v5301
      %v5540 = vpack.c.b16 %v5309, %v5302
      %v5541 = vpack.c.b16 %v5310, %v5303
      %v5542 = vpack.c.b16 %v5318, %v5311
      %v5543 = vpack.c.b16 %v5319, %v5312
      %v5544 = vpack.c.b16 %v5320, %v5313
      %v5545 = vpack.c.b16 %v5321, %v5314
      %v5546 = vpack.c.b16 %v5322, %v5315
      %v5547 = vpack.c.b16 %v5323, %v5316
      %v5548 = vpack.c.b16 %v5324, %v5317
      %5773 = vmatprep.subr.bf16.mxu0 %v5326
      %5774 = vmatpush1.bf16.msra.mxu0 %v5325
      %5775 = vmatprep.subr.bf16.mxu0 %v5333
      %5776 = vmatpush1.bf16.msra.mxu0 %v5332
      %5777 = vmatprep.subr.bf16.mxu0 %v5340
      %5778 = vmatpush1.bf16.msra.mxu0 %v5339
      %5779 = vmatprep.subr.bf16.mxu0 %v5347
      %5780 = vmatpush1.bf16.msra.mxu0 %v5346
      %5781 = vmatprep.subr.bf16.mxu0 %v5354
      %5782 = vmatpush1.bf16.msra.mxu0 %v5353
      %5783 = vmatprep.subr.bf16.mxu0 %v5361
      %5784 = vmatpush1.bf16.msra.mxu0 %v5360
      %5785 = vmatprep.subr.bf16.mxu0 %v5368
      %5786 = vmatpush1.bf16.msra.mxu0 %v5367
      %5787 = vmatprep.subr.bf16.mxu0 %v5375
      %5788 = vmatpush1.bf16.msra.mxu0 %v5374
      %5789 = vmatprep.subr.bf16.mxu0 %v5382
      %5790 = vmatpush1.bf16.msra.mxu0 %v5381
      %5791 = vmatprep.subr.bf16.mxu0 %v5389
      %5792 = vmatpush1.bf16.msra.mxu0 %v5388
      %5793 = vmatprep.subr.bf16.mxu0 %v5396
      %5794 = vmatpush1.bf16.msra.mxu0 %v5395
      %5795 = vmatprep.subr.bf16.mxu0 %v5403
      %5796 = vmatpush1.bf16.msra.mxu0 %v5402
      %5797 = vmatprep.subr.bf16.mxu0 %v5410
      %5798 = vmatpush1.bf16.msra.mxu0 %v5409
      %5799 = vmatprep.subr.bf16.mxu0 %v5417
      %5800 = vmatpush1.bf16.msra.mxu0 %v5416
      %5801 = vmatprep.subr.bf16.mxu0 %v5424
      %5802 = vmatpush1.bf16.msra.mxu0 %v5423
      %5803 = vmatprep.subr.bf16.mxu0 %v5431
      %5804 = vmatpush1.bf16.msra.mxu0 %v5430
      %5805 = vmatprep.mubr.bf16.mxu0 %v4289
      %5806 = vmatmul.mubr.bf16.gmra.mrb[0].mxu0 %v4288
      %v5807 = vpop.f32.mrb[0].mxu0
      %v5808 = vadd.f32 %v4589, %v5807
      %v5809 = vpop.f32.mrb[0].mxu0
      %v5810 = vadd.f32 %v4593, %v5809
      %v5811 = vpop.f32.mrb[0].mxu0
      %v5812 = vadd.f32 %v4589, %v5811
      %v5813 = vpop.f32.mrb[0].mxu0
      %v5814 = vadd.f32 %v4593, %v5813
      %5815 = vmatprep.mubr.bf16.mxu0 %v4293
      %5816 = vmatmul.mubr.bf16.gmra.mrb[0].mxu0 %v4292
      %v5817 = vpop.f32.mrb[0].mxu0
      %v5818 = vadd.f32 %v4589, %v5817
      %v5819 = vpop.f32.mrb[0].mxu0
      %v5820 = vadd.f32 %v4593, %v5819
      %v5821 = vpop.f32.mrb[0].mxu0
      %v5822 = vadd.f32 %v4589, %v5821
      %v5823 = vpop.f32.mrb[0].mxu0
      %v5824 = vadd.f32 %v4593, %v5823
      %5825 = vmatprep.mubr.bf16.mxu0 %v4297
      %5826 = vmatmul.mubr.bf16.gmra.mrb[0].mxu0 %v4296
      %v5827 = vpop.f32.mrb[0].mxu0
      %v5828 = vadd.f32 %v4589, %v5827
      %v5829 = vpop.f32.mrb[0].mxu0
      %v5830 = vadd.f32 %v4593, %v5829
      %v5831 = vpop.f32.mrb[0].mxu0
      %v5832 = vadd.f32 %v4589, %v5831
      %v5833 = vpop.f32.mrb[0].mxu0
      %v5834 = vadd.f32 %v4593, %v5833
      %5835 = vmatprep.mubr.bf16.mxu0 %v4301
      %5836 = vmatmul.mubr.bf16.gmra.mrb[0].mxu0 %v4300
      %v5837 = vpop.f32.mrb[0].mxu0
      %v5838 = vadd.f32 %v4589, %v5837
      %v5839 = vpop.f32.mrb[0].mxu0
      %v5840 = vadd.f32 %v4593, %v5839
      %v5841 = vpop.f32.mrb[0].mxu0
      %v5842 = vadd.f32 %v4589, %v5841
      %v5843 = vpop.f32.mrb[0].mxu0
      %v5844 = vadd.f32 %v4593, %v5843
      %5845 = vmatprep.mubr.bf16.mxu0 %v4305
      %5846 = vmatmul.mubr.bf16.gmra.mrb[0].mxu0 %v4304
      %v5847 = vpop.f32.mrb[0].mxu0
      %v5848 = vadd.f32 %v4589, %v5847
      %v5849 = vpop.f32.mrb[0].mxu0
      %v5850 = vadd.f32 %v4593, %v5849
      %v5851 = vpop.f32.mrb[0].mxu0
      %v5852 = vadd.f32 %v4589, %v5851
      %v5853 = vpop.f32.mrb[0].mxu0
      %v5854 = vadd.f32 %v4593, %v5853
      %5855 = vmatprep.mubr.bf16.mxu0 %v4309
      %5856 = vmatmul.mubr.bf16.gmra.mrb[0].mxu0 %v4308
      %v5857 = vpop.f32.mrb[0].mxu0
      %v5858 = vadd.f32 %v4589, %v5857
      %v5859 = vpop.f32.mrb[0].mxu0
      %v5860 = vadd.f32 %v4593, %v5859
      %v5861 = vpop.f32.mrb[0].mxu0
      %v5862 = vadd.f32 %v4589, %v5861
      %v5863 = vpop.f32.mrb[0].mxu0
      %v5864 = vadd.f32 %v4593, %v5863
      %5865 = vmatprep.mubr.bf16.mxu0 %v4313
      %5866 = vmatmul.mubr.bf16.gmra.mrb[0].mxu0 %v4312
      %v5867 = vpop.f32.mrb[0].mxu0
      %v5868 = vadd.f32 %v4589, %v5867
      %v5869 = vpop.f32.mrb[0].mxu0
      %v5870 = vadd.f32 %v4593, %v5869
      %v5871 = vpop.f32.mrb[0].mxu0
      %v5872 = vadd.f32 %v4589, %v5871
      %v5873 = vpop.f32.mrb[0].mxu0
      %v5874 = vadd.f32 %v4593, %v5873
      %5875 = vmatprep.mubr.bf16.mxu0 %v4317
      %5876 = vmatmul.mubr.bf16.gmra.mrb[0].mxu0 %v4316
      %v5877 = vpop.f32.mrb[0].mxu0
      %v5878 = vadd.f32 %v4589, %v5877
      %v5879 = vpop.f32.mrb[0].mxu0
      %v5880 = vadd.f32 %v4593, %v5879
      %v5881 = vpop.f32.mrb[0].mxu0
      %v5882 = vadd.f32 %v4589, %v5881
      %v5883 = vpop.f32.mrb[0].mxu0
      %v5884 = vadd.f32 %v4593, %v5883
      %5885 = vmatprep.mubr.bf16.mxu0 %v4321
      %5886 = vmatmul.mubr.bf16.gmra.mrb[0].mxu0 %v4320
      %v5887 = vpop.f32.mrb[0].mxu0
      %v5888 = vadd.f32 %v4589, %v5887
      %v5889 = vpop.f32.mrb[0].mxu0
      %v5890 = vadd.f32 %v4593, %v5889
      %v5891 = vpop.f32.mrb[0].mxu0
      %v5892 = vadd.f32 %v4589, %v5891
      %v5893 = vpop.f32.mrb[0].mxu0
      %v5894 = vadd.f32 %v4593, %v5893
      %5895 = vmatprep.mubr.bf16.mxu0 %v4325
      %5896 = vmatmul.mubr.bf16.gmra.mrb[0].mxu0 %v4324
      %v5897 = vpop.f32.mrb[0].mxu0
      %v5898 = vadd.f32 %v4589, %v5897
      %v5899 = vpop.f32.mrb[0].mxu0
      %v5900 = vadd.f32 %v4593, %v5899
      %v5901 = vpop.f32.mrb[0].mxu0
      %v5902 = vadd.f32 %v4589, %v5901
      %v5903 = vpop.f32.mrb[0].mxu0
      %v5904 = vadd.f32 %v4593, %v5903
      %5905 = vdwg.mxu0
      %5906 = vmatprep.subr.bf16.mxu0 %v5438
      %5907 = vmatpush1.bf16.msra.mxu0 %v5437
      %5908 = vmatprep.subr.bf16.mxu0 %v5445
      %5909 = vmatpush1.bf16.msra.mxu0 %v5444
      %5910 = vmatprep.subr.bf16.mxu0 %v5452
      %5911 = vmatpush1.bf16.msra.mxu0 %v5451
      %5912 = vmatprep.subr.bf16.mxu0 %v5459
      %5913 = vmatpush1.bf16.msra.mxu0 %v5458
      %5914 = vmatprep.subr.bf16.mxu0 %v5466
      %5915 = vmatpush1.bf16.msra.mxu0 %v5465
      %5916 = vmatprep.subr.bf16.mxu0 %v5473
      %5917 = vmatpush1.bf16.msra.mxu0 %v5472
      %5918 = vmatprep.subr.bf16.mxu0 %v5480
      %5919 = vmatpush1.bf16.msra.mxu0 %v5479
      %5920 = vmatprep.subr.bf16.mxu0 %v5487
      %5921 = vmatpush1.bf16.msra.mxu0 %v5486
      %5922 = vmatprep.subr.bf16.mxu0 %v5494
      %5923 = vmatpush1.bf16.msra.mxu0 %v5493
      %5924 = vmatprep.subr.bf16.mxu0 %v5501
      %5925 = vmatpush1.bf16.msra.mxu0 %v5500
      %5926 = vmatprep.subr.bf16.mxu0 %v5508
      %5927 = vmatpush1.bf16.msra.mxu0 %v5507
      %5928 = vmatprep.subr.bf16.mxu0 %v5515
      %5929 = vmatpush1.bf16.msra.mxu0 %v5514
      %5930 = vmatprep.subr.bf16.mxu0 %v5522
      %5931 = vmatpush1.bf16.msra.mxu0 %v5521
      %5932 = vmatprep.subr.bf16.mxu0 %v5529
      %5933 = vmatpush1.bf16.msra.mxu0 %v5528
      %5934 = vmatprep.subr.bf16.mxu0 %v5536
      %5935 = vmatpush1.bf16.msra.mxu0 %v5535
      %5936 = vmatprep.subr.bf16.mxu0 %v5543
      %5937 = vmatpush1.bf16.msra.mxu0 %v5542
      %5938 = vmatprep.mubr.bf16.mxu0 %v4291
      %5939 = vmatmul.mubr.bf16.gmra.mrb[0].mxu0 %v4290
      %v5940 = vpop.f32.mrb[0].mxu0
      %v5941 = vadd.f32 %v5808, %v5940
      %v5942 = vpop.f32.mrb[0].mxu0
      %v5943 = vadd.f32 %v5810, %v5942
      %v5944 = vpop.f32.mrb[0].mxu0
      %v5945 = vadd.f32 %v5812, %v5944
      %v5946 = vpop.f32.mrb[0].mxu0
      %v5947 = vadd.f32 %v5814, %v5946
      %5948 = vmatprep.mubr.bf16.mxu0 %v4295
      %5949 = vmatmul.mubr.bf16.gmra.mrb[0].mxu0 %v4294
      %v5950 = vpop.f32.mrb[0].mxu0
      %v5951 = vadd.f32 %v5818, %v5950
      %v5952 = vpop.f32.mrb[0].mxu0
      %v5953 = vadd.f32 %v5820, %v5952
      %v5954 = vpop.f32.mrb[0].mxu0
      %v5955 = vadd.f32 %v5822, %v5954
      %v5956 = vpop.f32.mrb[0].mxu0
      %v5957 = vadd.f32 %v5824, %v5956
      %5958 = vmatprep.mubr.bf16.mxu0 %v4299
      %5959 = vmatmul.mubr.bf16.gmra.mrb[0].mxu0 %v4298
      %v5960 = vpop.f32.mrb[0].mxu0
      %v5961 = vadd.f32 %v5828, %v5960
      %v5962 = vpop.f32.mrb[0].mxu0
      %v5963 = vadd.f32 %v5830, %v5962
      %v5964 = vpop.f32.mrb[0].mxu0
      %v5965 = vadd.f32 %v5832, %v5964
      %v5966 = vpop.f32.mrb[0].mxu0
      %v5967 = vadd.f32 %v5834, %v5966
      %5968 = vmatprep.mubr.bf16.mxu0 %v4303
      %5969 = vmatmul.mubr.bf16.gmra.mrb[0].mxu0 %v4302
      %v5970 = vpop.f32.mrb[0].mxu0
      %v5971 = vadd.f32 %v5838, %v5970
      %v5972 = vpop.f32.mrb[0].mxu0
      %v5973 = vadd.f32 %v5840, %v5972
      %v5974 = vpop.f32.mrb[0].mxu0
      %v5975 = vadd.f32 %v5842, %v5974
      %v5976 = vpop.f32.mrb[0].mxu0
      %v5977 = vadd.f32 %v5844, %v5976
      %5978 = vmatprep.mubr.bf16.mxu0 %v4307
      %5979 = vmatmul.mubr.bf16.gmra.mrb[0].mxu0 %v4306
      %v5980 = vpop.f32.mrb[0].mxu0
      %v5981 = vadd.f32 %v5848, %v5980
      %v5982 = vpop.f32.mrb[0].mxu0
      %v5983 = vadd.f32 %v5850, %v5982
      %v5984 = vpop.f32.mrb[0].mxu0
      %v5985 = vadd.f32 %v5852, %v5984
      %v5986 = vpop.f32.mrb[0].mxu0
      %v5987 = vadd.f32 %v5854, %v5986
      %5988 = vmatprep.mubr.bf16.mxu0 %v4311
      %5989 = vmatmul.mubr.bf16.gmra.mrb[0].mxu0 %v4310
      %v5990 = vpop.f32.mrb[0].mxu0
      %v5991 = vadd.f32 %v5858, %v5990
      %v5992 = vpop.f32.mrb[0].mxu0
      %v5993 = vadd.f32 %v5860, %v5992
      %v5994 = vpop.f32.mrb[0].mxu0
      %v5995 = vadd.f32 %v5862, %v5994
      %v5996 = vpop.f32.mrb[0].mxu0
      %v5997 = vadd.f32 %v5864, %v5996
      %5998 = vmatprep.mubr.bf16.mxu0 %v4315
      %5999 = vmatmul.mubr.bf16.gmra.mrb[0].mxu0 %v4314
      %v6000 = vpop.f32.mrb[0].mxu0
      %v6001 = vadd.f32 %v5868, %v6000
      %v6002 = vpop.f32.mrb[0].mxu0
      %v6003 = vadd.f32 %v5870, %v6002
      %v6004 = vpop.f32.mrb[0].mxu0
      %v6005 = vadd.f32 %v5872, %v6004
      %v6006 = vpop.f32.mrb[0].mxu0
      %v6007 = vadd.f32 %v5874, %v6006
      %6008 = vmatprep.mubr.bf16.mxu0 %v4319
      %6009 = vmatmul.mubr.bf16.gmra.mrb[0].mxu0 %v4318
      %v6010 = vpop.f32.mrb[0].mxu0
      %v6011 = vadd.f32 %v5878, %v6010
      %v6012 = vpop.f32.mrb[0].mxu0
      %v6013 = vadd.f32 %v5880, %v6012
      %v6014 = vpop.f32.mrb[0].mxu0
      %v6015 = vadd.f32 %v5882, %v6014
      %v6016 = vpop.f32.mrb[0].mxu0
      %v6017 = vadd.f32 %v5884, %v6016
      %6018 = vmatprep.mubr.bf16.mxu0 %v4323
      %6019 = vmatmul.mubr.bf16.gmra.mrb[0].mxu0 %v4322
      %v6020 = vpop.f32.mrb[0].mxu0
      %v6021 = vadd.f32 %v5888, %v6020
      %v6022 = vpop.f32.mrb[0].mxu0
      %v6023 = vadd.f32 %v5890, %v6022
      %v6024 = vpop.f32.mrb[0].mxu0
      %v6025 = vadd.f32 %v5892, %v6024
      %v6026 = vpop.f32.mrb[0].mxu0
      %v6027 = vadd.f32 %v5894, %v6026
      %6028 = vmatprep.mubr.bf16.mxu0 %v4327
      %6029 = vmatmul.mubr.bf16.gmra.mrb[0].mxu0 %v4326
      %v6030 = vpop.f32.mrb[0].mxu0
      %v6031 = vadd.f32 %v5898, %v6030
      %v6032 = vpop.f32.mrb[0].mxu0
      %v6033 = vadd.f32 %v5900, %v6032
      %v6034 = vpop.f32.mrb[0].mxu0
      %v6035 = vadd.f32 %v5902, %v6034
      %v6036 = vpop.f32.mrb[0].mxu0
      %v6037 = vadd.f32 %v5904, %v6036
      %6038 = vdwg.mxu0
      %6039 = vmatprep.subr.bf16.mxu0 %v5328
      %6040 = vmatpush1.bf16.msra.mxu0 %v5327
      %6041 = vmatprep.subr.bf16.mxu0 %v5335
      %6042 = vmatpush1.bf16.msra.mxu0 %v5334
      %6043 = vmatprep.subr.bf16.mxu0 %v5342
      %6044 = vmatpush1.bf16.msra.mxu0 %v5341
      %6045 = vmatprep.subr.bf16.mxu0 %v5349
      %6046 = vmatpush1.bf16.msra.mxu0 %v5348
      %6047 = vmatprep.subr.bf16.mxu0 %v5356
      %6048 = vmatpush1.bf16.msra.mxu0 %v5355
      %6049 = vmatprep.subr.bf16.mxu0 %v5363
      %6050 = vmatpush1.bf16.msra.mxu0 %v5362
      %6051 = vmatprep.subr.bf16.mxu0 %v5370
      %6052 = vmatpush1.bf16.msra.mxu0 %v5369
      %6053 = vmatprep.subr.bf16.mxu0 %v5377
      %6054 = vmatpush1.bf16.msra.mxu0 %v5376
      %6055 = vmatprep.subr.bf16.mxu0 %v5384
      %6056 = vmatpush1.bf16.msra.mxu0 %v5383
      %6057 = vmatprep.subr.bf16.mxu0 %v5391
      %6058 = vmatpush1.bf16.msra.mxu0 %v5390
      %6059 = vmatprep.subr.bf16.mxu0 %v5398
      %6060 = vmatpush1.bf16.msra.mxu0 %v5397
      %6061 = vmatprep.subr.bf16.mxu0 %v5405
      %6062 = vmatpush1.bf16.msra.mxu0 %v5404
      %6063 = vmatprep.subr.bf16.mxu0 %v5412
      %6064 = vmatpush1.bf16.msra.mxu0 %v5411
      %6065 = vmatprep.subr.bf16.mxu0 %v5419
      %6066 = vmatpush1.bf16.msra.mxu0 %v5418
      %6067 = vmatprep.subr.bf16.mxu0 %v5426
      %6068 = vmatpush1.bf16.msra.mxu0 %v5425
      %6069 = vmatprep.subr.bf16.mxu0 %v5433
      %6070 = vmatpush1.bf16.msra.mxu0 %v5432
      %6071 = vmatprep.mubr.bf16.mxu0 %v4289
      %6072 = vmatmul.mubr.bf16.gmra.mrb[0].mxu0 %v4288
      %v6073 = vpop.f32.mrb[0].mxu0
      %v6074 = vadd.f32 %v4597, %v6073
      %v6075 = vpop.f32.mrb[0].mxu0
      %v6076 = vadd.f32 %v4601, %v6075
      %v6077 = vpop.f32.mrb[0].mxu0
      %v6078 = vadd.f32 %v4597, %v6077
      %v6079 = vpop.f32.mrb[0].mxu0
      %v6080 = vadd.f32 %v4601, %v6079
      %6081 = vmatprep.mubr.bf16.mxu0 %v4293
      %6082 = vmatmul.mubr.bf16.gmra.mrb[0].mxu0 %v4292
      %v6083 = vpop.f32.mrb[0].mxu0
      %v6084 = vadd.f32 %v4597, %v6083
      %v6085 = vpop.f32.mrb[0].mxu0
      %v6086 = vadd.f32 %v4601, %v6085
      %v6087 = vpop.f32.mrb[0].mxu0
      %v6088 = vadd.f32 %v4597, %v6087
      %v6089 = vpop.f32.mrb[0].mxu0
      %v6090 = vadd.f32 %v4601, %v6089
      %6091 = vmatprep.mubr.bf16.mxu0 %v4297
      %6092 = vmatmul.mubr.bf16.gmra.mrb[0].mxu0 %v4296
      %v6093 = vpop.f32.mrb[0].mxu0
      %v6094 = vadd.f32 %v4597, %v6093
      %v6095 = vpop.f32.mrb[0].mxu0
      %v6096 = vadd.f32 %v4601, %v6095
      %v6097 = vpop.f32.mrb[0].mxu0
      %v6098 = vadd.f32 %v4597, %v6097
      %v6099 = vpop.f32.mrb[0].mxu0
      %v6100 = vadd.f32 %v4601, %v6099
      %6101 = vmatprep.mubr.bf16.mxu0 %v4301
      %6102 = vmatmul.mubr.bf16.gmra.mrb[0].mxu0 %v4300
      %v6103 = vpop.f32.mrb[0].mxu0
      %v6104 = vadd.f32 %v4597, %v6103
      %v6105 = vpop.f32.mrb[0].mxu0
      %v6106 = vadd.f32 %v4601, %v6105
      %v6107 = vpop.f32.mrb[0].mxu0
      %v6108 = vadd.f32 %v4597, %v6107
      %v6109 = vpop.f32.mrb[0].mxu0
      %v6110 = vadd.f32 %v4601, %v6109
      %6111 = vmatprep.mubr.bf16.mxu0 %v4305
      %6112 = vmatmul.mubr.bf16.gmra.mrb[0].mxu0 %v4304
      %v6113 = vpop.f32.mrb[0].mxu0
      %v6114 = vadd.f32 %v4597, %v6113
      %v6115 = vpop.f32.mrb[0].mxu0
      %v6116 = vadd.f32 %v4601, %v6115
      %v6117 = vpop.f32.mrb[0].mxu0
      %v6118 = vadd.f32 %v4597, %v6117
      %v6119 = vpop.f32.mrb[0].mxu0
      %v6120 = vadd.f32 %v4601, %v6119
      %6121 = vmatprep.mubr.bf16.mxu0 %v4309
      %6122 = vmatmul.mubr.bf16.gmra.mrb[0].mxu0 %v4308
      %v6123 = vpop.f32.mrb[0].mxu0
      %v6124 = vadd.f32 %v4597, %v6123
      %v6125 = vpop.f32.mrb[0].mxu0
      %v6126 = vadd.f32 %v4601, %v6125
      %v6127 = vpop.f32.mrb[0].mxu0
      %v6128 = vadd.f32 %v4597, %v6127
      %v6129 = vpop.f32.mrb[0].mxu0
      %v6130 = vadd.f32 %v4601, %v6129
      %6131 = vmatprep.mubr.bf16.mxu0 %v4313
      %6132 = vmatmul.mubr.bf16.gmra.mrb[0].mxu0 %v4312
      %v6133 = vpop.f32.mrb[0].mxu0
      %v6134 = vadd.f32 %v4597, %v6133
      %v6135 = vpop.f32.mrb[0].mxu0
      %v6136 = vadd.f32 %v4601, %v6135
      %v6137 = vpop.f32.mrb[0].mxu0
      %v6138 = vadd.f32 %v4597, %v6137
      %v6139 = vpop.f32.mrb[0].mxu0
      %v6140 = vadd.f32 %v4601, %v6139
      %6141 = vmatprep.mubr.bf16.mxu0 %v4317
      %6142 = vmatmul.mubr.bf16.gmra.mrb[0].mxu0 %v4316
      %v6143 = vpop.f32.mrb[0].mxu0
      %v6144 = vadd.f32 %v4597, %v6143
      %v6145 = vpop.f32.mrb[0].mxu0
      %v6146 = vadd.f32 %v4601, %v6145
      %v6147 = vpop.f32.mrb[0].mxu0
      %v6148 = vadd.f32 %v4597, %v6147
      %v6149 = vpop.f32.mrb[0].mxu0
      %v6150 = vadd.f32 %v4601, %v6149
      %6151 = vmatprep.mubr.bf16.mxu0 %v4321
      %6152 = vmatmul.mubr.bf16.gmra.mrb[0].mxu0 %v4320
      %v6153 = vpop.f32.mrb[0].mxu0
      %v6154 = vadd.f32 %v4597, %v6153
      %v6155 = vpop.f32.mrb[0].mxu0
      %v6156 = vadd.f32 %v4601, %v6155
      %v6157 = vpop.f32.mrb[0].mxu0
      %v6158 = vadd.f32 %v4597, %v6157
      %v6159 = vpop.f32.mrb[0].mxu0
      %v6160 = vadd.f32 %v4601, %v6159
      %6161 = vmatprep.mubr.bf16.mxu0 %v4325
      %6162 = vmatmul.mubr.bf16.gmra.mrb[0].mxu0 %v4324
      %v6163 = vpop.f32.mrb[0].mxu0
      %v6164 = vadd.f32 %v4597, %v6163
      %v6165 = vpop.f32.mrb[0].mxu0
      %v6166 = vadd.f32 %v4601, %v6165
      %v6167 = vpop.f32.mrb[0].mxu0
      %v6168 = vadd.f32 %v4597, %v6167
      %v6169 = vpop.f32.mrb[0].mxu0
      %v6170 = vadd.f32 %v4601, %v6169
      %6171 = vdwg.mxu0
      %6172 = vmatprep.subr.bf16.mxu0 %v5440
      %6173 = vmatpush1.bf16.msra.mxu0 %v5439
      %6174 = vmatprep.subr.bf16.mxu0 %v5447
      %6175 = vmatpush1.bf16.msra.mxu0 %v5446
      %6176 = vmatprep.subr.bf16.mxu0 %v5454
      %6177 = vmatpush1.bf16.msra.mxu0 %v5453
      %6178 = vmatprep.subr.bf16.mxu0 %v5461
      %6179 = vmatpush1.bf16.msra.mxu0 %v5460
      %6180 = vmatprep.subr.bf16.mxu0 %v5468
      %6181 = vmatpush1.bf16.msra.mxu0 %v5467
      %6182 = vmatprep.subr.bf16.mxu0 %v5475
      %6183 = vmatpush1.bf16.msra.mxu0 %v5474
      %6184 = vmatprep.subr.bf16.mxu0 %v5482
      %6185 = vmatpush1.bf16.msra.mxu0 %v5481
      %6186 = vmatprep.subr.bf16.mxu0 %v5489
      %6187 = vmatpush1.bf16.msra.mxu0 %v5488
      %6188 = vmatprep.subr.bf16.mxu0 %v5496
      %6189 = vmatpush1.bf16.msra.mxu0 %v5495
      %6190 = vmatprep.subr.bf16.mxu0 %v5503
      %6191 = vmatpush1.bf16.msra.mxu0 %v5502
      %6192 = vmatprep.subr.bf16.mxu0 %v5510
      %6193 = vmatpush1.bf16.msra.mxu0 %v5509
      %6194 = vmatprep.subr.bf16.mxu0 %v5517
      %6195 = vmatpush1.bf16.msra.mxu0 %v5516
      %6196 = vmatprep.subr.bf16.mxu0 %v5524
      %6197 = vmatpush1.bf16.msra.mxu0 %v5523
      %6198 = vmatprep.subr.bf16.mxu0 %v5531
      %6199 = vmatpush1.bf16.msra.mxu0 %v5530
      %6200 = vmatprep.subr.bf16.mxu0 %v5538
      %6201 = vmatpush1.bf16.msra.mxu0 %v5537
      %6202 = vmatprep.subr.bf16.mxu0 %v5545
      %6203 = vmatpush1.bf16.msra.mxu0 %v5544
      %6204 = vmatprep.mubr.bf16.mxu0 %v4291
      %6205 = vmatmul.mubr.bf16.gmra.mrb[0].mxu0 %v4290
      %v6206 = vpop.f32.mrb[0].mxu0
      %v6207 = vadd.f32 %v6074, %v6206
      %v6208 = vpop.f32.mrb[0].mxu0
      %v6209 = vadd.f32 %v6076, %v6208
      %v6210 = vpop.f32.mrb[0].mxu0
      %v6211 = vadd.f32 %v6078, %v6210
      %v6212 = vpop.f32.mrb[0].mxu0
      %v6213 = vadd.f32 %v6080, %v6212
      %6214 = vmatprep.mubr.bf16.mxu0 %v4295
      %6215 = vmatmul.mubr.bf16.gmra.mrb[0].mxu0 %v4294
      %v6216 = vpop.f32.mrb[0].mxu0
      %v6217 = vadd.f32 %v6084, %v6216
      %v6218 = vpop.f32.mrb[0].mxu0
      %v6219 = vadd.f32 %v6086, %v6218
      %v6220 = vpop.f32.mrb[0].mxu0
      %v6221 = vadd.f32 %v6088, %v6220
      %v6222 = vpop.f32.mrb[0].mxu0
      %v6223 = vadd.f32 %v6090, %v6222
      %6224 = vmatprep.mubr.bf16.mxu0 %v4299
      %6225 = vmatmul.mubr.bf16.gmra.mrb[0].mxu0 %v4298
      %v6226 = vpop.f32.mrb[0].mxu0
      %v6227 = vadd.f32 %v6094, %v6226
      %v6228 = vpop.f32.mrb[0].mxu0
      %v6229 = vadd.f32 %v6096, %v6228
      %v6230 = vpop.f32.mrb[0].mxu0
      %v6231 = vadd.f32 %v6098, %v6230
      %v6232 = vpop.f32.mrb[0].mxu0
      %v6233 = vadd.f32 %v6100, %v6232
      %6234 = vmatprep.mubr.bf16.mxu0 %v4303
      %6235 = vmatmul.mubr.bf16.gmra.mrb[0].mxu0 %v4302
      %v6236 = vpop.f32.mrb[0].mxu0
      %v6237 = vadd.f32 %v6104, %v6236
      %v6238 = vpop.f32.mrb[0].mxu0
      %v6239 = vadd.f32 %v6106, %v6238
      %v6240 = vpop.f32.mrb[0].mxu0
      %v6241 = vadd.f32 %v6108, %v6240
      %v6242 = vpop.f32.mrb[0].mxu0
      %v6243 = vadd.f32 %v6110, %v6242
      %6244 = vmatprep.mubr.bf16.mxu0 %v4307
      %6245 = vmatmul.mubr.bf16.gmra.mrb[0].mxu0 %v4306
      %v6246 = vpop.f32.mrb[0].mxu0
      %v6247 = vadd.f32 %v6114, %v6246
      %v6248 = vpop.f32.mrb[0].mxu0
      %v6249 = vadd.f32 %v6116, %v6248
      %v6250 = vpop.f32.mrb[0].mxu0
      %v6251 = vadd.f32 %v6118, %v6250
      %v6252 = vpop.f32.mrb[0].mxu0
      %v6253 = vadd.f32 %v6120, %v6252
      %6254 = vmatprep.mubr.bf16.mxu0 %v4311
      %6255 = vmatmul.mubr.bf16.gmra.mrb[0].mxu0 %v4310
      %v6256 = vpop.f32.mrb[0].mxu0
      %v6257 = vadd.f32 %v6124, %v6256
      %v6258 = vpop.f32.mrb[0].mxu0
      %v6259 = vadd.f32 %v6126, %v6258
      %v6260 = vpop.f32.mrb[0].mxu0
      %v6261 = vadd.f32 %v6128, %v6260
      %v6262 = vpop.f32.mrb[0].mxu0
      %v6263 = vadd.f32 %v6130, %v6262
      %6264 = vmatprep.mubr.bf16.mxu0 %v4315
      %6265 = vmatmul.mubr.bf16.gmra.mrb[0].mxu0 %v4314
      %v6266 = vpop.f32.mrb[0].mxu0
      %v6267 = vadd.f32 %v6134, %v6266
      %v6268 = vpop.f32.mrb[0].mxu0
      %v6269 = vadd.f32 %v6136, %v6268
      %v6270 = vpop.f32.mrb[0].mxu0
      %v6271 = vadd.f32 %v6138, %v6270
      %v6272 = vpop.f32.mrb[0].mxu0
      %v6273 = vadd.f32 %v6140, %v6272
      %6274 = vmatprep.mubr.bf16.mxu0 %v4319
      %6275 = vmatmul.mubr.bf16.gmra.mrb[0].mxu0 %v4318
      %v6276 = vpop.f32.mrb[0].mxu0
      %v6277 = vadd.f32 %v6144, %v6276
      %v6278 = vpop.f32.mrb[0].mxu0
      %v6279 = vadd.f32 %v6146, %v6278
      %v6280 = vpop.f32.mrb[0].mxu0
      %v6281 = vadd.f32 %v6148, %v6280
      %v6282 = vpop.f32.mrb[0].mxu0
      %v6283 = vadd.f32 %v6150, %v6282
      %6284 = vmatprep.mubr.bf16.mxu0 %v4323
      %6285 = vmatmul.mubr.bf16.gmra.mrb[0].mxu0 %v4322
      %v6286 = vpop.f32.mrb[0].mxu0
      %v6287 = vadd.f32 %v6154, %v6286
      %v6288 = vpop.f32.mrb[0].mxu0
      %v6289 = vadd.f32 %v6156, %v6288
      %v6290 = vpop.f32.mrb[0].mxu0
      %v6291 = vadd.f32 %v6158, %v6290
      %v6292 = vpop.f32.mrb[0].mxu0
      %v6293 = vadd.f32 %v6160, %v6292
      %6294 = vmatprep.mubr.bf16.mxu0 %v4327
      %6295 = vmatmul.mubr.bf16.gmra.mrb[0].mxu0 %v4326
      %v6296 = vpop.f32.mrb[0].mxu0
      %v6297 = vadd.f32 %v6164, %v6296
      %v6298 = vpop.f32.mrb[0].mxu0
      %v6299 = vadd.f32 %v6166, %v6298
      %v6300 = vpop.f32.mrb[0].mxu0
      %v6301 = vadd.f32 %v6168, %v6300
      %v6302 = vpop.f32.mrb[0].mxu0
      %v6303 = vadd.f32 %v6170, %v6302
      %6304 = vdwg.mxu0
      %6305 = vmatprep.subr.bf16.mxu0 %v5330
      %6306 = vmatpush1.bf16.msra.mxu0 %v5329
      %6307 = vmatprep.subr.bf16.mxu0 %v5337
      %6308 = vmatpush1.bf16.msra.mxu0 %v5336
      %6309 = vmatprep.subr.bf16.mxu0 %v5344
      %6310 = vmatpush1.bf16.msra.mxu0 %v5343
      %6311 = vmatprep.subr.bf16.mxu0 %v5351
      %6312 = vmatpush1.bf16.msra.mxu0 %v5350
      %6313 = vmatprep.subr.bf16.mxu0 %v5358
      %6314 = vmatpush1.bf16.msra.mxu0 %v5357
      %6315 = vmatprep.subr.bf16.mxu0 %v5365
      %6316 = vmatpush1.bf16.msra.mxu0 %v5364
      %6317 = vmatprep.subr.bf16.mxu0 %v5372
      %6318 = vmatpush1.bf16.msra.mxu0 %v5371
      %6319 = vmatprep.subr.bf16.mxu0 %v5379
      %6320 = vmatpush1.bf16.msra.mxu0 %v5378
      %6321 = vmatprep.subr.bf16.mxu0 %v5386
      %6322 = vmatpush1.bf16.msra.mxu0 %v5385
      %6323 = vmatprep.subr.bf16.mxu0 %v5393
      %6324 = vmatpush1.bf16.msra.mxu0 %v5392
      %6325 = vmatprep.subr.bf16.mxu0 %v5400
      %6326 = vmatpush1.bf16.msra.mxu0 %v5399
      %6327 = vmatprep.subr.bf16.mxu0 %v5407
      %6328 = vmatpush1.bf16.msra.mxu0 %v5406
      %6329 = vmatprep.subr.bf16.mxu0 %v5414
      %6330 = vmatpush1.bf16.msra.mxu0 %v5413
      %6331 = vmatprep.subr.bf16.mxu0 %v5421
      %6332 = vmatpush1.bf16.msra.mxu0 %v5420
      %6333 = vmatprep.subr.bf16.mxu0 %v5428
      %6334 = vmatpush1.bf16.msra.mxu0 %v5427
      %6335 = vmatprep.subr.bf16.mxu0 %v5435
      %6336 = vmatpush1.bf16.msra.mxu0 %v5434
      %6337 = vmatprep.mubr.bf16.mxu0 %v4289
      %6338 = vmatmul.mubr.bf16.gmra.mrb[0].mxu0 %v4288
      %v6339 = vpop.f32.mrb[0].mxu0
      %v6340 = vadd.f32 %v4605, %v6339
      %v6341 = vpop.f32.mrb[0].mxu0
      %v6342 = vadd.f32 %v4609, %v6341
      %v6343 = vpop.f32.mrb[0].mxu0
      %v6344 = vadd.f32 %v4605, %v6343
      %v6345 = vpop.f32.mrb[0].mxu0
      %v6346 = vadd.f32 %v4609, %v6345
      %6347 = vmatprep.mubr.bf16.mxu0 %v4293
      %6348 = vmatmul.mubr.bf16.gmra.mrb[0].mxu0 %v4292
      %v6349 = vpop.f32.mrb[0].mxu0
      %v6350 = vadd.f32 %v4605, %v6349
      %v6351 = vpop.f32.mrb[0].mxu0
      %v6352 = vadd.f32 %v4609, %v6351
      %v6353 = vpop.f32.mrb[0].mxu0
      %v6354 = vadd.f32 %v4605, %v6353
      %v6355 = vpop.f32.mrb[0].mxu0
      %v6356 = vadd.f32 %v4609, %v6355
      %6357 = vmatprep.mubr.bf16.mxu0 %v4297
      %6358 = vmatmul.mubr.bf16.gmra.mrb[0].mxu0 %v4296
      %v6359 = vpop.f32.mrb[0].mxu0
      %v6360 = vadd.f32 %v4605, %v6359
      %v6361 = vpop.f32.mrb[0].mxu0
      %v6362 = vadd.f32 %v4609, %v6361
      %v6363 = vpop.f32.mrb[0].mxu0
      %v6364 = vadd.f32 %v4605, %v6363
      %v6365 = vpop.f32.mrb[0].mxu0
      %v6366 = vadd.f32 %v4609, %v6365
      %6367 = vmatprep.mubr.bf16.mxu0 %v4301
      %6368 = vmatmul.mubr.bf16.gmra.mrb[0].mxu0 %v4300
      %v6369 = vpop.f32.mrb[0].mxu0
      %v6370 = vadd.f32 %v4605, %v6369
      %v6371 = vpop.f32.mrb[0].mxu0
      %v6372 = vadd.f32 %v4609, %v6371
      %v6373 = vpop.f32.mrb[0].mxu0
      %v6374 = vadd.f32 %v4605, %v6373
      %v6375 = vpop.f32.mrb[0].mxu0
      %v6376 = vadd.f32 %v4609, %v6375
      %6377 = vmatprep.mubr.bf16.mxu0 %v4305
      %6378 = vmatmul.mubr.bf16.gmra.mrb[0].mxu0 %v4304
      %v6379 = vpop.f32.mrb[0].mxu0
      %v6380 = vadd.f32 %v4605, %v6379
      %v6381 = vpop.f32.mrb[0].mxu0
      %v6382 = vadd.f32 %v4609, %v6381
      %v6383 = vpop.f32.mrb[0].mxu0
      %v6384 = vadd.f32 %v4605, %v6383
      %v6385 = vpop.f32.mrb[0].mxu0
      %v6386 = vadd.f32 %v4609, %v6385
      %6387 = vmatprep.mubr.bf16.mxu0 %v4309
      %6388 = vmatmul.mubr.bf16.gmra.mrb[0].mxu0 %v4308
      %v6389 = vpop.f32.mrb[0].mxu0
      %v6390 = vadd.f32 %v4605, %v6389
      %v6391 = vpop.f32.mrb[0].mxu0
      %v6392 = vadd.f32 %v4609, %v6391
      %v6393 = vpop.f32.mrb[0].mxu0
      %v6394 = vadd.f32 %v4605, %v6393
      %v6395 = vpop.f32.mrb[0].mxu0
      %v6396 = vadd.f32 %v4609, %v6395
      %6397 = vmatprep.mubr.bf16.mxu0 %v4313
      %6398 = vmatmul.mubr.bf16.gmra.mrb[0].mxu0 %v4312
      %v6399 = vpop.f32.mrb[0].mxu0
      %v6400 = vadd.f32 %v4605, %v6399
      %v6401 = vpop.f32.mrb[0].mxu0
      %v6402 = vadd.f32 %v4609, %v6401
      %v6403 = vpop.f32.mrb[0].mxu0
      %v6404 = vadd.f32 %v4605, %v6403
      %v6405 = vpop.f32.mrb[0].mxu0
      %v6406 = vadd.f32 %v4609, %v6405
      %6407 = vmatprep.mubr.bf16.mxu0 %v4317
      %6408 = vmatmul.mubr.bf16.gmra.mrb[0].mxu0 %v4316
      %v6409 = vpop.f32.mrb[0].mxu0
      %v6410 = vadd.f32 %v4605, %v6409
      %v6411 = vpop.f32.mrb[0].mxu0
      %v6412 = vadd.f32 %v4609, %v6411
      %v6413 = vpop.f32.mrb[0].mxu0
      %v6414 = vadd.f32 %v4605, %v6413
      %v6415 = vpop.f32.mrb[0].mxu0
      %v6416 = vadd.f32 %v4609, %v6415
      %6417 = vmatprep.mubr.bf16.mxu0 %v4321
      %6418 = vmatmul.mubr.bf16.gmra.mrb[0].mxu0 %v4320
      %v6419 = vpop.f32.mrb[0].mxu0
      %v6420 = vadd.f32 %v4605, %v6419
      %v6421 = vpop.f32.mrb[0].mxu0
      %v6422 = vadd.f32 %v4609, %v6421
      %v6423 = vpop.f32.mrb[0].mxu0
      %v6424 = vadd.f32 %v4605, %v6423
      %v6425 = vpop.f32.mrb[0].mxu0
      %v6426 = vadd.f32 %v4609, %v6425
      %6427 = vmatprep.mubr.bf16.mxu0 %v4325
      %6428 = vmatmul.mubr.bf16.gmra.mrb[0].mxu0 %v4324
      %v6429 = vpop.f32.mrb[0].mxu0
      %v6430 = vadd.f32 %v4605, %v6429
      %v6431 = vpop.f32.mrb[0].mxu0
      %v6432 = vadd.f32 %v4609, %v6431
      %v6433 = vpop.f32.mrb[0].mxu0
      %v6434 = vadd.f32 %v4605, %v6433
      %v6435 = vpop.f32.mrb[0].mxu0
      %v6436 = vadd.f32 %v4609, %v6435
      %6437 = vdwg.mxu0
      %6438 = vmatprep.subr.bf16.mxu0 %v5442
      %6439 = vmatpush1.bf16.msra.mxu0 %v5441
      %6440 = vmatprep.subr.bf16.mxu0 %v5449
      %6441 = vmatpush1.bf16.msra.mxu0 %v5448
      %6442 = vmatprep.subr.bf16.mxu0 %v5456
      %6443 = vmatpush1.bf16.msra.mxu0 %v5455
      %6444 = vmatprep.subr.bf16.mxu0 %v5463
      %6445 = vmatpush1.bf16.msra.mxu0 %v5462
      %6446 = vmatprep.subr.bf16.mxu0 %v5470
      %6447 = vmatpush1.bf16.msra.mxu0 %v5469
      %6448 = vmatprep.subr.bf16.mxu0 %v5477
      %6449 = vmatpush1.bf16.msra.mxu0 %v5476
      %6450 = vmatprep.subr.bf16.mxu0 %v5484
      %6451 = vmatpush1.bf16.msra.mxu0 %v5483
      %6452 = vmatprep.subr.bf16.mxu0 %v5491
      %6453 = vmatpush1.bf16.msra.mxu0 %v5490
      %6454 = vmatprep.subr.bf16.mxu0 %v5498
      %6455 = vmatpush1.bf16.msra.mxu0 %v5497
      %6456 = vmatprep.subr.bf16.mxu0 %v5505
      %6457 = vmatpush1.bf16.msra.mxu0 %v5504
      %6458 = vmatprep.subr.bf16.mxu0 %v5512
      %6459 = vmatpush1.bf16.msra.mxu0 %v5511
      %6460 = vmatprep.subr.bf16.mxu0 %v5519
      %6461 = vmatpush1.bf16.msra.mxu0 %v5518
      %6462 = vmatprep.subr.bf16.mxu0 %v5526
      %6463 = vmatpush1.bf16.msra.mxu0 %v5525
      %6464 = vmatprep.subr.bf16.mxu0 %v5533
      %6465 = vmatpush1.bf16.msra.mxu0 %v5532
      %6466 = vmatprep.subr.bf16.mxu0 %v5540
      %6467 = vmatpush1.bf16.msra.mxu0 %v5539
      %6468 = vmatprep.subr.bf16.mxu0 %v5547
      %6469 = vmatpush1.bf16.msra.mxu0 %v5546
      %6470 = vmatprep.mubr.bf16.mxu0 %v4291
      %6471 = vmatmul.mubr.bf16.gmra.mrb[0].mxu0 %v4290
      %v6472 = vpop.f32.mrb[0].mxu0
      %v6473 = vadd.f32 %v6340, %v6472
      %v6474 = vpop.f32.mrb[0].mxu0
      %v6475 = vadd.f32 %v6342, %v6474
      %v6476 = vpop.f32.mrb[0].mxu0
      %v6477 = vadd.f32 %v6344, %v6476
      %v6478 = vpop.f32.mrb[0].mxu0
      %v6479 = vadd.f32 %v6346, %v6478
      %6480 = vmatprep.mubr.bf16.mxu0 %v4295
      %6481 = vmatmul.mubr.bf16.gmra.mrb[0].mxu0 %v4294
      %v6482 = vpop.f32.mrb[0].mxu0
      %v6483 = vadd.f32 %v6350, %v6482
      %v6484 = vpop.f32.mrb[0].mxu0
      %v6485 = vadd.f32 %v6352, %v6484
      %v6486 = vpop.f32.mrb[0].mxu0
      %v6487 = vadd.f32 %v6354, %v6486
      %v6488 = vpop.f32.mrb[0].mxu0
      %v6489 = vadd.f32 %v6356, %v6488
      %6490 = vmatprep.mubr.bf16.mxu0 %v4299
      %6491 = vmatmul.mubr.bf16.gmra.mrb[0].mxu0 %v4298
      %v6492 = vpop.f32.mrb[0].mxu0
      %v6493 = vadd.f32 %v6360, %v6492
      %v6494 = vpop.f32.mrb[0].mxu0
      %v6495 = vadd.f32 %v6362, %v6494
      %v6496 = vpop.f32.mrb[0].mxu0
      %v6497 = vadd.f32 %v6364, %v6496
      %v6498 = vpop.f32.mrb[0].mxu0
      %v6499 = vadd.f32 %v6366, %v6498
      %6500 = vmatprep.mubr.bf16.mxu0 %v4303
      %6501 = vmatmul.mubr.bf16.gmra.mrb[0].mxu0 %v4302
      %v6502 = vpop.f32.mrb[0].mxu0
      %v6503 = vadd.f32 %v6370, %v6502
      %v6504 = vpop.f32.mrb[0].mxu0
      %v6505 = vadd.f32 %v6372, %v6504
      %v6506 = vpop.f32.mrb[0].mxu0
      %v6507 = vadd.f32 %v6374, %v6506
      %v6508 = vpop.f32.mrb[0].mxu0
      %v6509 = vadd.f32 %v6376, %v6508
      %6510 = vmatprep.mubr.bf16.mxu0 %v4307
      %6511 = vmatmul.mubr.bf16.gmra.mrb[0].mxu0 %v4306
      %v6512 = vpop.f32.mrb[0].mxu0
      %v6513 = vadd.f32 %v6380, %v6512
      %v6514 = vpop.f32.mrb[0].mxu0
      %v6515 = vadd.f32 %v6382, %v6514
      %v6516 = vpop.f32.mrb[0].mxu0
      %v6517 = vadd.f32 %v6384, %v6516
      %v6518 = vpop.f32.mrb[0].mxu0
      %v6519 = vadd.f32 %v6386, %v6518
      %6520 = vmatprep.mubr.bf16.mxu0 %v4311
      %6521 = vmatmul.mubr.bf16.gmra.mrb[0].mxu0 %v4310
      %v6522 = vpop.f32.mrb[0].mxu0
      %v6523 = vadd.f32 %v6390, %v6522
      %v6524 = vpop.f32.mrb[0].mxu0
      %v6525 = vadd.f32 %v6392, %v6524
      %v6526 = vpop.f32.mrb[0].mxu0
      %v6527 = vadd.f32 %v6394, %v6526
      %v6528 = vpop.f32.mrb[0].mxu0
      %v6529 = vadd.f32 %v6396, %v6528
      %6530 = vmatprep.mubr.bf16.mxu0 %v4315
      %6531 = vmatmul.mubr.bf16.gmra.mrb[0].mxu0 %v4314
      %v6532 = vpop.f32.mrb[0].mxu0
      %v6533 = vadd.f32 %v6400, %v6532
      %v6534 = vpop.f32.mrb[0].mxu0
      %v6535 = vadd.f32 %v6402, %v6534
      %v6536 = vpop.f32.mrb[0].mxu0
      %v6537 = vadd.f32 %v6404, %v6536
      %v6538 = vpop.f32.mrb[0].mxu0
      %v6539 = vadd.f32 %v6406, %v6538
      %6540 = vmatprep.mubr.bf16.mxu0 %v4319
      %6541 = vmatmul.mubr.bf16.gmra.mrb[0].mxu0 %v4318
      %v6542 = vpop.f32.mrb[0].mxu0
      %v6543 = vadd.f32 %v6410, %v6542
      %v6544 = vpop.f32.mrb[0].mxu0
      %v6545 = vadd.f32 %v6412, %v6544
      %v6546 = vpop.f32.mrb[0].mxu0
      %v6547 = vadd.f32 %v6414, %v6546
      %v6548 = vpop.f32.mrb[0].mxu0
      %v6549 = vadd.f32 %v6416, %v6548
      %6550 = vmatprep.mubr.bf16.mxu0 %v4323
      %6551 = vmatmul.mubr.bf16.gmra.mrb[0].mxu0 %v4322
      %v6552 = vpop.f32.mrb[0].mxu0
      %v6553 = vadd.f32 %v6420, %v6552
      %v6554 = vpop.f32.mrb[0].mxu0
      %v6555 = vadd.f32 %v6422, %v6554
      %v6556 = vpop.f32.mrb[0].mxu0
      %v6557 = vadd.f32 %v6424, %v6556
      %v6558 = vpop.f32.mrb[0].mxu0
      %v6559 = vadd.f32 %v6426, %v6558
      %6560 = vmatprep.mubr.bf16.mxu0 %v4327
      %6561 = vmatmul.mubr.bf16.gmra.mrb[0].mxu0 %v4326
      %v6562 = vpop.f32.mrb[0].mxu0
      %v6563 = vadd.f32 %v6430, %v6562
      %v6564 = vpop.f32.mrb[0].mxu0
      %v6565 = vadd.f32 %v6432, %v6564
      %v6566 = vpop.f32.mrb[0].mxu0
      %v6567 = vadd.f32 %v6434, %v6566
      %v6568 = vpop.f32.mrb[0].mxu0
      %v6569 = vadd.f32 %v6436, %v6568
      %6570 = vdwg.mxu0
      %6571 = vmatprep.subr.bf16.mxu0 0
      %6572 = vmatpush1.bf16.msra.mxu0 %v5331
      %6573 = vmatprep.subr.bf16.mxu0 0
      %6574 = vmatpush1.bf16.msra.mxu0 %v5338
      %6575 = vmatprep.subr.bf16.mxu0 0
      %6576 = vmatpush1.bf16.msra.mxu0 %v5345
      %6577 = vmatprep.subr.bf16.mxu0 0
      %6578 = vmatpush1.bf16.msra.mxu0 %v5352
      %6579 = vmatprep.subr.bf16.mxu0 0
      %6580 = vmatpush1.bf16.msra.mxu0 %v5359
      %6581 = vmatprep.subr.bf16.mxu0 0
      %6582 = vmatpush1.bf16.msra.mxu0 %v5366
      %6583 = vmatprep.subr.bf16.mxu0 0
      %6584 = vmatpush1.bf16.msra.mxu0 %v5373
      %6585 = vmatprep.subr.bf16.mxu0 0
      %6586 = vmatpush1.bf16.msra.mxu0 %v5380
      %6587 = vmatprep.subr.bf16.mxu0 0
      %6588 = vmatpush1.bf16.msra.mxu0 %v5387
      %6589 = vmatprep.subr.bf16.mxu0 0
      %6590 = vmatpush1.bf16.msra.mxu0 %v5394
      %6591 = vmatprep.subr.bf16.mxu0 0
      %6592 = vmatpush1.bf16.msra.mxu0 %v5401
      %6593 = vmatprep.subr.bf16.mxu0 0
      %6594 = vmatpush1.bf16.msra.mxu0 %v5408
      %6595 = vmatprep.subr.bf16.mxu0 0
      %6596 = vmatpush1.bf16.msra.mxu0 %v5415
      %6597 = vmatprep.subr.bf16.mxu0 0
      %6598 = vmatpush1.bf16.msra.mxu0 %v5422
      %6599 = vmatprep.subr.bf16.mxu0 0
      %6600 = vmatpush1.bf16.msra.mxu0 %v5429
      %6601 = vmatprep.subr.bf16.mxu0 0
      %6602 = vmatpush1.bf16.msra.mxu0 %v5436
      %6603 = vmatprep.mubr.bf16.mxu0 %v4289
      %6604 = vmatmul.mubr.bf16.gmra.mrb[0].mxu0 %v4288
      %v6605 = vpop.f32.mrb[0].mxu0
      %v6606 = vadd.f32 %v4613, %v6605
      %v6607 = vpop.f32.mrb[0].mxu0
      %v6608 = vpop.f32.mrb[0].mxu0
      %v6609 = vadd.f32 %v4613, %v6608
      %v6610 = vpop.f32.mrb[0].mxu0
      %6611 = vmatprep.mubr.bf16.mxu0 %v4293
      %6612 = vmatmul.mubr.bf16.gmra.mrb[0].mxu0 %v4292
      %v6613 = vpop.f32.mrb[0].mxu0
      %v6614 = vadd.f32 %v4613, %v6613
      %v6615 = vpop.f32.mrb[0].mxu0
      %v6616 = vpop.f32.mrb[0].mxu0
      %v6617 = vadd.f32 %v4613, %v6616
      %v6618 = vpop.f32.mrb[0].mxu0
      %6619 = vmatprep.mubr.bf16.mxu0 %v4297
      %6620 = vmatmul.mubr.bf16.gmra.mrb[0].mxu0 %v4296
      %v6621 = vpop.f32.mrb[0].mxu0
      %v6622 = vadd.f32 %v4613, %v6621
      %v6623 = vpop.f32.mrb[0].mxu0
      %v6624 = vpop.f32.mrb[0].mxu0
      %v6625 = vadd.f32 %v4613, %v6624
      %v6626 = vpop.f32.mrb[0].mxu0
      %6627 = vmatprep.mubr.bf16.mxu0 %v4301
      %6628 = vmatmul.mubr.bf16.gmra.mrb[0].mxu0 %v4300
      %v6629 = vpop.f32.mrb[0].mxu0
      %v6630 = vadd.f32 %v4613, %v6629
      %v6631 = vpop.f32.mrb[0].mxu0
      %v6632 = vpop.f32.mrb[0].mxu0
      %v6633 = vadd.f32 %v4613, %v6632
      %v6634 = vpop.f32.mrb[0].mxu0
      %6635 = vmatprep.mubr.bf16.mxu0 %v4305
      %6636 = vmatmul.mubr.bf16.gmra.mrb[0].mxu0 %v4304
      %v6637 = vpop.f32.mrb[0].mxu0
      %v6638 = vadd.f32 %v4613, %v6637
      %v6639 = vpop.f32.mrb[0].mxu0
      %v6640 = vpop.f32.mrb[0].mxu0
      %v6641 = vadd.f32 %v4613, %v6640
      %v6642 = vpop.f32.mrb[0].mxu0
      %6643 = vmatprep.mubr.bf16.mxu0 %v4309
      %6644 = vmatmul.mubr.bf16.gmra.mrb[0].mxu0 %v4308
      %v6645 = vpop.f32.mrb[0].mxu0
      %v6646 = vadd.f32 %v4613, %v6645
      %v6647 = vpop.f32.mrb[0].mxu0
      %v6648 = vpop.f32.mrb[0].mxu0
      %v6649 = vadd.f32 %v4613, %v6648
      %v6650 = vpop.f32.mrb[0].mxu0
      %6651 = vmatprep.mubr.bf16.mxu0 %v4313
      %6652 = vmatmul.mubr.bf16.gmra.mrb[0].mxu0 %v4312
      %v6653 = vpop.f32.mrb[0].mxu0
      %v6654 = vadd.f32 %v4613, %v6653
      %v6655 = vpop.f32.mrb[0].mxu0
      %v6656 = vpop.f32.mrb[0].mxu0
      %v6657 = vadd.f32 %v4613, %v6656
      %v6658 = vpop.f32.mrb[0].mxu0
      %6659 = vmatprep.mubr.bf16.mxu0 %v4317
      %6660 = vmatmul.mubr.bf16.gmra.mrb[0].mxu0 %v4316
      %v6661 = vpop.f32.mrb[0].mxu0
      %v6662 = vadd.f32 %v4613, %v6661
      %v6663 = vpop.f32.mrb[0].mxu0
      %v6664 = vpop.f32.mrb[0].mxu0
      %v6665 = vadd.f32 %v4613, %v6664
      %v6666 = vpop.f32.mrb[0].mxu0
      %6667 = vmatprep.mubr.bf16.mxu0 %v4321
      %6668 = vmatmul.mubr.bf16.gmra.mrb[0].mxu0 %v4320
      %v6669 = vpop.f32.mrb[0].mxu0
      %v6670 = vadd.f32 %v4613, %v6669
      %v6671 = vpop.f32.mrb[0].mxu0
      %v6672 = vpop.f32.mrb[0].mxu0
      %v6673 = vadd.f32 %v4613, %v6672
      %v6674 = vpop.f32.mrb[0].mxu0
      %6675 = vmatprep.mubr.bf16.mxu0 %v4325
      %6676 = vmatmul.mubr.bf16.gmra.mrb[0].mxu0 %v4324
      %v6677 = vpop.f32.mrb[0].mxu0
      %v6678 = vadd.f32 %v4613, %v6677
      %v6679 = vpop.f32.mrb[0].mxu0
      %v6680 = vpop.f32.mrb[0].mxu0
      %v6681 = vadd.f32 %v4613, %v6680
      %v6682 = vpop.f32.mrb[0].mxu0
      %6683 = vdwg.mxu0
      %6684 = vmatprep.subr.bf16.mxu0 0
      %6685 = vmatpush1.bf16.msra.mxu0 %v5443
      %6686 = vmatprep.subr.bf16.mxu0 0
      %6687 = vmatpush1.bf16.msra.mxu0 %v5450
      %6688 = vmatprep.subr.bf16.mxu0 0
      %6689 = vmatpush1.bf16.msra.mxu0 %v5457
      %6690 = vmatprep.subr.bf16.mxu0 0
      %6691 = vmatpush1.bf16.msra.mxu0 %v5464
      %6692 = vmatprep.subr.bf16.mxu0 0
      %6693 = vmatpush1.bf16.msra.mxu0 %v5471
      %6694 = vmatprep.subr.bf16.mxu0 0
      %6695 = vmatpush1.bf16.msra.mxu0 %v5478
      %6696 = vmatprep.subr.bf16.mxu0 0
      %6697 = vmatpush1.bf16.msra.mxu0 %v5485
      %6698 = vmatprep.subr.bf16.mxu0 0
      %6699 = vmatpush1.bf16.msra.mxu0 %v5492
      %6700 = vmatprep.subr.bf16.mxu0 0
      %6701 = vmatpush1.bf16.msra.mxu0 %v5499
      %6702 = vmatprep.subr.bf16.mxu0 0
      %6703 = vmatpush1.bf16.msra.mxu0 %v5506
      %6704 = vmatprep.subr.bf16.mxu0 0
      %6705 = vmatpush1.bf16.msra.mxu0 %v5513
      %6706 = vmatprep.subr.bf16.mxu0 0
      %6707 = vmatpush1.bf16.msra.mxu0 %v5520
      %6708 = vmatprep.subr.bf16.mxu0 0
      %6709 = vmatpush1.bf16.msra.mxu0 %v5527
      %6710 = vmatprep.subr.bf16.mxu0 0
      %6711 = vmatpush1.bf16.msra.mxu0 %v5534
      %6712 = vmatprep.subr.bf16.mxu0 0
      %6713 = vmatpush1.bf16.msra.mxu0 %v5541
      %6714 = vmatprep.subr.bf16.mxu0 0
      %6715 = vmatpush1.bf16.msra.mxu0 %v5548
      %6716 = vmatprep.mubr.bf16.mxu0 %v4291
      %6717 = vmatmul.mubr.bf16.gmra.mrb[0].mxu0 %v4290
      %v6718 = vpop.f32.mrb[0].mxu0
      %v6719 = vadd.f32 %v6606, %v6718
      %v6720 = vpop.f32.mrb[0].mxu0
      %v6721 = vpop.f32.mrb[0].mxu0
      %v6722 = vadd.f32 %v6609, %v6721
      %v6723 = vpop.f32.mrb[0].mxu0
      %6724 = vmatprep.mubr.bf16.mxu0 %v4295
      %6725 = vmatmul.mubr.bf16.gmra.mrb[0].mxu0 %v4294
      %v6726 = vpop.f32.mrb[0].mxu0
      %v6727 = vadd.f32 %v6614, %v6726
      %v6728 = vpop.f32.mrb[0].mxu0
      %v6729 = vpop.f32.mrb[0].mxu0
      %v6730 = vadd.f32 %v6617, %v6729
      %v6731 = vpop.f32.mrb[0].mxu0
      %6732 = vmatprep.mubr.bf16.mxu0 %v4299
      %6733 = vmatmul.mubr.bf16.gmra.mrb[0].mxu0 %v4298
      %v6734 = vpop.f32.mrb[0].mxu0
      %v6735 = vadd.f32 %v6622, %v6734
      %v6736 = vpop.f32.mrb[0].mxu0
      %v6737 = vpop.f32.mrb[0].mxu0
      %v6738 = vadd.f32 %v6625, %v6737
      %v6739 = vpop.f32.mrb[0].mxu0
      %6740 = vmatprep.mubr.bf16.mxu0 %v4303
      %6741 = vmatmul.mubr.bf16.gmra.mrb[0].mxu0 %v4302
      %v6742 = vpop.f32.mrb[0].mxu0
      %v6743 = vadd.f32 %v6630, %v6742
      %v6744 = vpop.f32.mrb[0].mxu0
      %v6745 = vpop.f32.mrb[0].mxu0
      %v6746 = vadd.f32 %v6633, %v6745
      %v6747 = vpop.f32.mrb[0].mxu0
      %6748 = vmatprep.mubr.bf16.mxu0 %v4307
      %6749 = vmatmul.mubr.bf16.gmra.mrb[0].mxu0 %v4306
      %v6750 = vpop.f32.mrb[0].mxu0
      %v6751 = vadd.f32 %v6638, %v6750
      %v6752 = vpop.f32.mrb[0].mxu0
      %v6753 = vpop.f32.mrb[0].mxu0
      %v6754 = vadd.f32 %v6641, %v6753
      %v6755 = vpop.f32.mrb[0].mxu0
      %6756 = vmatprep.mubr.bf16.mxu0 %v4311
      %6757 = vmatmul.mubr.bf16.gmra.mrb[0].mxu0 %v4310
      %v6758 = vpop.f32.mrb[0].mxu0
      %v6759 = vadd.f32 %v6646, %v6758
      %v6760 = vpop.f32.mrb[0].mxu0
      %v6761 = vpop.f32.mrb[0].mxu0
      %v6762 = vadd.f32 %v6649, %v6761
      %v6763 = vpop.f32.mrb[0].mxu0
      %6764 = vmatprep.mubr.bf16.mxu0 %v4315
      %6765 = vmatmul.mubr.bf16.gmra.mrb[0].mxu0 %v4314
      %v6766 = vpop.f32.mrb[0].mxu0
      %v6767 = vadd.f32 %v6654, %v6766
      %v6768 = vpop.f32.mrb[0].mxu0
      %v6769 = vpop.f32.mrb[0].mxu0
      %v6770 = vadd.f32 %v6657, %v6769
      %v6771 = vpop.f32.mrb[0].mxu0
      %6772 = vmatprep.mubr.bf16.mxu0 %v4319
      %6773 = vmatmul.mubr.bf16.gmra.mrb[0].mxu0 %v4318
      %v6774 = vpop.f32.mrb[0].mxu0
      %v6775 = vadd.f32 %v6662, %v6774
      %v6776 = vpop.f32.mrb[0].mxu0
      %v6777 = vpop.f32.mrb[0].mxu0
      %v6778 = vadd.f32 %v6665, %v6777
      %v6779 = vpop.f32.mrb[0].mxu0
      %6780 = vmatprep.mubr.bf16.mxu0 %v4323
      %6781 = vmatmul.mubr.bf16.gmra.mrb[0].mxu0 %v4322
      %v6782 = vpop.f32.mrb[0].mxu0
      %v6783 = vadd.f32 %v6670, %v6782
      %v6784 = vpop.f32.mrb[0].mxu0
      %v6785 = vpop.f32.mrb[0].mxu0
      %v6786 = vadd.f32 %v6673, %v6785
      %v6787 = vpop.f32.mrb[0].mxu0
      %6788 = vmatprep.mubr.bf16.mxu0 %v4327
      %6789 = vmatmul.mubr.bf16.gmra.mrb[0].mxu0 %v4326
      %v6790 = vpop.f32.mrb[0].mxu0
      %v6791 = vadd.f32 %v6678, %v6790
      %v6792 = vpop.f32.mrb[0].mxu0
      %v6793 = vpop.f32.mrb[0].mxu0
      %v6794 = vadd.f32 %v6681, %v6793
      %v6795 = vpop.f32.mrb[0].mxu0
      %6796 = vdwg.mxu0
      %v6797 = vmul.f32 %v5941, 0.5
      %v6798 = vmul.f32 %v5943, 0.5
      %v6799 = vmul.f32 %v6207, 0.5
      %v6800 = vmul.f32 %v6209, 0.5
      %v6801 = vmul.f32 %v6473, 0.5
      %v6802 = vmul.f32 %v6475, 0.5
      %v6803 = vmul.f32 %v6719, 0.5
      %v6804 = vmul.f32 %v5945, 0.5
      %v6805 = vmul.f32 %v5947, 0.5
      %v6806 = vmul.f32 %v6211, 0.5
      %v6807 = vmul.f32 %v6213, 0.5
      %v6808 = vmul.f32 %v6477, 0.5
      %v6809 = vmul.f32 %v6479, 0.5
      %v6810 = vmul.f32 %v6722, 0.5
      %v6811 = vmul.f32 %v5951, 0.5
      %v6812 = vmul.f32 %v5953, 0.5
      %v6813 = vmul.f32 %v6217, 0.5
      %v6814 = vmul.f32 %v6219, 0.5
      %v6815 = vmul.f32 %v6483, 0.5
      %v6816 = vmul.f32 %v6485, 0.5
      %v6817 = vmul.f32 %v6727, 0.5
      %v6818 = vmul.f32 %v5955, 0.5
      %v6819 = vmul.f32 %v5957, 0.5
      %v6820 = vmul.f32 %v6221, 0.5
      %v6821 = vmul.f32 %v6223, 0.5
      %v6822 = vmul.f32 %v6487, 0.5
      %v6823 = vmul.f32 %v6489, 0.5
      %v6824 = vmul.f32 %v6730, 0.5
      %v6825 = vmul.f32 %v5961, 0.5
      %v6826 = vmul.f32 %v5963, 0.5
      %v6827 = vmul.f32 %v6227, 0.5
      %v6828 = vmul.f32 %v6229, 0.5
      %v6829 = vmul.f32 %v6493, 0.5
      %v6830 = vmul.f32 %v6495, 0.5
      %v6831 = vmul.f32 %v6735, 0.5
      %v6832 = vmul.f32 %v5965, 0.5
      %v6833 = vmul.f32 %v5967, 0.5
      %v6834 = vmul.f32 %v6231, 0.5
      %v6835 = vmul.f32 %v6233, 0.5
      %v6836 = vmul.f32 %v6497, 0.5
      %v6837 = vmul.f32 %v6499, 0.5
      %v6838 = vmul.f32 %v6738, 0.5
      %v6839 = vmul.f32 %v5971, 0.5
      %v6840 = vmul.f32 %v5973, 0.5
      %v6841 = vmul.f32 %v6237, 0.5
      %v6842 = vmul.f32 %v6239, 0.5
      %v6843 = vmul.f32 %v6503, 0.5
      %v6844 = vmul.f32 %v6505, 0.5
      %v6845 = vmul.f32 %v6743, 0.5
      %v6846 = vmul.f32 %v5975, 0.5
      %v6847 = vmul.f32 %v5977, 0.5
      %v6848 = vmul.f32 %v6241, 0.5
      %v6849 = vmul.f32 %v6243, 0.5
      %v6850 = vmul.f32 %v6507, 0.5
      %v6851 = vmul.f32 %v6509, 0.5
      %v6852 = vmul.f32 %v6746, 0.5
      %v6853 = vmul.f32 %v5981, 0.5
      %v6854 = vmul.f32 %v5983, 0.5
      %v6855 = vmul.f32 %v6247, 0.5
      %v6856 = vmul.f32 %v6249, 0.5
      %v6857 = vmul.f32 %v6513, 0.5
      %v6858 = vmul.f32 %v6515, 0.5
      %v6859 = vmul.f32 %v6751, 0.5
      %v6860 = vmul.f32 %v5985, 0.5
      %v6861 = vmul.f32 %v5987, 0.5
      %v6862 = vmul.f32 %v6251, 0.5
      %v6863 = vmul.f32 %v6253, 0.5
      %v6864 = vmul.f32 %v6517, 0.5
      %v6865 = vmul.f32 %v6519, 0.5
      %v6866 = vmul.f32 %v6754, 0.5
      %v6867 = vmul.f32 %v5991, 0.5
      %v6868 = vmul.f32 %v5993, 0.5
      %v6869 = vmul.f32 %v6257, 0.5
      %v6870 = vmul.f32 %v6259, 0.5
      %v6871 = vmul.f32 %v6523, 0.5
      %v6872 = vmul.f32 %v6525, 0.5
      %v6873 = vmul.f32 %v6759, 0.5
      %v6874 = vmul.f32 %v5995, 0.5
      %v6875 = vmul.f32 %v5997, 0.5
      %v6876 = vmul.f32 %v6261, 0.5
      %v6877 = vmul.f32 %v6263, 0.5
      %v6878 = vmul.f32 %v6527, 0.5
      %v6879 = vmul.f32 %v6529, 0.5
      %v6880 = vmul.f32 %v6762, 0.5
      %v6881 = vmul.f32 %v6001, 0.5
      %v6882 = vmul.f32 %v6003, 0.5
      %v6883 = vmul.f32 %v6267, 0.5
      %v6884 = vmul.f32 %v6269, 0.5
      %v6885 = vmul.f32 %v6533, 0.5
      %v6886 = vmul.f32 %v6535, 0.5
      %v6887 = vmul.f32 %v6767, 0.5
      %v6888 = vmul.f32 %v6005, 0.5
      %v6889 = vmul.f32 %v6007, 0.5
      %v6890 = vmul.f32 %v6271, 0.5
      %v6891 = vmul.f32 %v6273, 0.5
      %v6892 = vmul.f32 %v6537, 0.5
      %v6893 = vmul.f32 %v6539, 0.5
      %v6894 = vmul.f32 %v6770, 0.5
      %v6895 = vmul.f32 %v6011, 0.5
      %v6896 = vmul.f32 %v6013, 0.5
      %v6897 = vmul.f32 %v6277, 0.5
      %v6898 = vmul.f32 %v6279, 0.5
      %v6899 = vmul.f32 %v6543, 0.5
      %v6900 = vmul.f32 %v6545, 0.5
      %v6901 = vmul.f32 %v6775, 0.5
      %v6902 = vmul.f32 %v6015, 0.5
      %v6903 = vmul.f32 %v6017, 0.5
      %v6904 = vmul.f32 %v6281, 0.5
      %v6905 = vmul.f32 %v6283, 0.5
      %v6906 = vmul.f32 %v6547, 0.5
      %v6907 = vmul.f32 %v6549, 0.5
      %v6908 = vmul.f32 %v6778, 0.5
      %v6909 = vmul.f32 %v6021, 0.5
      %v6910 = vmul.f32 %v6023, 0.5
      %v6911 = vmul.f32 %v6287, 0.5
      %v6912 = vmul.f32 %v6289, 0.5
      %v6913 = vmul.f32 %v6553, 0.5
      %v6914 = vmul.f32 %v6555, 0.5
      %v6915 = vmul.f32 %v6783, 0.5
      %v6916 = vmul.f32 %v6025, 0.5
      %v6917 = vmul.f32 %v6027, 0.5
      %v6918 = vmul.f32 %v6291, 0.5
      %v6919 = vmul.f32 %v6293, 0.5
      %v6920 = vmul.f32 %v6557, 0.5
      %v6921 = vmul.f32 %v6559, 0.5
      %v6922 = vmul.f32 %v6786, 0.5
      %v6923 = vmul.f32 %v6031, 0.5
      %v6924 = vmul.f32 %v6033, 0.5
      %v6925 = vmul.f32 %v6297, 0.5
      %v6926 = vmul.f32 %v6299, 0.5
      %v6927 = vmul.f32 %v6563, 0.5
      %v6928 = vmul.f32 %v6565, 0.5
      %v6929 = vmul.f32 %v6791, 0.5
      %v6930 = vmul.f32 %v6035, 0.5
      %v6931 = vmul.f32 %v6037, 0.5
      %v6932 = vmul.f32 %v6301, 0.5
      %v6933 = vmul.f32 %v6303, 0.5
      %v6934 = vmul.f32 %v6567, 0.5
      %v6935 = vmul.f32 %v6569, 0.5
      %v6936 = vmul.f32 %v6794, 0.5
      %v6937 = vtanh.pop %v6797
      %v6938 = vtanh.pop %v6798
      %v6939 = vtanh.pop %v6799
      %v6940 = vtanh.pop %v6800
      %v6941 = vtanh.pop %v6801
      %v6942 = vtanh.pop %v6802
      %v6943 = vtanh.pop %v6803
      %v6944 = vtanh.pop %v6804
      %v6945 = vtanh.pop %v6805
      %v6946 = vtanh.pop %v6806
      %v6947 = vtanh.pop %v6807
      %v6948 = vtanh.pop %v6808
      %v6949 = vtanh.pop %v6809
      %v6950 = vtanh.pop %v6810
      %v6951 = vtanh.pop %v6811
      %v6952 = vtanh.pop %v6812
      %v6953 = vtanh.pop %v6813
      %v6954 = vtanh.pop %v6814
      %v6955 = vtanh.pop %v6815
      %v6956 = vtanh.pop %v6816
      %v6957 = vtanh.pop %v6817
      %v6958 = vtanh.pop %v6818
      %v6959 = vtanh.pop %v6819
      %v6960 = vtanh.pop %v6820
      %v6961 = vtanh.pop %v6821
      %v6962 = vtanh.pop %v6822
      %v6963 = vtanh.pop %v6823
      %v6964 = vtanh.pop %v6824
      %v6965 = vtanh.pop %v6825
      %v6966 = vtanh.pop %v6826
      %v6967 = vtanh.pop %v6827
      %v6968 = vtanh.pop %v6828
      %v6969 = vtanh.pop %v6829
      %v6970 = vtanh.pop %v6830
      %v6971 = vtanh.pop %v6831
      %v6972 = vtanh.pop %v6832
      %v6973 = vtanh.pop %v6833
      %v6974 = vtanh.pop %v6834
      %v6975 = vtanh.pop %v6835
      %v6976 = vtanh.pop %v6836
      %v6977 = vtanh.pop %v6837
      %v6978 = vtanh.pop %v6838
      %v6979 = vtanh.pop %v6839
      %v6980 = vtanh.pop %v6840
      %v6981 = vtanh.pop %v6841
      %v6982 = vtanh.pop %v6842
      %v6983 = vtanh.pop %v6843
      %v6984 = vtanh.pop %v6844
      %v6985 = vtanh.pop %v6845
      %v6986 = vtanh.pop %v6846
      %v6987 = vtanh.pop %v6847
      %v6988 = vtanh.pop %v6848
      %v6989 = vtanh.pop %v6849
      %v6990 = vtanh.pop %v6850
      %v6991 = vtanh.pop %v6851
      %v6992 = vtanh.pop %v6852
      %v6993 = vtanh.pop %v6853
      %v6994 = vtanh.pop %v6854
      %v6995 = vtanh.pop %v6855
      %v6996 = vtanh.pop %v6856
      %v6997 = vtanh.pop %v6857
      %v6998 = vtanh.pop %v6858
      %v6999 = vtanh.pop %v6859
      %v7000 = vtanh.pop %v6860
      %v7001 = vtanh.pop %v6861
      %v7002 = vtanh.pop %v6862
      %v7003 = vtanh.pop %v6863
      %v7004 = vtanh.pop %v6864
      %v7005 = vtanh.pop %v6865
      %v7006 = vtanh.pop %v6866
      %v7007 = vtanh.pop %v6867
      %v7008 = vtanh.pop %v6868
      %v7009 = vtanh.pop %v6869
      %v7010 = vtanh.pop %v6870
      %v7011 = vtanh.pop %v6871
      %v7012 = vtanh.pop %v6872
      %v7013 = vtanh.pop %v6873
      %v7014 = vtanh.pop %v6874
      %v7015 = vtanh.pop %v6875
      %v7016 = vtanh.pop %v6876
      %v7017 = vtanh.pop %v6877
      %v7018 = vtanh.pop %v6878
      %v7019 = vtanh.pop %v6879
      %v7020 = vtanh.pop %v6880
      %v7021 = vtanh.pop %v6881
      %v7022 = vtanh.pop %v6882
      %v7023 = vtanh.pop %v6883
      %v7024 = vtanh.pop %v6884
      %v7025 = vtanh.pop %v6885
      %v7026 = vtanh.pop %v6886
      %v7027 = vtanh.pop %v6887
      %v7028 = vtanh.pop %v6888
      %v7029 = vtanh.pop %v6889
      %v7030 = vtanh.pop %v6890
      %v7031 = vtanh.pop %v6891
      %v7032 = vtanh.pop %v6892
      %v7033 = vtanh.pop %v6893
      %v7034 = vtanh.pop %v6894
      %v7035 = vtanh.pop %v6895
      %v7036 = vtanh.pop %v6896
      %v7037 = vtanh.pop %v6897
      %v7038 = vtanh.pop %v6898
      %v7039 = vtanh.pop %v6899
      %v7040 = vtanh.pop %v6900
      %v7041 = vtanh.pop %v6901
      %v7042 = vtanh.pop %v6902
      %v7043 = vtanh.pop %v6903
      %v7044 = vtanh.pop %v6904
      %v7045 = vtanh.pop %v6905
      %v7046 = vtanh.pop %v6906
      %v7047 = vtanh.pop %v6907
      %v7048 = vtanh.pop %v6908
      %v7049 = vtanh.pop %v6909
      %v7050 = vtanh.pop %v6910
      %v7051 = vtanh.pop %v6911
      %v7052 = vtanh.pop %v6912
      %v7053 = vtanh.pop %v6913
      %v7054 = vtanh.pop %v6914
      %v7055 = vtanh.pop %v6915
      %v7056 = vtanh.pop %v6916
      %v7057 = vtanh.pop %v6917
      %v7058 = vtanh.pop %v6918
      %v7059 = vtanh.pop %v6919
      %v7060 = vtanh.pop %v6920
      %v7061 = vtanh.pop %v6921
      %v7062 = vtanh.pop %v6922
      %v7063 = vtanh.pop %v6923
      %v7064 = vtanh.pop %v6924
      %v7065 = vtanh.pop %v6925
      %v7066 = vtanh.pop %v6926
      %v7067 = vtanh.pop %v6927
      %v7068 = vtanh.pop %v6928
      %v7069 = vtanh.pop %v6929
      %v7070 = vtanh.pop %v6930
      %v7071 = vtanh.pop %v6931
      %v7072 = vtanh.pop %v6932
      %v7073 = vtanh.pop %v6933
      %v7074 = vtanh.pop %v6934
      %v7075 = vtanh.pop %v6935
      %v7076 = vtanh.pop %v6936
      %v7077 = vmul.f32 %v6937, 0.5
      %v7078 = vmul.f32 %v6938, 0.5
      %v7079 = vmul.f32 %v6939, 0.5
      %v7080 = vmul.f32 %v6940, 0.5
      %v7081 = vmul.f32 %v6941, 0.5
      %v7082 = vmul.f32 %v6942, 0.5
      %v7083 = vmul.f32 %v6943, 0.5
      %v7084 = vmul.f32 %v6944, 0.5
      %v7085 = vmul.f32 %v6945, 0.5
      %v7086 = vmul.f32 %v6946, 0.5
      %v7087 = vmul.f32 %v6947, 0.5
      %v7088 = vmul.f32 %v6948, 0.5
      %v7089 = vmul.f32 %v6949, 0.5
      %v7090 = vmul.f32 %v6950, 0.5
      %v7091 = vmul.f32 %v6951, 0.5
      %v7092 = vmul.f32 %v6952, 0.5
      %v7093 = vmul.f32 %v6953, 0.5
      %v7094 = vmul.f32 %v6954, 0.5
      %v7095 = vmul.f32 %v6955, 0.5
      %v7096 = vmul.f32 %v6956, 0.5
      %v7097 = vmul.f32 %v6957, 0.5
      %v7098 = vmul.f32 %v6958, 0.5
      %v7099 = vmul.f32 %v6959, 0.5
      %v7100 = vmul.f32 %v6960, 0.5
      %v7101 = vmul.f32 %v6961, 0.5
      %v7102 = vmul.f32 %v6962, 0.5
      %v7103 = vmul.f32 %v6963, 0.5
      %v7104 = vmul.f32 %v6964, 0.5
      %v7105 = vmul.f32 %v6965, 0.5
      %v7106 = vmul.f32 %v6966, 0.5
      %v7107 = vmul.f32 %v6967, 0.5
      %v7108 = vmul.f32 %v6968, 0.5
      %v7109 = vmul.f32 %v6969, 0.5
      %v7110 = vmul.f32 %v6970, 0.5
      %v7111 = vmul.f32 %v6971, 0.5
      %v7112 = vmul.f32 %v6972, 0.5
      %v7113 = vmul.f32 %v6973, 0.5
      %v7114 = vmul.f32 %v6974, 0.5
      %v7115 = vmul.f32 %v6975, 0.5
      %v7116 = vmul.f32 %v6976, 0.5
      %v7117 = vmul.f32 %v6977, 0.5
      %v7118 = vmul.f32 %v6978, 0.5
      %v7119 = vmul.f32 %v6979, 0.5
      %v7120 = vmul.f32 %v6980, 0.5
      %v7121 = vmul.f32 %v6981, 0.5
      %v7122 = vmul.f32 %v6982, 0.5
      %v7123 = vmul.f32 %v6983, 0.5
      %v7124 = vmul.f32 %v6984, 0.5
      %v7125 = vmul.f32 %v6985, 0.5
      %v7126 = vmul.f32 %v6986, 0.5
      %v7127 = vmul.f32 %v6987, 0.5
      %v7128 = vmul.f32 %v6988, 0.5
      %v7129 = vmul.f32 %v6989, 0.5
      %v7130 = vmul.f32 %v6990, 0.5
      %v7131 = vmul.f32 %v6991, 0.5
      %v7132 = vmul.f32 %v6992, 0.5
      %v7133 = vmul.f32 %v6993, 0.5
      %v7134 = vmul.f32 %v6994, 0.5
      %v7135 = vmul.f32 %v6995, 0.5
      %v7136 = vmul.f32 %v6996, 0.5
      %v7137 = vmul.f32 %v6997, 0.5
      %v7138 = vmul.f32 %v6998, 0.5
      %v7139 = vmul.f32 %v6999, 0.5
      %v7140 = vmul.f32 %v7000, 0.5
      %v7141 = vmul.f32 %v7001, 0.5
      %v7142 = vmul.f32 %v7002, 0.5
      %v7143 = vmul.f32 %v7003, 0.5
      %v7144 = vmul.f32 %v7004, 0.5
      %v7145 = vmul.f32 %v7005, 0.5
      %v7146 = vmul.f32 %v7006, 0.5
      %v7147 = vmul.f32 %v7007, 0.5
      %v7148 = vmul.f32 %v7008, 0.5
      %v7149 = vmul.f32 %v7009, 0.5
      %v7150 = vmul.f32 %v7010, 0.5
      %v7151 = vmul.f32 %v7011, 0.5
      %v7152 = vmul.f32 %v7012, 0.5
      %v7153 = vmul.f32 %v7013, 0.5
      %v7154 = vmul.f32 %v7014, 0.5
      %v7155 = vmul.f32 %v7015, 0.5
      %v7156 = vmul.f32 %v7016, 0.5
      %v7157 = vmul.f32 %v7017, 0.5
      %v7158 = vmul.f32 %v7018, 0.5
      %v7159 = vmul.f32 %v7019, 0.5
      %v7160 = vmul.f32 %v7020, 0.5
      %v7161 = vmul.f32 %v7021, 0.5
      %v7162 = vmul.f32 %v7022, 0.5
      %v7163 = vmul.f32 %v7023, 0.5
      %v7164 = vmul.f32 %v7024, 0.5
      %v7165 = vmul.f32 %v7025, 0.5
      %v7166 = vmul.f32 %v7026, 0.5
      %v7167 = vmul.f32 %v7027, 0.5
      %v7168 = vmul.f32 %v7028, 0.5
      %v7169 = vmul.f32 %v7029, 0.5
      %v7170 = vmul.f32 %v7030, 0.5
      %v7171 = vmul.f32 %v7031, 0.5
      %v7172 = vmul.f32 %v7032, 0.5
      %v7173 = vmul.f32 %v7033, 0.5
      %v7174 = vmul.f32 %v7034, 0.5
      %v7175 = vmul.f32 %v7035, 0.5
      %v7176 = vmul.f32 %v7036, 0.5
      %v7177 = vmul.f32 %v7037, 0.5
      %v7178 = vmul.f32 %v7038, 0.5
      %v7179 = vmul.f32 %v7039, 0.5
      %v7180 = vmul.f32 %v7040, 0.5
      %v7181 = vmul.f32 %v7041, 0.5
      %v7182 = vmul.f32 %v7042, 0.5
      %v7183 = vmul.f32 %v7043, 0.5
      %v7184 = vmul.f32 %v7044, 0.5
      %v7185 = vmul.f32 %v7045, 0.5
      %v7186 = vmul.f32 %v7046, 0.5
      %v7187 = vmul.f32 %v7047, 0.5
      %v7188 = vmul.f32 %v7048, 0.5
      %v7189 = vmul.f32 %v7049, 0.5
      %v7190 = vmul.f32 %v7050, 0.5
      %v7191 = vmul.f32 %v7051, 0.5
      %v7192 = vmul.f32 %v7052, 0.5
      %v7193 = vmul.f32 %v7053, 0.5
      %v7194 = vmul.f32 %v7054, 0.5
      %v7195 = vmul.f32 %v7055, 0.5
      %v7196 = vmul.f32 %v7056, 0.5
      %v7197 = vmul.f32 %v7057, 0.5
      %v7198 = vmul.f32 %v7058, 0.5
      %v7199 = vmul.f32 %v7059, 0.5
      %v7200 = vmul.f32 %v7060, 0.5
      %v7201 = vmul.f32 %v7061, 0.5
      %v7202 = vmul.f32 %v7062, 0.5
      %v7203 = vmul.f32 %v7063, 0.5
      %v7204 = vmul.f32 %v7064, 0.5
      %v7205 = vmul.f32 %v7065, 0.5
      %v7206 = vmul.f32 %v7066, 0.5
      %v7207 = vmul.f32 %v7067, 0.5
      %v7208 = vmul.f32 %v7068, 0.5
      %v7209 = vmul.f32 %v7069, 0.5
      %v7210 = vmul.f32 %v7070, 0.5
      %v7211 = vmul.f32 %v7071, 0.5
      %v7212 = vmul.f32 %v7072, 0.5
      %v7213 = vmul.f32 %v7073, 0.5
      %v7214 = vmul.f32 %v7074, 0.5
      %v7215 = vmul.f32 %v7075, 0.5
      %v7216 = vmul.f32 %v7076, 0.5
      %v7217 = vadd.f32 %v7077, 0.5
      %v7218 = vadd.f32 %v7078, 0.5
      %v7219 = vadd.f32 %v7079, 0.5
      %v7220 = vadd.f32 %v7080, 0.5
      %v7221 = vadd.f32 %v7081, 0.5
      %v7222 = vadd.f32 %v7082, 0.5
      %v7223 = vadd.f32 %v7083, 0.5
      %v7224 = vadd.f32 %v7084, 0.5
      %v7225 = vadd.f32 %v7085, 0.5
      %v7226 = vadd.f32 %v7086, 0.5
      %v7227 = vadd.f32 %v7087, 0.5
      %v7228 = vadd.f32 %v7088, 0.5
      %v7229 = vadd.f32 %v7089, 0.5
      %v7230 = vadd.f32 %v7090, 0.5
      %v7231 = vadd.f32 %v7091, 0.5
      %v7232 = vadd.f32 %v7092, 0.5
      %v7233 = vadd.f32 %v7093, 0.5
      %v7234 = vadd.f32 %v7094, 0.5
      %v7235 = vadd.f32 %v7095, 0.5
      %v7236 = vadd.f32 %v7096, 0.5
      %v7237 = vadd.f32 %v7097, 0.5
      %v7238 = vadd.f32 %v7098, 0.5
      %v7239 = vadd.f32 %v7099, 0.5
      %v7240 = vadd.f32 %v7100, 0.5
      %v7241 = vadd.f32 %v7101, 0.5
      %v7242 = vadd.f32 %v7102, 0.5
      %v7243 = vadd.f32 %v7103, 0.5
      %v7244 = vadd.f32 %v7104, 0.5
      %v7245 = vadd.f32 %v7105, 0.5
      %v7246 = vadd.f32 %v7106, 0.5
      %v7247 = vadd.f32 %v7107, 0.5
      %v7248 = vadd.f32 %v7108, 0.5
      %v7249 = vadd.f32 %v7109, 0.5
      %v7250 = vadd.f32 %v7110, 0.5
      %v7251 = vadd.f32 %v7111, 0.5
      %v7252 = vadd.f32 %v7112, 0.5
      %v7253 = vadd.f32 %v7113, 0.5
      %v7254 = vadd.f32 %v7114, 0.5
      %v7255 = vadd.f32 %v7115, 0.5
      %v7256 = vadd.f32 %v7116, 0.5
      %v7257 = vadd.f32 %v7117, 0.5
      %v7258 = vadd.f32 %v7118, 0.5
      %v7259 = vadd.f32 %v7119, 0.5
      %v7260 = vadd.f32 %v7120, 0.5
      %v7261 = vadd.f32 %v7121, 0.5
      %v7262 = vadd.f32 %v7122, 0.5
      %v7263 = vadd.f32 %v7123, 0.5
      %v7264 = vadd.f32 %v7124, 0.5
      %v7265 = vadd.f32 %v7125, 0.5
      %v7266 = vadd.f32 %v7126, 0.5
      %v7267 = vadd.f32 %v7127, 0.5
      %v7268 = vadd.f32 %v7128, 0.5
      %v7269 = vadd.f32 %v7129, 0.5
      %v7270 = vadd.f32 %v7130, 0.5
      %v7271 = vadd.f32 %v7131, 0.5
      %v7272 = vadd.f32 %v7132, 0.5
      %v7273 = vadd.f32 %v7133, 0.5
      %v7274 = vadd.f32 %v7134, 0.5
      %v7275 = vadd.f32 %v7135, 0.5
      %v7276 = vadd.f32 %v7136, 0.5
      %v7277 = vadd.f32 %v7137, 0.5
      %v7278 = vadd.f32 %v7138, 0.5
      %v7279 = vadd.f32 %v7139, 0.5
      %v7280 = vadd.f32 %v7140, 0.5
      %v7281 = vadd.f32 %v7141, 0.5
      %v7282 = vadd.f32 %v7142, 0.5
      %v7283 = vadd.f32 %v7143, 0.5
      %v7284 = vadd.f32 %v7144, 0.5
      %v7285 = vadd.f32 %v7145, 0.5
      %v7286 = vadd.f32 %v7146, 0.5
      %v7287 = vadd.f32 %v7147, 0.5
      %v7288 = vadd.f32 %v7148, 0.5
      %v7289 = vadd.f32 %v7149, 0.5
      %v7290 = vadd.f32 %v7150, 0.5
      %v7291 = vadd.f32 %v7151, 0.5
      %v7292 = vadd.f32 %v7152, 0.5
      %v7293 = vadd.f32 %v7153, 0.5
      %v7294 = vadd.f32 %v7154, 0.5
      %v7295 = vadd.f32 %v7155, 0.5
      %v7296 = vadd.f32 %v7156, 0.5
      %v7297 = vadd.f32 %v7157, 0.5
      %v7298 = vadd.f32 %v7158, 0.5
      %v7299 = vadd.f32 %v7159, 0.5
      %v7300 = vadd.f32 %v7160, 0.5
      %v7301 = vadd.f32 %v7161, 0.5
      %v7302 = vadd.f32 %v7162, 0.5
      %v7303 = vadd.f32 %v7163, 0.5
      %v7304 = vadd.f32 %v7164, 0.5
      %v7305 = vadd.f32 %v7165, 0.5
      %v7306 = vadd.f32 %v7166, 0.5
      %v7307 = vadd.f32 %v7167, 0.5
      %v7308 = vadd.f32 %v7168, 0.5
      %v7309 = vadd.f32 %v7169, 0.5
      %v7310 = vadd.f32 %v7170, 0.5
      %v7311 = vadd.f32 %v7171, 0.5
      %v7312 = vadd.f32 %v7172, 0.5
      %v7313 = vadd.f32 %v7173, 0.5
      %v7314 = vadd.f32 %v7174, 0.5
      %v7315 = vadd.f32 %v7175, 0.5
      %v7316 = vadd.f32 %v7176, 0.5
      %v7317 = vadd.f32 %v7177, 0.5
      %v7318 = vadd.f32 %v7178, 0.5
      %v7319 = vadd.f32 %v7179, 0.5
      %v7320 = vadd.f32 %v7180, 0.5
      %v7321 = vadd.f32 %v7181, 0.5
      %v7322 = vadd.f32 %v7182, 0.5
      %v7323 = vadd.f32 %v7183, 0.5
      %v7324 = vadd.f32 %v7184, 0.5
      %v7325 = vadd.f32 %v7185, 0.5
      %v7326 = vadd.f32 %v7186, 0.5
      %v7327 = vadd.f32 %v7187, 0.5
      %v7328 = vadd.f32 %v7188, 0.5
      %v7329 = vadd.f32 %v7189, 0.5
      %v7330 = vadd.f32 %v7190, 0.5
      %v7331 = vadd.f32 %v7191, 0.5
      %v7332 = vadd.f32 %v7192, 0.5
      %v7333 = vadd.f32 %v7193, 0.5
      %v7334 = vadd.f32 %v7194, 0.5
      %v7335 = vadd.f32 %v7195, 0.5
      %v7336 = vadd.f32 %v7196, 0.5
      %v7337 = vadd.f32 %v7197, 0.5
      %v7338 = vadd.f32 %v7198, 0.5
      %v7339 = vadd.f32 %v7199, 0.5
      %v7340 = vadd.f32 %v7200, 0.5
      %v7341 = vadd.f32 %v7201, 0.5
      %v7342 = vadd.f32 %v7202, 0.5
      %v7343 = vadd.f32 %v7203, 0.5
      %v7344 = vadd.f32 %v7204, 0.5
      %v7345 = vadd.f32 %v7205, 0.5
      %v7346 = vadd.f32 %v7206, 0.5
      %v7347 = vadd.f32 %v7207, 0.5
      %v7348 = vadd.f32 %v7208, 0.5
      %v7349 = vadd.f32 %v7209, 0.5
      %v7350 = vadd.f32 %v7210, 0.5
      %v7351 = vadd.f32 %v7211, 0.5
      %v7352 = vadd.f32 %v7212, 0.5
      %v7353 = vadd.f32 %v7213, 0.5
      %v7354 = vadd.f32 %v7214, 0.5
      %v7355 = vadd.f32 %v7215, 0.5
      %v7356 = vadd.f32 %v7216, 0.5
      %v7357 = vpack.c.bf16 %v7224, %v7217
      %v7358 = vpack.c.bf16 %v7225, %v7218
      %v7359 = vpack.c.bf16 %v7226, %v7219
      %v7360 = vpack.c.bf16 %v7227, %v7220
      %v7361 = vpack.c.bf16 %v7228, %v7221
      %v7362 = vpack.c.bf16 %v7229, %v7222
      %v7363 = vpack.c.bf16 %v7230, %v7223
      %v7364 = vpack.c.bf16 %v7238, %v7231
      %v7365 = vpack.c.bf16 %v7239, %v7232
      %v7366 = vpack.c.bf16 %v7240, %v7233
      %v7367 = vpack.c.bf16 %v7241, %v7234
      %v7368 = vpack.c.bf16 %v7242, %v7235
      %v7369 = vpack.c.bf16 %v7243, %v7236
      %v7370 = vpack.c.bf16 %v7244, %v7237
      %v7371 = vpack.c.bf16 %v7252, %v7245
      %v7372 = vpack.c.bf16 %v7253, %v7246
      %v7373 = vpack.c.bf16 %v7254, %v7247
      %v7374 = vpack.c.bf16 %v7255, %v7248
      %v7375 = vpack.c.bf16 %v7256, %v7249
      %v7376 = vpack.c.bf16 %v7257, %v7250
      %v7377 = vpack.c.bf16 %v7258, %v7251
      %v7378 = vpack.c.bf16 %v7266, %v7259
      %v7379 = vpack.c.bf16 %v7267, %v7260
      %v7380 = vpack.c.bf16 %v7268, %v7261
      %v7381 = vpack.c.bf16 %v7269, %v7262
      %v7382 = vpack.c.bf16 %v7270, %v7263
      %v7383 = vpack.c.bf16 %v7271, %v7264
      %v7384 = vpack.c.bf16 %v7272, %v7265
      %v7385 = vpack.c.bf16 %v7280, %v7273
      %v7386 = vpack.c.bf16 %v7281, %v7274
      %v7387 = vpack.c.bf16 %v7282, %v7275
      %v7388 = vpack.c.bf16 %v7283, %v7276
      %v7389 = vpack.c.bf16 %v7284, %v7277
      %v7390 = vpack.c.bf16 %v7285, %v7278
      %v7391 = vpack.c.bf16 %v7286, %v7279
      %v7392 = vpack.c.bf16 %v7294, %v7287
      %v7393 = vpack.c.bf16 %v7295, %v7288
      %v7394 = vpack.c.bf16 %v7296, %v7289
      %v7395 = vpack.c.bf16 %v7297, %v7290
      %v7396 = vpack.c.bf16 %v7298, %v7291
      %v7397 = vpack.c.bf16 %v7299, %v7292
      %v7398 = vpack.c.bf16 %v7300, %v7293
      %v7399 = vpack.c.bf16 %v7308, %v7301
      %v7400 = vpack.c.bf16 %v7309, %v7302
      %v7401 = vpack.c.bf16 %v7310, %v7303
      %v7402 = vpack.c.bf16 %v7311, %v7304
      %v7403 = vpack.c.bf16 %v7312, %v7305
      %v7404 = vpack.c.bf16 %v7313, %v7306
      %v7405 = vpack.c.bf16 %v7314, %v7307
      %v7406 = vpack.c.bf16 %v7322, %v7315
      %v7407 = vpack.c.bf16 %v7323, %v7316
      %v7408 = vpack.c.bf16 %v7324, %v7317
      %v7409 = vpack.c.bf16 %v7325, %v7318
      %v7410 = vpack.c.bf16 %v7326, %v7319
      %v7411 = vpack.c.bf16 %v7327, %v7320
      %v7412 = vpack.c.bf16 %v7328, %v7321
      %v7413 = vpack.c.bf16 %v7336, %v7329
      %v7414 = vpack.c.bf16 %v7337, %v7330
      %v7415 = vpack.c.bf16 %v7338, %v7331
      %v7416 = vpack.c.bf16 %v7339, %v7332
      %v7417 = vpack.c.bf16 %v7340, %v7333
      %v7418 = vpack.c.bf16 %v7341, %v7334
      %v7419 = vpack.c.bf16 %v7342, %v7335
      %v7420 = vpack.c.bf16 %v7350, %v7343
      %v7421 = vpack.c.bf16 %v7351, %v7344
      %v7422 = vpack.c.bf16 %v7352, %v7345
      %v7423 = vpack.c.bf16 %v7353, %v7346
      %v7424 = vpack.c.bf16 %v7354, %v7347
      %v7425 = vpack.c.bf16 %v7355, %v7348
      %v7426 = vpack.c.bf16 %v7356, %v7349
      %v7497 = vunpack.c.l.b16 %v7357
      %v7498 = vunpack.c.l.b16 %v7358
      %v7499 = vunpack.c.l.b16 %v7359
      %v7500 = vunpack.c.l.b16 %v7360
      %v7501 = vunpack.c.l.b16 %v7361
      %v7502 = vunpack.c.l.b16 %v7362
      %v7503 = vunpack.c.l.b16 %v7363
      %v7504 = vunpack.c.h.b16 %v7357
      %v7505 = vunpack.c.h.b16 %v7358
      %v7506 = vunpack.c.h.b16 %v7359
      %v7507 = vunpack.c.h.b16 %v7360
      %v7508 = vunpack.c.h.b16 %v7361
      %v7509 = vunpack.c.h.b16 %v7362
      %v7510 = vunpack.c.h.b16 %v7363
      %v7511 = vunpack.c.l.b16 %v7364
      %v7512 = vunpack.c.l.b16 %v7365
      %v7513 = vunpack.c.l.b16 %v7366
      %v7514 = vunpack.c.l.b16 %v7367
      %v7515 = vunpack.c.l.b16 %v7368
      %v7516 = vunpack.c.l.b16 %v7369
      %v7517 = vunpack.c.l.b16 %v7370
      %v7518 = vunpack.c.h.b16 %v7364
      %v7519 = vunpack.c.h.b16 %v7365
      %v7520 = vunpack.c.h.b16 %v7366
      %v7521 = vunpack.c.h.b16 %v7367
      %v7522 = vunpack.c.h.b16 %v7368
      %v7523 = vunpack.c.h.b16 %v7369
      %v7524 = vunpack.c.h.b16 %v7370
      %v7525 = vunpack.c.l.b16 %v7371
      %v7526 = vunpack.c.l.b16 %v7372
      %v7527 = vunpack.c.l.b16 %v7373
      %v7528 = vunpack.c.l.b16 %v7374
      %v7529 = vunpack.c.l.b16 %v7375
      %v7530 = vunpack.c.l.b16 %v7376
      %v7531 = vunpack.c.l.b16 %v7377
      %v7532 = vunpack.c.h.b16 %v7371
      %v7533 = vunpack.c.h.b16 %v7372
      %v7534 = vunpack.c.h.b16 %v7373
      %v7535 = vunpack.c.h.b16 %v7374
      %v7536 = vunpack.c.h.b16 %v7375
      %v7537 = vunpack.c.h.b16 %v7376
      %v7538 = vunpack.c.h.b16 %v7377
      %v7539 = vunpack.c.l.b16 %v7378
      %v7540 = vunpack.c.l.b16 %v7379
      %v7541 = vunpack.c.l.b16 %v7380
      %v7542 = vunpack.c.l.b16 %v7381
      %v7543 = vunpack.c.l.b16 %v7382
      %v7544 = vunpack.c.l.b16 %v7383
      %v7545 = vunpack.c.l.b16 %v7384
      %v7546 = vunpack.c.h.b16 %v7378
      %v7547 = vunpack.c.h.b16 %v7379
      %v7548 = vunpack.c.h.b16 %v7380
      %v7549 = vunpack.c.h.b16 %v7381
      %v7550 = vunpack.c.h.b16 %v7382
      %v7551 = vunpack.c.h.b16 %v7383
      %v7552 = vunpack.c.h.b16 %v7384
      %v7553 = vunpack.c.l.b16 %v7385
      %v7554 = vunpack.c.l.b16 %v7386
      %v7555 = vunpack.c.l.b16 %v7387
      %v7556 = vunpack.c.l.b16 %v7388
      %v7557 = vunpack.c.l.b16 %v7389
      %v7558 = vunpack.c.l.b16 %v7390
      %v7559 = vunpack.c.l.b16 %v7391
      %v7560 = vunpack.c.h.b16 %v7385
      %v7561 = vunpack.c.h.b16 %v7386
      %v7562 = vunpack.c.h.b16 %v7387
      %v7563 = vunpack.c.h.b16 %v7388
      %v7564 = vunpack.c.h.b16 %v7389
      %v7565 = vunpack.c.h.b16 %v7390
      %v7566 = vunpack.c.h.b16 %v7391
      %v7567 = vunpack.c.l.b16 %v7392
      %v7568 = vunpack.c.l.b16 %v7393
      %v7569 = vunpack.c.l.b16 %v7394
      %v7570 = vunpack.c.l.b16 %v7395
      %v7571 = vunpack.c.l.b16 %v7396
      %v7572 = vunpack.c.l.b16 %v7397
      %v7573 = vunpack.c.l.b16 %v7398
      %v7574 = vunpack.c.h.b16 %v7392
      %v7575 = vunpack.c.h.b16 %v7393
      %v7576 = vunpack.c.h.b16 %v7394
      %v7577 = vunpack.c.h.b16 %v7395
      %v7578 = vunpack.c.h.b16 %v7396
      %v7579 = vunpack.c.h.b16 %v7397
      %v7580 = vunpack.c.h.b16 %v7398
      %v7581 = vunpack.c.l.b16 %v7399
      %v7582 = vunpack.c.l.b16 %v7400
      %v7583 = vunpack.c.l.b16 %v7401
      %v7584 = vunpack.c.l.b16 %v7402
      %v7585 = vunpack.c.l.b16 %v7403
      %v7586 = vunpack.c.l.b16 %v7404
      %v7587 = vunpack.c.l.b16 %v7405
      %v7588 = vunpack.c.h.b16 %v7399
      %v7589 = vunpack.c.h.b16 %v7400
      %v7590 = vunpack.c.h.b16 %v7401
      %v7591 = vunpack.c.h.b16 %v7402
      %v7592 = vunpack.c.h.b16 %v7403
      %v7593 = vunpack.c.h.b16 %v7404
      %v7594 = vunpack.c.h.b16 %v7405
      %v7595 = vunpack.c.l.b16 %v7406
      %v7596 = vunpack.c.l.b16 %v7407
      %v7597 = vunpack.c.l.b16 %v7408
      %v7598 = vunpack.c.l.b16 %v7409
      %v7599 = vunpack.c.l.b16 %v7410
      %v7600 = vunpack.c.l.b16 %v7411
      %v7601 = vunpack.c.l.b16 %v7412
      %v7602 = vunpack.c.h.b16 %v7406
      %v7603 = vunpack.c.h.b16 %v7407
      %v7604 = vunpack.c.h.b16 %v7408
      %v7605 = vunpack.c.h.b16 %v7409
      %v7606 = vunpack.c.h.b16 %v7410
      %v7607 = vunpack.c.h.b16 %v7411
      %v7608 = vunpack.c.h.b16 %v7412
      %v7609 = vunpack.c.l.b16 %v7413
      %v7610 = vunpack.c.l.b16 %v7414
      %v7611 = vunpack.c.l.b16 %v7415
      %v7612 = vunpack.c.l.b16 %v7416
      %v7613 = vunpack.c.l.b16 %v7417
      %v7614 = vunpack.c.l.b16 %v7418
      %v7615 = vunpack.c.l.b16 %v7419
      %v7616 = vunpack.c.h.b16 %v7413
      %v7617 = vunpack.c.h.b16 %v7414
      %v7618 = vunpack.c.h.b16 %v7415
      %v7619 = vunpack.c.h.b16 %v7416
      %v7620 = vunpack.c.h.b16 %v7417
      %v7621 = vunpack.c.h.b16 %v7418
      %v7622 = vunpack.c.h.b16 %v7419
      %v7623 = vunpack.c.l.b16 %v7420
      %v7624 = vunpack.c.l.b16 %v7421
      %v7625 = vunpack.c.l.b16 %v7422
      %v7626 = vunpack.c.l.b16 %v7423
      %v7627 = vunpack.c.l.b16 %v7424
      %v7628 = vunpack.c.l.b16 %v7425
      %v7629 = vunpack.c.l.b16 %v7426
      %v7630 = vunpack.c.h.b16 %v7420
      %v7631 = vunpack.c.h.b16 %v7421
      %v7632 = vunpack.c.h.b16 %v7422
      %v7633 = vunpack.c.h.b16 %v7423
      %v7634 = vunpack.c.h.b16 %v7424
      %v7635 = vunpack.c.h.b16 %v7425
      %v7636 = vunpack.c.h.b16 %v7426
      %v7637 = vpack.c.b16 %v7498, %v7497
      %v7638 = vpack.c.b16 %v7500, %v7499
      %v7639 = vpack.c.b16 %v7502, %v7501
      %v7640 = vpack.c.b16 %v7503, %v7503
      %v7641 = vpack.c.b16 %v7505, %v7504
      %v7642 = vpack.c.b16 %v7507, %v7506
      %v7643 = vpack.c.b16 %v7509, %v7508
      %v7644 = vpack.c.b16 %v7510, %v7510
      %v7645 = vpack.c.b16 %v7512, %v7511
      %v7646 = vpack.c.b16 %v7514, %v7513
      %v7647 = vpack.c.b16 %v7516, %v7515
      %v7648 = vpack.c.b16 %v7517, %v7517
      %v7649 = vpack.c.b16 %v7519, %v7518
      %v7650 = vpack.c.b16 %v7521, %v7520
      %v7651 = vpack.c.b16 %v7523, %v7522
      %v7652 = vpack.c.b16 %v7524, %v7524
      %v7653 = vpack.c.b16 %v7526, %v7525
      %v7654 = vpack.c.b16 %v7528, %v7527
      %v7655 = vpack.c.b16 %v7530, %v7529
      %v7656 = vpack.c.b16 %v7531, %v7531
      %v7657 = vpack.c.b16 %v7533, %v7532
      %v7658 = vpack.c.b16 %v7535, %v7534
      %v7659 = vpack.c.b16 %v7537, %v7536
      %v7660 = vpack.c.b16 %v7538, %v7538
      %v7661 = vpack.c.b16 %v7540, %v7539
      %v7662 = vpack.c.b16 %v7542, %v7541
      %v7663 = vpack.c.b16 %v7544, %v7543
      %v7664 = vpack.c.b16 %v7545, %v7545
      %v7665 = vpack.c.b16 %v7547, %v7546
      %v7666 = vpack.c.b16 %v7549, %v7548
      %v7667 = vpack.c.b16 %v7551, %v7550
      %v7668 = vpack.c.b16 %v7552, %v7552
      %v7669 = vpack.c.b16 %v7554, %v7553
      %v7670 = vpack.c.b16 %v7556, %v7555
      %v7671 = vpack.c.b16 %v7558, %v7557
      %v7672 = vpack.c.b16 %v7559, %v7559
      %v7673 = vpack.c.b16 %v7561, %v7560
      %v7674 = vpack.c.b16 %v7563, %v7562
      %v7675 = vpack.c.b16 %v7565, %v7564
      %v7676 = vpack.c.b16 %v7566, %v7566
      %v7677 = vpack.c.b16 %v7568, %v7567
      %v7678 = vpack.c.b16 %v7570, %v7569
      %v7679 = vpack.c.b16 %v7572, %v7571
      %v7680 = vpack.c.b16 %v7573, %v7573
      %v7681 = vpack.c.b16 %v7575, %v7574
      %v7682 = vpack.c.b16 %v7577, %v7576
      %v7683 = vpack.c.b16 %v7579, %v7578
      %v7684 = vpack.c.b16 %v7580, %v7580
      %v7685 = vpack.c.b16 %v7582, %v7581
      %v7686 = vpack.c.b16 %v7584, %v7583
      %v7687 = vpack.c.b16 %v7586, %v7585
      %v7688 = vpack.c.b16 %v7587, %v7587
      %v7689 = vpack.c.b16 %v7589, %v7588
      %v7690 = vpack.c.b16 %v7591, %v7590
      %v7691 = vpack.c.b16 %v7593, %v7592
      %v7692 = vpack.c.b16 %v7594, %v7594
      %v7693 = vpack.c.b16 %v7596, %v7595
      %v7694 = vpack.c.b16 %v7598, %v7597
      %v7695 = vpack.c.b16 %v7600, %v7599
      %v7696 = vpack.c.b16 %v7601, %v7601
      %v7697 = vpack.c.b16 %v7603, %v7602
      %v7698 = vpack.c.b16 %v7605, %v7604
      %v7699 = vpack.c.b16 %v7607, %v7606
      %v7700 = vpack.c.b16 %v7608, %v7608
      %v7701 = vpack.c.b16 %v7610, %v7609
      %v7702 = vpack.c.b16 %v7612, %v7611
      %v7703 = vpack.c.b16 %v7614, %v7613
      %v7704 = vpack.c.b16 %v7615, %v7615
      %v7705 = vpack.c.b16 %v7617, %v7616
      %v7706 = vpack.c.b16 %v7619, %v7618
      %v7707 = vpack.c.b16 %v7621, %v7620
      %v7708 = vpack.c.b16 %v7622, %v7622
      %v7709 = vpack.c.b16 %v7624, %v7623
      %v7710 = vpack.c.b16 %v7626, %v7625
      %v7711 = vpack.c.b16 %v7628, %v7627
      %v7712 = vpack.c.b16 %v7629, %v7629
      %v7713 = vpack.c.b16 %v7631, %v7630
      %v7714 = vpack.c.b16 %v7633, %v7632
      %v7715 = vpack.c.b16 %v7635, %v7634
      %v7716 = vpack.c.b16 %v7636, %v7636
      %7797 = vst [vmem:[%s477] sm:$0xff] %v7637
      %7798 = vst [vmem:[%s477 + $0x8] sm:$0xff] %v7638
      %7799 = vst [vmem:[%s477 + $0x10] sm:$0xff] %v7639
      %7800 = vst [vmem:[%s477 + $0x18] sm:$0xf] %v7640
      %7801 = vst [vmem:[%s477 + $0x1c] sm:$0xff] %v7641
      %7802 = vst [vmem:[%s477 + $0x24] sm:$0xff] %v7642
      %7803 = vst [vmem:[%s477 + $0x2c] sm:$0xff] %v7643
      %7804 = vst [vmem:[%s477 + $0x34] sm:$0xf] %v7644
      %7805 = vst [vmem:[%s477 + $0x38] sm:$0xff] %v7645
      %7806 = vst [vmem:[%s477 + $0x40] sm:$0xff] %v7646
      %7807 = vst [vmem:[%s477 + $0x48] sm:$0xff] %v7647
      %7808 = vst [vmem:[%s477 + $0x50] sm:$0xf] %v7648
      %7809 = vst [vmem:[%s477 + $0x54] sm:$0xff] %v7649
      %7810 = vst [vmem:[%s477 + $0x5c] sm:$0xff] %v7650
      %7811 = vst [vmem:[%s477 + $0x64] sm:$0xff] %v7651
      %7812 = vst [vmem:[%s477 + $0x6c] sm:$0xf] %v7652
      %7813 = vst [vmem:[%s477 + $0x70] sm:$0xff] %v7653
      %7814 = vst [vmem:[%s477 + $0x78] sm:$0xff] %v7654
      %7815 = vst [vmem:[%s477 + $0x80] sm:$0xff] %v7655
      %7816 = vst [vmem:[%s477 + $0x88] sm:$0xf] %v7656
      %7817 = vst [vmem:[%s477 + $0x8c] sm:$0xff] %v7657
      %7818 = vst [vmem:[%s477 + $0x94] sm:$0xff] %v7658
      %7819 = vst [vmem:[%s477 + $0x9c] sm:$0xff] %v7659
      %7820 = vst [vmem:[%s477 + $0xa4] sm:$0xf] %v7660
      %7821 = vst [vmem:[%s477 + $0xa8] sm:$0xff] %v7661
      %7822 = vst [vmem:[%s477 + $0xb0] sm:$0xff] %v7662
      %7823 = vst [vmem:[%s477 + $0xb8] sm:$0xff] %v7663
      %7824 = vst [vmem:[%s477 + $0xc0] sm:$0xf] %v7664
      %7825 = vst [vmem:[%s477 + $0xc4] sm:$0xff] %v7665
      %7826 = vst [vmem:[%s477 + $0xcc] sm:$0xff] %v7666
      %7827 = vst [vmem:[%s477 + $0xd4] sm:$0xff] %v7667
      %7828 = vst [vmem:[%s477 + $0xdc] sm:$0xf] %v7668
      %7829 = vst [vmem:[%s477 + $0xe0] sm:$0xff] %v7669
      %7830 = vst [vmem:[%s477 + $0xe8] sm:$0xff] %v7670
      %7831 = vst [vmem:[%s477 + $0xf0] sm:$0xff] %v7671
      %7832 = vst [vmem:[%s477 + $0xf8] sm:$0xf] %v7672
      %7833 = vst [vmem:[%s477 + $0xfc] sm:$0xff] %v7673
      %7834 = vst [vmem:[%s477 + $0x104] sm:$0xff] %v7674
      %7835 = vst [vmem:[%s477 + $0x10c] sm:$0xff] %v7675
      %7836 = vst [vmem:[%s477 + $0x114] sm:$0xf] %v7676
      %7837 = vst [vmem:[%s477 + $0x118] sm:$0xff] %v7677
      %7838 = vst [vmem:[%s477 + $0x120] sm:$0xff] %v7678
      %7839 = vst [vmem:[%s477 + $0x128] sm:$0xff] %v7679
      %7840 = vst [vmem:[%s477 + $0x130] sm:$0xf] %v7680
      %7841 = vst [vmem:[%s477 + $0x134] sm:$0xff] %v7681
      %7842 = vst [vmem:[%s477 + $0x13c] sm:$0xff] %v7682
      %7843 = vst [vmem:[%s477 + $0x144] sm:$0xff] %v7683
      %7844 = vst [vmem:[%s477 + $0x14c] sm:$0xf] %v7684
      %7845 = vst [vmem:[%s477 + $0x150] sm:$0xff] %v7685
      %7846 = vst [vmem:[%s477 + $0x158] sm:$0xff] %v7686
      %7847 = vst [vmem:[%s477 + $0x160] sm:$0xff] %v7687
      %7848 = vst [vmem:[%s477 + $0x168] sm:$0xf] %v7688
      %7849 = vst [vmem:[%s477 + $0x16c] sm:$0xff] %v7689
      %7850 = vst [vmem:[%s477 + $0x174] sm:$0xff] %v7690
      %7851 = vst [vmem:[%s477 + $0x17c] sm:$0xff] %v7691
      %7852 = vst [vmem:[%s477 + $0x184] sm:$0xf] %v7692
      %7853 = vst [vmem:[%s477 + $0x188] sm:$0xff] %v7693
      %7854 = vst [vmem:[%s477 + $0x190] sm:$0xff] %v7694
      %7855 = vst [vmem:[%s477 + $0x198] sm:$0xff] %v7695
      %7856 = vst [vmem:[%s477 + $0x1a0] sm:$0xf] %v7696
      %7857 = vst [vmem:[%s477 + $0x1a4] sm:$0xff] %v7697
      %7858 = vst [vmem:[%s477 + $0x1ac] sm:$0xff] %v7698
      %7859 = vst [vmem:[%s477 + $0x1b4] sm:$0xff] %v7699
      %7860 = vst [vmem:[%s477 + $0x1bc] sm:$0xf] %v7700
      %7861 = vst [vmem:[%s477 + $0x1c0] sm:$0xff] %v7701
      %7862 = vst [vmem:[%s477 + $0x1c8] sm:$0xff] %v7702
      %7863 = vst [vmem:[%s477 + $0x1d0] sm:$0xff] %v7703
      %7864 = vst [vmem:[%s477 + $0x1d8] sm:$0xf] %v7704
      %7865 = vst [vmem:[%s477 + $0x1dc] sm:$0xff] %v7705
      %7866 = vst [vmem:[%s477 + $0x1e4] sm:$0xff] %v7706
      %7867 = vst [vmem:[%s477 + $0x1ec] sm:$0xff] %v7707
      %7868 = vst [vmem:[%s477 + $0x1f4] sm:$0xf] %v7708
      %7869 = vst [vmem:[%s477 + $0x1f8] sm:$0xff] %v7709
      %7870 = vst [vmem:[%s477 + $0x200] sm:$0xff] %v7710
      %7871 = vst [vmem:[%s477 + $0x208] sm:$0xff] %v7711
      %7872 = vst [vmem:[%s477 + $0x210] sm:$0xf] %v7712
      %7873 = vst [vmem:[%s477 + $0x214] sm:$0xff] %v7713
      %7874 = vst [vmem:[%s477 + $0x21c] sm:$0xff] %v7714
      %7875 = vst [vmem:[%s477 + $0x224] sm:$0xff] %v7715
      %7876 = vst [vmem:[%s477 + $0x22c] sm:$0xf] %v7716
      %s7877 = smul.u32 20, %s25
      %p7878 = scmp.lt.s32.totalorder %s7877, 39
      %s7879 = scalar_select %p7878, %s7877, 39
      %s7880 = smul.addr %s7879, 7
      %s7881 = smul.addr %s7880, 4
      %s7882 = scalar_lea.vmem %s12, %s7881
      %s7883 = smul.u32 20, %s25
      %p7884 = scmp.lt.s32.totalorder %s7883, 39
      %s7885 = scalar_select %p7884, %s7883, 39
      %s7886 = smul.addr %s7885, 8
      %s7887 = scalar_lea.vmem %s13, %s7886
      // Predicated region
      $region69: #{vae_forward.1} parent=67 // pred_check
        %p7888 = pneg %p305
      $region70: #{vae_forward.1} parent=67 // pred_check_branch
        %7890 = sbr.rel (%p7888) target = $region72
      $region71: #{vae_forward.1} parent=67 // pred_region
        %s7891 = smul.u32 20, %s25
      $region72: #{vae_forward.1} parent=67 // pred_fallthru
        _
      // Predicated region
      $region73: #{vae_forward.1} parent=67 // pred_check
        %p7892 = pneg %p331
      $region74: #{vae_forward.1} parent=67 // pred_check_branch
        %7894 = sbr.rel (%p7892) target = $region76
      $region75: #{vae_forward.1} parent=67 // pred_region
        %s7895 = smul.u32 20, %s25
      $region76: #{vae_forward.1} parent=67 // pred_fallthru
        _
    $region68: #{vae_forward.1} parent=5 // pred_fallthru
      _
    %p7896 = scmp.le.s32.totalorder 2, %s20
    // Predicated region
    $region77: #{vae_forward.1} parent=5 // pred_check
      %p7897 = pneg %p7896
    $region78: #{vae_forward.1} parent=5 // pred_check_branch
      %7899 = sbr.rel (%p7897) target = $region80
    $region79: #{vae_forward.1} parent=5 // pred_region
      %s7900 = ssub.s32 %s20, 2
      // Predicated region
      $region81: #{vae_forward.1} parent=79 // pred_check
        %p7901 = pneg %p311
      $region82: #{vae_forward.1} parent=79 // pred_check_branch
        %7903 = sbr.rel (%p7901) target = $region84
      $region83: #{vae_forward.1} parent=79 // pred_region
        %s7904 = smul.u32 20, %s26
        %p7905 = scmp.lt.s32.totalorder %s7904, 39
        %s7906 = scalar_select %p7905, %s7904, 39
        %s7907 = smul.addr %s7906, 7
        %s7908 = smul.addr %s7907, 4
        %s7909 = scalar_lea.vmem %s12, %s7908
      $region84: #{vae_forward.1} parent=79 // pred_fallthru
        _
      // Predicated region
      $region85: #{vae_forward.1} parent=79 // pred_check
        %p7910 = pneg %p337
      $region86: #{vae_forward.1} parent=79 // pred_check_branch
        %7912 = sbr.rel (%p7910) target = $region88
      $region87: #{vae_forward.1} parent=79 // pred_region
        %s7913 = smul.u32 20, %s26
        %p7914 = scmp.lt.s32.totalorder %s7913, 39
        %s7915 = scalar_select %p7914, %s7913, 39
        %s7916 = smul.addr %s7915, 8
        %s7917 = scalar_lea.vmem %s13, %s7916
      $region88: #{vae_forward.1} parent=79 // pred_fallthru
        _
    $region80: #{vae_forward.1} parent=5 // pred_fallthru
      _
  $region6: #{vae_forward.1} parent=0 // loop_footer
    %s24 = sadd.s32 1, %s20
  $region7: #{vae_forward.1} parent=0 // loop_footer_branch
    %19 = sbr.rel target = $region3
  $region8: #{vae_forward.1} parent=0 // loop_exit
    _

</llo_original>
